<compile_context>
chip_gen: v7x
topology: tpu7x:2x2x1
jax: 0.10.0
libtpu: 0.0.40
codegen_flags: <defaults>
</compile_context>

<pallas_src>
import jax
import jax.numpy as jnp
from jax.experimental import pallas as pl
from jax.experimental.pallas import tpu as pltpu


# --------------------------------------------------------------------------
# Pallas kernels
# --------------------------------------------------------------------------
def _conv_gemm_bn_relu_kernel(x_ref, w_ref, shift_ref, o_ref):
    # x: (M, K) bf16 im2col patches of ONE image, w: (K, N) bf16 (BN scale folded),
    # shift: (1, N) f32 (conv bias + BN shift). f32 accumulation + f32 epilogue.
    acc = jnp.dot(x_ref[...], w_ref[...], preferred_element_type=jnp.float32)
    o_ref[...] = jnp.maximum(acc + shift_ref[...], 0.0).astype(o_ref.dtype)


def _dueling_head_kernel(y_ref, w1_ref, b1_ref, w2_ref, b2_ref, o_ref):
    # y : (tb, F) bf16 features (NHWC-flat, weights pre-permuted to match)
    # w1: (F, 2H) bf16 = [adv_w1 | val_w1]          -> one lane-dense GEMM
    # w2: (2H, A+1) bf16 block-diag([adv_w2, val_w2]) -> one GEMM for adv & val
    num_actions = o_ref.shape[-1]
    h = jnp.maximum(
        jnp.dot(y_ref[...], w1_ref[...], preferred_element_type=jnp.float32)
        + b1_ref[...], 0.0).astype(y_ref.dtype)
    z = jnp.dot(h, w2_ref[...], preferred_element_type=jnp.float32) + b2_ref[...]
    adv = z[:, :num_actions]
    val = z[:, num_actions:num_actions + 1]
    o_ref[...] = val + adv - jnp.mean(adv, axis=1, keepdims=True)


# --------------------------------------------------------------------------
# Wrappers
# --------------------------------------------------------------------------
def _round_up(x, m):
    return ((x + m - 1) // m) * m


def im2col_nhwc(x, k, stride):
    """NHWC -> (B, Ho*Wo, k*k*C) patch rows, K ordered (kh, kw, c).

    Strided slices concatenated along the lane axis: one XLA fusion, no stack +
    6-D transpose materialisations and no NCHW<->NHWC shuffles at layer bounds.
    """
    B, H, W, C = x.shape
    Ho = (H - k) // stride + 1
    Wo = (W - k) // stride + 1
    cols = []
    for kh in range(k):
        for kw in range(k):
            cols.append(x[:, kh:kh + stride * (Ho - 1) + 1:stride,
                          kw:kw + stride * (Wo - 1) + 1:stride, :])
    patches = jnp.concatenate(cols, axis=-1)          # (B, Ho, Wo, k*k*C)
    return patches.reshape(B, Ho * Wo, k * k * C), Ho, Wo


def conv_gemm_bn_relu(patches, w, shift, out_dtype=jnp.bfloat16):
    """relu(patches @ w + shift) per image; grid over batch, no padding, no slicing."""
    B, M, K = patches.shape
    K2, N = w.shape
    assert K == K2
    return pl.pallas_call(
        _conv_gemm_bn_relu_kernel,
        out_shape=jax.ShapeDtypeStruct((B, M, N), out_dtype),
        grid_spec=pltpu.PrefetchScalarGridSpec(
            num_scalar_prefetch=0,
            grid=(B,),
            in_specs=[
                pl.BlockSpec((None, M, K), lambda b: (b, 0, 0)),   # one image's patches
                pl.BlockSpec((K, N), lambda b: (0, 0)),            # resident weights
                pl.BlockSpec((1, N), lambda b: (0, 0)),            # resident shift
            ],
            out_specs=pl.BlockSpec((None, M, N), lambda b: (b, 0, 0)),
        ),
        compiler_params=pltpu.CompilerParams(
            dimension_semantics=("parallel",)),
        cost_estimate=pl.CostEstimate(
            flops=2 * B * M * K * N,
            transcendentals=0,
            bytes_accessed=(B * M * K + K * N) * 2 + N * 4 + B * M * N * 2),
    )(patches, w, shift.reshape(1, N))


def dueling_head(feats, w1, b1, w2, b2):
    B, F = feats.shape
    H2 = w1.shape[1]                    # 2 * hidden
    A1 = w2.shape[1]                    # num_actions + 1
    num_actions = A1 - 1

    if B <= 512:
        # Single full-batch block (block dims == array dims, so no (8,128) padding
        # needed and no wasted FLOPs on phantom rows).
        tb, Bp = B, B
        fp = feats
    else:
        tb = 256
        Bp = _round_up(B, tb)
        fp = jnp.pad(feats, ((0, Bp - B), (0, 0)))

    out = pl.pallas_call(
        _dueling_head_kernel,
        out_shape=jax.ShapeDtypeStruct((Bp, num_actions), jnp.float32),
        grid_spec=pltpu.PrefetchScalarGridSpec(
            num_scalar_prefetch=0,
            grid=(Bp // tb,),
            in_specs=[
                pl.BlockSpec((tb, F), lambda i: (i, 0)),
                pl.BlockSpec((F, H2), lambda i: (0, 0)),
                pl.BlockSpec((1, H2), lambda i: (0, 0)),
                pl.BlockSpec((H2, A1), lambda i: (0, 0)),
                pl.BlockSpec((1, A1), lambda i: (0, 0)),
            ],
            out_specs=pl.BlockSpec((tb, num_actions), lambda i: (i, 0)),
        ),
        compiler_params=pltpu.CompilerParams(
            dimension_semantics=("parallel",)),
        cost_estimate=pl.CostEstimate(
            flops=2 * Bp * F * H2 + 2 * Bp * H2 * A1,
            transcendentals=0,
            bytes_accessed=(Bp * F + F * H2 + H2 * A1) * 2
                           + (H2 + A1) * 4 + Bp * num_actions * 4),
    )(fp, w1, b1.reshape(1, H2), w2, b2.reshape(1, A1))
    return out if Bp == B else out[:B]


# --------------------------------------------------------------------------
# One-time parameter preparation (BN fold, NHWC row permute, head fusion, bf16)
# --------------------------------------------------------------------------
def prepare_params(params, eps=1e-5):
    p = params
    prep = {}

    def fold_conv(w_oihw, conv_b, g, beta, m, v):
        Cout, Cin, KH, KW = w_oihw.shape
        scale = g / jnp.sqrt(v + eps)
        # OIHW -> (KH, KW, Cin, Cout) -> (KH*KW*Cin, Cout): matches im2col K-order.
        wmat = w_oihw.transpose(2, 3, 1, 0).reshape(KH * KW * Cin, Cout)
        wmat = (wmat * scale[None, :]).astype(jnp.bfloat16)    # BN scale folded in
        shift = ((conv_b - m) * scale + beta).astype(jnp.float32)
        return wmat, shift

    for n in (1, 2, 3):
        prep[f"cw{n}"], prep[f"cs{n}"] = fold_conv(
            p[f"c{n}_w"], p[f"c{n}_b"], p[f"bn{n}_g"], p[f"bn{n}_b"],
            p[f"bn{n}_m"], p[f"bn{n}_v"])

    # Dueling head: PyTorch flattens NCHW (c, h, w); our features are NHWC-flat
    # (h, w, c) -> permute rows of the first-layer weights once, then fuse branches.
    C, Hc, Wc = 64, 7, 7
    hidden = p["a1_w"].shape[1]
    num_actions = p["a2_w"].shape[1]

    def to_nhwc_rows(w):                 # (C*H*W, hidden) -> (H*W*C, hidden)
        return w.reshape(C, Hc, Wc, hidden).transpose(1, 2, 0, 3).reshape(
            Hc * Wc * C, hidden)

    w1 = jnp.concatenate([to_nhwc_rows(p["a1_w"]), to_nhwc_rows(p["v1_w"])], axis=1)
    b1 = jnp.concatenate([p["a1_b"], p["v1_b"]])
    w2 = jnp.zeros((2 * hidden, num_actions + 1), jnp.float32)
    w2 = w2.at[:hidden, :num_actions].set(p["a2_w"])
    w2 = w2.at[hidden:, num_actions:].set(p["v2_w"])
    b2 = jnp.concatenate([p["a2_b"], p["v2_b"]])
    prep["hw1"] = w1.astype(jnp.bfloat16)
    prep["hb1"] = b1.astype(jnp.float32)
    prep["hw2"] = w2.astype(jnp.bfloat16)
    prep["hb2"] = b2.astype(jnp.float32)
    return prep


# --------------------------------------------------------------------------
# Forward
# --------------------------------------------------------------------------
def dueling_dqn_forward(prep, x):
    """x: NCHW f32 (PyTorch layout).  Conv stack runs NHWC / bf16 end-to-end."""
    B = x.shape[0]
    y = jnp.transpose(x, (0, 2, 3, 1)).astype(jnp.bfloat16)   # one-time NCHW->NHWC
    for n, (k, s) in ((1, (8, 4)), (2, (4, 2)), (3, (3, 1))):
        patches, Ho, Wo = im2col_nhwc(y, k, s)                  # (B, Ho*Wo, K)
        out = conv_gemm_bn_relu(patches, prep[f"cw{n}"], prep[f"cs{n}"])
        y = out.reshape(B, Ho, Wo, -1)
    feats = y.reshape(B, -1)             # NHWC-flat; head weights pre-permuted
    return dueling_head(feats, prep["hw1"], prep["hb1"], prep["hw2"], prep["hb2"])


# --------------------------------------------------------------------------
# Deterministic parameter init (shapes from the PyTorch __init__)
# --------------------------------------------------------------------------
def init_params(key, in_ch=4, num_actions=12):
    ks = jax.random.split(key, 8)

    def uni(k, shape, fan_in):
        b = 1.0 / jnp.sqrt(jnp.float32(fan_in))
        return jax.random.uniform(k, shape, jnp.float32, -b, b)

    p = {}
    p["c1_w"] = uni(ks[0], (32, in_ch, 8, 8), in_ch * 8 * 8)
    p["c1_b"] = jnp.zeros((32,), jnp.float32)
    p["c2_w"] = uni(ks[1], (64, 32, 4, 4), 32 * 4 * 4)
    p["c2_b"] = jnp.zeros((64,), jnp.float32)
    p["c3_w"] = uni(ks[2], (64, 64, 3, 3), 64 * 3 * 3)
    p["c3_b"] = jnp.zeros((64,), jnp.float32)
    for i, c in ((1, 32), (2, 64), (3, 64)):
        p[f"bn{i}_g"] = jnp.ones((c,), jnp.float32)
        p[f"bn{i}_b"] = jnp.zeros((c,), jnp.float32)
        p[f"bn{i}_m"] = jnp.zeros((c,), jnp.float32)
        p[f"bn{i}_v"] = jnp.ones((c,), jnp.float32)
    feat = 7 * 7 * 64
    p["a1_w"] = uni(ks[3], (feat, 256), feat)
    p["a1_b"] = uni(ks[4], (256,), feat)
    p["a2_w"] = uni(ks[5], (256, num_actions), 256)
    p["a2_b"] = jnp.zeros((num_actions,), jnp.float32)
    p["v1_w"] = uni(ks[6], (feat, 256), feat)
    p["v1_b"] = jnp.zeros((256,), jnp.float32)
    p["v2_w"] = uni(ks[7], (256, 1), 256)
    p["v2_b"] = jnp.zeros((1,), jnp.float32)
    return p


# --------------------------------------------------------------------------
# Pure-JAX reference (for correctness check)
# --------------------------------------------------------------------------
def reference_forward(params, x, eps=1e-5):
    p = params

    def conv(x, w, b, stride):
        y = jax.lax.conv_general_dilated(
            x, w, (stride, stride), "VALID",
            dimension_numbers=("NCHW", "OIHW", "NCHW"),
            precision=jax.lax.Precision.HIGHEST)
        return y + b[None, :, None, None]

    def bn_relu(x, g, be, m, v):
        y = (x - m[None, :, None, None]) / jnp.sqrt(v[None, :, None, None] + eps)
        return jnp.maximum(y * g[None, :, None, None] + be[None, :, None, None], 0.0)

    y = bn_relu(conv(x, p["c1_w"], p["c1_b"], 4), p["bn1_g"], p["bn1_b"], p["bn1_m"], p["bn1_v"])
    y = bn_relu(conv(y, p["c2_w"], p["c2_b"], 2), p["bn2_g"], p["bn2_b"], p["bn2_m"], p["bn2_v"])
    y = bn_relu(conv(y, p["c3_w"], p["c3_b"], 1), p["bn3_g"], p["bn3_b"], p["bn3_m"], p["bn3_v"])
    y = y.reshape(x.shape[0], -1)
    hi = jax.lax.Precision.HIGHEST
    ha = jnp.maximum(jnp.dot(y, p["a1_w"], precision=hi) + p["a1_b"], 0.0)
    adv = jnp.dot(ha, p["a2_w"], precision=hi) + p["a2_b"]
    hv = jnp.maximum(jnp.dot(y, p["v1_w"], precision=hi) + p["v1_b"], 0.0)
    val = jnp.dot(hv, p["v2_w"], precision=hi) + p["v2_b"]
    return val + adv - jnp.mean(adv, axis=1, keepdims=True)


if __name__ == "__main__":
    key = jax.random.PRNGKey(0)
    pkey, xkey = jax.random.split(key)
    params = init_params(pkey, in_ch=4, num_actions=12)
    # 84x84 spatial is forced by the Linear(7*7*64, ...) in the module.
    x = jax.random.uniform(xkey, (2, 4, 84, 84), jnp.float32)

    prep = prepare_params(params)
    fwd = jax.jit(dueling_dqn_forward)
    out = jax.block_until_ready(fwd(prep, x))

    ref = reference_forward(params, x)
    assert out.shape == (2, 12)
    assert jnp.allclose(out, ref, atol=2e-2, rtol=2e-2), (
        f"max abs err {jnp.max(jnp.abs(out - ref))}")
    print("KERNEL_OK")
</pallas_src>

<mosaic_0001>
module attributes {stable_mosaic.version = 11 : i64} {
  func.func @_conv_gemm_bn_relu_kernel(%arg0: i32, %arg1: memref<1x400x256xbf16, #tpu.memory_space<vmem>>, %arg2: memref<256x32xbf16, #tpu.memory_space<vmem>>, %arg3: memref<1x32xf32, #tpu.memory_space<vmem>>, %arg4: memref<1x400x32xbf16, #tpu.memory_space<vmem>>) attributes {dimension_semantics = [#tpu.dimension_semantics<parallel>], iteration_bounds = array<i64: 2>, scalar_prefetch = 0 : i64, scratch_operands = 0 : i64, tpu.core_type = #tpu.core_type<tc>, window_params = [{transform_indices = @transform_0, window_bounds = array<i64: 1, 400, 256>}, {pipeline_mode = #tpu.pipeline_mode<synchronous>, transform_indices = @transform_1, window_bounds = array<i64: 256, 32>}, {pipeline_mode = #tpu.pipeline_mode<synchronous>, transform_indices = @transform_2, window_bounds = array<i64: 1, 32>}, {transform_indices = @transform_3, window_bounds = array<i64: 1, 400, 32>}]} {
    %c0 = arith.constant 0 : index
    %c0_0 = arith.constant 0 : index
    %c0_1 = arith.constant 0 : index
    %0 = vector.load %arg1[%c0, %c0_0, %c0_1] : memref<1x400x256xbf16, #tpu.memory_space<vmem>>, vector<1x400x256xbf16>
    %1 = vector.shape_cast %0 : vector<1x400x256xbf16> to vector<400x256xbf16>
    %c0_2 = arith.constant 0 : index
    %c0_3 = arith.constant 0 : index
    %2 = vector.load %arg2[%c0_2, %c0_3] : memref<256x32xbf16, #tpu.memory_space<vmem>>, vector<256x32xbf16>
    %cst = arith.constant dense<0.000000e+00> : vector<400x32xf32>
    %3 = tpu.matmul %1, %2, %cst {dimension_numbers = #tpu.dot_dimension_numbers<[1], [0], [0], [1], [0, 0, 1, 1], [], []>} : vector<400x256xbf16>, vector<256x32xbf16>, vector<400x32xf32> -> vector<400x32xf32>
    %c0_4 = arith.constant 0 : index
    %c0_5 = arith.constant 0 : index
    %4 = vector.load %arg3[%c0_4, %c0_5] : memref<1x32xf32, #tpu.memory_space<vmem>>, vector<1x32xf32>
    %5 = vector.broadcast %4 : vector<1x32xf32> to vector<400x32xf32>
    %6 = arith.addf %3, %5 : vector<400x32xf32>
    %cst_6 = arith.constant 0.000000e+00 : f32
    %7 = vector.broadcast %cst_6 : f32 to vector<400x32xf32>
    %8 = arith.maximumf %6, %7 : vector<400x32xf32>
    %9 = arith.truncf %8 : vector<400x32xf32> to vector<400x32xbf16>
    %c0_7 = arith.constant 0 : index
    %c0_8 = arith.constant 0 : index
    %c0_9 = arith.constant 0 : index
    %10 = vector.load %arg4[%c0_7, %c0_8, %c0_9] : memref<1x400x32xbf16, #tpu.memory_space<vmem>>, vector<1x400x32xbf16>
    %11 = vector.shape_cast %10 : vector<1x400x32xbf16> to vector<400x32xbf16>
    %12 = vector.shape_cast %9 : vector<400x32xbf16> to vector<1x400x32xbf16>
    tpu.vector_store %arg4[%c0_7, %c0_8, %c0_9], %12 {strides = array<i32>} : memref<1x400x32xbf16, #tpu.memory_space<vmem>>, vector<1x400x32xbf16>,
    return
  }
  func.func @transform_0(%arg0: i32) -> (i32, i32, i32) {
    %c0_i32 = arith.constant 0 : i32
    %c0_i32_0 = arith.constant 0 : i32
    %c0_i32_1 = arith.constant 0 : i32
    return %arg0, %c0_i32, %c0_i32_0 : i32, i32, i32
  }
  func.func @transform_1(%arg0: i32) -> (i32, i32) {
    %c0_i32 = arith.constant 0 : i32
    %c0_i32_0 = arith.constant 0 : i32
    %c0_i32_1 = arith.constant 0 : i32
    return %c0_i32, %c0_i32_0 : i32, i32
  }
  func.func @transform_2(%arg0: i32) -> (i32, i32) {
    %c0_i32 = arith.constant 0 : i32
    %c0_i32_0 = arith.constant 0 : i32
    %c0_i32_1 = arith.constant 0 : i32
    return %c0_i32, %c0_i32_0 : i32, i32
  }
  func.func @transform_3(%arg0: i32) -> (i32, i32, i32) {
    %c0_i32 = arith.constant 0 : i32
    %c0_i32_0 = arith.constant 0 : i32
    %c0_i32_1 = arith.constant 0 : i32
    return %arg0, %c0_i32, %c0_i32_0 : i32, i32, i32
  }
}

module attributes {stable_mosaic.version = 11 : i64} {
  func.func @_conv_gemm_bn_relu_kernel(%arg0: i32, %arg1: memref<1x81x512xbf16, #tpu.memory_space<vmem>>, %arg2: memref<512x64xbf16, #tpu.memory_space<vmem>>, %arg3: memref<1x64xf32, #tpu.memory_space<vmem>>, %arg4: memref<1x81x64xbf16, #tpu.memory_space<vmem>>) attributes {dimension_semantics = [#tpu.dimension_semantics<parallel>], iteration_bounds = array<i64: 2>, scalar_prefetch = 0 : i64, scratch_operands = 0 : i64, tpu.core_type = #tpu.core_type<tc>, window_params = [{transform_indices = @transform_0, window_bounds = array<i64: 1, 81, 512>}, {pipeline_mode = #tpu.pipeline_mode<synchronous>, transform_indices = @transform_1, window_bounds = array<i64: 512, 64>}, {pipeline_mode = #tpu.pipeline_mode<synchronous>, transform_indices = @transform_2, window_bounds = array<i64: 1, 64>}, {transform_indices = @transform_3, window_bounds = array<i64: 1, 81, 64>}]} {
    %c0 = arith.constant 0 : index
    %c0_0 = arith.constant 0 : index
    %c0_1 = arith.constant 0 : index
    %0 = vector.load %arg1[%c0, %c0_0, %c0_1] : memref<1x81x512xbf16, #tpu.memory_space<vmem>>, vector<1x81x512xbf16>
    %1 = vector.shape_cast %0 : vector<1x81x512xbf16> to vector<81x512xbf16>
    %c0_2 = arith.constant 0 : index
    %c0_3 = arith.constant 0 : index
    %2 = vector.load %arg2[%c0_2, %c0_3] : memref<512x64xbf16, #tpu.memory_space<vmem>>, vector<512x64xbf16>
    %cst = arith.constant dense<0.000000e+00> : vector<81x64xf32>
    %3 = tpu.matmul %1, %2, %cst {dimension_numbers = #tpu.dot_dimension_numbers<[1], [0], [0], [1], [0, 0, 1, 1], [], []>} : vector<81x512xbf16>, vector<512x64xbf16>, vector<81x64xf32> -> vector<81x64xf32>
    %c0_4 = arith.constant 0 : index
    %c0_5 = arith.constant 0 : index
    %4 = vector.load %arg3[%c0_4, %c0_5] : memref<1x64xf32, #tpu.memory_space<vmem>>, vector<1x64xf32>
    %5 = vector.broadcast %4 : vector<1x64xf32> to vector<81x64xf32>
    %6 = arith.addf %3, %5 : vector<81x64xf32>
    %cst_6 = arith.constant 0.000000e+00 : f32
    %7 = vector.broadcast %cst_6 : f32 to vector<81x64xf32>
    %8 = arith.maximumf %6, %7 : vector<81x64xf32>
    %9 = arith.truncf %8 : vector<81x64xf32> to vector<81x64xbf16>
    %c0_7 = arith.constant 0 : index
    %c0_8 = arith.constant 0 : index
    %c0_9 = arith.constant 0 : index
    %10 = vector.load %arg4[%c0_7, %c0_8, %c0_9] : memref<1x81x64xbf16, #tpu.memory_space<vmem>>, vector<1x81x64xbf16>
    %11 = vector.shape_cast %10 : vector<1x81x64xbf16> to vector<81x64xbf16>
    %12 = vector.shape_cast %9 : vector<81x64xbf16> to vector<1x81x64xbf16>
    tpu.vector_store %arg4[%c0_7, %c0_8, %c0_9], %12 {strides = array<i32>} : memref<1x81x64xbf16, #tpu.memory_space<vmem>>, vector<1x81x64xbf16>,
    return
  }
  func.func @transform_0(%arg0: i32) -> (i32, i32, i32) {
    %c0_i32 = arith.constant 0 : i32
    %c0_i32_0 = arith.constant 0 : i32
    %c0_i32_1 = arith.constant 0 : i32
    return %arg0, %c0_i32, %c0_i32_0 : i32, i32, i32
  }
  func.func @transform_1(%arg0: i32) -> (i32, i32) {
    %c0_i32 = arith.constant 0 : i32
    %c0_i32_0 = arith.constant 0 : i32
    %c0_i32_1 = arith.constant 0 : i32
    return %c0_i32, %c0_i32_0 : i32, i32
  }
  func.func @transform_2(%arg0: i32) -> (i32, i32) {
    %c0_i32 = arith.constant 0 : i32
    %c0_i32_0 = arith.constant 0 : i32
    %c0_i32_1 = arith.constant 0 : i32
    return %c0_i32, %c0_i32_0 : i32, i32
  }
  func.func @transform_3(%arg0: i32) -> (i32, i32, i32) {
    %c0_i32 = arith.constant 0 : i32
    %c0_i32_0 = arith.constant 0 : i32
    %c0_i32_1 = arith.constant 0 : i32
    return %arg0, %c0_i32, %c0_i32_0 : i32, i32, i32
  }
}

module attributes {stable_mosaic.version = 11 : i64} {
  func.func @_conv_gemm_bn_relu_kernel(%arg0: i32, %arg1: memref<1x49x576xbf16, #tpu.memory_space<vmem>>, %arg2: memref<576x64xbf16, #tpu.memory_space<vmem>>, %arg3: memref<1x64xf32, #tpu.memory_space<vmem>>, %arg4: memref<1x49x64xbf16, #tpu.memory_space<vmem>>) attributes {dimension_semantics = [#tpu.dimension_semantics<parallel>], iteration_bounds = array<i64: 2>, scalar_prefetch = 0 : i64, scratch_operands = 0 : i64, tpu.core_type = #tpu.core_type<tc>, window_params = [{transform_indices = @transform_0, window_bounds = array<i64: 1, 49, 576>}, {pipeline_mode = #tpu.pipeline_mode<synchronous>, transform_indices = @transform_1, window_bounds = array<i64: 576, 64>}, {pipeline_mode = #tpu.pipeline_mode<synchronous>, transform_indices = @transform_2, window_bounds = array<i64: 1, 64>}, {transform_indices = @transform_3, window_bounds = array<i64: 1, 49, 64>}]} {
    %c0 = arith.constant 0 : index
    %c0_0 = arith.constant 0 : index
    %c0_1 = arith.constant 0 : index
    %0 = vector.load %arg1[%c0, %c0_0, %c0_1] : memref<1x49x576xbf16, #tpu.memory_space<vmem>>, vector<1x49x576xbf16>
    %1 = vector.shape_cast %0 : vector<1x49x576xbf16> to vector<49x576xbf16>
    %c0_2 = arith.constant 0 : index
    %c0_3 = arith.constant 0 : index
    %2 = vector.load %arg2[%c0_2, %c0_3] : memref<576x64xbf16, #tpu.memory_space<vmem>>, vector<576x64xbf16>
    %cst = arith.constant dense<0.000000e+00> : vector<49x64xf32>
    %3 = tpu.matmul %1, %2, %cst {dimension_numbers = #tpu.dot_dimension_numbers<[1], [0], [0], [1], [0, 0, 1, 1], [], []>} : vector<49x576xbf16>, vector<576x64xbf16>, vector<49x64xf32> -> vector<49x64xf32>
    %c0_4 = arith.constant 0 : index
    %c0_5 = arith.constant 0 : index
    %4 = vector.load %arg3[%c0_4, %c0_5] : memref<1x64xf32, #tpu.memory_space<vmem>>, vector<1x64xf32>
    %5 = vector.broadcast %4 : vector<1x64xf32> to vector<49x64xf32>
    %6 = arith.addf %3, %5 : vector<49x64xf32>
    %cst_6 = arith.constant 0.000000e+00 : f32
    %7 = vector.broadcast %cst_6 : f32 to vector<49x64xf32>
    %8 = arith.maximumf %6, %7 : vector<49x64xf32>
    %9 = arith.truncf %8 : vector<49x64xf32> to vector<49x64xbf16>
    %c0_7 = arith.constant 0 : index
    %c0_8 = arith.constant 0 : index
    %c0_9 = arith.constant 0 : index
    %10 = vector.load %arg4[%c0_7, %c0_8, %c0_9] : memref<1x49x64xbf16, #tpu.memory_space<vmem>>, vector<1x49x64xbf16>
    %11 = vector.shape_cast %10 : vector<1x49x64xbf16> to vector<49x64xbf16>
    %12 = vector.shape_cast %9 : vector<49x64xbf16> to vector<1x49x64xbf16>
    tpu.vector_store %arg4[%c0_7, %c0_8, %c0_9], %12 {strides = array<i32>} : memref<1x49x64xbf16, #tpu.memory_space<vmem>>, vector<1x49x64xbf16>,
    return
  }
  func.func @transform_0(%arg0: i32) -> (i32, i32, i32) {
    %c0_i32 = arith.constant 0 : i32
    %c0_i32_0 = arith.constant 0 : i32
    %c0_i32_1 = arith.constant 0 : i32
    return %arg0, %c0_i32, %c0_i32_0 : i32, i32, i32
  }
  func.func @transform_1(%arg0: i32) -> (i32, i32) {
    %c0_i32 = arith.constant 0 : i32
    %c0_i32_0 = arith.constant 0 : i32
    %c0_i32_1 = arith.constant 0 : i32
    return %c0_i32, %c0_i32_0 : i32, i32
  }
  func.func @transform_2(%arg0: i32) -> (i32, i32) {
    %c0_i32 = arith.constant 0 : i32
    %c0_i32_0 = arith.constant 0 : i32
    %c0_i32_1 = arith.constant 0 : i32
    return %c0_i32, %c0_i32_0 : i32, i32
  }
  func.func @transform_3(%arg0: i32) -> (i32, i32, i32) {
    %c0_i32 = arith.constant 0 : i32
    %c0_i32_0 = arith.constant 0 : i32
    %c0_i32_1 = arith.constant 0 : i32
    return %arg0, %c0_i32, %c0_i32_0 : i32, i32, i32
  }
}

module attributes {stable_mosaic.version = 11 : i64} {
  func.func @_dueling_head_kernel(%arg0: i32, %arg1: memref<2x3136xbf16, #tpu.memory_space<vmem>>, %arg2: memref<3136x512xbf16, #tpu.memory_space<vmem>>, %arg3: memref<1x512xf32, #tpu.memory_space<vmem>>, %arg4: memref<512x13xbf16, #tpu.memory_space<vmem>>, %arg5: memref<1x13xf32, #tpu.memory_space<vmem>>, %arg6: memref<2x12xf32, #tpu.memory_space<vmem>>) attributes {dimension_semantics = [#tpu.dimension_semantics<parallel>], iteration_bounds = array<i64: 1>, scalar_prefetch = 0 : i64, scratch_operands = 0 : i64, tpu.core_type = #tpu.core_type<tc>, window_params = [{transform_indices = @transform_0, window_bounds = array<i64: 2, 3136>}, {pipeline_mode = #tpu.pipeline_mode<synchronous>, transform_indices = @transform_1, window_bounds = array<i64: 3136, 512>}, {pipeline_mode = #tpu.pipeline_mode<synchronous>, transform_indices = @transform_2, window_bounds = array<i64: 1, 512>}, {pipeline_mode = #tpu.pipeline_mode<synchronous>, transform_indices = @transform_3, window_bounds = array<i64: 512, 13>}, {pipeline_mode = #tpu.pipeline_mode<synchronous>, transform_indices = @transform_4, window_bounds = array<i64: 1, 13>}, {transform_indices = @transform_5, window_bounds = array<i64: 2, 12>}]} {
    %c0 = arith.constant 0 : index
    %c0_0 = arith.constant 0 : index
    %0 = vector.load %arg1[%c0, %c0_0] : memref<2x3136xbf16, #tpu.memory_space<vmem>>, vector<2x3136xbf16>
    %c0_1 = arith.constant 0 : index
    %c0_2 = arith.constant 0 : index
    %1 = vector.load %arg2[%c0_1, %c0_2] : memref<3136x512xbf16, #tpu.memory_space<vmem>>, vector<3136x512xbf16>
    %cst = arith.constant dense<0.000000e+00> : vector<2x512xf32>
    %2 = tpu.matmul %0, %1, %cst {dimension_numbers = #tpu.dot_dimension_numbers<[1], [0], [0], [1], [0, 0, 1, 1], [], []>} : vector<2x3136xbf16>, vector<3136x512xbf16>, vector<2x512xf32> -> vector<2x512xf32>
    %c0_3 = arith.constant 0 : index
    %c0_4 = arith.constant 0 : index
    %3 = vector.load %arg3[%c0_3, %c0_4] : memref<1x512xf32, #tpu.memory_space<vmem>>, vector<1x512xf32>
    %4 = vector.broadcast %3 : vector<1x512xf32> to vector<2x512xf32>
    %5 = arith.addf %2, %4 : vector<2x512xf32>
    %cst_5 = arith.constant 0.000000e+00 : f32
    %6 = vector.broadcast %cst_5 : f32 to vector<2x512xf32>
    %7 = arith.maximumf %5, %6 : vector<2x512xf32>
    %8 = arith.truncf %7 : vector<2x512xf32> to vector<2x512xbf16>
    %c0_6 = arith.constant 0 : index
    %c0_7 = arith.constant 0 : index
    %9 = vector.load %arg4[%c0_6, %c0_7] : memref<512x13xbf16, #tpu.memory_space<vmem>>, vector<512x13xbf16>
    %cst_8 = arith.constant dense<0.000000e+00> : vector<2x13xf32>
    %10 = tpu.matmul %8, %9, %cst_8 {dimension_numbers = #tpu.dot_dimension_numbers<[1], [0], [0], [1], [0, 0, 1, 1], [], []>} : vector<2x512xbf16>, vector<512x13xbf16>, vector<2x13xf32> -> vector<2x13xf32>
    %c0_9 = arith.constant 0 : index
    %c0_10 = arith.constant 0 : index
    %11 = vector.load %arg5[%c0_9, %c0_10] : memref<1x13xf32, #tpu.memory_space<vmem>>, vector<1x13xf32>
    %12 = vector.broadcast %11 : vector<1x13xf32> to vector<2x13xf32>
    %13 = arith.addf %10, %12 : vector<2x13xf32>
    %14 = vector.extract_strided_slice %13 {offsets = [0, 0], sizes = [2, 12], strides = [1, 1]} : vector<2x13xf32> to vector<2x12xf32>
    %15 = vector.extract_strided_slice %13 {offsets = [0, 12], sizes = [2, 1], strides = [1, 1]} : vector<2x13xf32> to vector<2x1xf32>
    %16 = vector.broadcast %15 : vector<2x1xf32> to vector<2x12xf32>
    %17 = arith.addf %16, %14 : vector<2x12xf32>
    %cst_11 = arith.constant dense<0.000000e+00> : vector<2xf32>
    %18 = vector.multi_reduction <add>, %14, %cst_11 [1] : vector<2x12xf32> to vector<2xf32>
    %19 = vector.shape_cast %18 : vector<2xf32> to vector<2x1xf32>
    %cst_12 = arith.constant 1.200000e+01 : f32
    %20 = vector.broadcast %cst_12 : f32 to vector<2x1xf32>
    %21 = arith.divf %19, %20 : vector<2x1xf32>
    %22 = vector.broadcast %21 : vector<2x1xf32> to vector<2x12xf32>
    %23 = arith.subf %17, %22 : vector<2x12xf32>
    %c0_13 = arith.constant 0 : index
    %c0_14 = arith.constant 0 : index
    %24 = vector.load %arg6[%c0_13, %c0_14] : memref<2x12xf32, #tpu.memory_space<vmem>>, vector<2x12xf32>
    tpu.vector_store %arg6[%c0_13, %c0_14], %23 {strides = array<i32>} : memref<2x12xf32, #tpu.memory_space<vmem>>, vector<2x12xf32>,
    return
  }
  func.func @transform_0(%arg0: i32) -> (i32, i32) {
    %c0_i32 = arith.constant 0 : i32
    %c0_i32_0 = arith.constant 0 : i32
    return %arg0, %c0_i32 : i32, i32
  }
  func.func @transform_1(%arg0: i32) -> (i32, i32) {
    %c0_i32 = arith.constant 0 : i32
    %c0_i32_0 = arith.constant 0 : i32
    %c0_i32_1 = arith.constant 0 : i32
    return %c0_i32, %c0_i32_0 : i32, i32
  }
  func.func @transform_2(%arg0: i32) -> (i32, i32) {
    %c0_i32 = arith.constant 0 : i32
    %c0_i32_0 = arith.constant 0 : i32
    %c0_i32_1 = arith.constant 0 : i32
    return %c0_i32, %c0_i32_0 : i32, i32
  }
  func.func @transform_3(%arg0: i32) -> (i32, i32) {
    %c0_i32 = arith.constant 0 : i32
    %c0_i32_0 = arith.constant 0 : i32
    %c0_i32_1 = arith.constant 0 : i32
    return %c0_i32, %c0_i32_0 : i32, i32
  }
  func.func @transform_4(%arg0: i32) -> (i32, i32) {
    %c0_i32 = arith.constant 0 : i32
    %c0_i32_0 = arith.constant 0 : i32
    %c0_i32_1 = arith.constant 0 : i32
    return %c0_i32, %c0_i32_0 : i32, i32
  }
  func.func @transform_5(%arg0: i32) -> (i32, i32) {
    %c0_i32 = arith.constant 0 : i32
    %c0_i32_0 = arith.constant 0 : i32
    return %arg0, %c0_i32 : i32, i32
  }
}

</mosaic_0001>

<llo_original>
// kernel: dueling_dqn_forward.4
$region0: #{dueling_dqn_forward.4}
  #allocation0 [shape = 'u32[]', space=smem, size = 0x4, offset = 0x4, fixed_abs, tag = 'smem constant byte address 0x4 - core index']
  #allocation1 [shape = 'u32[144,128]{1,0:T(1,128)}', space=vmem, size = 0x12000, scoped, tag = 'internal scratch']
  %s0 = inlined_call_operand.vmem [shape: bf16[2,400,256], index: 0, kind: input, shape index: {}]
  %s1 = inlined_call_operand.vmem [shape: bf16[256,32], index: 1, kind: input, shape index: {}]
  %s2 = inlined_call_operand.vmem [shape: f32[1,32], index: 2, kind: input, shape index: {}]
  %s3 = inlined_call_operand.vmem [shape: bf16[2,400,32], index: 3, kind: output, shape index: {}]
  %s4 = sld [smem:[#allocation0]]
  $region45: #{dueling_dqn_forward.4} parent=0
    _
  %s6 = ssub.s32 1, %s4
  %s7 = scalar_select 0, %s6, %s4
  loop: start=0, step=1, limit=4
  $region2: #{dueling_dqn_forward.4} parent=0 // loop_pre_header
    _
  $region3: #{dueling_dqn_forward.4} parent=0 // loop_header
    %s9 = sphi 0, %s13
    %p10 = scmp.ge.s32.totalorder %s9, 4
    %s19 = sphi 0, %s21
    %s22 = sphi 0, %s19
    %s23 = sphi 0, %s22
    %s39 = sphi 0, %s23
    %s43 = sphi 0, %s43
    %s45 = sphi 0, %s43
    %s46 = sphi 0, %s45
    %s60 = sphi 0, %s46
    %s64 = sphi 0, %s64
    %s66 = sphi 0, %s64
    %s67 = sphi 0, %s66
    %s81 = sphi 0, %s67
    %s87 = sphi 0, %s89
    %s90 = sphi 0, %s87
    %s91 = sphi 0, %s90
    %s107 = sphi 0, %s91
  $region4: #{dueling_dqn_forward.4} parent=0 // loop_header_branch
    %12 = sbr.rel (%p10) target = $region8
  $region5: #{dueling_dqn_forward.4} parent=0 // loop_body
    %s14 = ssub.s32 %s9, 1
    %s15 = ssub.s32 %s9, 2
    %s16 = sadd.s32 %s9, 1
    %s17 = ssub.s32 %s9, %s16
    %p18 = scmp.eq.s32.totalorder %s17, 0
    %s20 = sadd.s32 %s19, 1
    %s21 = scalar_select %p18, %s19, %s20
    %p24 = pneg %p18
    %p25 = scmp.eq.s32.totalorder %s9, 1
    %p26 = por %p24, %p25
    %p27 = scmp.ne.s32.totalorder %s19, %s22
    %p28 = scmp.eq.s32.totalorder %s9, 0
    %p29 = por %p27, %p28
    %p30 = scmp.ne.s32.totalorder %s19, %s22
    %p31 = scmp.eq.s32.totalorder %s14, 1
    %p32 = por %p30, %p31
    %p33 = scmp.ne.s32.totalorder %s22, %s23
    %p34 = scmp.eq.s32.totalorder %s14, 0
    %p35 = por %p33, %p34
    %p36 = scmp.ne.s32.totalorder %s22, %s23
    %p37 = scmp.eq.s32.totalorder %s15, 1
    %p38 = por %p36, %p37
    %p40 = scmp.ne.s32.totalorder %s23, %s39
    %p41 = scmp.eq.s32.totalorder %s15, 0
    %p42 = por %p40, %p41
    %s44 = sadd.s32 %s43, 1
    %p47 = scmp.eq.s32.totalorder %s9, 1
    %p48 = scmp.ne.s32.totalorder %s43, %s45
    %p49 = scmp.eq.s32.totalorder %s9, 0
    %p50 = por %p48, %p49
    %p51 = scmp.ne.s32.totalorder %s43, %s45
    %p52 = scmp.eq.s32.totalorder %s14, 1
    %p53 = por %p51, %p52
    %p54 = scmp.ne.s32.totalorder %s45, %s46
    %p55 = scmp.eq.s32.totalorder %s14, 0
    %p56 = por %p54, %p55
    %p57 = scmp.ne.s32.totalorder %s45, %s46
    %p58 = scmp.eq.s32.totalorder %s15, 1
    %p59 = por %p57, %p58
    %p61 = scmp.ne.s32.totalorder %s46, %s60
    %p62 = scmp.eq.s32.totalorder %s15, 0
    %p63 = por %p61, %p62
    %s65 = sadd.s32 %s64, 1
    %p68 = scmp.eq.s32.totalorder %s9, 1
    %p69 = scmp.ne.s32.totalorder %s64, %s66
    %p70 = scmp.eq.s32.totalorder %s9, 0
    %p71 = por %p69, %p70
    %p72 = scmp.ne.s32.totalorder %s64, %s66
    %p73 = scmp.eq.s32.totalorder %s14, 1
    %p74 = por %p72, %p73
    %p75 = scmp.ne.s32.totalorder %s66, %s67
    %p76 = scmp.eq.s32.totalorder %s14, 0
    %p77 = por %p75, %p76
    %p78 = scmp.ne.s32.totalorder %s66, %s67
    %p79 = scmp.eq.s32.totalorder %s15, 1
    %p80 = por %p78, %p79
    %p82 = scmp.ne.s32.totalorder %s67, %s81
    %p83 = scmp.eq.s32.totalorder %s15, 0
    %p84 = por %p82, %p83
    %s85 = ssub.s32 %s9, %s16
    %p86 = scmp.eq.s32.totalorder %s85, 0
    %s88 = sadd.s32 %s87, 1
    %s89 = scalar_select %p86, %s87, %s88
    %p92 = pneg %p86
    %p93 = scmp.eq.s32.totalorder %s9, 1
    %p94 = por %p92, %p93
    %p95 = scmp.ne.s32.totalorder %s87, %s90
    %p96 = scmp.eq.s32.totalorder %s9, 0
    %p97 = por %p95, %p96
    %p98 = scmp.ne.s32.totalorder %s87, %s90
    %p99 = scmp.eq.s32.totalorder %s14, 1
    %p100 = por %p98, %p99
    %p101 = scmp.ne.s32.totalorder %s90, %s91
    %p102 = scmp.eq.s32.totalorder %s14, 0
    %p103 = por %p101, %p102
    %p104 = scmp.ne.s32.totalorder %s90, %s91
    %p105 = scmp.eq.s32.totalorder %s15, 1
    %p106 = por %p104, %p105
    %p108 = scmp.ne.s32.totalorder %s91, %s107
    %p109 = scmp.eq.s32.totalorder %s15, 0
    %p110 = por %p108, %p109
    %p111 = scmp.le.s32.totalorder 1, %s9
    %p112 = scmp.lt.s32.totalorder %s9, 3
    %p113 = pnand %p111, %p112
    %p114 = pneg %p113
    // Predicated region
    $region9: #{dueling_dqn_forward.4} parent=5 // pred_check
      _
    $region10: #{dueling_dqn_forward.4} parent=5 // pred_check_branch
      %116 = sbr.rel (%p113) target = $region12
    $region11: #{dueling_dqn_forward.4} parent=5 // pred_region
      %s117 = ssub.s32 %s9, 1
      // Predicated region
      $region13: #{dueling_dqn_forward.4} parent=11 // pred_check
        %p118 = pneg %p56
      $region14: #{dueling_dqn_forward.4} parent=11 // pred_check_branch
        %120 = sbr.rel (%p118) target = $region16
      $region15: #{dueling_dqn_forward.4} parent=11 // pred_region
        _
      $region16: #{dueling_dqn_forward.4} parent=11 // pred_fallthru
        _
      // Predicated region
      $region17: #{dueling_dqn_forward.4} parent=11 // pred_check
        %p121 = pneg %p77
      $region18: #{dueling_dqn_forward.4} parent=11 // pred_check_branch
        %123 = sbr.rel (%p121) target = $region20
      $region19: #{dueling_dqn_forward.4} parent=11 // pred_region
        _
      $region20: #{dueling_dqn_forward.4} parent=11 // pred_fallthru
        _
    $region12: #{dueling_dqn_forward.4} parent=5 // pred_fallthru
      _
    %p124 = scmp.lt.s32.totalorder %s9, 2
    // Predicated region
    $region21: #{dueling_dqn_forward.4} parent=5 // pred_check
      %p125 = pneg %p124
    $region22: #{dueling_dqn_forward.4} parent=5 // pred_check_branch
      %127 = sbr.rel (%p125) target = $region24
    $region23: #{dueling_dqn_forward.4} parent=5 // pred_region
      // Predicated region
      $region25: #{dueling_dqn_forward.4} parent=23 // pred_check
        %p128 = pneg %p29
      $region26: #{dueling_dqn_forward.4} parent=23 // pred_check_branch
        %130 = sbr.rel (%p128) target = $region28
      $region27: #{dueling_dqn_forward.4} parent=23 // pred_region
        %p131 = scmp.lt.s32.totalorder %s9, 1
        %s132 = scalar_select %p131, %s9, 1
        %s133 = smul.addr %s132, 100
        %s134 = smul.addr %s133, 4
        %s135 = scalar_lea.vmem %s0, %s134
      $region28: #{dueling_dqn_forward.4} parent=23 // pred_fallthru
        _
    $region24: #{dueling_dqn_forward.4} parent=5 // pred_fallthru
      _
    %p136 = scmp.le.s32.totalorder 1, %s9
    %p137 = scmp.lt.s32.totalorder %s9, 3
    %p138 = pnand %p136, %p137
    %p139 = pneg %p138
    // Predicated region
    $region29: #{dueling_dqn_forward.4} parent=5 // pred_check
      _
    $region30: #{dueling_dqn_forward.4} parent=5 // pred_check_branch
      %141 = sbr.rel (%p138) target = $region32
    $region31: #{dueling_dqn_forward.4} parent=5 // pred_region
      %s142 = ssub.s32 %s9, 1
      %p143 = scmp.lt.s32.totalorder %s14, 1
      %s144 = scalar_select %p143, %s14, 1
      %s145 = smul.addr %s144, 100
      %s146 = smul.addr %s145, 4
      %s147 = scalar_lea.vmem %s0, %s146
      %p148 = pneg %p35
      %p149 = pneg %p32
      %p150 = pneg %p56
      %p151 = pneg %p53
      %p152 = pneg %p77
      %p153 = pneg %p74
      %p154 = pneg %p103
      %p155 = pneg %p100
      %p156 = scmp.lt.s32.totalorder %s14, 1
      %s157 = scalar_select %p156, %s14, 1
      %s158 = smul.addr %s157, 50
      %s159 = smul.addr %s158, 4
      %s160 = scalar_lea.vmem %s3, %s159
      %p161 = scmp.lt.s32.totalorder %s14, 1
      %s162 = scalar_select %p161, %s14, 1
      %s163 = smul.addr %s162, 100
      %s164 = smul.addr %s163, 4
      %s165 = scalar_lea.vmem %s0, %s164
      %p166 = scmp.lt.s32.totalorder %s14, 1
      %s167 = scalar_select %p166, %s14, 1
      %s168 = smul.addr %s167, 50
      %s169 = smul.addr %s168, 4
      %s170 = scalar_lea.vmem %s3, %s169
      %v172 = vld [vmem:[%s165] sm:$0xff]
      %v173 = vld [vmem:[%s165 + $0x8] sm:$0xff]
      %v174 = vld [vmem:[%s165 + $0x10] sm:$0xff]
      %v175 = vld [vmem:[%s165 + $0x18] sm:$0xff]
      %v176 = vld [vmem:[%s165 + $0x20] sm:$0xff]
      %v177 = vld [vmem:[%s165 + $0x28] sm:$0xff]
      %v178 = vld [vmem:[%s165 + $0x30] sm:$0xff]
      %v179 = vld [vmem:[%s165 + $0x38] sm:$0xff]
      %v180 = vld [vmem:[%s165 + $0x40] sm:$0xff]
      %v181 = vld [vmem:[%s165 + $0x48] sm:$0xff]
      %v182 = vld [vmem:[%s165 + $0x50] sm:$0xff]
      %v183 = vld [vmem:[%s165 + $0x58] sm:$0xff]
      %v184 = vld [vmem:[%s165 + $0x60] sm:$0xff]
      %v185 = vld [vmem:[%s165 + $0x68] sm:$0xff]
      %v186 = vld [vmem:[%s165 + $0x70] sm:$0xff]
      %v187 = vld [vmem:[%s165 + $0x78] sm:$0xff]
      %v188 = vld [vmem:[%s165 + $0x80] sm:$0xff]
      %v189 = vld [vmem:[%s165 + $0x88] sm:$0xff]
      %v190 = vld [vmem:[%s165 + $0x90] sm:$0xff]
      %v191 = vld [vmem:[%s165 + $0x98] sm:$0xff]
      %v192 = vld [vmem:[%s165 + $0xa0] sm:$0xff]
      %v193 = vld [vmem:[%s165 + $0xa8] sm:$0xff]
      %v194 = vld [vmem:[%s165 + $0xb0] sm:$0xff]
      %v195 = vld [vmem:[%s165 + $0xb8] sm:$0xff]
      %v196 = vld [vmem:[%s165 + $0xc0] sm:$0xff]
      %v197 = vld [vmem:[%s165 + $0xc8] sm:$0xff]
      %v198 = vld [vmem:[%s165 + $0xd0] sm:$0xff]
      %v199 = vld [vmem:[%s165 + $0xd8] sm:$0xff]
      %v200 = vld [vmem:[%s165 + $0xe0] sm:$0xff]
      %v201 = vld [vmem:[%s165 + $0xe8] sm:$0xff]
      %v202 = vld [vmem:[%s165 + $0xf0] sm:$0xff]
      %v203 = vld [vmem:[%s165 + $0xf8] sm:$0xff]
      %v204 = vld [vmem:[%s165 + $0x100] sm:$0xff]
      %v205 = vld [vmem:[%s165 + $0x108] sm:$0xff]
      %v206 = vld [vmem:[%s165 + $0x110] sm:$0xff]
      %v207 = vld [vmem:[%s165 + $0x118] sm:$0xff]
      %v208 = vld [vmem:[%s165 + $0x120] sm:$0xff]
      %v209 = vld [vmem:[%s165 + $0x128] sm:$0xff]
      %v210 = vld [vmem:[%s165 + $0x130] sm:$0xff]
      %v211 = vld [vmem:[%s165 + $0x138] sm:$0xff]
      %v212 = vld [vmem:[%s165 + $0x140] sm:$0xff]
      %v213 = vld [vmem:[%s165 + $0x148] sm:$0xff]
      %v214 = vld [vmem:[%s165 + $0x150] sm:$0xff]
      %v215 = vld [vmem:[%s165 + $0x158] sm:$0xff]
      %v216 = vld [vmem:[%s165 + $0x160] sm:$0xff]
      %v217 = vld [vmem:[%s165 + $0x168] sm:$0xff]
      %v218 = vld [vmem:[%s165 + $0x170] sm:$0xff]
      %v219 = vld [vmem:[%s165 + $0x178] sm:$0xff]
      %v220 = vld [vmem:[%s165 + $0x180] sm:$0xff]
      %v221 = vld [vmem:[%s165 + $0x188] sm:$0xff]
      %v222 = vld [vmem:[%s1] sm:$0xf]
      %v223 = vld [vmem:[%s1 + $0x4] sm:$0xf]
      %v224 = vld [vmem:[%s1 + $0x8] sm:$0xf]
      %v225 = vld [vmem:[%s1 + $0xc] sm:$0xf]
      %v226 = vld [vmem:[%s1 + $0x10] sm:$0xf]
      %v227 = vld [vmem:[%s1 + $0x14] sm:$0xf]
      %v228 = vld [vmem:[%s1 + $0x18] sm:$0xf]
      %v229 = vld [vmem:[%s1 + $0x1c] sm:$0xf]
      %v230 = vld [vmem:[%s1 + $0x20] sm:$0xf]
      %v231 = vld [vmem:[%s1 + $0x24] sm:$0xf]
      %v232 = vld [vmem:[%s1 + $0x28] sm:$0xf]
      %v233 = vld [vmem:[%s1 + $0x2c] sm:$0xf]
      %v234 = vld [vmem:[%s1 + $0x30] sm:$0xf]
      %v235 = vld [vmem:[%s1 + $0x34] sm:$0xf]
      %v236 = vld [vmem:[%s1 + $0x38] sm:$0xf]
      %v237 = vld [vmem:[%s1 + $0x3c] sm:$0xf]
      %v238 = vld [vmem:[%s1 + $0x40] sm:$0xf]
      %v239 = vld [vmem:[%s1 + $0x44] sm:$0xf]
      %v240 = vld [vmem:[%s1 + $0x48] sm:$0xf]
      %v241 = vld [vmem:[%s1 + $0x4c] sm:$0xf]
      %v242 = vld [vmem:[%s1 + $0x50] sm:$0xf]
      %v243 = vld [vmem:[%s1 + $0x54] sm:$0xf]
      %v244 = vld [vmem:[%s1 + $0x58] sm:$0xf]
      %v245 = vld [vmem:[%s1 + $0x5c] sm:$0xf]
      %v246 = vld [vmem:[%s1 + $0x60] sm:$0xf]
      %v247 = vld [vmem:[%s1 + $0x64] sm:$0xf]
      %v248 = vld [vmem:[%s1 + $0x68] sm:$0xf]
      %v249 = vld [vmem:[%s1 + $0x6c] sm:$0xf]
      %v250 = vld [vmem:[%s1 + $0x70] sm:$0xf]
      %v251 = vld [vmem:[%s1 + $0x74] sm:$0xf]
      %v252 = vld [vmem:[%s1 + $0x78] sm:$0xf]
      %v253 = vld [vmem:[%s1 + $0x7c] sm:$0xf]
      %v254 = vld [vmem:[%s2] sm:$0x1]
      %v256 = vlaneseq
      %v257 = vshrl.u32 %v256, 7
      %v258 = vsub.s32 0, %v257
      %v259 = vrot.slane %v254, %v258
      %v311 = vunpack.c.l.b16 %v172
      %v312 = vunpack.c.h.b16 %v172
      %v313 = vunpack.c.l.b16 %v173
      %v314 = vunpack.c.h.b16 %v173
      %v315 = vunpack.c.l.b16 %v174
      %v316 = vunpack.c.h.b16 %v174
      %v317 = vunpack.c.l.b16 %v175
      %v318 = vunpack.c.h.b16 %v175
      %v319 = vunpack.c.l.b16 %v176
      %v320 = vunpack.c.h.b16 %v176
      %v321 = vunpack.c.l.b16 %v177
      %v322 = vunpack.c.h.b16 %v177
      %v323 = vunpack.c.l.b16 %v178
      %v324 = vunpack.c.h.b16 %v178
      %v325 = vunpack.c.l.b16 %v179
      %v326 = vunpack.c.h.b16 %v179
      %v327 = vunpack.c.l.b16 %v180
      %v328 = vunpack.c.h.b16 %v180
      %v329 = vunpack.c.l.b16 %v181
      %v330 = vunpack.c.h.b16 %v181
      %v331 = vunpack.c.l.b16 %v182
      %v332 = vunpack.c.h.b16 %v182
      %v333 = vunpack.c.l.b16 %v183
      %v334 = vunpack.c.h.b16 %v183
      %v335 = vunpack.c.l.b16 %v184
      %v336 = vunpack.c.h.b16 %v184
      %v337 = vunpack.c.l.b16 %v185
      %v338 = vunpack.c.h.b16 %v185
      %v339 = vunpack.c.l.b16 %v186
      %v340 = vunpack.c.h.b16 %v186
      %v341 = vunpack.c.l.b16 %v187
      %v342 = vunpack.c.h.b16 %v187
      %v343 = vunpack.c.l.b16 %v188
      %v344 = vunpack.c.h.b16 %v188
      %v345 = vunpack.c.l.b16 %v189
      %v346 = vunpack.c.h.b16 %v189
      %v347 = vunpack.c.l.b16 %v190
      %v348 = vunpack.c.h.b16 %v190
      %v349 = vunpack.c.l.b16 %v191
      %v350 = vunpack.c.h.b16 %v191
      %v351 = vunpack.c.l.b16 %v192
      %v352 = vunpack.c.h.b16 %v192
      %v353 = vunpack.c.l.b16 %v193
      %v354 = vunpack.c.h.b16 %v193
      %v355 = vunpack.c.l.b16 %v194
      %v356 = vunpack.c.h.b16 %v194
      %v357 = vunpack.c.l.b16 %v195
      %v358 = vunpack.c.h.b16 %v195
      %v359 = vunpack.c.l.b16 %v196
      %v360 = vunpack.c.h.b16 %v196
      %v361 = vunpack.c.l.b16 %v197
      %v362 = vunpack.c.h.b16 %v197
      %v363 = vunpack.c.l.b16 %v198
      %v364 = vunpack.c.h.b16 %v198
      %v365 = vunpack.c.l.b16 %v199
      %v366 = vunpack.c.h.b16 %v199
      %v367 = vunpack.c.l.b16 %v200
      %v368 = vunpack.c.h.b16 %v200
      %v369 = vunpack.c.l.b16 %v201
      %v370 = vunpack.c.h.b16 %v201
      %v371 = vunpack.c.l.b16 %v202
      %v372 = vunpack.c.h.b16 %v202
      %v373 = vunpack.c.l.b16 %v203
      %v374 = vunpack.c.h.b16 %v203
      %v375 = vunpack.c.l.b16 %v204
      %v376 = vunpack.c.h.b16 %v204
      %v377 = vunpack.c.l.b16 %v205
      %v378 = vunpack.c.h.b16 %v205
      %v379 = vunpack.c.l.b16 %v206
      %v380 = vunpack.c.h.b16 %v206
      %v381 = vunpack.c.l.b16 %v207
      %v382 = vunpack.c.h.b16 %v207
      %v383 = vunpack.c.l.b16 %v208
      %v384 = vunpack.c.h.b16 %v208
      %v385 = vunpack.c.l.b16 %v209
      %v386 = vunpack.c.h.b16 %v209
      %v387 = vunpack.c.l.b16 %v210
      %v388 = vunpack.c.h.b16 %v210
      %v389 = vunpack.c.l.b16 %v211
      %v390 = vunpack.c.h.b16 %v211
      %v391 = vunpack.c.l.b16 %v212
      %v392 = vunpack.c.h.b16 %v212
      %v393 = vunpack.c.l.b16 %v213
      %v394 = vunpack.c.h.b16 %v213
      %v395 = vunpack.c.l.b16 %v214
      %v396 = vunpack.c.h.b16 %v214
      %v397 = vunpack.c.l.b16 %v215
      %v398 = vunpack.c.h.b16 %v215
      %v399 = vunpack.c.l.b16 %v216
      %v400 = vunpack.c.h.b16 %v216
      %v401 = vunpack.c.l.b16 %v217
      %v402 = vunpack.c.h.b16 %v217
      %v403 = vunpack.c.l.b16 %v218
      %v404 = vunpack.c.h.b16 %v218
      %v405 = vunpack.c.l.b16 %v219
      %v406 = vunpack.c.h.b16 %v219
      %v407 = vunpack.c.l.b16 %v220
      %v408 = vunpack.c.h.b16 %v220
      %v409 = vunpack.c.l.b16 %v221
      %v410 = vunpack.c.h.b16 %v221
      %v411 = vpack.c.b16 %v313, %v311
      %v412 = vpack.c.b16 %v314, %v312
      %v413 = vpack.c.b16 %v317, %v315
      %v414 = vpack.c.b16 %v318, %v316
      %v415 = vpack.c.b16 %v321, %v319
      %v416 = vpack.c.b16 %v322, %v320
      %v417 = vpack.c.b16 %v325, %v323
      %v418 = vpack.c.b16 %v326, %v324
      %v419 = vpack.c.b16 %v329, %v327
      %v420 = vpack.c.b16 %v330, %v328
      %v421 = vpack.c.b16 %v333, %v331
      %v422 = vpack.c.b16 %v334, %v332
      %v423 = vpack.c.b16 %v337, %v335
      %v424 = vpack.c.b16 %v338, %v336
      %v425 = vpack.c.b16 %v341, %v339
      %v426 = vpack.c.b16 %v342, %v340
      %v427 = vpack.c.b16 %v345, %v343
      %v428 = vpack.c.b16 %v346, %v344
      %v429 = vpack.c.b16 %v349, %v347
      %v430 = vpack.c.b16 %v350, %v348
      %v431 = vpack.c.b16 %v353, %v351
      %v432 = vpack.c.b16 %v354, %v352
      %v433 = vpack.c.b16 %v357, %v355
      %v434 = vpack.c.b16 %v358, %v356
      %v435 = vpack.c.b16 %v361, %v359
      %v436 = vpack.c.b16 %v362, %v360
      %v437 = vpack.c.b16 %v365, %v363
      %v438 = vpack.c.b16 %v366, %v364
      %v439 = vpack.c.b16 %v369, %v367
      %v440 = vpack.c.b16 %v370, %v368
      %v441 = vpack.c.b16 %v373, %v371
      %v442 = vpack.c.b16 %v374, %v372
      %v443 = vpack.c.b16 %v377, %v375
      %v444 = vpack.c.b16 %v378, %v376
      %v445 = vpack.c.b16 %v381, %v379
      %v446 = vpack.c.b16 %v382, %v380
      %v447 = vpack.c.b16 %v385, %v383
      %v448 = vpack.c.b16 %v386, %v384
      %v449 = vpack.c.b16 %v389, %v387
      %v450 = vpack.c.b16 %v390, %v388
      %v451 = vpack.c.b16 %v393, %v391
      %v452 = vpack.c.b16 %v394, %v392
      %v453 = vpack.c.b16 %v397, %v395
      %v454 = vpack.c.b16 %v398, %v396
      %v455 = vpack.c.b16 %v401, %v399
      %v456 = vpack.c.b16 %v402, %v400
      %v457 = vpack.c.b16 %v405, %v403
      %v458 = vpack.c.b16 %v406, %v404
      %v459 = vpack.c.b16 %v409, %v407
      %v460 = vpack.c.b16 %v410, %v408
      %v543 = vunpack.c.l.b16 %v222
      %v544 = vunpack.c.l.b16 %v223
      %v545 = vunpack.c.l.b16 %v224
      %v546 = vunpack.c.l.b16 %v225
      %v547 = vunpack.c.l.b16 %v226
      %v548 = vunpack.c.l.b16 %v227
      %v549 = vunpack.c.l.b16 %v228
      %v550 = vunpack.c.l.b16 %v229
      %v551 = vunpack.c.l.b16 %v230
      %v552 = vunpack.c.l.b16 %v231
      %v553 = vunpack.c.l.b16 %v232
      %v554 = vunpack.c.l.b16 %v233
      %v555 = vunpack.c.l.b16 %v234
      %v556 = vunpack.c.l.b16 %v235
      %v557 = vunpack.c.l.b16 %v236
      %v558 = vunpack.c.l.b16 %v237
      %v559 = vunpack.c.l.b16 %v238
      %v560 = vunpack.c.l.b16 %v239
      %v561 = vunpack.c.l.b16 %v240
      %v562 = vunpack.c.l.b16 %v241
      %v563 = vunpack.c.l.b16 %v242
      %v564 = vunpack.c.l.b16 %v243
      %v565 = vunpack.c.l.b16 %v244
      %v566 = vunpack.c.l.b16 %v245
      %v567 = vunpack.c.l.b16 %v246
      %v568 = vunpack.c.l.b16 %v247
      %v569 = vunpack.c.l.b16 %v248
      %v570 = vunpack.c.l.b16 %v249
      %v571 = vunpack.c.l.b16 %v250
      %v572 = vunpack.c.l.b16 %v251
      %v573 = vunpack.c.l.b16 %v252
      %v574 = vunpack.c.l.b16 %v253
      %v575 = vpack.c.b16 %v544, %v543
      %v576 = vpack.c.b16 %v546, %v545
      %v577 = vpack.c.b16 %v548, %v547
      %v578 = vpack.c.b16 %v550, %v549
      %v579 = vpack.c.b16 %v552, %v551
      %v580 = vpack.c.b16 %v554, %v553
      %v581 = vpack.c.b16 %v556, %v555
      %v582 = vpack.c.b16 %v558, %v557
      %v583 = vpack.c.b16 %v560, %v559
      %v584 = vpack.c.b16 %v562, %v561
      %v585 = vpack.c.b16 %v564, %v563
      %v586 = vpack.c.b16 %v566, %v565
      %v587 = vpack.c.b16 %v568, %v567
      %v588 = vpack.c.b16 %v570, %v569
      %v589 = vpack.c.b16 %v572, %v571
      %v590 = vpack.c.b16 %v574, %v573
      %607 = vmatprep.subr.bf16.mxu0 0
      %608 = vmatpush1.bf16.msra.mxu0 %v575
      %609 = vmatprep.subr.bf16.mxu0 0
      %610 = vmatpush1.bf16.msra.mxu0 %v576
      %611 = vmatprep.subr.bf16.mxu0 0
      %612 = vmatpush1.bf16.msra.mxu0 %v577
      %613 = vmatprep.subr.bf16.mxu0 0
      %614 = vmatpush1.bf16.msra.mxu0 %v578
      %615 = vmatprep.subr.bf16.mxu0 0
      %616 = vmatpush1.bf16.msra.mxu0 %v579
      %617 = vmatprep.subr.bf16.mxu0 0
      %618 = vmatpush1.bf16.msra.mxu0 %v580
      %619 = vmatprep.subr.bf16.mxu0 0
      %620 = vmatpush1.bf16.msra.mxu0 %v581
      %621 = vmatprep.subr.bf16.mxu0 0
      %622 = vmatpush1.bf16.msra.mxu0 %v582
      %623 = vmatprep.subr.bf16.mxu0 0
      %624 = vmatpush1.bf16.msra.mxu0 %v583
      %625 = vmatprep.subr.bf16.mxu0 0
      %626 = vmatpush1.bf16.msra.mxu0 %v584
      %627 = vmatprep.subr.bf16.mxu0 0
      %628 = vmatpush1.bf16.msra.mxu0 %v585
      %629 = vmatprep.subr.bf16.mxu0 0
      %630 = vmatpush1.bf16.msra.mxu0 %v586
      %631 = vmatprep.subr.bf16.mxu0 0
      %632 = vmatpush1.bf16.msra.mxu0 %v587
      %633 = vmatprep.subr.bf16.mxu0 0
      %634 = vmatpush1.bf16.msra.mxu0 %v588
      %635 = vmatprep.subr.bf16.mxu0 0
      %636 = vmatpush1.bf16.msra.mxu0 %v589
      %637 = vmatprep.subr.bf16.mxu0 0
      %638 = vmatpush1.bf16.msra.mxu0 %v590
      %639 = vmatprep.mubr.bf16.mxu0 %v412
      %640 = vmatmul.mubr.bf16.gmra.mrb[0].mxu0 %v411
      %v641 = vpop.f32.mrb[0].mxu0
      %v642 = vadd.f32 %v259, %v641
      %v643 = vpop.f32.mrb[0].mxu0
      %v644 = vpop.f32.mrb[0].mxu0
      %v645 = vadd.f32 %v259, %v644
      %v646 = vpop.f32.mrb[0].mxu0
      %647 = vmatprep.mubr.bf16.mxu0 %v414
      %648 = vmatmul.mubr.bf16.gmra.mrb[0].mxu0 %v413
      %v649 = vpop.f32.mrb[0].mxu0
      %v650 = vadd.f32 %v259, %v649
      %v651 = vpop.f32.mrb[0].mxu0
      %v652 = vpop.f32.mrb[0].mxu0
      %v653 = vadd.f32 %v259, %v652
      %v654 = vpop.f32.mrb[0].mxu0
      %655 = vmatprep.mubr.bf16.mxu0 %v416
      %656 = vmatmul.mubr.bf16.gmra.mrb[0].mxu0 %v415
      %v657 = vpop.f32.mrb[0].mxu0
      %v658 = vadd.f32 %v259, %v657
      %v659 = vpop.f32.mrb[0].mxu0
      %v660 = vpop.f32.mrb[0].mxu0
      %v661 = vadd.f32 %v259, %v660
      %v662 = vpop.f32.mrb[0].mxu0
      %663 = vmatprep.mubr.bf16.mxu0 %v418
      %664 = vmatmul.mubr.bf16.gmra.mrb[0].mxu0 %v417
      %v665 = vpop.f32.mrb[0].mxu0
      %v666 = vadd.f32 %v259, %v665
      %v667 = vpop.f32.mrb[0].mxu0
      %v668 = vpop.f32.mrb[0].mxu0
      %v669 = vadd.f32 %v259, %v668
      %v670 = vpop.f32.mrb[0].mxu0
      %671 = vmatprep.mubr.bf16.mxu0 %v420
      %672 = vmatmul.mubr.bf16.gmra.mrb[0].mxu0 %v419
      %v673 = vpop.f32.mrb[0].mxu0
      %v674 = vadd.f32 %v259, %v673
      %v675 = vpop.f32.mrb[0].mxu0
      %v676 = vpop.f32.mrb[0].mxu0
      %v677 = vadd.f32 %v259, %v676
      %v678 = vpop.f32.mrb[0].mxu0
      %679 = vmatprep.mubr.bf16.mxu0 %v422
      %680 = vmatmul.mubr.bf16.gmra.mrb[0].mxu0 %v421
      %v681 = vpop.f32.mrb[0].mxu0
      %v682 = vadd.f32 %v259, %v681
      %v683 = vpop.f32.mrb[0].mxu0
      %v684 = vpop.f32.mrb[0].mxu0
      %v685 = vadd.f32 %v259, %v684
      %v686 = vpop.f32.mrb[0].mxu0
      %687 = vmatprep.mubr.bf16.mxu0 %v424
      %688 = vmatmul.mubr.bf16.gmra.mrb[0].mxu0 %v423
      %v689 = vpop.f32.mrb[0].mxu0
      %v690 = vadd.f32 %v259, %v689
      %v691 = vpop.f32.mrb[0].mxu0
      %v692 = vpop.f32.mrb[0].mxu0
      %v693 = vadd.f32 %v259, %v692
      %v694 = vpop.f32.mrb[0].mxu0
      %695 = vmatprep.mubr.bf16.mxu0 %v426
      %696 = vmatmul.mubr.bf16.gmra.mrb[0].mxu0 %v425
      %v697 = vpop.f32.mrb[0].mxu0
      %v698 = vadd.f32 %v259, %v697
      %v699 = vpop.f32.mrb[0].mxu0
      %v700 = vpop.f32.mrb[0].mxu0
      %v701 = vadd.f32 %v259, %v700
      %v702 = vpop.f32.mrb[0].mxu0
      %703 = vmatprep.mubr.bf16.mxu0 %v428
      %704 = vmatmul.mubr.bf16.gmra.mrb[0].mxu0 %v427
      %v705 = vpop.f32.mrb[0].mxu0
      %v706 = vadd.f32 %v259, %v705
      %v707 = vpop.f32.mrb[0].mxu0
      %v708 = vpop.f32.mrb[0].mxu0
      %v709 = vadd.f32 %v259, %v708
      %v710 = vpop.f32.mrb[0].mxu0
      %711 = vmatprep.mubr.bf16.mxu0 %v430
      %712 = vmatmul.mubr.bf16.gmra.mrb[0].mxu0 %v429
      %v713 = vpop.f32.mrb[0].mxu0
      %v714 = vadd.f32 %v259, %v713
      %v715 = vpop.f32.mrb[0].mxu0
      %v716 = vpop.f32.mrb[0].mxu0
      %v717 = vadd.f32 %v259, %v716
      %v718 = vpop.f32.mrb[0].mxu0
      %719 = vmatprep.mubr.bf16.mxu0 %v432
      %720 = vmatmul.mubr.bf16.gmra.mrb[0].mxu0 %v431
      %v721 = vpop.f32.mrb[0].mxu0
      %v722 = vadd.f32 %v259, %v721
      %v723 = vpop.f32.mrb[0].mxu0
      %v724 = vpop.f32.mrb[0].mxu0
      %v725 = vadd.f32 %v259, %v724
      %v726 = vpop.f32.mrb[0].mxu0
      %727 = vmatprep.mubr.bf16.mxu0 %v434
      %728 = vmatmul.mubr.bf16.gmra.mrb[0].mxu0 %v433
      %v729 = vpop.f32.mrb[0].mxu0
      %v730 = vadd.f32 %v259, %v729
      %v731 = vpop.f32.mrb[0].mxu0
      %v732 = vpop.f32.mrb[0].mxu0
      %v733 = vadd.f32 %v259, %v732
      %v734 = vpop.f32.mrb[0].mxu0
      %735 = vmatprep.mubr.bf16.mxu0 %v436
      %736 = vmatmul.mubr.bf16.gmra.mrb[0].mxu0 %v435
      %v737 = vpop.f32.mrb[0].mxu0
      %v738 = vadd.f32 %v259, %v737
      %v739 = vpop.f32.mrb[0].mxu0
      %v740 = vpop.f32.mrb[0].mxu0
      %v741 = vadd.f32 %v259, %v740
      %v742 = vpop.f32.mrb[0].mxu0
      %743 = vmatprep.mubr.bf16.mxu0 %v438
      %744 = vmatmul.mubr.bf16.gmra.mrb[0].mxu0 %v437
      %v745 = vpop.f32.mrb[0].mxu0
      %v746 = vadd.f32 %v259, %v745
      %v747 = vpop.f32.mrb[0].mxu0
      %v748 = vpop.f32.mrb[0].mxu0
      %v749 = vadd.f32 %v259, %v748
      %v750 = vpop.f32.mrb[0].mxu0
      %751 = vmatprep.mubr.bf16.mxu0 %v440
      %752 = vmatmul.mubr.bf16.gmra.mrb[0].mxu0 %v439
      %v753 = vpop.f32.mrb[0].mxu0
      %v754 = vadd.f32 %v259, %v753
      %v755 = vpop.f32.mrb[0].mxu0
      %v756 = vpop.f32.mrb[0].mxu0
      %v757 = vadd.f32 %v259, %v756
      %v758 = vpop.f32.mrb[0].mxu0
      %759 = vmatprep.mubr.bf16.mxu0 %v442
      %760 = vmatmul.mubr.bf16.gmra.mrb[0].mxu0 %v441
      %v761 = vpop.f32.mrb[0].mxu0
      %v762 = vadd.f32 %v259, %v761
      %v763 = vpop.f32.mrb[0].mxu0
      %v764 = vpop.f32.mrb[0].mxu0
      %v765 = vadd.f32 %v259, %v764
      %v766 = vpop.f32.mrb[0].mxu0
      %767 = vmatprep.mubr.bf16.mxu0 %v444
      %768 = vmatmul.mubr.bf16.gmra.mrb[0].mxu0 %v443
      %v769 = vpop.f32.mrb[0].mxu0
      %v770 = vadd.f32 %v259, %v769
      %v771 = vpop.f32.mrb[0].mxu0
      %v772 = vpop.f32.mrb[0].mxu0
      %v773 = vadd.f32 %v259, %v772
      %v774 = vpop.f32.mrb[0].mxu0
      %775 = vmatprep.mubr.bf16.mxu0 %v446
      %776 = vmatmul.mubr.bf16.gmra.mrb[0].mxu0 %v445
      %v777 = vpop.f32.mrb[0].mxu0
      %v778 = vadd.f32 %v259, %v777
      %v779 = vpop.f32.mrb[0].mxu0
      %v780 = vpop.f32.mrb[0].mxu0
      %v781 = vadd.f32 %v259, %v780
      %v782 = vpop.f32.mrb[0].mxu0
      %783 = vmatprep.mubr.bf16.mxu0 %v448
      %784 = vmatmul.mubr.bf16.gmra.mrb[0].mxu0 %v447
      %v785 = vpop.f32.mrb[0].mxu0
      %v786 = vadd.f32 %v259, %v785
      %v787 = vpop.f32.mrb[0].mxu0
      %v788 = vpop.f32.mrb[0].mxu0
      %v789 = vadd.f32 %v259, %v788
      %v790 = vpop.f32.mrb[0].mxu0
      %791 = vmatprep.mubr.bf16.mxu0 %v450
      %792 = vmatmul.mubr.bf16.gmra.mrb[0].mxu0 %v449
      %v793 = vpop.f32.mrb[0].mxu0
      %v794 = vadd.f32 %v259, %v793
      %v795 = vpop.f32.mrb[0].mxu0
      %v796 = vpop.f32.mrb[0].mxu0
      %v797 = vadd.f32 %v259, %v796
      %v798 = vpop.f32.mrb[0].mxu0
      %799 = vmatprep.mubr.bf16.mxu0 %v452
      %800 = vmatmul.mubr.bf16.gmra.mrb[0].mxu0 %v451
      %v801 = vpop.f32.mrb[0].mxu0
      %v802 = vadd.f32 %v259, %v801
      %v803 = vpop.f32.mrb[0].mxu0
      %v804 = vpop.f32.mrb[0].mxu0
      %v805 = vadd.f32 %v259, %v804
      %v806 = vpop.f32.mrb[0].mxu0
      %807 = vmatprep.mubr.bf16.mxu0 %v454
      %808 = vmatmul.mubr.bf16.gmra.mrb[0].mxu0 %v453
      %v809 = vpop.f32.mrb[0].mxu0
      %v810 = vadd.f32 %v259, %v809
      %v811 = vpop.f32.mrb[0].mxu0
      %v812 = vpop.f32.mrb[0].mxu0
      %v813 = vadd.f32 %v259, %v812
      %v814 = vpop.f32.mrb[0].mxu0
      %815 = vmatprep.mubr.bf16.mxu0 %v456
      %816 = vmatmul.mubr.bf16.gmra.mrb[0].mxu0 %v455
      %v817 = vpop.f32.mrb[0].mxu0
      %v818 = vadd.f32 %v259, %v817
      %v819 = vpop.f32.mrb[0].mxu0
      %v820 = vpop.f32.mrb[0].mxu0
      %v821 = vadd.f32 %v259, %v820
      %v822 = vpop.f32.mrb[0].mxu0
      %823 = vmatprep.mubr.bf16.mxu0 %v458
      %824 = vmatmul.mubr.bf16.gmra.mrb[0].mxu0 %v457
      %v825 = vpop.f32.mrb[0].mxu0
      %v826 = vadd.f32 %v259, %v825
      %v827 = vpop.f32.mrb[0].mxu0
      %v828 = vpop.f32.mrb[0].mxu0
      %v829 = vadd.f32 %v259, %v828
      %v830 = vpop.f32.mrb[0].mxu0
      %831 = vmatprep.mubr.bf16.mxu0 %v460
      %832 = vmatmul.mubr.bf16.gmra.mrb[0].mxu0 %v459
      %v833 = vpop.f32.mrb[0].mxu0
      %v834 = vadd.f32 %v259, %v833
      %v835 = vpop.f32.mrb[0].mxu0
      %v836 = vpop.f32.mrb[0].mxu0
      %v837 = vadd.f32 %v259, %v836
      %v838 = vpop.f32.mrb[0].mxu0
      %839 = vdwg.mxu0
      %v840 = vmax.f32 %v642, 0.0
      %v841 = vmax.f32 %v645, 0.0
      %v842 = vmax.f32 %v650, 0.0
      %v843 = vmax.f32 %v653, 0.0
      %v844 = vmax.f32 %v658, 0.0
      %v845 = vmax.f32 %v661, 0.0
      %v846 = vmax.f32 %v666, 0.0
      %v847 = vmax.f32 %v669, 0.0
      %v848 = vmax.f32 %v674, 0.0
      %v849 = vmax.f32 %v677, 0.0
      %v850 = vmax.f32 %v682, 0.0
      %v851 = vmax.f32 %v685, 0.0
      %v852 = vmax.f32 %v690, 0.0
      %v853 = vmax.f32 %v693, 0.0
      %v854 = vmax.f32 %v698, 0.0
      %v855 = vmax.f32 %v701, 0.0
      %v856 = vmax.f32 %v706, 0.0
      %v857 = vmax.f32 %v709, 0.0
      %v858 = vmax.f32 %v714, 0.0
      %v859 = vmax.f32 %v717, 0.0
      %v860 = vmax.f32 %v722, 0.0
      %v861 = vmax.f32 %v725, 0.0
      %v862 = vmax.f32 %v730, 0.0
      %v863 = vmax.f32 %v733, 0.0
      %v864 = vmax.f32 %v738, 0.0
      %v865 = vmax.f32 %v741, 0.0
      %v866 = vmax.f32 %v746, 0.0
      %v867 = vmax.f32 %v749, 0.0
      %v868 = vmax.f32 %v754, 0.0
      %v869 = vmax.f32 %v757, 0.0
      %v870 = vmax.f32 %v762, 0.0
      %v871 = vmax.f32 %v765, 0.0
      %v872 = vmax.f32 %v770, 0.0
      %v873 = vmax.f32 %v773, 0.0
      %v874 = vmax.f32 %v778, 0.0
      %v875 = vmax.f32 %v781, 0.0
      %v876 = vmax.f32 %v786, 0.0
      %v877 = vmax.f32 %v789, 0.0
      %v878 = vmax.f32 %v794, 0.0
      %v879 = vmax.f32 %v797, 0.0
      %v880 = vmax.f32 %v802, 0.0
      %v881 = vmax.f32 %v805, 0.0
      %v882 = vmax.f32 %v810, 0.0
      %v883 = vmax.f32 %v813, 0.0
      %v884 = vmax.f32 %v818, 0.0
      %v885 = vmax.f32 %v821, 0.0
      %v886 = vmax.f32 %v826, 0.0
      %v887 = vmax.f32 %v829, 0.0
      %v888 = vmax.f32 %v834, 0.0
      %v889 = vmax.f32 %v837, 0.0
      %v890 = vpack.c.bf16 %v841, %v840
      %v891 = vpack.c.bf16 %v843, %v842
      %v892 = vpack.c.bf16 %v845, %v844
      %v893 = vpack.c.bf16 %v847, %v846
      %v894 = vpack.c.bf16 %v849, %v848
      %v895 = vpack.c.bf16 %v851, %v850
      %v896 = vpack.c.bf16 %v853, %v852
      %v897 = vpack.c.bf16 %v855, %v854
      %v898 = vpack.c.bf16 %v857, %v856
      %v899 = vpack.c.bf16 %v859, %v858
      %v900 = vpack.c.bf16 %v861, %v860
      %v901 = vpack.c.bf16 %v863, %v862
      %v902 = vpack.c.bf16 %v865, %v864
      %v903 = vpack.c.bf16 %v867, %v866
      %v904 = vpack.c.bf16 %v869, %v868
      %v905 = vpack.c.bf16 %v871, %v870
      %v906 = vpack.c.bf16 %v873, %v872
      %v907 = vpack.c.bf16 %v875, %v874
      %v908 = vpack.c.bf16 %v877, %v876
      %v909 = vpack.c.bf16 %v879, %v878
      %v910 = vpack.c.bf16 %v881, %v880
      %v911 = vpack.c.bf16 %v883, %v882
      %v912 = vpack.c.bf16 %v885, %v884
      %v913 = vpack.c.bf16 %v887, %v886
      %v914 = vpack.c.bf16 %v889, %v888
      %v940 = vunpack.c.l.b16 %v890
      %v941 = vunpack.c.h.b16 %v890
      %v942 = vunpack.c.l.b16 %v891
      %v943 = vunpack.c.h.b16 %v891
      %v944 = vunpack.c.l.b16 %v892
      %v945 = vunpack.c.h.b16 %v892
      %v946 = vunpack.c.l.b16 %v893
      %v947 = vunpack.c.h.b16 %v893
      %v948 = vunpack.c.l.b16 %v894
      %v949 = vunpack.c.h.b16 %v894
      %v950 = vunpack.c.l.b16 %v895
      %v951 = vunpack.c.h.b16 %v895
      %v952 = vunpack.c.l.b16 %v896
      %v953 = vunpack.c.h.b16 %v896
      %v954 = vunpack.c.l.b16 %v897
      %v955 = vunpack.c.h.b16 %v897
      %v956 = vunpack.c.l.b16 %v898
      %v957 = vunpack.c.h.b16 %v898
      %v958 = vunpack.c.l.b16 %v899
      %v959 = vunpack.c.h.b16 %v899
      %v960 = vunpack.c.l.b16 %v900
      %v961 = vunpack.c.h.b16 %v900
      %v962 = vunpack.c.l.b16 %v901
      %v963 = vunpack.c.h.b16 %v901
      %v964 = vunpack.c.l.b16 %v902
      %v965 = vunpack.c.h.b16 %v902
      %v966 = vunpack.c.l.b16 %v903
      %v967 = vunpack.c.h.b16 %v903
      %v968 = vunpack.c.l.b16 %v904
      %v969 = vunpack.c.h.b16 %v904
      %v970 = vunpack.c.l.b16 %v905
      %v971 = vunpack.c.h.b16 %v905
      %v972 = vunpack.c.l.b16 %v906
      %v973 = vunpack.c.h.b16 %v906
      %v974 = vunpack.c.l.b16 %v907
      %v975 = vunpack.c.h.b16 %v907
      %v976 = vunpack.c.l.b16 %v908
      %v977 = vunpack.c.h.b16 %v908
      %v978 = vunpack.c.l.b16 %v909
      %v979 = vunpack.c.h.b16 %v909
      %v980 = vunpack.c.l.b16 %v910
      %v981 = vunpack.c.h.b16 %v910
      %v982 = vunpack.c.l.b16 %v911
      %v983 = vunpack.c.h.b16 %v911
      %v984 = vunpack.c.l.b16 %v912
      %v985 = vunpack.c.h.b16 %v912
      %v986 = vunpack.c.l.b16 %v913
      %v987 = vunpack.c.h.b16 %v913
      %v988 = vunpack.c.l.b16 %v914
      %v989 = vunpack.c.h.b16 %v914
      %v990 = vpack.c.b16 %v940, %v940
      %v991 = vpack.c.b16 %v941, %v941
      %v992 = vpack.c.b16 %v942, %v942
      %v993 = vpack.c.b16 %v943, %v943
      %v994 = vpack.c.b16 %v944, %v944
      %v995 = vpack.c.b16 %v945, %v945
      %v996 = vpack.c.b16 %v946, %v946
      %v997 = vpack.c.b16 %v947, %v947
      %v998 = vpack.c.b16 %v948, %v948
      %v999 = vpack.c.b16 %v949, %v949
      %v1000 = vpack.c.b16 %v950, %v950
      %v1001 = vpack.c.b16 %v951, %v951
      %v1002 = vpack.c.b16 %v952, %v952
      %v1003 = vpack.c.b16 %v953, %v953
      %v1004 = vpack.c.b16 %v954, %v954
      %v1005 = vpack.c.b16 %v955, %v955
      %v1006 = vpack.c.b16 %v956, %v956
      %v1007 = vpack.c.b16 %v957, %v957
      %v1008 = vpack.c.b16 %v958, %v958
      %v1009 = vpack.c.b16 %v959, %v959
      %v1010 = vpack.c.b16 %v960, %v960
      %v1011 = vpack.c.b16 %v961, %v961
      %v1012 = vpack.c.b16 %v962, %v962
      %v1013 = vpack.c.b16 %v963, %v963
      %v1014 = vpack.c.b16 %v964, %v964
      %v1015 = vpack.c.b16 %v965, %v965
      %v1016 = vpack.c.b16 %v966, %v966
      %v1017 = vpack.c.b16 %v967, %v967
      %v1018 = vpack.c.b16 %v968, %v968
      %v1019 = vpack.c.b16 %v969, %v969
      %v1020 = vpack.c.b16 %v970, %v970
      %v1021 = vpack.c.b16 %v971, %v971
      %v1022 = vpack.c.b16 %v972, %v972
      %v1023 = vpack.c.b16 %v973, %v973
      %v1024 = vpack.c.b16 %v974, %v974
      %v1025 = vpack.c.b16 %v975, %v975
      %v1026 = vpack.c.b16 %v976, %v976
      %v1027 = vpack.c.b16 %v977, %v977
      %v1028 = vpack.c.b16 %v978, %v978
      %v1029 = vpack.c.b16 %v979, %v979
      %v1030 = vpack.c.b16 %v980, %v980
      %v1031 = vpack.c.b16 %v981, %v981
      %v1032 = vpack.c.b16 %v982, %v982
      %v1033 = vpack.c.b16 %v983, %v983
      %v1034 = vpack.c.b16 %v984, %v984
      %v1035 = vpack.c.b16 %v985, %v985
      %v1036 = vpack.c.b16 %v986, %v986
      %v1037 = vpack.c.b16 %v987, %v987
      %v1038 = vpack.c.b16 %v988, %v988
      %v1039 = vpack.c.b16 %v989, %v989
      %vm1090 = vcmask 257024
      %1091 = vst.msk [vmem:[%s170] sm:$0xf] %vm1090, %v990
      %1092 = vst.msk [vmem:[%s170 + $0x4] sm:$0xf] %vm1090, %v991
      %1093 = vst.msk [vmem:[%s170 + $0x8] sm:$0xf] %vm1090, %v992
      %1094 = vst.msk [vmem:[%s170 + $0xc] sm:$0xf] %vm1090, %v993
      %1095 = vst.msk [vmem:[%s170 + $0x10] sm:$0xf] %vm1090, %v994
      %1096 = vst.msk [vmem:[%s170 + $0x14] sm:$0xf] %vm1090, %v995
      %1097 = vst.msk [vmem:[%s170 + $0x18] sm:$0xf] %vm1090, %v996
      %1098 = vst.msk [vmem:[%s170 + $0x1c] sm:$0xf] %vm1090, %v997
      %1099 = vst.msk [vmem:[%s170 + $0x20] sm:$0xf] %vm1090, %v998
      %1100 = vst.msk [vmem:[%s170 + $0x24] sm:$0xf] %vm1090, %v999
      %1101 = vst.msk [vmem:[%s170 + $0x28] sm:$0xf] %vm1090, %v1000
      %1102 = vst.msk [vmem:[%s170 + $0x2c] sm:$0xf] %vm1090, %v1001
      %1103 = vst.msk [vmem:[%s170 + $0x30] sm:$0xf] %vm1090, %v1002
      %1104 = vst.msk [vmem:[%s170 + $0x34] sm:$0xf] %vm1090, %v1003
      %1105 = vst.msk [vmem:[%s170 + $0x38] sm:$0xf] %vm1090, %v1004
      %1106 = vst.msk [vmem:[%s170 + $0x3c] sm:$0xf] %vm1090, %v1005
      %1107 = vst.msk [vmem:[%s170 + $0x40] sm:$0xf] %vm1090, %v1006
      %1108 = vst.msk [vmem:[%s170 + $0x44] sm:$0xf] %vm1090, %v1007
      %1109 = vst.msk [vmem:[%s170 + $0x48] sm:$0xf] %vm1090, %v1008
      %1110 = vst.msk [vmem:[%s170 + $0x4c] sm:$0xf] %vm1090, %v1009
      %1111 = vst.msk [vmem:[%s170 + $0x50] sm:$0xf] %vm1090, %v1010
      %1112 = vst.msk [vmem:[%s170 + $0x54] sm:$0xf] %vm1090, %v1011
      %1113 = vst.msk [vmem:[%s170 + $0x58] sm:$0xf] %vm1090, %v1012
      %1114 = vst.msk [vmem:[%s170 + $0x5c] sm:$0xf] %vm1090, %v1013
      %1115 = vst.msk [vmem:[%s170 + $0x60] sm:$0xf] %vm1090, %v1014
      %1116 = vst.msk [vmem:[%s170 + $0x64] sm:$0xf] %vm1090, %v1015
      %1117 = vst.msk [vmem:[%s170 + $0x68] sm:$0xf] %vm1090, %v1016
      %1118 = vst.msk [vmem:[%s170 + $0x6c] sm:$0xf] %vm1090, %v1017
      %1119 = vst.msk [vmem:[%s170 + $0x70] sm:$0xf] %vm1090, %v1018
      %1120 = vst.msk [vmem:[%s170 + $0x74] sm:$0xf] %vm1090, %v1019
      %1121 = vst.msk [vmem:[%s170 + $0x78] sm:$0xf] %vm1090, %v1020
      %1122 = vst.msk [vmem:[%s170 + $0x7c] sm:$0xf] %vm1090, %v1021
      %1123 = vst.msk [vmem:[%s170 + $0x80] sm:$0xf] %vm1090, %v1022
      %1124 = vst.msk [vmem:[%s170 + $0x84] sm:$0xf] %vm1090, %v1023
      %1125 = vst.msk [vmem:[%s170 + $0x88] sm:$0xf] %vm1090, %v1024
      %1126 = vst.msk [vmem:[%s170 + $0x8c] sm:$0xf] %vm1090, %v1025
      %1127 = vst.msk [vmem:[%s170 + $0x90] sm:$0xf] %vm1090, %v1026
      %1128 = vst.msk [vmem:[%s170 + $0x94] sm:$0xf] %vm1090, %v1027
      %1129 = vst.msk [vmem:[%s170 + $0x98] sm:$0xf] %vm1090, %v1028
      %1130 = vst.msk [vmem:[%s170 + $0x9c] sm:$0xf] %vm1090, %v1029
      %1131 = vst.msk [vmem:[%s170 + $0xa0] sm:$0xf] %vm1090, %v1030
      %1132 = vst.msk [vmem:[%s170 + $0xa4] sm:$0xf] %vm1090, %v1031
      %1133 = vst.msk [vmem:[%s170 + $0xa8] sm:$0xf] %vm1090, %v1032
      %1134 = vst.msk [vmem:[%s170 + $0xac] sm:$0xf] %vm1090, %v1033
      %1135 = vst.msk [vmem:[%s170 + $0xb0] sm:$0xf] %vm1090, %v1034
      %1136 = vst.msk [vmem:[%s170 + $0xb4] sm:$0xf] %vm1090, %v1035
      %1137 = vst.msk [vmem:[%s170 + $0xb8] sm:$0xf] %vm1090, %v1036
      %1138 = vst.msk [vmem:[%s170 + $0xbc] sm:$0xf] %vm1090, %v1037
      %1139 = vst.msk [vmem:[%s170 + $0xc0] sm:$0xf] %vm1090, %v1038
      %1140 = vst.msk [vmem:[%s170 + $0xc4] sm:$0xf] %vm1090, %v1039
      %p1141 = scmp.lt.s32.totalorder %s14, 1
      %s1142 = scalar_select %p1141, %s14, 1
      %s1143 = smul.addr %s1142, 50
      %s1144 = smul.addr %s1143, 4
      %s1145 = scalar_lea.vmem %s3, %s1144
      // Predicated region
      $region33: #{dueling_dqn_forward.4} parent=31 // pred_check
        %p1146 = pneg %p100
      $region34: #{dueling_dqn_forward.4} parent=31 // pred_check_branch
        %1148 = sbr.rel (%p1146) target = $region36
      $region35: #{dueling_dqn_forward.4} parent=31 // pred_region
        _
      $region36: #{dueling_dqn_forward.4} parent=31 // pred_fallthru
        _
    $region32: #{dueling_dqn_forward.4} parent=5 // pred_fallthru
      _
    %p1149 = scmp.le.s32.totalorder 2, %s9
    // Predicated region
    $region37: #{dueling_dqn_forward.4} parent=5 // pred_check
      %p1150 = pneg %p1149
    $region38: #{dueling_dqn_forward.4} parent=5 // pred_check_branch
      %1152 = sbr.rel (%p1150) target = $region40
    $region39: #{dueling_dqn_forward.4} parent=5 // pred_region
      %s1153 = ssub.s32 %s9, 2
      // Predicated region
      $region41: #{dueling_dqn_forward.4} parent=39 // pred_check
        %p1154 = pneg %p106
      $region42: #{dueling_dqn_forward.4} parent=39 // pred_check_branch
        %1156 = sbr.rel (%p1154) target = $region44
      $region43: #{dueling_dqn_forward.4} parent=39 // pred_region
        %p1157 = scmp.lt.s32.totalorder %s15, 1
        %s1158 = scalar_select %p1157, %s15, 1
        %s1159 = smul.addr %s1158, 50
        %s1160 = smul.addr %s1159, 4
        %s1161 = scalar_lea.vmem %s3, %s1160
      $region44: #{dueling_dqn_forward.4} parent=39 // pred_fallthru
        _
    $region40: #{dueling_dqn_forward.4} parent=5 // pred_fallthru
      _
  $region6: #{dueling_dqn_forward.4} parent=0 // loop_footer
    %s13 = sadd.s32 1, %s9
  $region7: #{dueling_dqn_forward.4} parent=0 // loop_footer_branch
    %8 = sbr.rel target = $region3
  $region8: #{dueling_dqn_forward.4} parent=0 // loop_exit
    _

// kernel: dueling_dqn_forward.5
$region0: #{dueling_dqn_forward.5}
  #allocation0 [shape = 'u32[]', space=smem, size = 0x4, offset = 0x4, fixed_abs, tag = 'smem constant byte address 0x4 - core index']
  #allocation1 [shape = 'u32[144,128]{1,0:T(1,128)}', space=vmem, size = 0x12000, scoped, tag = 'internal scratch']
  %s0 = inlined_call_operand.vmem [shape: bf16[2,81,512], index: 0, kind: input, shape index: {}]
  %s1 = inlined_call_operand.vmem [shape: bf16[512,64], index: 1, kind: input, shape index: {}]
  %s2 = inlined_call_operand.vmem [shape: f32[1,64], index: 2, kind: input, shape index: {}]
  %s3 = inlined_call_operand.vmem [shape: bf16[2,81,64], index: 3, kind: output, shape index: {}]
  %s4 = sld [smem:[#allocation0]]
  $region45: #{dueling_dqn_forward.5} parent=0
    _
  %s6 = ssub.s32 1, %s4
  %s7 = scalar_select 0, %s6, %s4
  loop: start=0, step=1, limit=4
  $region2: #{dueling_dqn_forward.5} parent=0 // loop_pre_header
    _
  $region3: #{dueling_dqn_forward.5} parent=0 // loop_header
    %s9 = sphi 0, %s13
    %p10 = scmp.ge.s32.totalorder %s9, 4
    %s19 = sphi 0, %s21
    %s22 = sphi 0, %s19
    %s23 = sphi 0, %s22
    %s39 = sphi 0, %s23
    %s43 = sphi 0, %s43
    %s45 = sphi 0, %s43
    %s46 = sphi 0, %s45
    %s60 = sphi 0, %s46
    %s64 = sphi 0, %s64
    %s66 = sphi 0, %s64
    %s67 = sphi 0, %s66
    %s81 = sphi 0, %s67
    %s87 = sphi 0, %s89
    %s90 = sphi 0, %s87
    %s91 = sphi 0, %s90
    %s107 = sphi 0, %s91
  $region4: #{dueling_dqn_forward.5} parent=0 // loop_header_branch
    %12 = sbr.rel (%p10) target = $region8
  $region5: #{dueling_dqn_forward.5} parent=0 // loop_body
    %s14 = ssub.s32 %s9, 1
    %s15 = ssub.s32 %s9, 2
    %s16 = sadd.s32 %s9, 1
    %s17 = ssub.s32 %s9, %s16
    %p18 = scmp.eq.s32.totalorder %s17, 0
    %s20 = sadd.s32 %s19, 1
    %s21 = scalar_select %p18, %s19, %s20
    %p24 = pneg %p18
    %p25 = scmp.eq.s32.totalorder %s9, 1
    %p26 = por %p24, %p25
    %p27 = scmp.ne.s32.totalorder %s19, %s22
    %p28 = scmp.eq.s32.totalorder %s9, 0
    %p29 = por %p27, %p28
    %p30 = scmp.ne.s32.totalorder %s19, %s22
    %p31 = scmp.eq.s32.totalorder %s14, 1
    %p32 = por %p30, %p31
    %p33 = scmp.ne.s32.totalorder %s22, %s23
    %p34 = scmp.eq.s32.totalorder %s14, 0
    %p35 = por %p33, %p34
    %p36 = scmp.ne.s32.totalorder %s22, %s23
    %p37 = scmp.eq.s32.totalorder %s15, 1
    %p38 = por %p36, %p37
    %p40 = scmp.ne.s32.totalorder %s23, %s39
    %p41 = scmp.eq.s32.totalorder %s15, 0
    %p42 = por %p40, %p41
    %s44 = sadd.s32 %s43, 1
    %p47 = scmp.eq.s32.totalorder %s9, 1
    %p48 = scmp.ne.s32.totalorder %s43, %s45
    %p49 = scmp.eq.s32.totalorder %s9, 0
    %p50 = por %p48, %p49
    %p51 = scmp.ne.s32.totalorder %s43, %s45
    %p52 = scmp.eq.s32.totalorder %s14, 1
    %p53 = por %p51, %p52
    %p54 = scmp.ne.s32.totalorder %s45, %s46
    %p55 = scmp.eq.s32.totalorder %s14, 0
    %p56 = por %p54, %p55
    %p57 = scmp.ne.s32.totalorder %s45, %s46
    %p58 = scmp.eq.s32.totalorder %s15, 1
    %p59 = por %p57, %p58
    %p61 = scmp.ne.s32.totalorder %s46, %s60
    %p62 = scmp.eq.s32.totalorder %s15, 0
    %p63 = por %p61, %p62
    %s65 = sadd.s32 %s64, 1
    %p68 = scmp.eq.s32.totalorder %s9, 1
    %p69 = scmp.ne.s32.totalorder %s64, %s66
    %p70 = scmp.eq.s32.totalorder %s9, 0
    %p71 = por %p69, %p70
    %p72 = scmp.ne.s32.totalorder %s64, %s66
    %p73 = scmp.eq.s32.totalorder %s14, 1
    %p74 = por %p72, %p73
    %p75 = scmp.ne.s32.totalorder %s66, %s67
    %p76 = scmp.eq.s32.totalorder %s14, 0
    %p77 = por %p75, %p76
    %p78 = scmp.ne.s32.totalorder %s66, %s67
    %p79 = scmp.eq.s32.totalorder %s15, 1
    %p80 = por %p78, %p79
    %p82 = scmp.ne.s32.totalorder %s67, %s81
    %p83 = scmp.eq.s32.totalorder %s15, 0
    %p84 = por %p82, %p83
    %s85 = ssub.s32 %s9, %s16
    %p86 = scmp.eq.s32.totalorder %s85, 0
    %s88 = sadd.s32 %s87, 1
    %s89 = scalar_select %p86, %s87, %s88
    %p92 = pneg %p86
    %p93 = scmp.eq.s32.totalorder %s9, 1
    %p94 = por %p92, %p93
    %p95 = scmp.ne.s32.totalorder %s87, %s90
    %p96 = scmp.eq.s32.totalorder %s9, 0
    %p97 = por %p95, %p96
    %p98 = scmp.ne.s32.totalorder %s87, %s90
    %p99 = scmp.eq.s32.totalorder %s14, 1
    %p100 = por %p98, %p99
    %p101 = scmp.ne.s32.totalorder %s90, %s91
    %p102 = scmp.eq.s32.totalorder %s14, 0
    %p103 = por %p101, %p102
    %p104 = scmp.ne.s32.totalorder %s90, %s91
    %p105 = scmp.eq.s32.totalorder %s15, 1
    %p106 = por %p104, %p105
    %p108 = scmp.ne.s32.totalorder %s91, %s107
    %p109 = scmp.eq.s32.totalorder %s15, 0
    %p110 = por %p108, %p109
    %p111 = scmp.le.s32.totalorder 1, %s9
    %p112 = scmp.lt.s32.totalorder %s9, 3
    %p113 = pnand %p111, %p112
    %p114 = pneg %p113
    // Predicated region
    $region9: #{dueling_dqn_forward.5} parent=5 // pred_check
      _
    $region10: #{dueling_dqn_forward.5} parent=5 // pred_check_branch
      %116 = sbr.rel (%p113) target = $region12
    $region11: #{dueling_dqn_forward.5} parent=5 // pred_region
      %s117 = ssub.s32 %s9, 1
      // Predicated region
      $region13: #{dueling_dqn_forward.5} parent=11 // pred_check
        %p118 = pneg %p56
      $region14: #{dueling_dqn_forward.5} parent=11 // pred_check_branch
        %120 = sbr.rel (%p118) target = $region16
      $region15: #{dueling_dqn_forward.5} parent=11 // pred_region
        _
      $region16: #{dueling_dqn_forward.5} parent=11 // pred_fallthru
        _
      // Predicated region
      $region17: #{dueling_dqn_forward.5} parent=11 // pred_check
        %p121 = pneg %p77
      $region18: #{dueling_dqn_forward.5} parent=11 // pred_check_branch
        %123 = sbr.rel (%p121) target = $region20
      $region19: #{dueling_dqn_forward.5} parent=11 // pred_region
        _
      $region20: #{dueling_dqn_forward.5} parent=11 // pred_fallthru
        _
    $region12: #{dueling_dqn_forward.5} parent=5 // pred_fallthru
      _
    %p124 = scmp.lt.s32.totalorder %s9, 2
    // Predicated region
    $region21: #{dueling_dqn_forward.5} parent=5 // pred_check
      %p125 = pneg %p124
    $region22: #{dueling_dqn_forward.5} parent=5 // pred_check_branch
      %127 = sbr.rel (%p125) target = $region24
    $region23: #{dueling_dqn_forward.5} parent=5 // pred_region
      // Predicated region
      $region25: #{dueling_dqn_forward.5} parent=23 // pred_check
        %p128 = pneg %p29
      $region26: #{dueling_dqn_forward.5} parent=23 // pred_check_branch
        %130 = sbr.rel (%p128) target = $region28
      $region27: #{dueling_dqn_forward.5} parent=23 // pred_region
        %p131 = scmp.lt.s32.totalorder %s9, 1
        %s132 = scalar_select %p131, %s9, 1
        %s133 = smul.addr %s132, 44
        %s134 = smul.addr %s133, 4
        %s135 = scalar_lea.vmem %s0, %s134
      $region28: #{dueling_dqn_forward.5} parent=23 // pred_fallthru
        _
    $region24: #{dueling_dqn_forward.5} parent=5 // pred_fallthru
      _
    %p136 = scmp.le.s32.totalorder 1, %s9
    %p137 = scmp.lt.s32.totalorder %s9, 3
    %p138 = pnand %p136, %p137
    %p139 = pneg %p138
    // Predicated region
    $region29: #{dueling_dqn_forward.5} parent=5 // pred_check
      _
    $region30: #{dueling_dqn_forward.5} parent=5 // pred_check_branch
      %141 = sbr.rel (%p138) target = $region32
    $region31: #{dueling_dqn_forward.5} parent=5 // pred_region
      %s142 = ssub.s32 %s9, 1
      %p143 = scmp.lt.s32.totalorder %s14, 1
      %s144 = scalar_select %p143, %s14, 1
      %s145 = smul.addr %s144, 44
      %s146 = smul.addr %s145, 4
      %s147 = scalar_lea.vmem %s0, %s146
      %p148 = pneg %p35
      %p149 = pneg %p32
      %p150 = pneg %p56
      %p151 = pneg %p53
      %p152 = pneg %p77
      %p153 = pneg %p74
      %p154 = pneg %p103
      %p155 = pneg %p100
      %p156 = scmp.lt.s32.totalorder %s14, 1
      %s157 = scalar_select %p156, %s14, 1
      %s158 = smul.addr %s157, 11
      %s159 = smul.addr %s158, 4
      %s160 = scalar_lea.vmem %s3, %s159
      %p161 = scmp.lt.s32.totalorder %s14, 1
      %s162 = scalar_select %p161, %s14, 1
      %s163 = smul.addr %s162, 44
      %s164 = smul.addr %s163, 4
      %s165 = scalar_lea.vmem %s0, %s164
      %p166 = scmp.lt.s32.totalorder %s14, 1
      %s167 = scalar_select %p166, %s14, 1
      %s168 = smul.addr %s167, 11
      %s169 = smul.addr %s168, 4
      %s170 = scalar_lea.vmem %s3, %s169
      %v172 = vld [vmem:[%s165] sm:$0xff]
      %v173 = vld [vmem:[%s165 + $0x8] sm:$0xff]
      %v174 = vld [vmem:[%s165 + $0x10] sm:$0xff]
      %v175 = vld [vmem:[%s165 + $0x18] sm:$0xff]
      %v176 = vld [vmem:[%s165 + $0x20] sm:$0xff]
      %v177 = vld [vmem:[%s165 + $0x28] sm:$0xff]
      %v178 = vld [vmem:[%s165 + $0x30] sm:$0xff]
      %v179 = vld [vmem:[%s165 + $0x38] sm:$0xff]
      %v180 = vld [vmem:[%s165 + $0x40] sm:$0xff]
      %v181 = vld [vmem:[%s165 + $0x48] sm:$0xff]
      %v182 = vld [vmem:[%s165 + $0x50] sm:$0xff]
      %v183 = vld [vmem:[%s165 + $0x58] sm:$0xff]
      %v184 = vld [vmem:[%s165 + $0x60] sm:$0xff]
      %v185 = vld [vmem:[%s165 + $0x68] sm:$0xff]
      %v186 = vld [vmem:[%s165 + $0x70] sm:$0xff]
      %v187 = vld [vmem:[%s165 + $0x78] sm:$0xff]
      %v188 = vld [vmem:[%s165 + $0x80] sm:$0xff]
      %v189 = vld [vmem:[%s165 + $0x88] sm:$0xff]
      %v190 = vld [vmem:[%s165 + $0x90] sm:$0xff]
      %v191 = vld [vmem:[%s165 + $0x98] sm:$0xff]
      %v192 = vld [vmem:[%s165 + $0xa0] sm:$0x11]
      %v193 = vld [vmem:[%s165 + $0xa8] sm:$0x11]
      %v194 = vld [vmem:[%s1] sm:$0xf]
      %v195 = vld [vmem:[%s1 + $0x4] sm:$0xf]
      %v196 = vld [vmem:[%s1 + $0x8] sm:$0xf]
      %v197 = vld [vmem:[%s1 + $0xc] sm:$0xf]
      %v198 = vld [vmem:[%s1 + $0x10] sm:$0xf]
      %v199 = vld [vmem:[%s1 + $0x14] sm:$0xf]
      %v200 = vld [vmem:[%s1 + $0x18] sm:$0xf]
      %v201 = vld [vmem:[%s1 + $0x1c] sm:$0xf]
      %v202 = vld [vmem:[%s1 + $0x20] sm:$0xf]
      %v203 = vld [vmem:[%s1 + $0x24] sm:$0xf]
      %v204 = vld [vmem:[%s1 + $0x28] sm:$0xf]
      %v205 = vld [vmem:[%s1 + $0x2c] sm:$0xf]
      %v206 = vld [vmem:[%s1 + $0x30] sm:$0xf]
      %v207 = vld [vmem:[%s1 + $0x34] sm:$0xf]
      %v208 = vld [vmem:[%s1 + $0x38] sm:$0xf]
      %v209 = vld [vmem:[%s1 + $0x3c] sm:$0xf]
      %v210 = vld [vmem:[%s1 + $0x40] sm:$0xf]
      %v211 = vld [vmem:[%s1 + $0x44] sm:$0xf]
      %v212 = vld [vmem:[%s1 + $0x48] sm:$0xf]
      %v213 = vld [vmem:[%s1 + $0x4c] sm:$0xf]
      %v214 = vld [vmem:[%s1 + $0x50] sm:$0xf]
      %v215 = vld [vmem:[%s1 + $0x54] sm:$0xf]
      %v216 = vld [vmem:[%s1 + $0x58] sm:$0xf]
      %v217 = vld [vmem:[%s1 + $0x5c] sm:$0xf]
      %v218 = vld [vmem:[%s1 + $0x60] sm:$0xf]
      %v219 = vld [vmem:[%s1 + $0x64] sm:$0xf]
      %v220 = vld [vmem:[%s1 + $0x68] sm:$0xf]
      %v221 = vld [vmem:[%s1 + $0x6c] sm:$0xf]
      %v222 = vld [vmem:[%s1 + $0x70] sm:$0xf]
      %v223 = vld [vmem:[%s1 + $0x74] sm:$0xf]
      %v224 = vld [vmem:[%s1 + $0x78] sm:$0xf]
      %v225 = vld [vmem:[%s1 + $0x7c] sm:$0xf]
      %v226 = vld [vmem:[%s1 + $0x80] sm:$0xf]
      %v227 = vld [vmem:[%s1 + $0x84] sm:$0xf]
      %v228 = vld [vmem:[%s1 + $0x88] sm:$0xf]
      %v229 = vld [vmem:[%s1 + $0x8c] sm:$0xf]
      %v230 = vld [vmem:[%s1 + $0x90] sm:$0xf]
      %v231 = vld [vmem:[%s1 + $0x94] sm:$0xf]
      %v232 = vld [vmem:[%s1 + $0x98] sm:$0xf]
      %v233 = vld [vmem:[%s1 + $0x9c] sm:$0xf]
      %v234 = vld [vmem:[%s1 + $0xa0] sm:$0xf]
      %v235 = vld [vmem:[%s1 + $0xa4] sm:$0xf]
      %v236 = vld [vmem:[%s1 + $0xa8] sm:$0xf]
      %v237 = vld [vmem:[%s1 + $0xac] sm:$0xf]
      %v238 = vld [vmem:[%s1 + $0xb0] sm:$0xf]
      %v239 = vld [vmem:[%s1 + $0xb4] sm:$0xf]
      %v240 = vld [vmem:[%s1 + $0xb8] sm:$0xf]
      %v241 = vld [vmem:[%s1 + $0xbc] sm:$0xf]
      %v242 = vld [vmem:[%s1 + $0xc0] sm:$0xf]
      %v243 = vld [vmem:[%s1 + $0xc4] sm:$0xf]
      %v244 = vld [vmem:[%s1 + $0xc8] sm:$0xf]
      %v245 = vld [vmem:[%s1 + $0xcc] sm:$0xf]
      %v246 = vld [vmem:[%s1 + $0xd0] sm:$0xf]
      %v247 = vld [vmem:[%s1 + $0xd4] sm:$0xf]
      %v248 = vld [vmem:[%s1 + $0xd8] sm:$0xf]
      %v249 = vld [vmem:[%s1 + $0xdc] sm:$0xf]
      %v250 = vld [vmem:[%s1 + $0xe0] sm:$0xf]
      %v251 = vld [vmem:[%s1 + $0xe4] sm:$0xf]
      %v252 = vld [vmem:[%s1 + $0xe8] sm:$0xf]
      %v253 = vld [vmem:[%s1 + $0xec] sm:$0xf]
      %v254 = vld [vmem:[%s1 + $0xf0] sm:$0xf]
      %v255 = vld [vmem:[%s1 + $0xf4] sm:$0xf]
      %v256 = vld [vmem:[%s1 + $0xf8] sm:$0xf]
      %v257 = vld [vmem:[%s1 + $0xfc] sm:$0xf]
      %v258 = vld [vmem:[%s2] sm:$0x1]
      %v260 = vlaneseq
      %v261 = vshrl.u32 %v260, 7
      %v262 = vsub.s32 0, %v261
      %v263 = vrot.slane %v258, %v262
      %v287 = vunpack.c.l.b16 %v172
      %v288 = vunpack.c.h.b16 %v172
      %v289 = vunpack.c.l.b16 %v173
      %v290 = vunpack.c.h.b16 %v173
      %v291 = vunpack.c.l.b16 %v174
      %v292 = vunpack.c.h.b16 %v174
      %v293 = vunpack.c.l.b16 %v175
      %v294 = vunpack.c.h.b16 %v175
      %v295 = vunpack.c.l.b16 %v176
      %v296 = vunpack.c.h.b16 %v176
      %v297 = vunpack.c.l.b16 %v177
      %v298 = vunpack.c.h.b16 %v177
      %v299 = vunpack.c.l.b16 %v178
      %v300 = vunpack.c.h.b16 %v178
      %v301 = vunpack.c.l.b16 %v179
      %v302 = vunpack.c.h.b16 %v179
      %v303 = vunpack.c.l.b16 %v180
      %v304 = vunpack.c.h.b16 %v180
      %v305 = vunpack.c.l.b16 %v181
      %v306 = vunpack.c.h.b16 %v181
      %v307 = vunpack.c.l.b16 %v182
      %v308 = vunpack.c.h.b16 %v182
      %v309 = vunpack.c.l.b16 %v183
      %v310 = vunpack.c.h.b16 %v183
      %v311 = vunpack.c.l.b16 %v184
      %v312 = vunpack.c.h.b16 %v184
      %v313 = vunpack.c.l.b16 %v185
      %v314 = vunpack.c.h.b16 %v185
      %v315 = vunpack.c.l.b16 %v186
      %v316 = vunpack.c.h.b16 %v186
      %v317 = vunpack.c.l.b16 %v187
      %v318 = vunpack.c.h.b16 %v187
      %v319 = vunpack.c.l.b16 %v188
      %v320 = vunpack.c.h.b16 %v188
      %v321 = vunpack.c.l.b16 %v189
      %v322 = vunpack.c.h.b16 %v189
      %v323 = vunpack.c.l.b16 %v190
      %v324 = vunpack.c.h.b16 %v190
      %v325 = vunpack.c.l.b16 %v191
      %v326 = vunpack.c.h.b16 %v191
      %v327 = vunpack.c.l.b16 %v192
      %v328 = vunpack.c.h.b16 %v192
      %v329 = vunpack.c.l.b16 %v193
      %v330 = vunpack.c.h.b16 %v193
      %v331 = vpack.c.b16 %v291, %v287
      %v332 = vpack.c.b16 %v292, %v288
      %v333 = vpack.c.b16 %v293, %v289
      %v334 = vpack.c.b16 %v294, %v290
      %v335 = vpack.c.b16 %v299, %v295
      %v336 = vpack.c.b16 %v300, %v296
      %v337 = vpack.c.b16 %v301, %v297
      %v338 = vpack.c.b16 %v302, %v298
      %v339 = vpack.c.b16 %v307, %v303
      %v340 = vpack.c.b16 %v308, %v304
      %v341 = vpack.c.b16 %v309, %v305
      %v342 = vpack.c.b16 %v310, %v306
      %v343 = vpack.c.b16 %v315, %v311
      %v344 = vpack.c.b16 %v316, %v312
      %v345 = vpack.c.b16 %v317, %v313
      %v346 = vpack.c.b16 %v318, %v314
      %v347 = vpack.c.b16 %v323, %v319
      %v348 = vpack.c.b16 %v324, %v320
      %v349 = vpack.c.b16 %v325, %v321
      %v350 = vpack.c.b16 %v326, %v322
      %v351 = vpack.c.b16 %v327, %v327
      %v352 = vpack.c.b16 %v328, %v328
      %v353 = vpack.c.b16 %v329, %v329
      %v354 = vpack.c.b16 %v330, %v330
      %v443 = vunpack.c.l.b16 %v194
      %v444 = vunpack.c.l.b16 %v195
      %v445 = vunpack.c.l.b16 %v196
      %v446 = vunpack.c.l.b16 %v197
      %v447 = vunpack.c.l.b16 %v198
      %v448 = vunpack.c.l.b16 %v199
      %v449 = vunpack.c.l.b16 %v200
      %v450 = vunpack.c.l.b16 %v201
      %v451 = vunpack.c.l.b16 %v202
      %v452 = vunpack.c.l.b16 %v203
      %v453 = vunpack.c.l.b16 %v204
      %v454 = vunpack.c.l.b16 %v205
      %v455 = vunpack.c.l.b16 %v206
      %v456 = vunpack.c.l.b16 %v207
      %v457 = vunpack.c.l.b16 %v208
      %v458 = vunpack.c.l.b16 %v209
      %v459 = vunpack.c.l.b16 %v210
      %v460 = vunpack.c.l.b16 %v211
      %v461 = vunpack.c.l.b16 %v212
      %v462 = vunpack.c.l.b16 %v213
      %v463 = vunpack.c.l.b16 %v214
      %v464 = vunpack.c.l.b16 %v215
      %v465 = vunpack.c.l.b16 %v216
      %v466 = vunpack.c.l.b16 %v217
      %v467 = vunpack.c.l.b16 %v218
      %v468 = vunpack.c.l.b16 %v219
      %v469 = vunpack.c.l.b16 %v220
      %v470 = vunpack.c.l.b16 %v221
      %v471 = vunpack.c.l.b16 %v222
      %v472 = vunpack.c.l.b16 %v223
      %v473 = vunpack.c.l.b16 %v224
      %v474 = vunpack.c.l.b16 %v225
      %v475 = vunpack.c.l.b16 %v226
      %v476 = vunpack.c.l.b16 %v227
      %v477 = vunpack.c.l.b16 %v228
      %v478 = vunpack.c.l.b16 %v229
      %v479 = vunpack.c.l.b16 %v230
      %v480 = vunpack.c.l.b16 %v231
      %v481 = vunpack.c.l.b16 %v232
      %v482 = vunpack.c.l.b16 %v233
      %v483 = vunpack.c.l.b16 %v234
      %v484 = vunpack.c.l.b16 %v235
      %v485 = vunpack.c.l.b16 %v236
      %v486 = vunpack.c.l.b16 %v237
      %v487 = vunpack.c.l.b16 %v238
      %v488 = vunpack.c.l.b16 %v239
      %v489 = vunpack.c.l.b16 %v240
      %v490 = vunpack.c.l.b16 %v241
      %v491 = vunpack.c.l.b16 %v242
      %v492 = vunpack.c.l.b16 %v243
      %v493 = vunpack.c.l.b16 %v244
      %v494 = vunpack.c.l.b16 %v245
      %v495 = vunpack.c.l.b16 %v246
      %v496 = vunpack.c.l.b16 %v247
      %v497 = vunpack.c.l.b16 %v248
      %v498 = vunpack.c.l.b16 %v249
      %v499 = vunpack.c.l.b16 %v250
      %v500 = vunpack.c.l.b16 %v251
      %v501 = vunpack.c.l.b16 %v252
      %v502 = vunpack.c.l.b16 %v253
      %v503 = vunpack.c.l.b16 %v254
      %v504 = vunpack.c.l.b16 %v255
      %v505 = vunpack.c.l.b16 %v256
      %v506 = vunpack.c.l.b16 %v257
      %v507 = vpack.c.b16 %v444, %v443
      %v508 = vpack.c.b16 %v446, %v445
      %v509 = vpack.c.b16 %v448, %v447
      %v510 = vpack.c.b16 %v450, %v449
      %v511 = vpack.c.b16 %v452, %v451
      %v512 = vpack.c.b16 %v454, %v453
      %v513 = vpack.c.b16 %v456, %v455
      %v514 = vpack.c.b16 %v458, %v457
      %v515 = vpack.c.b16 %v460, %v459
      %v516 = vpack.c.b16 %v462, %v461
      %v517 = vpack.c.b16 %v464, %v463
      %v518 = vpack.c.b16 %v466, %v465
      %v519 = vpack.c.b16 %v468, %v467
      %v520 = vpack.c.b16 %v470, %v469
      %v521 = vpack.c.b16 %v472, %v471
      %v522 = vpack.c.b16 %v474, %v473
      %v523 = vpack.c.b16 %v476, %v475
      %v524 = vpack.c.b16 %v478, %v477
      %v525 = vpack.c.b16 %v480, %v479
      %v526 = vpack.c.b16 %v482, %v481
      %v527 = vpack.c.b16 %v484, %v483
      %v528 = vpack.c.b16 %v486, %v485
      %v529 = vpack.c.b16 %v488, %v487
      %v530 = vpack.c.b16 %v490, %v489
      %v531 = vpack.c.b16 %v492, %v491
      %v532 = vpack.c.b16 %v494, %v493
      %v533 = vpack.c.b16 %v496, %v495
      %v534 = vpack.c.b16 %v498, %v497
      %v535 = vpack.c.b16 %v500, %v499
      %v536 = vpack.c.b16 %v502, %v501
      %v537 = vpack.c.b16 %v504, %v503
      %v538 = vpack.c.b16 %v506, %v505
      %571 = vmatprep.subr.bf16.mxu0 0
      %572 = vmatpush1.bf16.msra.mxu0 %v507
      %573 = vmatprep.subr.bf16.mxu0 0
      %574 = vmatpush1.bf16.msra.mxu0 %v508
      %575 = vmatprep.subr.bf16.mxu0 0
      %576 = vmatpush1.bf16.msra.mxu0 %v509
      %577 = vmatprep.subr.bf16.mxu0 0
      %578 = vmatpush1.bf16.msra.mxu0 %v510
      %579 = vmatprep.subr.bf16.mxu0 0
      %580 = vmatpush1.bf16.msra.mxu0 %v511
      %581 = vmatprep.subr.bf16.mxu0 0
      %582 = vmatpush1.bf16.msra.mxu0 %v512
      %583 = vmatprep.subr.bf16.mxu0 0
      %584 = vmatpush1.bf16.msra.mxu0 %v513
      %585 = vmatprep.subr.bf16.mxu0 0
      %586 = vmatpush1.bf16.msra.mxu0 %v514
      %587 = vmatprep.subr.bf16.mxu0 0
      %588 = vmatpush1.bf16.msra.mxu0 %v515
      %589 = vmatprep.subr.bf16.mxu0 0
      %590 = vmatpush1.bf16.msra.mxu0 %v516
      %591 = vmatprep.subr.bf16.mxu0 0
      %592 = vmatpush1.bf16.msra.mxu0 %v517
      %593 = vmatprep.subr.bf16.mxu0 0
      %594 = vmatpush1.bf16.msra.mxu0 %v518
      %595 = vmatprep.subr.bf16.mxu0 0
      %596 = vmatpush1.bf16.msra.mxu0 %v519
      %597 = vmatprep.subr.bf16.mxu0 0
      %598 = vmatpush1.bf16.msra.mxu0 %v520
      %599 = vmatprep.subr.bf16.mxu0 0
      %600 = vmatpush1.bf16.msra.mxu0 %v521
      %601 = vmatprep.subr.bf16.mxu0 0
      %602 = vmatpush1.bf16.msra.mxu0 %v522
      %603 = vmatprep.mubr.bf16.mxu0 %v332
      %604 = vmatmul.mubr.bf16.gmra.mrb[0].mxu0 %v331
      %v605 = vpop.f32.mrb[0].mxu0
      %v606 = vadd.f32 %v263, %v605
      %v607 = vpop.f32.mrb[0].mxu0
      %v608 = vpop.f32.mrb[0].mxu0
      %v609 = vadd.f32 %v263, %v608
      %v610 = vpop.f32.mrb[0].mxu0
      %611 = vmatprep.mubr.bf16.mxu0 %v336
      %612 = vmatmul.mubr.bf16.gmra.mrb[0].mxu0 %v335
      %v613 = vpop.f32.mrb[0].mxu0
      %v614 = vadd.f32 %v263, %v613
      %v615 = vpop.f32.mrb[0].mxu0
      %v616 = vpop.f32.mrb[0].mxu0
      %v617 = vadd.f32 %v263, %v616
      %v618 = vpop.f32.mrb[0].mxu0
      %619 = vmatprep.mubr.bf16.mxu0 %v340
      %620 = vmatmul.mubr.bf16.gmra.mrb[0].mxu0 %v339
      %v621 = vpop.f32.mrb[0].mxu0
      %v622 = vadd.f32 %v263, %v621
      %v623 = vpop.f32.mrb[0].mxu0
      %v624 = vpop.f32.mrb[0].mxu0
      %v625 = vadd.f32 %v263, %v624
      %v626 = vpop.f32.mrb[0].mxu0
      %627 = vmatprep.mubr.bf16.mxu0 %v344
      %628 = vmatmul.mubr.bf16.gmra.mrb[0].mxu0 %v343
      %v629 = vpop.f32.mrb[0].mxu0
      %v630 = vadd.f32 %v263, %v629
      %v631 = vpop.f32.mrb[0].mxu0
      %v632 = vpop.f32.mrb[0].mxu0
      %v633 = vadd.f32 %v263, %v632
      %v634 = vpop.f32.mrb[0].mxu0
      %635 = vmatprep.mubr.bf16.mxu0 %v348
      %636 = vmatmul.mubr.bf16.gmra.mrb[0].mxu0 %v347
      %v637 = vpop.f32.mrb[0].mxu0
      %v638 = vadd.f32 %v263, %v637
      %v639 = vpop.f32.mrb[0].mxu0
      %v640 = vpop.f32.mrb[0].mxu0
      %v641 = vadd.f32 %v263, %v640
      %v642 = vpop.f32.mrb[0].mxu0
      %643 = vmatprep.mubr.bf16.mxu0 %v352
      %644 = vmatmul.mubr.bf16.gmra.mrb[0].mxu0 %v351
      %v645 = vpop.f32.mrb[0].mxu0
      %v646 = vadd.f32 %v263, %v645
      %v647 = vpop.f32.mrb[0].mxu0
      %v648 = vpop.f32.mrb[0].mxu0
      %v649 = vpop.f32.mrb[0].mxu0
      %650 = vdwg.mxu0
      %651 = vmatprep.subr.bf16.mxu0 0
      %652 = vmatpush1.bf16.msra.mxu0 %v523
      %653 = vmatprep.subr.bf16.mxu0 0
      %654 = vmatpush1.bf16.msra.mxu0 %v524
      %655 = vmatprep.subr.bf16.mxu0 0
      %656 = vmatpush1.bf16.msra.mxu0 %v525
      %657 = vmatprep.subr.bf16.mxu0 0
      %658 = vmatpush1.bf16.msra.mxu0 %v526
      %659 = vmatprep.subr.bf16.mxu0 0
      %660 = vmatpush1.bf16.msra.mxu0 %v527
      %661 = vmatprep.subr.bf16.mxu0 0
      %662 = vmatpush1.bf16.msra.mxu0 %v528
      %663 = vmatprep.subr.bf16.mxu0 0
      %664 = vmatpush1.bf16.msra.mxu0 %v529
      %665 = vmatprep.subr.bf16.mxu0 0
      %666 = vmatpush1.bf16.msra.mxu0 %v530
      %667 = vmatprep.subr.bf16.mxu0 0
      %668 = vmatpush1.bf16.msra.mxu0 %v531
      %669 = vmatprep.subr.bf16.mxu0 0
      %670 = vmatpush1.bf16.msra.mxu0 %v532
      %671 = vmatprep.subr.bf16.mxu0 0
      %672 = vmatpush1.bf16.msra.mxu0 %v533
      %673 = vmatprep.subr.bf16.mxu0 0
      %674 = vmatpush1.bf16.msra.mxu0 %v534
      %675 = vmatprep.subr.bf16.mxu0 0
      %676 = vmatpush1.bf16.msra.mxu0 %v535
      %677 = vmatprep.subr.bf16.mxu0 0
      %678 = vmatpush1.bf16.msra.mxu0 %v536
      %679 = vmatprep.subr.bf16.mxu0 0
      %680 = vmatpush1.bf16.msra.mxu0 %v537
      %681 = vmatprep.subr.bf16.mxu0 0
      %682 = vmatpush1.bf16.msra.mxu0 %v538
      %683 = vmatprep.mubr.bf16.mxu0 %v334
      %684 = vmatmul.mubr.bf16.gmra.mrb[0].mxu0 %v333
      %v685 = vpop.f32.mrb[0].mxu0
      %v686 = vadd.f32 %v606, %v685
      %v687 = vpop.f32.mrb[0].mxu0
      %v688 = vpop.f32.mrb[0].mxu0
      %v689 = vadd.f32 %v609, %v688
      %v690 = vpop.f32.mrb[0].mxu0
      %691 = vmatprep.mubr.bf16.mxu0 %v338
      %692 = vmatmul.mubr.bf16.gmra.mrb[0].mxu0 %v337
      %v693 = vpop.f32.mrb[0].mxu0
      %v694 = vadd.f32 %v614, %v693
      %v695 = vpop.f32.mrb[0].mxu0
      %v696 = vpop.f32.mrb[0].mxu0
      %v697 = vadd.f32 %v617, %v696
      %v698 = vpop.f32.mrb[0].mxu0
      %699 = vmatprep.mubr.bf16.mxu0 %v342
      %700 = vmatmul.mubr.bf16.gmra.mrb[0].mxu0 %v341
      %v701 = vpop.f32.mrb[0].mxu0
      %v702 = vadd.f32 %v622, %v701
      %v703 = vpop.f32.mrb[0].mxu0
      %v704 = vpop.f32.mrb[0].mxu0
      %v705 = vadd.f32 %v625, %v704
      %v706 = vpop.f32.mrb[0].mxu0
      %707 = vmatprep.mubr.bf16.mxu0 %v346
      %708 = vmatmul.mubr.bf16.gmra.mrb[0].mxu0 %v345
      %v709 = vpop.f32.mrb[0].mxu0
      %v710 = vadd.f32 %v630, %v709
      %v711 = vpop.f32.mrb[0].mxu0
      %v712 = vpop.f32.mrb[0].mxu0
      %v713 = vadd.f32 %v633, %v712
      %v714 = vpop.f32.mrb[0].mxu0
      %715 = vmatprep.mubr.bf16.mxu0 %v350
      %716 = vmatmul.mubr.bf16.gmra.mrb[0].mxu0 %v349
      %v717 = vpop.f32.mrb[0].mxu0
      %v718 = vadd.f32 %v638, %v717
      %v719 = vpop.f32.mrb[0].mxu0
      %v720 = vpop.f32.mrb[0].mxu0
      %v721 = vadd.f32 %v641, %v720
      %v722 = vpop.f32.mrb[0].mxu0
      %723 = vmatprep.mubr.bf16.mxu0 %v354
      %724 = vmatmul.mubr.bf16.gmra.mrb[0].mxu0 %v353
      %v725 = vpop.f32.mrb[0].mxu0
      %v726 = vadd.f32 %v646, %v725
      %v727 = vpop.f32.mrb[0].mxu0
      %v728 = vpop.f32.mrb[0].mxu0
      %v729 = vpop.f32.mrb[0].mxu0
      %730 = vdwg.mxu0
      %v731 = vmax.f32 %v686, 0.0
      %v732 = vmax.f32 %v689, 0.0
      %v733 = vmax.f32 %v694, 0.0
      %v734 = vmax.f32 %v697, 0.0
      %v735 = vmax.f32 %v702, 0.0
      %v736 = vmax.f32 %v705, 0.0
      %v737 = vmax.f32 %v710, 0.0
      %v738 = vmax.f32 %v713, 0.0
      %v739 = vmax.f32 %v718, 0.0
      %v740 = vmax.f32 %v721, 0.0
      %v741 = vmax.f32 %v726, 0.0
      %v742 = vpack.c.bf16 %v732, %v731
      %v743 = vpack.c.bf16 %v734, %v733
      %v744 = vpack.c.bf16 %v736, %v735
      %v745 = vpack.c.bf16 %v738, %v737
      %v746 = vpack.c.bf16 %v740, %v739
      %v747 = vpack.c.bf16 %v741, %v741
      %v754 = vunpack.c.l.b16 %v742
      %v755 = vunpack.c.h.b16 %v742
      %v756 = vunpack.c.l.b16 %v743
      %v757 = vunpack.c.h.b16 %v743
      %v758 = vunpack.c.l.b16 %v744
      %v759 = vunpack.c.h.b16 %v744
      %v760 = vunpack.c.l.b16 %v745
      %v761 = vunpack.c.h.b16 %v745
      %v762 = vunpack.c.l.b16 %v746
      %v763 = vunpack.c.h.b16 %v746
      %v764 = vunpack.c.l.b16 %v747
      %v765 = vpack.c.b16 %v754, %v754
      %v766 = vpack.c.b16 %v755, %v755
      %v767 = vpack.c.b16 %v756, %v756
      %v768 = vpack.c.b16 %v757, %v757
      %v769 = vpack.c.b16 %v758, %v758
      %v770 = vpack.c.b16 %v759, %v759
      %v771 = vpack.c.b16 %v760, %v760
      %v772 = vpack.c.b16 %v761, %v761
      %v773 = vpack.c.b16 %v762, %v762
      %v774 = vpack.c.b16 %v763, %v763
      %v775 = vpack.c.b16 %v764, %v764
      %vm787 = vcmask 519168
      %788 = vst.msk [vmem:[%s170] sm:$0xf] %vm787, %v765
      %789 = vst.msk [vmem:[%s170 + $0x4] sm:$0xf] %vm787, %v766
      %790 = vst.msk [vmem:[%s170 + $0x8] sm:$0xf] %vm787, %v767
      %791 = vst.msk [vmem:[%s170 + $0xc] sm:$0xf] %vm787, %v768
      %792 = vst.msk [vmem:[%s170 + $0x10] sm:$0xf] %vm787, %v769
      %793 = vst.msk [vmem:[%s170 + $0x14] sm:$0xf] %vm787, %v770
      %794 = vst.msk [vmem:[%s170 + $0x18] sm:$0xf] %vm787, %v771
      %795 = vst.msk [vmem:[%s170 + $0x1c] sm:$0xf] %vm787, %v772
      %796 = vst.msk [vmem:[%s170 + $0x20] sm:$0xf] %vm787, %v773
      %797 = vst.msk [vmem:[%s170 + $0x24] sm:$0xf] %vm787, %v774
      %vm798 = vcmask 516096
      %vm799 = vsmask.f32 256
      %vm800 = vmand %vm798, %vm799
      %v801 = vld [vmem:[%s170 + $0x28] sm:$0x1]
      %v802 = vsel %vm800, %v775, %v801
      %803 = vst [vmem:[%s170 + $0x28] sm:$0x1] %v802
      %p804 = scmp.lt.s32.totalorder %s14, 1
      %s805 = scalar_select %p804, %s14, 1
      %s806 = smul.addr %s805, 11
      %s807 = smul.addr %s806, 4
      %s808 = scalar_lea.vmem %s3, %s807
      // Predicated region
      $region33: #{dueling_dqn_forward.5} parent=31 // pred_check
        %p809 = pneg %p100
      $region34: #{dueling_dqn_forward.5} parent=31 // pred_check_branch
        %811 = sbr.rel (%p809) target = $region36
      $region35: #{dueling_dqn_forward.5} parent=31 // pred_region
        _
      $region36: #{dueling_dqn_forward.5} parent=31 // pred_fallthru
        _
    $region32: #{dueling_dqn_forward.5} parent=5 // pred_fallthru
      _
    %p812 = scmp.le.s32.totalorder 2, %s9
    // Predicated region
    $region37: #{dueling_dqn_forward.5} parent=5 // pred_check
      %p813 = pneg %p812
    $region38: #{dueling_dqn_forward.5} parent=5 // pred_check_branch
      %815 = sbr.rel (%p813) target = $region40
    $region39: #{dueling_dqn_forward.5} parent=5 // pred_region
      %s816 = ssub.s32 %s9, 2
      // Predicated region
      $region41: #{dueling_dqn_forward.5} parent=39 // pred_check
        %p817 = pneg %p106
      $region42: #{dueling_dqn_forward.5} parent=39 // pred_check_branch
        %819 = sbr.rel (%p817) target = $region44
      $region43: #{dueling_dqn_forward.5} parent=39 // pred_region
        %p820 = scmp.lt.s32.totalorder %s15, 1
        %s821 = scalar_select %p820, %s15, 1
        %s822 = smul.addr %s821, 11
        %s823 = smul.addr %s822, 4
        %s824 = scalar_lea.vmem %s3, %s823
      $region44: #{dueling_dqn_forward.5} parent=39 // pred_fallthru
        _
    $region40: #{dueling_dqn_forward.5} parent=5 // pred_fallthru
      _
  $region6: #{dueling_dqn_forward.5} parent=0 // loop_footer
    %s13 = sadd.s32 1, %s9
  $region7: #{dueling_dqn_forward.5} parent=0 // loop_footer_branch
    %8 = sbr.rel target = $region3
  $region8: #{dueling_dqn_forward.5} parent=0 // loop_exit
    _

// kernel: dueling_dqn_forward.6
$region0: #{dueling_dqn_forward.6}
  #allocation0 [shape = 'u32[]', space=smem, size = 0x4, offset = 0x4, fixed_abs, tag = 'smem constant byte address 0x4 - core index']
  #allocation1 [shape = 'u32[144,128]{1,0:T(1,128)}', space=vmem, size = 0x12000, scoped, tag = 'internal scratch']
  %s0 = inlined_call_operand.vmem [shape: bf16[2,49,576], index: 0, kind: input, shape index: {}]
  %s1 = inlined_call_operand.vmem [shape: bf16[576,64], index: 1, kind: input, shape index: {}]
  %s2 = inlined_call_operand.vmem [shape: f32[1,64], index: 2, kind: input, shape index: {}]
  %s3 = inlined_call_operand.vmem [shape: bf16[2,49,64], index: 3, kind: output, shape index: {}]
  %s4 = sld [smem:[#allocation0]]
  $region45: #{dueling_dqn_forward.6} parent=0
    _
  %s6 = ssub.s32 1, %s4
  %s7 = scalar_select 0, %s6, %s4
  loop: start=0, step=1, limit=4
  $region2: #{dueling_dqn_forward.6} parent=0 // loop_pre_header
    _
  $region3: #{dueling_dqn_forward.6} parent=0 // loop_header
    %s9 = sphi 0, %s13
    %p10 = scmp.ge.s32.totalorder %s9, 4
    %s19 = sphi 0, %s21
    %s22 = sphi 0, %s19
    %s23 = sphi 0, %s22
    %s39 = sphi 0, %s23
    %s43 = sphi 0, %s43
    %s45 = sphi 0, %s43
    %s46 = sphi 0, %s45
    %s60 = sphi 0, %s46
    %s64 = sphi 0, %s64
    %s66 = sphi 0, %s64
    %s67 = sphi 0, %s66
    %s81 = sphi 0, %s67
    %s87 = sphi 0, %s89
    %s90 = sphi 0, %s87
    %s91 = sphi 0, %s90
    %s107 = sphi 0, %s91
  $region4: #{dueling_dqn_forward.6} parent=0 // loop_header_branch
    %12 = sbr.rel (%p10) target = $region8
  $region5: #{dueling_dqn_forward.6} parent=0 // loop_body
    %s14 = ssub.s32 %s9, 1
    %s15 = ssub.s32 %s9, 2
    %s16 = sadd.s32 %s9, 1
    %s17 = ssub.s32 %s9, %s16
    %p18 = scmp.eq.s32.totalorder %s17, 0
    %s20 = sadd.s32 %s19, 1
    %s21 = scalar_select %p18, %s19, %s20
    %p24 = pneg %p18
    %p25 = scmp.eq.s32.totalorder %s9, 1
    %p26 = por %p24, %p25
    %p27 = scmp.ne.s32.totalorder %s19, %s22
    %p28 = scmp.eq.s32.totalorder %s9, 0
    %p29 = por %p27, %p28
    %p30 = scmp.ne.s32.totalorder %s19, %s22
    %p31 = scmp.eq.s32.totalorder %s14, 1
    %p32 = por %p30, %p31
    %p33 = scmp.ne.s32.totalorder %s22, %s23
    %p34 = scmp.eq.s32.totalorder %s14, 0
    %p35 = por %p33, %p34
    %p36 = scmp.ne.s32.totalorder %s22, %s23
    %p37 = scmp.eq.s32.totalorder %s15, 1
    %p38 = por %p36, %p37
    %p40 = scmp.ne.s32.totalorder %s23, %s39
    %p41 = scmp.eq.s32.totalorder %s15, 0
    %p42 = por %p40, %p41
    %s44 = sadd.s32 %s43, 1
    %p47 = scmp.eq.s32.totalorder %s9, 1
    %p48 = scmp.ne.s32.totalorder %s43, %s45
    %p49 = scmp.eq.s32.totalorder %s9, 0
    %p50 = por %p48, %p49
    %p51 = scmp.ne.s32.totalorder %s43, %s45
    %p52 = scmp.eq.s32.totalorder %s14, 1
    %p53 = por %p51, %p52
    %p54 = scmp.ne.s32.totalorder %s45, %s46
    %p55 = scmp.eq.s32.totalorder %s14, 0
    %p56 = por %p54, %p55
    %p57 = scmp.ne.s32.totalorder %s45, %s46
    %p58 = scmp.eq.s32.totalorder %s15, 1
    %p59 = por %p57, %p58
    %p61 = scmp.ne.s32.totalorder %s46, %s60
    %p62 = scmp.eq.s32.totalorder %s15, 0
    %p63 = por %p61, %p62
    %s65 = sadd.s32 %s64, 1
    %p68 = scmp.eq.s32.totalorder %s9, 1
    %p69 = scmp.ne.s32.totalorder %s64, %s66
    %p70 = scmp.eq.s32.totalorder %s9, 0
    %p71 = por %p69, %p70
    %p72 = scmp.ne.s32.totalorder %s64, %s66
    %p73 = scmp.eq.s32.totalorder %s14, 1
    %p74 = por %p72, %p73
    %p75 = scmp.ne.s32.totalorder %s66, %s67
    %p76 = scmp.eq.s32.totalorder %s14, 0
    %p77 = por %p75, %p76
    %p78 = scmp.ne.s32.totalorder %s66, %s67
    %p79 = scmp.eq.s32.totalorder %s15, 1
    %p80 = por %p78, %p79
    %p82 = scmp.ne.s32.totalorder %s67, %s81
    %p83 = scmp.eq.s32.totalorder %s15, 0
    %p84 = por %p82, %p83
    %s85 = ssub.s32 %s9, %s16
    %p86 = scmp.eq.s32.totalorder %s85, 0
    %s88 = sadd.s32 %s87, 1
    %s89 = scalar_select %p86, %s87, %s88
    %p92 = pneg %p86
    %p93 = scmp.eq.s32.totalorder %s9, 1
    %p94 = por %p92, %p93
    %p95 = scmp.ne.s32.totalorder %s87, %s90
    %p96 = scmp.eq.s32.totalorder %s9, 0
    %p97 = por %p95, %p96
    %p98 = scmp.ne.s32.totalorder %s87, %s90
    %p99 = scmp.eq.s32.totalorder %s14, 1
    %p100 = por %p98, %p99
    %p101 = scmp.ne.s32.totalorder %s90, %s91
    %p102 = scmp.eq.s32.totalorder %s14, 0
    %p103 = por %p101, %p102
    %p104 = scmp.ne.s32.totalorder %s90, %s91
    %p105 = scmp.eq.s32.totalorder %s15, 1
    %p106 = por %p104, %p105
    %p108 = scmp.ne.s32.totalorder %s91, %s107
    %p109 = scmp.eq.s32.totalorder %s15, 0
    %p110 = por %p108, %p109
    %p111 = scmp.le.s32.totalorder 1, %s9
    %p112 = scmp.lt.s32.totalorder %s9, 3
    %p113 = pnand %p111, %p112
    %p114 = pneg %p113
    // Predicated region
    $region9: #{dueling_dqn_forward.6} parent=5 // pred_check
      _
    $region10: #{dueling_dqn_forward.6} parent=5 // pred_check_branch
      %116 = sbr.rel (%p113) target = $region12
    $region11: #{dueling_dqn_forward.6} parent=5 // pred_region
      %s117 = ssub.s32 %s9, 1
      // Predicated region
      $region13: #{dueling_dqn_forward.6} parent=11 // pred_check
        %p118 = pneg %p56
      $region14: #{dueling_dqn_forward.6} parent=11 // pred_check_branch
        %120 = sbr.rel (%p118) target = $region16
      $region15: #{dueling_dqn_forward.6} parent=11 // pred_region
        _
      $region16: #{dueling_dqn_forward.6} parent=11 // pred_fallthru
        _
      // Predicated region
      $region17: #{dueling_dqn_forward.6} parent=11 // pred_check
        %p121 = pneg %p77
      $region18: #{dueling_dqn_forward.6} parent=11 // pred_check_branch
        %123 = sbr.rel (%p121) target = $region20
      $region19: #{dueling_dqn_forward.6} parent=11 // pred_region
        _
      $region20: #{dueling_dqn_forward.6} parent=11 // pred_fallthru
        _
    $region12: #{dueling_dqn_forward.6} parent=5 // pred_fallthru
      _
    %p124 = scmp.lt.s32.totalorder %s9, 2
    // Predicated region
    $region21: #{dueling_dqn_forward.6} parent=5 // pred_check
      %p125 = pneg %p124
    $region22: #{dueling_dqn_forward.6} parent=5 // pred_check_branch
      %127 = sbr.rel (%p125) target = $region24
    $region23: #{dueling_dqn_forward.6} parent=5 // pred_region
      // Predicated region
      $region25: #{dueling_dqn_forward.6} parent=23 // pred_check
        %p128 = pneg %p29
      $region26: #{dueling_dqn_forward.6} parent=23 // pred_check_branch
        %130 = sbr.rel (%p128) target = $region28
      $region27: #{dueling_dqn_forward.6} parent=23 // pred_region
        %p131 = scmp.lt.s32.totalorder %s9, 1
        %s132 = scalar_select %p131, %s9, 1
        %s133 = smul.addr %s132, 35
        %s134 = smul.addr %s133, 4
        %s135 = scalar_lea.vmem %s0, %s134
      $region28: #{dueling_dqn_forward.6} parent=23 // pred_fallthru
        _
    $region24: #{dueling_dqn_forward.6} parent=5 // pred_fallthru
      _
    %p136 = scmp.le.s32.totalorder 1, %s9
    %p137 = scmp.lt.s32.totalorder %s9, 3
    %p138 = pnand %p136, %p137
    %p139 = pneg %p138
    // Predicated region
    $region29: #{dueling_dqn_forward.6} parent=5 // pred_check
      _
    $region30: #{dueling_dqn_forward.6} parent=5 // pred_check_branch
      %141 = sbr.rel (%p138) target = $region32
    $region31: #{dueling_dqn_forward.6} parent=5 // pred_region
      %s142 = ssub.s32 %s9, 1
      %p143 = scmp.lt.s32.totalorder %s14, 1
      %s144 = scalar_select %p143, %s14, 1
      %s145 = smul.addr %s144, 35
      %s146 = smul.addr %s145, 4
      %s147 = scalar_lea.vmem %s0, %s146
      %p148 = pneg %p35
      %p149 = pneg %p32
      %p150 = pneg %p56
      %p151 = pneg %p53
      %p152 = pneg %p77
      %p153 = pneg %p74
      %p154 = pneg %p103
      %p155 = pneg %p100
      %p156 = scmp.lt.s32.totalorder %s14, 1
      %s157 = scalar_select %p156, %s14, 1
      %s158 = smul.addr %s157, 7
      %s159 = smul.addr %s158, 4
      %s160 = scalar_lea.vmem %s3, %s159
      %p161 = scmp.lt.s32.totalorder %s14, 1
      %s162 = scalar_select %p161, %s14, 1
      %s163 = smul.addr %s162, 35
      %s164 = smul.addr %s163, 4
      %s165 = scalar_lea.vmem %s0, %s164
      %p166 = scmp.lt.s32.totalorder %s14, 1
      %s167 = scalar_select %p166, %s14, 1
      %s168 = smul.addr %s167, 7
      %s169 = smul.addr %s168, 4
      %s170 = scalar_lea.vmem %s3, %s169
      %v172 = vld [vmem:[%s165] sm:$0xff]
      %v173 = vld [vmem:[%s165 + $0x8] sm:$0xff]
      %v174 = vld [vmem:[%s165 + $0x10] sm:$0xf]
      %v175 = vld [vmem:[%s165 + $0x14] sm:$0xff]
      %v176 = vld [vmem:[%s165 + $0x1c] sm:$0xff]
      %v177 = vld [vmem:[%s165 + $0x24] sm:$0xf]
      %v178 = vld [vmem:[%s165 + $0x28] sm:$0xff]
      %v179 = vld [vmem:[%s165 + $0x30] sm:$0xff]
      %v180 = vld [vmem:[%s165 + $0x38] sm:$0xf]
      %v181 = vld [vmem:[%s165 + $0x3c] sm:$0xff]
      %v182 = vld [vmem:[%s165 + $0x44] sm:$0xff]
      %v183 = vld [vmem:[%s165 + $0x4c] sm:$0xf]
      %v184 = vld [vmem:[%s165 + $0x50] sm:$0xff]
      %v185 = vld [vmem:[%s165 + $0x58] sm:$0xff]
      %v186 = vld [vmem:[%s165 + $0x60] sm:$0xf]
      %v187 = vld [vmem:[%s165 + $0x64] sm:$0xff]
      %v188 = vld [vmem:[%s165 + $0x6c] sm:$0xff]
      %v189 = vld [vmem:[%s165 + $0x74] sm:$0xf]
      %v190 = vld [vmem:[%s165 + $0x78] sm:$0x11]
      %v191 = vld [vmem:[%s165 + $0x80] sm:$0x11]
      %v192 = vld [vmem:[%s165 + $0x88] sm:$0x1]
      %v193 = vld [vmem:[%s1] sm:$0xf]
      %v194 = vld [vmem:[%s1 + $0x4] sm:$0xf]
      %v195 = vld [vmem:[%s1 + $0x8] sm:$0xf]
      %v196 = vld [vmem:[%s1 + $0xc] sm:$0xf]
      %v197 = vld [vmem:[%s1 + $0x10] sm:$0xf]
      %v198 = vld [vmem:[%s1 + $0x14] sm:$0xf]
      %v199 = vld [vmem:[%s1 + $0x18] sm:$0xf]
      %v200 = vld [vmem:[%s1 + $0x1c] sm:$0xf]
      %v201 = vld [vmem:[%s1 + $0x20] sm:$0xf]
      %v202 = vld [vmem:[%s1 + $0x24] sm:$0xf]
      %v203 = vld [vmem:[%s1 + $0x28] sm:$0xf]
      %v204 = vld [vmem:[%s1 + $0x2c] sm:$0xf]
      %v205 = vld [vmem:[%s1 + $0x30] sm:$0xf]
      %v206 = vld [vmem:[%s1 + $0x34] sm:$0xf]
      %v207 = vld [vmem:[%s1 + $0x38] sm:$0xf]
      %v208 = vld [vmem:[%s1 + $0x3c] sm:$0xf]
      %v209 = vld [vmem:[%s1 + $0x40] sm:$0xf]
      %v210 = vld [vmem:[%s1 + $0x44] sm:$0xf]
      %v211 = vld [vmem:[%s1 + $0x48] sm:$0xf]
      %v212 = vld [vmem:[%s1 + $0x4c] sm:$0xf]
      %v213 = vld [vmem:[%s1 + $0x50] sm:$0xf]
      %v214 = vld [vmem:[%s1 + $0x54] sm:$0xf]
      %v215 = vld [vmem:[%s1 + $0x58] sm:$0xf]
      %v216 = vld [vmem:[%s1 + $0x5c] sm:$0xf]
      %v217 = vld [vmem:[%s1 + $0x60] sm:$0xf]
      %v218 = vld [vmem:[%s1 + $0x64] sm:$0xf]
      %v219 = vld [vmem:[%s1 + $0x68] sm:$0xf]
      %v220 = vld [vmem:[%s1 + $0x6c] sm:$0xf]
      %v221 = vld [vmem:[%s1 + $0x70] sm:$0xf]
      %v222 = vld [vmem:[%s1 + $0x74] sm:$0xf]
      %v223 = vld [vmem:[%s1 + $0x78] sm:$0xf]
      %v224 = vld [vmem:[%s1 + $0x7c] sm:$0xf]
      %v225 = vld [vmem:[%s1 + $0x80] sm:$0xf]
      %v226 = vld [vmem:[%s1 + $0x84] sm:$0xf]
      %v227 = vld [vmem:[%s1 + $0x88] sm:$0xf]
      %v228 = vld [vmem:[%s1 + $0x8c] sm:$0xf]
      %v229 = vld [vmem:[%s1 + $0x90] sm:$0xf]
      %v230 = vld [vmem:[%s1 + $0x94] sm:$0xf]
      %v231 = vld [vmem:[%s1 + $0x98] sm:$0xf]
      %v232 = vld [vmem:[%s1 + $0x9c] sm:$0xf]
      %v233 = vld [vmem:[%s1 + $0xa0] sm:$0xf]
      %v234 = vld [vmem:[%s1 + $0xa4] sm:$0xf]
      %v235 = vld [vmem:[%s1 + $0xa8] sm:$0xf]
      %v236 = vld [vmem:[%s1 + $0xac] sm:$0xf]
      %v237 = vld [vmem:[%s1 + $0xb0] sm:$0xf]
      %v238 = vld [vmem:[%s1 + $0xb4] sm:$0xf]
      %v239 = vld [vmem:[%s1 + $0xb8] sm:$0xf]
      %v240 = vld [vmem:[%s1 + $0xbc] sm:$0xf]
      %v241 = vld [vmem:[%s1 + $0xc0] sm:$0xf]
      %v242 = vld [vmem:[%s1 + $0xc4] sm:$0xf]
      %v243 = vld [vmem:[%s1 + $0xc8] sm:$0xf]
      %v244 = vld [vmem:[%s1 + $0xcc] sm:$0xf]
      %v245 = vld [vmem:[%s1 + $0xd0] sm:$0xf]
      %v246 = vld [vmem:[%s1 + $0xd4] sm:$0xf]
      %v247 = vld [vmem:[%s1 + $0xd8] sm:$0xf]
      %v248 = vld [vmem:[%s1 + $0xdc] sm:$0xf]
      %v249 = vld [vmem:[%s1 + $0xe0] sm:$0xf]
      %v250 = vld [vmem:[%s1 + $0xe4] sm:$0xf]
      %v251 = vld [vmem:[%s1 + $0xe8] sm:$0xf]
      %v252 = vld [vmem:[%s1 + $0xec] sm:$0xf]
      %v253 = vld [vmem:[%s1 + $0xf0] sm:$0xf]
      %v254 = vld [vmem:[%s1 + $0xf4] sm:$0xf]
      %v255 = vld [vmem:[%s1 + $0xf8] sm:$0xf]
      %v256 = vld [vmem:[%s1 + $0xfc] sm:$0xf]
      %v257 = vld [vmem:[%s1 + $0x100] sm:$0xf]
      %v258 = vld [vmem:[%s1 + $0x104] sm:$0xf]
      %v259 = vld [vmem:[%s1 + $0x108] sm:$0xf]
      %v260 = vld [vmem:[%s1 + $0x10c] sm:$0xf]
      %v261 = vld [vmem:[%s1 + $0x110] sm:$0xf]
      %v262 = vld [vmem:[%s1 + $0x114] sm:$0xf]
      %v263 = vld [vmem:[%s1 + $0x118] sm:$0xf]
      %v264 = vld [vmem:[%s1 + $0x11c] sm:$0xf]
      %v265 = vld [vmem:[%s2] sm:$0x1]
      %v267 = vlaneseq
      %v268 = vshrl.u32 %v267, 7
      %v269 = vsub.s32 0, %v268
      %v270 = vrot.slane %v265, %v269
      %v293 = vunpack.c.l.b16 %v172
      %v294 = vunpack.c.h.b16 %v172
      %v295 = vunpack.c.l.b16 %v173
      %v296 = vunpack.c.h.b16 %v173
      %v297 = vunpack.c.l.b16 %v174
      %v298 = vunpack.c.l.b16 %v175
      %v299 = vunpack.c.h.b16 %v175
      %v300 = vunpack.c.l.b16 %v176
      %v301 = vunpack.c.h.b16 %v176
      %v302 = vunpack.c.l.b16 %v177
      %v303 = vunpack.c.l.b16 %v178
      %v304 = vunpack.c.h.b16 %v178
      %v305 = vunpack.c.l.b16 %v179
      %v306 = vunpack.c.h.b16 %v179
      %v307 = vunpack.c.l.b16 %v180
      %v308 = vunpack.c.l.b16 %v181
      %v309 = vunpack.c.h.b16 %v181
      %v310 = vunpack.c.l.b16 %v182
      %v311 = vunpack.c.h.b16 %v182
      %v312 = vunpack.c.l.b16 %v183
      %v313 = vunpack.c.l.b16 %v184
      %v314 = vunpack.c.h.b16 %v184
      %v315 = vunpack.c.l.b16 %v185
      %v316 = vunpack.c.h.b16 %v185
      %v317 = vunpack.c.l.b16 %v186
      %v318 = vunpack.c.l.b16 %v187
      %v319 = vunpack.c.h.b16 %v187
      %v320 = vunpack.c.l.b16 %v188
      %v321 = vunpack.c.h.b16 %v188
      %v322 = vunpack.c.l.b16 %v189
      %v323 = vunpack.c.l.b16 %v190
      %v324 = vunpack.c.h.b16 %v190
      %v325 = vunpack.c.l.b16 %v191
      %v326 = vunpack.c.h.b16 %v191
      %v327 = vunpack.c.l.b16 %v192
      %v328 = vpack.c.b16 %v298, %v293
      %v329 = vpack.c.b16 %v299, %v294
      %v330 = vpack.c.b16 %v300, %v295
      %v331 = vpack.c.b16 %v301, %v296
      %v332 = vpack.c.b16 %v302, %v297
      %v333 = vpack.c.b16 %v308, %v303
      %v334 = vpack.c.b16 %v309, %v304
      %v335 = vpack.c.b16 %v310, %v305
      %v336 = vpack.c.b16 %v311, %v306
      %v337 = vpack.c.b16 %v312, %v307
      %v338 = vpack.c.b16 %v318, %v313
      %v339 = vpack.c.b16 %v319, %v314
      %v340 = vpack.c.b16 %v320, %v315
      %v341 = vpack.c.b16 %v321, %v316
      %v342 = vpack.c.b16 %v322, %v317
      %v343 = vpack.c.b16 %v323, %v323
      %v344 = vpack.c.b16 %v324, %v324
      %v345 = vpack.c.b16 %v325, %v325
      %v346 = vpack.c.b16 %v326, %v326
      %v347 = vpack.c.b16 %v327, %v327
      %v436 = vunpack.c.l.b16 %v193
      %v437 = vunpack.c.l.b16 %v194
      %v438 = vunpack.c.l.b16 %v195
      %v439 = vunpack.c.l.b16 %v196
      %v440 = vunpack.c.l.b16 %v197
      %v441 = vunpack.c.l.b16 %v198
      %v442 = vunpack.c.l.b16 %v199
      %v443 = vunpack.c.l.b16 %v200
      %v444 = vunpack.c.l.b16 %v201
      %v445 = vunpack.c.l.b16 %v202
      %v446 = vunpack.c.l.b16 %v203
      %v447 = vunpack.c.l.b16 %v204
      %v448 = vunpack.c.l.b16 %v205
      %v449 = vunpack.c.l.b16 %v206
      %v450 = vunpack.c.l.b16 %v207
      %v451 = vunpack.c.l.b16 %v208
      %v452 = vunpack.c.l.b16 %v209
      %v453 = vunpack.c.l.b16 %v210
      %v454 = vunpack.c.l.b16 %v211
      %v455 = vunpack.c.l.b16 %v212
      %v456 = vunpack.c.l.b16 %v213
      %v457 = vunpack.c.l.b16 %v214
      %v458 = vunpack.c.l.b16 %v215
      %v459 = vunpack.c.l.b16 %v216
      %v460 = vunpack.c.l.b16 %v217
      %v461 = vunpack.c.l.b16 %v218
      %v462 = vunpack.c.l.b16 %v219
      %v463 = vunpack.c.l.b16 %v220
      %v464 = vunpack.c.l.b16 %v221
      %v465 = vunpack.c.l.b16 %v222
      %v466 = vunpack.c.l.b16 %v223
      %v467 = vunpack.c.l.b16 %v224
      %v468 = vunpack.c.l.b16 %v225
      %v469 = vunpack.c.l.b16 %v226
      %v470 = vunpack.c.l.b16 %v227
      %v471 = vunpack.c.l.b16 %v228
      %v472 = vunpack.c.l.b16 %v229
      %v473 = vunpack.c.l.b16 %v230
      %v474 = vunpack.c.l.b16 %v231
      %v475 = vunpack.c.l.b16 %v232
      %v476 = vunpack.c.l.b16 %v233
      %v477 = vunpack.c.l.b16 %v234
      %v478 = vunpack.c.l.b16 %v235
      %v479 = vunpack.c.l.b16 %v236
      %v480 = vunpack.c.l.b16 %v237
      %v481 = vunpack.c.l.b16 %v238
      %v482 = vunpack.c.l.b16 %v239
      %v483 = vunpack.c.l.b16 %v240
      %v484 = vunpack.c.l.b16 %v241
      %v485 = vunpack.c.l.b16 %v242
      %v486 = vunpack.c.l.b16 %v243
      %v487 = vunpack.c.l.b16 %v244
      %v488 = vunpack.c.l.b16 %v245
      %v489 = vunpack.c.l.b16 %v246
      %v490 = vunpack.c.l.b16 %v247
      %v491 = vunpack.c.l.b16 %v248
      %v492 = vunpack.c.l.b16 %v249
      %v493 = vunpack.c.l.b16 %v250
      %v494 = vunpack.c.l.b16 %v251
      %v495 = vunpack.c.l.b16 %v252
      %v496 = vunpack.c.l.b16 %v253
      %v497 = vunpack.c.l.b16 %v254
      %v498 = vunpack.c.l.b16 %v255
      %v499 = vunpack.c.l.b16 %v256
      %v500 = vunpack.c.l.b16 %v257
      %v501 = vunpack.c.l.b16 %v258
      %v502 = vunpack.c.l.b16 %v259
      %v503 = vunpack.c.l.b16 %v260
      %v504 = vunpack.c.l.b16 %v261
      %v505 = vunpack.c.l.b16 %v262
      %v506 = vunpack.c.l.b16 %v263
      %v507 = vunpack.c.l.b16 %v264
      %v508 = vpack.c.b16 %v437, %v436
      %v509 = vpack.c.b16 %v439, %v438
      %v510 = vpack.c.b16 %v441, %v440
      %v511 = vpack.c.b16 %v443, %v442
      %v512 = vpack.c.b16 %v445, %v444
      %v513 = vpack.c.b16 %v447, %v446
      %v514 = vpack.c.b16 %v449, %v448
      %v515 = vpack.c.b16 %v451, %v450
      %v516 = vpack.c.b16 %v453, %v452
      %v517 = vpack.c.b16 %v455, %v454
      %v518 = vpack.c.b16 %v457, %v456
      %v519 = vpack.c.b16 %v459, %v458
      %v520 = vpack.c.b16 %v461, %v460
      %v521 = vpack.c.b16 %v463, %v462
      %v522 = vpack.c.b16 %v465, %v464
      %v523 = vpack.c.b16 %v467, %v466
      %v524 = vpack.c.b16 %v469, %v468
      %v525 = vpack.c.b16 %v471, %v470
      %v526 = vpack.c.b16 %v473, %v472
      %v527 = vpack.c.b16 %v475, %v474
      %v528 = vpack.c.b16 %v477, %v476
      %v529 = vpack.c.b16 %v479, %v478
      %v530 = vpack.c.b16 %v481, %v480
      %v531 = vpack.c.b16 %v483, %v482
      %v532 = vpack.c.b16 %v485, %v484
      %v533 = vpack.c.b16 %v487, %v486
      %v534 = vpack.c.b16 %v489, %v488
      %v535 = vpack.c.b16 %v491, %v490
      %v536 = vpack.c.b16 %v493, %v492
      %v537 = vpack.c.b16 %v495, %v494
      %v538 = vpack.c.b16 %v497, %v496
      %v539 = vpack.c.b16 %v499, %v498
      %v540 = vpack.c.b16 %v501, %v500
      %v541 = vpack.c.b16 %v503, %v502
      %v542 = vpack.c.b16 %v505, %v504
      %v543 = vpack.c.b16 %v507, %v506
      %vm580 = vcmask 523264
      %v582 = vsel %vm580, %v332, 0
      %v585 = vsel %vm580, %v337, 0
      %v588 = vsel %vm580, %v342, 0
      %v591 = vsel %vm580, %v347, 0
      %593 = vmatprep.subr.bf16.mxu0 0
      %594 = vmatpush1.bf16.msra.mxu0 %v508
      %595 = vmatprep.subr.bf16.mxu0 0
      %596 = vmatpush1.bf16.msra.mxu0 %v509
      %597 = vmatprep.subr.bf16.mxu0 0
      %598 = vmatpush1.bf16.msra.mxu0 %v510
      %599 = vmatprep.subr.bf16.mxu0 0
      %600 = vmatpush1.bf16.msra.mxu0 %v511
      %601 = vmatprep.subr.bf16.mxu0 0
      %602 = vmatpush1.bf16.msra.mxu0 %v512
      %603 = vmatprep.subr.bf16.mxu0 0
      %604 = vmatpush1.bf16.msra.mxu0 %v513
      %605 = vmatprep.subr.bf16.mxu0 0
      %606 = vmatpush1.bf16.msra.mxu0 %v514
      %607 = vmatprep.subr.bf16.mxu0 0
      %608 = vmatpush1.bf16.msra.mxu0 %v515
      %609 = vmatprep.subr.bf16.mxu0 0
      %610 = vmatpush1.bf16.msra.mxu0 %v516
      %611 = vmatprep.subr.bf16.mxu0 0
      %612 = vmatpush1.bf16.msra.mxu0 %v517
      %613 = vmatprep.subr.bf16.mxu0 0
      %614 = vmatpush1.bf16.msra.mxu0 %v518
      %615 = vmatprep.subr.bf16.mxu0 0
      %616 = vmatpush1.bf16.msra.mxu0 %v519
      %617 = vmatprep.subr.bf16.mxu0 0
      %618 = vmatpush1.bf16.msra.mxu0 %v520
      %619 = vmatprep.subr.bf16.mxu0 0
      %620 = vmatpush1.bf16.msra.mxu0 %v521
      %621 = vmatprep.subr.bf16.mxu0 0
      %622 = vmatpush1.bf16.msra.mxu0 %v522
      %623 = vmatprep.subr.bf16.mxu0 0
      %624 = vmatpush1.bf16.msra.mxu0 %v523
      %625 = vmatprep.mubr.bf16.mxu0 %v329
      %626 = vmatmul.mubr.bf16.gmra.mrb[0].mxu0 %v328
      %v627 = vpop.f32.mrb[0].mxu0
      %v628 = vadd.f32 %v270, %v627
      %v629 = vpop.f32.mrb[0].mxu0
      %v630 = vpop.f32.mrb[0].mxu0
      %v631 = vadd.f32 %v270, %v630
      %v632 = vpop.f32.mrb[0].mxu0
      %633 = vmatprep.mubr.bf16.mxu0 %v334
      %634 = vmatmul.mubr.bf16.gmra.mrb[0].mxu0 %v333
      %v635 = vpop.f32.mrb[0].mxu0
      %v636 = vadd.f32 %v270, %v635
      %v637 = vpop.f32.mrb[0].mxu0
      %v638 = vpop.f32.mrb[0].mxu0
      %v639 = vadd.f32 %v270, %v638
      %v640 = vpop.f32.mrb[0].mxu0
      %641 = vmatprep.mubr.bf16.mxu0 %v339
      %642 = vmatmul.mubr.bf16.gmra.mrb[0].mxu0 %v338
      %v643 = vpop.f32.mrb[0].mxu0
      %v644 = vadd.f32 %v270, %v643
      %v645 = vpop.f32.mrb[0].mxu0
      %v646 = vpop.f32.mrb[0].mxu0
      %v647 = vadd.f32 %v270, %v646
      %v648 = vpop.f32.mrb[0].mxu0
      %649 = vmatprep.mubr.bf16.mxu0 %v344
      %650 = vmatmul.mubr.bf16.gmra.mrb[0].mxu0 %v343
      %v651 = vpop.f32.mrb[0].mxu0
      %v652 = vadd.f32 %v270, %v651
      %v653 = vpop.f32.mrb[0].mxu0
      %v654 = vpop.f32.mrb[0].mxu0
      %v655 = vpop.f32.mrb[0].mxu0
      %656 = vdwg.mxu0
      %657 = vmatprep.subr.bf16.mxu0 0
      %658 = vmatpush1.bf16.msra.mxu0 %v524
      %659 = vmatprep.subr.bf16.mxu0 0
      %660 = vmatpush1.bf16.msra.mxu0 %v525
      %661 = vmatprep.subr.bf16.mxu0 0
      %662 = vmatpush1.bf16.msra.mxu0 %v526
      %663 = vmatprep.subr.bf16.mxu0 0
      %664 = vmatpush1.bf16.msra.mxu0 %v527
      %665 = vmatprep.subr.bf16.mxu0 0
      %666 = vmatpush1.bf16.msra.mxu0 %v528
      %667 = vmatprep.subr.bf16.mxu0 0
      %668 = vmatpush1.bf16.msra.mxu0 %v529
      %669 = vmatprep.subr.bf16.mxu0 0
      %670 = vmatpush1.bf16.msra.mxu0 %v530
      %671 = vmatprep.subr.bf16.mxu0 0
      %672 = vmatpush1.bf16.msra.mxu0 %v531
      %673 = vmatprep.subr.bf16.mxu0 0
      %674 = vmatpush1.bf16.msra.mxu0 %v532
      %675 = vmatprep.subr.bf16.mxu0 0
      %676 = vmatpush1.bf16.msra.mxu0 %v533
      %677 = vmatprep.subr.bf16.mxu0 0
      %678 = vmatpush1.bf16.msra.mxu0 %v534
      %679 = vmatprep.subr.bf16.mxu0 0
      %680 = vmatpush1.bf16.msra.mxu0 %v535
      %681 = vmatprep.subr.bf16.mxu0 0
      %682 = vmatpush1.bf16.msra.mxu0 %v536
      %683 = vmatprep.subr.bf16.mxu0 0
      %684 = vmatpush1.bf16.msra.mxu0 %v537
      %685 = vmatprep.subr.bf16.mxu0 0
      %686 = vmatpush1.bf16.msra.mxu0 %v538
      %687 = vmatprep.subr.bf16.mxu0 0
      %688 = vmatpush1.bf16.msra.mxu0 %v539
      %689 = vmatprep.mubr.bf16.mxu0 %v331
      %690 = vmatmul.mubr.bf16.gmra.mrb[0].mxu0 %v330
      %v691 = vpop.f32.mrb[0].mxu0
      %v692 = vadd.f32 %v628, %v691
      %v693 = vpop.f32.mrb[0].mxu0
      %v694 = vpop.f32.mrb[0].mxu0
      %v695 = vadd.f32 %v631, %v694
      %v696 = vpop.f32.mrb[0].mxu0
      %697 = vmatprep.mubr.bf16.mxu0 %v336
      %698 = vmatmul.mubr.bf16.gmra.mrb[0].mxu0 %v335
      %v699 = vpop.f32.mrb[0].mxu0
      %v700 = vadd.f32 %v636, %v699
      %v701 = vpop.f32.mrb[0].mxu0
      %v702 = vpop.f32.mrb[0].mxu0
      %v703 = vadd.f32 %v639, %v702
      %v704 = vpop.f32.mrb[0].mxu0
      %705 = vmatprep.mubr.bf16.mxu0 %v341
      %706 = vmatmul.mubr.bf16.gmra.mrb[0].mxu0 %v340
      %v707 = vpop.f32.mrb[0].mxu0
      %v708 = vadd.f32 %v644, %v707
      %v709 = vpop.f32.mrb[0].mxu0
      %v710 = vpop.f32.mrb[0].mxu0
      %v711 = vadd.f32 %v647, %v710
      %v712 = vpop.f32.mrb[0].mxu0
      %713 = vmatprep.mubr.bf16.mxu0 %v346
      %714 = vmatmul.mubr.bf16.gmra.mrb[0].mxu0 %v345
      %v715 = vpop.f32.mrb[0].mxu0
      %v716 = vadd.f32 %v652, %v715
      %v717 = vpop.f32.mrb[0].mxu0
      %v718 = vpop.f32.mrb[0].mxu0
      %v719 = vpop.f32.mrb[0].mxu0
      %720 = vdwg.mxu0
      %721 = vmatprep.subr.bf16.mxu0 0
      %722 = vmatpush1.bf16.msra.mxu0 %v540
      %723 = vmatprep.subr.bf16.mxu0 0
      %724 = vmatpush1.bf16.msra.mxu0 %v541
      %725 = vmatprep.subr.bf16.mxu0 0
      %726 = vmatpush1.bf16.msra.mxu0 %v542
      %727 = vmatprep.subr.bf16.mxu0 0
      %728 = vmatpush1.bf16.msra.mxu0 %v543
      %729 = vmatprep.subr.bf16.mxu0 0
      %730 = vmatpush1.bf16.msra.mxu0 0
      %731 = vmatprep.subr.bf16.mxu0 0
      %732 = vmatpush1.bf16.msra.mxu0 0
      %733 = vmatprep.subr.bf16.mxu0 0
      %734 = vmatpush1.bf16.msra.mxu0 0
      %735 = vmatprep.subr.bf16.mxu0 0
      %736 = vmatpush1.bf16.msra.mxu0 0
      %737 = vmatprep.subr.bf16.mxu0 0
      %738 = vmatpush1.bf16.msra.mxu0 0
      %739 = vmatprep.subr.bf16.mxu0 0
      %740 = vmatpush1.bf16.msra.mxu0 0
      %741 = vmatprep.subr.bf16.mxu0 0
      %742 = vmatpush1.bf16.msra.mxu0 0
      %743 = vmatprep.subr.bf16.mxu0 0
      %744 = vmatpush1.bf16.msra.mxu0 0
      %745 = vmatprep.subr.bf16.mxu0 0
      %746 = vmatpush1.bf16.msra.mxu0 0
      %747 = vmatprep.subr.bf16.mxu0 0
      %748 = vmatpush1.bf16.msra.mxu0 0
      %749 = vmatprep.subr.bf16.mxu0 0
      %750 = vmatpush1.bf16.msra.mxu0 0
      %751 = vmatprep.subr.bf16.mxu0 0
      %752 = vmatpush1.bf16.msra.mxu0 0
      %753 = vmatprep.mubr.bf16.mxu0 0
      %754 = vmatmul.mubr.bf16.gmra.mrb[0].mxu0 %v582
      %v755 = vpop.f32.mrb[0].mxu0
      %v756 = vadd.f32 %v692, %v755
      %v757 = vpop.f32.mrb[0].mxu0
      %v758 = vpop.f32.mrb[0].mxu0
      %v759 = vadd.f32 %v695, %v758
      %v760 = vpop.f32.mrb[0].mxu0
      %761 = vmatprep.mubr.bf16.mxu0 0
      %762 = vmatmul.mubr.bf16.gmra.mrb[0].mxu0 %v585
      %v763 = vpop.f32.mrb[0].mxu0
      %v764 = vadd.f32 %v700, %v763
      %v765 = vpop.f32.mrb[0].mxu0
      %v766 = vpop.f32.mrb[0].mxu0
      %v767 = vadd.f32 %v703, %v766
      %v768 = vpop.f32.mrb[0].mxu0
      %769 = vmatprep.mubr.bf16.mxu0 0
      %770 = vmatmul.mubr.bf16.gmra.mrb[0].mxu0 %v588
      %v771 = vpop.f32.mrb[0].mxu0
      %v772 = vadd.f32 %v708, %v771
      %v773 = vpop.f32.mrb[0].mxu0
      %v774 = vpop.f32.mrb[0].mxu0
      %v775 = vadd.f32 %v711, %v774
      %v776 = vpop.f32.mrb[0].mxu0
      %777 = vmatprep.mubr.bf16.mxu0 0
      %778 = vmatmul.mubr.bf16.gmra.mrb[0].mxu0 %v591
      %v779 = vpop.f32.mrb[0].mxu0
      %v780 = vadd.f32 %v716, %v779
      %v781 = vpop.f32.mrb[0].mxu0
      %v782 = vpop.f32.mrb[0].mxu0
      %v783 = vpop.f32.mrb[0].mxu0
      %784 = vdwg.mxu0
      %v785 = vmax.f32 %v756, 0.0
      %v786 = vmax.f32 %v759, 0.0
      %v787 = vmax.f32 %v764, 0.0
      %v788 = vmax.f32 %v767, 0.0
      %v789 = vmax.f32 %v772, 0.0
      %v790 = vmax.f32 %v775, 0.0
      %v791 = vmax.f32 %v780, 0.0
      %v792 = vpack.c.bf16 %v786, %v785
      %v793 = vpack.c.bf16 %v788, %v787
      %v794 = vpack.c.bf16 %v790, %v789
      %v795 = vpack.c.bf16 %v791, %v791
      %v800 = vunpack.c.l.b16 %v792
      %v801 = vunpack.c.h.b16 %v792
      %v802 = vunpack.c.l.b16 %v793
      %v803 = vunpack.c.h.b16 %v793
      %v804 = vunpack.c.l.b16 %v794
      %v805 = vunpack.c.h.b16 %v794
      %v806 = vunpack.c.l.b16 %v795
      %v807 = vpack.c.b16 %v800, %v800
      %v808 = vpack.c.b16 %v801, %v801
      %v809 = vpack.c.b16 %v802, %v802
      %v810 = vpack.c.b16 %v803, %v803
      %v811 = vpack.c.b16 %v804, %v804
      %v812 = vpack.c.b16 %v805, %v805
      %v813 = vpack.c.b16 %v806, %v806
      %vm821 = vcmask 519168
      %822 = vst.msk [vmem:[%s170] sm:$0xf] %vm821, %v807
      %823 = vst.msk [vmem:[%s170 + $0x4] sm:$0xf] %vm821, %v808
      %824 = vst.msk [vmem:[%s170 + $0x8] sm:$0xf] %vm821, %v809
      %825 = vst.msk [vmem:[%s170 + $0xc] sm:$0xf] %vm821, %v810
      %826 = vst.msk [vmem:[%s170 + $0x10] sm:$0xf] %vm821, %v811
      %827 = vst.msk [vmem:[%s170 + $0x14] sm:$0xf] %vm821, %v812
      %vm828 = vcmask 516096
      %vm829 = vsmask.f32 256
      %vm830 = vmand %vm828, %vm829
      %v831 = vld [vmem:[%s170 + $0x18] sm:$0x1]
      %v832 = vsel %vm830, %v813, %v831
      %833 = vst [vmem:[%s170 + $0x18] sm:$0x1] %v832
      %p834 = scmp.lt.s32.totalorder %s14, 1
      %s835 = scalar_select %p834, %s14, 1
      %s836 = smul.addr %s835, 7
      %s837 = smul.addr %s836, 4
      %s838 = scalar_lea.vmem %s3, %s837
      // Predicated region
      $region33: #{dueling_dqn_forward.6} parent=31 // pred_check
        %p839 = pneg %p100
      $region34: #{dueling_dqn_forward.6} parent=31 // pred_check_branch
        %841 = sbr.rel (%p839) target = $region36
      $region35: #{dueling_dqn_forward.6} parent=31 // pred_region
        _
      $region36: #{dueling_dqn_forward.6} parent=31 // pred_fallthru
        _
    $region32: #{dueling_dqn_forward.6} parent=5 // pred_fallthru
      _
    %p842 = scmp.le.s32.totalorder 2, %s9
    // Predicated region
    $region37: #{dueling_dqn_forward.6} parent=5 // pred_check
      %p843 = pneg %p842
    $region38: #{dueling_dqn_forward.6} parent=5 // pred_check_branch
      %845 = sbr.rel (%p843) target = $region40
    $region39: #{dueling_dqn_forward.6} parent=5 // pred_region
      %s846 = ssub.s32 %s9, 2
      // Predicated region
      $region41: #{dueling_dqn_forward.6} parent=39 // pred_check
        %p847 = pneg %p106
      $region42: #{dueling_dqn_forward.6} parent=39 // pred_check_branch
        %849 = sbr.rel (%p847) target = $region44
      $region43: #{dueling_dqn_forward.6} parent=39 // pred_region
        %p850 = scmp.lt.s32.totalorder %s15, 1
        %s851 = scalar_select %p850, %s15, 1
        %s852 = smul.addr %s851, 7
        %s853 = smul.addr %s852, 4
        %s854 = scalar_lea.vmem %s3, %s853
      $region44: #{dueling_dqn_forward.6} parent=39 // pred_fallthru
        _
    $region40: #{dueling_dqn_forward.6} parent=5 // pred_fallthru
      _
  $region6: #{dueling_dqn_forward.6} parent=0 // loop_footer
    %s13 = sadd.s32 1, %s9
  $region7: #{dueling_dqn_forward.6} parent=0 // loop_footer_branch
    %8 = sbr.rel target = $region3
  $region8: #{dueling_dqn_forward.6} parent=0 // loop_exit
    _

// kernel: dueling_dqn_forward.7
$region0: #{dueling_dqn_forward.7}
  #allocation0 [shape = 'u32[]', space=smem, size = 0x4, offset = 0x4, fixed_abs, tag = 'smem constant byte address 0x4 - core index']
  #allocation1 [shape = 'u32[144,128]{1,0:T(1,128)}', space=vmem, size = 0x12000, scoped, tag = 'internal scratch']
  %s0 = inlined_call_operand.vmem [shape: bf16[2,3136], index: 0, kind: input, shape index: {}]
  %s1 = inlined_call_operand.vmem [shape: bf16[3136,512], index: 1, kind: input, shape index: {}]
  %s2 = inlined_call_operand.vmem [shape: f32[1,512], index: 2, kind: input, shape index: {}]
  %s3 = inlined_call_operand.vmem [shape: bf16[512,13], index: 3, kind: input, shape index: {}]
  %s4 = inlined_call_operand.vmem [shape: f32[1,13], index: 4, kind: input, shape index: {}]
  %s5 = inlined_call_operand.hbm [shape: f32[2,12], index: 5, kind: output, shape index: {}]
  %s6 = sld [smem:[#allocation0]]
  $region30: #{dueling_dqn_forward.7} parent=0
    _
  %s8 = ssub.s32 1, %s6
  %s9 = scalar_select 0, %s8, %s6
  $region1: #{dueling_dqn_forward.7} parent=0
    #allocation2 [shape = 'u8[1024]{0}', space=vmem, size = 0x400, scoped, tag = 'output window, operand 0, single buffered']
    #allocation3 [shape = 's32[1]{0}', space=sflag, size = 0x4, scoped, tag = 'scoped memory for dueling_dqn_forward.7']
    %10 = vsyncpa [#allocation3], 0
    // Predicated region
    $region2: #{dueling_dqn_forward.7} parent=1 // pred_check
      _
    $region3: #{dueling_dqn_forward.7} parent=1 // pred_check_branch
      %12 = sbr.rel (0) target = $region5
    $region4: #{dueling_dqn_forward.7} parent=1 // pred_region
      _
    $region5: #{dueling_dqn_forward.7} parent=1 // pred_fallthru
      _
    // Predicated region
    $region6: #{dueling_dqn_forward.7} parent=1 // pred_check
      _
    $region7: #{dueling_dqn_forward.7} parent=1 // pred_check_branch
      %14 = sbr.rel (0) target = $region9
    $region8: #{dueling_dqn_forward.7} parent=1 // pred_region
      _
    $region9: #{dueling_dqn_forward.7} parent=1 // pred_fallthru
      _
    // Predicated region
    $region10: #{dueling_dqn_forward.7} parent=1 // pred_check
      _
    $region11: #{dueling_dqn_forward.7} parent=1 // pred_check_branch
      %16 = sbr.rel (0) target = $region13
    $region12: #{dueling_dqn_forward.7} parent=1 // pred_region
      _
    $region13: #{dueling_dqn_forward.7} parent=1 // pred_fallthru
      _
    // Predicated region
    $region14: #{dueling_dqn_forward.7} parent=1 // pred_check
      _
    $region15: #{dueling_dqn_forward.7} parent=1 // pred_check_branch
      %18 = sbr.rel (0) target = $region17
    $region16: #{dueling_dqn_forward.7} parent=1 // pred_region
      _
    $region17: #{dueling_dqn_forward.7} parent=1 // pred_fallthru
      _
    // Predicated region
    $region18: #{dueling_dqn_forward.7} parent=1 // pred_check
      _
    $region19: #{dueling_dqn_forward.7} parent=1 // pred_check_branch
      %20 = sbr.rel (0) target = $region21
    $region20: #{dueling_dqn_forward.7} parent=1 // pred_region
      _
    $region21: #{dueling_dqn_forward.7} parent=1 // pred_fallthru
      _
    %v22 = vld [vmem:[%s0] sm:$0xff]
    %v23 = vld [vmem:[%s0 + $0x8] sm:$0xff]
    %v24 = vld [vmem:[%s0 + $0x10] sm:$0xff]
    %v25 = vld [vmem:[%s0 + $0x18] sm:$0x1]
    %v26 = vld [vmem:[%s1] sm:$0xff]
    %v27 = vld [vmem:[%s1 + $0x8] sm:$0xff]
    %v28 = vld [vmem:[%s1 + $0x10] sm:$0xff]
    %v29 = vld [vmem:[%s1 + $0x18] sm:$0xff]
    %v30 = vld [vmem:[%s1 + $0x20] sm:$0xff]
    %v31 = vld [vmem:[%s1 + $0x28] sm:$0xff]
    %v32 = vld [vmem:[%s1 + $0x30] sm:$0xff]
    %v33 = vld [vmem:[%s1 + $0x38] sm:$0xff]
    %v34 = vld [vmem:[%s1 + $0x40] sm:$0xff]
    %v35 = vld [vmem:[%s1 + $0x48] sm:$0xff]
    %v36 = vld [vmem:[%s1 + $0x50] sm:$0xff]
    %v37 = vld [vmem:[%s1 + $0x58] sm:$0xff]
    %v38 = vld [vmem:[%s1 + $0x60] sm:$0xff]
    %v39 = vld [vmem:[%s1 + $0x68] sm:$0xff]
    %v40 = vld [vmem:[%s1 + $0x70] sm:$0xff]
    %v41 = vld [vmem:[%s1 + $0x78] sm:$0xff]
    %v42 = vld [vmem:[%s1 + $0x80] sm:$0xff]
    %v43 = vld [vmem:[%s1 + $0x88] sm:$0xff]
    %v44 = vld [vmem:[%s1 + $0x90] sm:$0xff]
    %v45 = vld [vmem:[%s1 + $0x98] sm:$0xff]
    %v46 = vld [vmem:[%s1 + $0xa0] sm:$0xff]
    %v47 = vld [vmem:[%s1 + $0xa8] sm:$0xff]
    %v48 = vld [vmem:[%s1 + $0xb0] sm:$0xff]
    %v49 = vld [vmem:[%s1 + $0xb8] sm:$0xff]
    %v50 = vld [vmem:[%s1 + $0xc0] sm:$0xff]
    %v51 = vld [vmem:[%s1 + $0xc8] sm:$0xff]
    %v52 = vld [vmem:[%s1 + $0xd0] sm:$0xff]
    %v53 = vld [vmem:[%s1 + $0xd8] sm:$0xff]
    %v54 = vld [vmem:[%s1 + $0xe0] sm:$0xff]
    %v55 = vld [vmem:[%s1 + $0xe8] sm:$0xff]
    %v56 = vld [vmem:[%s1 + $0xf0] sm:$0xff]
    %v57 = vld [vmem:[%s1 + $0xf8] sm:$0xff]
    %v58 = vld [vmem:[%s1 + $0x100] sm:$0xff]
    %v59 = vld [vmem:[%s1 + $0x108] sm:$0xff]
    %v60 = vld [vmem:[%s1 + $0x110] sm:$0xff]
    %v61 = vld [vmem:[%s1 + $0x118] sm:$0xff]
    %v62 = vld [vmem:[%s1 + $0x120] sm:$0xff]
    %v63 = vld [vmem:[%s1 + $0x128] sm:$0xff]
    %v64 = vld [vmem:[%s1 + $0x130] sm:$0xff]
    %v65 = vld [vmem:[%s1 + $0x138] sm:$0xff]
    %v66 = vld [vmem:[%s1 + $0x140] sm:$0xff]
    %v67 = vld [vmem:[%s1 + $0x148] sm:$0xff]
    %v68 = vld [vmem:[%s1 + $0x150] sm:$0xff]
    %v69 = vld [vmem:[%s1 + $0x158] sm:$0xff]
    %v70 = vld [vmem:[%s1 + $0x160] sm:$0xff]
    %v71 = vld [vmem:[%s1 + $0x168] sm:$0xff]
    %v72 = vld [vmem:[%s1 + $0x170] sm:$0xff]
    %v73 = vld [vmem:[%s1 + $0x178] sm:$0xff]
    %v74 = vld [vmem:[%s1 + $0x180] sm:$0xff]
    %v75 = vld [vmem:[%s1 + $0x188] sm:$0xff]
    %v76 = vld [vmem:[%s1 + $0x190] sm:$0xff]
    %v77 = vld [vmem:[%s1 + $0x198] sm:$0xff]
    %v78 = vld [vmem:[%s1 + $0x1a0] sm:$0xff]
    %v79 = vld [vmem:[%s1 + $0x1a8] sm:$0xff]
    %v80 = vld [vmem:[%s1 + $0x1b0] sm:$0xff]
    %v81 = vld [vmem:[%s1 + $0x1b8] sm:$0xff]
    %v82 = vld [vmem:[%s1 + $0x1c0] sm:$0xff]
    %v83 = vld [vmem:[%s1 + $0x1c8] sm:$0xff]
    %v84 = vld [vmem:[%s1 + $0x1d0] sm:$0xff]
    %v85 = vld [vmem:[%s1 + $0x1d8] sm:$0xff]
    %v86 = vld [vmem:[%s1 + $0x1e0] sm:$0xff]
    %v87 = vld [vmem:[%s1 + $0x1e8] sm:$0xff]
    %v88 = vld [vmem:[%s1 + $0x1f0] sm:$0xff]
    %v89 = vld [vmem:[%s1 + $0x1f8] sm:$0xff]
    %v90 = vld [vmem:[%s1 + $0x200] sm:$0xff]
    %v91 = vld [vmem:[%s1 + $0x208] sm:$0xff]
    %v92 = vld [vmem:[%s1 + $0x210] sm:$0xff]
    %v93 = vld [vmem:[%s1 + $0x218] sm:$0xff]
    %v94 = vld [vmem:[%s1 + $0x220] sm:$0xff]
    %v95 = vld [vmem:[%s1 + $0x228] sm:$0xff]
    %v96 = vld [vmem:[%s1 + $0x230] sm:$0xff]
    %v97 = vld [vmem:[%s1 + $0x238] sm:$0xff]
    %v98 = vld [vmem:[%s1 + $0x240] sm:$0xff]
    %v99 = vld [vmem:[%s1 + $0x248] sm:$0xff]
    %v100 = vld [vmem:[%s1 + $0x250] sm:$0xff]
    %v101 = vld [vmem:[%s1 + $0x258] sm:$0xff]
    %v102 = vld [vmem:[%s1 + $0x260] sm:$0xff]
    %v103 = vld [vmem:[%s1 + $0x268] sm:$0xff]
    %v104 = vld [vmem:[%s1 + $0x270] sm:$0xff]
    %v105 = vld [vmem:[%s1 + $0x278] sm:$0xff]
    %v106 = vld [vmem:[%s1 + $0x280] sm:$0xff]
    %v107 = vld [vmem:[%s1 + $0x288] sm:$0xff]
    %v108 = vld [vmem:[%s1 + $0x290] sm:$0xff]
    %v109 = vld [vmem:[%s1 + $0x298] sm:$0xff]
    %v110 = vld [vmem:[%s1 + $0x2a0] sm:$0xff]
    %v111 = vld [vmem:[%s1 + $0x2a8] sm:$0xff]
    %v112 = vld [vmem:[%s1 + $0x2b0] sm:$0xff]
    %v113 = vld [vmem:[%s1 + $0x2b8] sm:$0xff]
    %v114 = vld [vmem:[%s1 + $0x2c0] sm:$0xff]
    %v115 = vld [vmem:[%s1 + $0x2c8] sm:$0xff]
    %v116 = vld [vmem:[%s1 + $0x2d0] sm:$0xff]
    %v117 = vld [vmem:[%s1 + $0x2d8] sm:$0xff]
    %v118 = vld [vmem:[%s1 + $0x2e0] sm:$0xff]
    %v119 = vld [vmem:[%s1 + $0x2e8] sm:$0xff]
    %v120 = vld [vmem:[%s1 + $0x2f0] sm:$0xff]
    %v121 = vld [vmem:[%s1 + $0x2f8] sm:$0xff]
    %v122 = vld [vmem:[%s1 + $0x300] sm:$0xff]
    %v123 = vld [vmem:[%s1 + $0x308] sm:$0xff]
    %v124 = vld [vmem:[%s1 + $0x310] sm:$0xff]
    %v125 = vld [vmem:[%s1 + $0x318] sm:$0xff]
    %v126 = vld [vmem:[%s1 + $0x320] sm:$0xff]
    %v127 = vld [vmem:[%s1 + $0x328] sm:$0xff]
    %v128 = vld [vmem:[%s1 + $0x330] sm:$0xff]
    %v129 = vld [vmem:[%s1 + $0x338] sm:$0xff]
    %v130 = vld [vmem:[%s1 + $0x340] sm:$0xff]
    %v131 = vld [vmem:[%s1 + $0x348] sm:$0xff]
    %v132 = vld [vmem:[%s1 + $0x350] sm:$0xff]
    %v133 = vld [vmem:[%s1 + $0x358] sm:$0xff]
    %v134 = vld [vmem:[%s1 + $0x360] sm:$0xff]
    %v135 = vld [vmem:[%s1 + $0x368] sm:$0xff]
    %v136 = vld [vmem:[%s1 + $0x370] sm:$0xff]
    %v137 = vld [vmem:[%s1 + $0x378] sm:$0xff]
    %v138 = vld [vmem:[%s1 + $0x380] sm:$0xff]
    %v139 = vld [vmem:[%s1 + $0x388] sm:$0xff]
    %v140 = vld [vmem:[%s1 + $0x390] sm:$0xff]
    %v141 = vld [vmem:[%s1 + $0x398] sm:$0xff]
    %v142 = vld [vmem:[%s1 + $0x3a0] sm:$0xff]
    %v143 = vld [vmem:[%s1 + $0x3a8] sm:$0xff]
    %v144 = vld [vmem:[%s1 + $0x3b0] sm:$0xff]
    %v145 = vld [vmem:[%s1 + $0x3b8] sm:$0xff]
    %v146 = vld [vmem:[%s1 + $0x3c0] sm:$0xff]
    %v147 = vld [vmem:[%s1 + $0x3c8] sm:$0xff]
    %v148 = vld [vmem:[%s1 + $0x3d0] sm:$0xff]
    %v149 = vld [vmem:[%s1 + $0x3d8] sm:$0xff]
    %v150 = vld [vmem:[%s1 + $0x3e0] sm:$0xff]
    %v151 = vld [vmem:[%s1 + $0x3e8] sm:$0xff]
    %v152 = vld [vmem:[%s1 + $0x3f0] sm:$0xff]
    %v153 = vld [vmem:[%s1 + $0x3f8] sm:$0xff]
    %v154 = vld [vmem:[%s1 + $0x400] sm:$0xff]
    %v155 = vld [vmem:[%s1 + $0x408] sm:$0xff]
    %v156 = vld [vmem:[%s1 + $0x410] sm:$0xff]
    %v157 = vld [vmem:[%s1 + $0x418] sm:$0xff]
    %v158 = vld [vmem:[%s1 + $0x420] sm:$0xff]
    %v159 = vld [vmem:[%s1 + $0x428] sm:$0xff]
    %v160 = vld [vmem:[%s1 + $0x430] sm:$0xff]
    %v161 = vld [vmem:[%s1 + $0x438] sm:$0xff]
    %v162 = vld [vmem:[%s1 + $0x440] sm:$0xff]
    %v163 = vld [vmem:[%s1 + $0x448] sm:$0xff]
    %v164 = vld [vmem:[%s1 + $0x450] sm:$0xff]
    %v165 = vld [vmem:[%s1 + $0x458] sm:$0xff]
    %v166 = vld [vmem:[%s1 + $0x460] sm:$0xff]
    %v167 = vld [vmem:[%s1 + $0x468] sm:$0xff]
    %v168 = vld [vmem:[%s1 + $0x470] sm:$0xff]
    %v169 = vld [vmem:[%s1 + $0x478] sm:$0xff]
    %v170 = vld [vmem:[%s1 + $0x480] sm:$0xff]
    %v171 = vld [vmem:[%s1 + $0x488] sm:$0xff]
    %v172 = vld [vmem:[%s1 + $0x490] sm:$0xff]
    %v173 = vld [vmem:[%s1 + $0x498] sm:$0xff]
    %v174 = vld [vmem:[%s1 + $0x4a0] sm:$0xff]
    %v175 = vld [vmem:[%s1 + $0x4a8] sm:$0xff]
    %v176 = vld [vmem:[%s1 + $0x4b0] sm:$0xff]
    %v177 = vld [vmem:[%s1 + $0x4b8] sm:$0xff]
    %v178 = vld [vmem:[%s1 + $0x4c0] sm:$0xff]
    %v179 = vld [vmem:[%s1 + $0x4c8] sm:$0xff]
    %v180 = vld [vmem:[%s1 + $0x4d0] sm:$0xff]
    %v181 = vld [vmem:[%s1 + $0x4d8] sm:$0xff]
    %v182 = vld [vmem:[%s1 + $0x4e0] sm:$0xff]
    %v183 = vld [vmem:[%s1 + $0x4e8] sm:$0xff]
    %v184 = vld [vmem:[%s1 + $0x4f0] sm:$0xff]
    %v185 = vld [vmem:[%s1 + $0x4f8] sm:$0xff]
    %v186 = vld [vmem:[%s1 + $0x500] sm:$0xff]
    %v187 = vld [vmem:[%s1 + $0x508] sm:$0xff]
    %v188 = vld [vmem:[%s1 + $0x510] sm:$0xff]
    %v189 = vld [vmem:[%s1 + $0x518] sm:$0xff]
    %v190 = vld [vmem:[%s1 + $0x520] sm:$0xff]
    %v191 = vld [vmem:[%s1 + $0x528] sm:$0xff]
    %v192 = vld [vmem:[%s1 + $0x530] sm:$0xff]
    %v193 = vld [vmem:[%s1 + $0x538] sm:$0xff]
    %v194 = vld [vmem:[%s1 + $0x540] sm:$0xff]
    %v195 = vld [vmem:[%s1 + $0x548] sm:$0xff]
    %v196 = vld [vmem:[%s1 + $0x550] sm:$0xff]
    %v197 = vld [vmem:[%s1 + $0x558] sm:$0xff]
    %v198 = vld [vmem:[%s1 + $0x560] sm:$0xff]
    %v199 = vld [vmem:[%s1 + $0x568] sm:$0xff]
    %v200 = vld [vmem:[%s1 + $0x570] sm:$0xff]
    %v201 = vld [vmem:[%s1 + $0x578] sm:$0xff]
    %v202 = vld [vmem:[%s1 + $0x580] sm:$0xff]
    %v203 = vld [vmem:[%s1 + $0x588] sm:$0xff]
    %v204 = vld [vmem:[%s1 + $0x590] sm:$0xff]
    %v205 = vld [vmem:[%s1 + $0x598] sm:$0xff]
    %v206 = vld [vmem:[%s1 + $0x5a0] sm:$0xff]
    %v207 = vld [vmem:[%s1 + $0x5a8] sm:$0xff]
    %v208 = vld [vmem:[%s1 + $0x5b0] sm:$0xff]
    %v209 = vld [vmem:[%s1 + $0x5b8] sm:$0xff]
    %v210 = vld [vmem:[%s1 + $0x5c0] sm:$0xff]
    %v211 = vld [vmem:[%s1 + $0x5c8] sm:$0xff]
    %v212 = vld [vmem:[%s1 + $0x5d0] sm:$0xff]
    %v213 = vld [vmem:[%s1 + $0x5d8] sm:$0xff]
    %v214 = vld [vmem:[%s1 + $0x5e0] sm:$0xff]
    %v215 = vld [vmem:[%s1 + $0x5e8] sm:$0xff]
    %v216 = vld [vmem:[%s1 + $0x5f0] sm:$0xff]
    %v217 = vld [vmem:[%s1 + $0x5f8] sm:$0xff]
    %v218 = vld [vmem:[%s1 + $0x600] sm:$0xff]
    %v219 = vld [vmem:[%s1 + $0x608] sm:$0xff]
    %v220 = vld [vmem:[%s1 + $0x610] sm:$0xff]
    %v221 = vld [vmem:[%s1 + $0x618] sm:$0xff]
    %v222 = vld [vmem:[%s1 + $0x620] sm:$0xff]
    %v223 = vld [vmem:[%s1 + $0x628] sm:$0xff]
    %v224 = vld [vmem:[%s1 + $0x630] sm:$0xff]
    %v225 = vld [vmem:[%s1 + $0x638] sm:$0xff]
    %v226 = vld [vmem:[%s1 + $0x640] sm:$0xff]
    %v227 = vld [vmem:[%s1 + $0x648] sm:$0xff]
    %v228 = vld [vmem:[%s1 + $0x650] sm:$0xff]
    %v229 = vld [vmem:[%s1 + $0x658] sm:$0xff]
    %v230 = vld [vmem:[%s1 + $0x660] sm:$0xff]
    %v231 = vld [vmem:[%s1 + $0x668] sm:$0xff]
    %v232 = vld [vmem:[%s1 + $0x670] sm:$0xff]
    %v233 = vld [vmem:[%s1 + $0x678] sm:$0xff]
    %v234 = vld [vmem:[%s1 + $0x680] sm:$0xff]
    %v235 = vld [vmem:[%s1 + $0x688] sm:$0xff]
    %v236 = vld [vmem:[%s1 + $0x690] sm:$0xff]
    %v237 = vld [vmem:[%s1 + $0x698] sm:$0xff]
    %v238 = vld [vmem:[%s1 + $0x6a0] sm:$0xff]
    %v239 = vld [vmem:[%s1 + $0x6a8] sm:$0xff]
    %v240 = vld [vmem:[%s1 + $0x6b0] sm:$0xff]
    %v241 = vld [vmem:[%s1 + $0x6b8] sm:$0xff]
    %v242 = vld [vmem:[%s1 + $0x6c0] sm:$0xff]
    %v243 = vld [vmem:[%s1 + $0x6c8] sm:$0xff]
    %v244 = vld [vmem:[%s1 + $0x6d0] sm:$0xff]
    %v245 = vld [vmem:[%s1 + $0x6d8] sm:$0xff]
    %v246 = vld [vmem:[%s1 + $0x6e0] sm:$0xff]
    %v247 = vld [vmem:[%s1 + $0x6e8] sm:$0xff]
    %v248 = vld [vmem:[%s1 + $0x6f0] sm:$0xff]
    %v249 = vld [vmem:[%s1 + $0x6f8] sm:$0xff]
    %v250 = vld [vmem:[%s1 + $0x700] sm:$0xff]
    %v251 = vld [vmem:[%s1 + $0x708] sm:$0xff]
    %v252 = vld [vmem:[%s1 + $0x710] sm:$0xff]
    %v253 = vld [vmem:[%s1 + $0x718] sm:$0xff]
    %v254 = vld [vmem:[%s1 + $0x720] sm:$0xff]
    %v255 = vld [vmem:[%s1 + $0x728] sm:$0xff]
    %v256 = vld [vmem:[%s1 + $0x730] sm:$0xff]
    %v257 = vld [vmem:[%s1 + $0x738] sm:$0xff]
    %v258 = vld [vmem:[%s1 + $0x740] sm:$0xff]
    %v259 = vld [vmem:[%s1 + $0x748] sm:$0xff]
    %v260 = vld [vmem:[%s1 + $0x750] sm:$0xff]
    %v261 = vld [vmem:[%s1 + $0x758] sm:$0xff]
    %v262 = vld [vmem:[%s1 + $0x760] sm:$0xff]
    %v263 = vld [vmem:[%s1 + $0x768] sm:$0xff]
    %v264 = vld [vmem:[%s1 + $0x770] sm:$0xff]
    %v265 = vld [vmem:[%s1 + $0x778] sm:$0xff]
    %v266 = vld [vmem:[%s1 + $0x780] sm:$0xff]
    %v267 = vld [vmem:[%s1 + $0x788] sm:$0xff]
    %v268 = vld [vmem:[%s1 + $0x790] sm:$0xff]
    %v269 = vld [vmem:[%s1 + $0x798] sm:$0xff]
    %v270 = vld [vmem:[%s1 + $0x7a0] sm:$0xff]
    %v271 = vld [vmem:[%s1 + $0x7a8] sm:$0xff]
    %v272 = vld [vmem:[%s1 + $0x7b0] sm:$0xff]
    %v273 = vld [vmem:[%s1 + $0x7b8] sm:$0xff]
    %v274 = vld [vmem:[%s1 + $0x7c0] sm:$0xff]
    %v275 = vld [vmem:[%s1 + $0x7c8] sm:$0xff]
    %v276 = vld [vmem:[%s1 + $0x7d0] sm:$0xff]
    %v277 = vld [vmem:[%s1 + $0x7d8] sm:$0xff]
    %v278 = vld [vmem:[%s1 + $0x7e0] sm:$0xff]
    %v279 = vld [vmem:[%s1 + $0x7e8] sm:$0xff]
    %v280 = vld [vmem:[%s1 + $0x7f0] sm:$0xff]
    %v281 = vld [vmem:[%s1 + $0x7f8] sm:$0xff]
    %v282 = vld [vmem:[%s1 + $0x800] sm:$0xff]
    %v283 = vld [vmem:[%s1 + $0x808] sm:$0xff]
    %v284 = vld [vmem:[%s1 + $0x810] sm:$0xff]
    %v285 = vld [vmem:[%s1 + $0x818] sm:$0xff]
    %v286 = vld [vmem:[%s1 + $0x820] sm:$0xff]
    %v287 = vld [vmem:[%s1 + $0x828] sm:$0xff]
    %v288 = vld [vmem:[%s1 + $0x830] sm:$0xff]
    %v289 = vld [vmem:[%s1 + $0x838] sm:$0xff]
    %v290 = vld [vmem:[%s1 + $0x840] sm:$0xff]
    %v291 = vld [vmem:[%s1 + $0x848] sm:$0xff]
    %v292 = vld [vmem:[%s1 + $0x850] sm:$0xff]
    %v293 = vld [vmem:[%s1 + $0x858] sm:$0xff]
    %v294 = vld [vmem:[%s1 + $0x860] sm:$0xff]
    %v295 = vld [vmem:[%s1 + $0x868] sm:$0xff]
    %v296 = vld [vmem:[%s1 + $0x870] sm:$0xff]
    %v297 = vld [vmem:[%s1 + $0x878] sm:$0xff]
    %v298 = vld [vmem:[%s1 + $0x880] sm:$0xff]
    %v299 = vld [vmem:[%s1 + $0x888] sm:$0xff]
    %v300 = vld [vmem:[%s1 + $0x890] sm:$0xff]
    %v301 = vld [vmem:[%s1 + $0x898] sm:$0xff]
    %v302 = vld [vmem:[%s1 + $0x8a0] sm:$0xff]
    %v303 = vld [vmem:[%s1 + $0x8a8] sm:$0xff]
    %v304 = vld [vmem:[%s1 + $0x8b0] sm:$0xff]
    %v305 = vld [vmem:[%s1 + $0x8b8] sm:$0xff]
    %v306 = vld [vmem:[%s1 + $0x8c0] sm:$0xff]
    %v307 = vld [vmem:[%s1 + $0x8c8] sm:$0xff]
    %v308 = vld [vmem:[%s1 + $0x8d0] sm:$0xff]
    %v309 = vld [vmem:[%s1 + $0x8d8] sm:$0xff]
    %v310 = vld [vmem:[%s1 + $0x8e0] sm:$0xff]
    %v311 = vld [vmem:[%s1 + $0x8e8] sm:$0xff]
    %v312 = vld [vmem:[%s1 + $0x8f0] sm:$0xff]
    %v313 = vld [vmem:[%s1 + $0x8f8] sm:$0xff]
    %v314 = vld [vmem:[%s1 + $0x900] sm:$0xff]
    %v315 = vld [vmem:[%s1 + $0x908] sm:$0xff]
    %v316 = vld [vmem:[%s1 + $0x910] sm:$0xff]
    %v317 = vld [vmem:[%s1 + $0x918] sm:$0xff]
    %v318 = vld [vmem:[%s1 + $0x920] sm:$0xff]
    %v319 = vld [vmem:[%s1 + $0x928] sm:$0xff]
    %v320 = vld [vmem:[%s1 + $0x930] sm:$0xff]
    %v321 = vld [vmem:[%s1 + $0x938] sm:$0xff]
    %v322 = vld [vmem:[%s1 + $0x940] sm:$0xff]
    %v323 = vld [vmem:[%s1 + $0x948] sm:$0xff]
    %v324 = vld [vmem:[%s1 + $0x950] sm:$0xff]
    %v325 = vld [vmem:[%s1 + $0x958] sm:$0xff]
    %v326 = vld [vmem:[%s1 + $0x960] sm:$0xff]
    %v327 = vld [vmem:[%s1 + $0x968] sm:$0xff]
    %v328 = vld [vmem:[%s1 + $0x970] sm:$0xff]
    %v329 = vld [vmem:[%s1 + $0x978] sm:$0xff]
    %v330 = vld [vmem:[%s1 + $0x980] sm:$0xff]
    %v331 = vld [vmem:[%s1 + $0x988] sm:$0xff]
    %v332 = vld [vmem:[%s1 + $0x990] sm:$0xff]
    %v333 = vld [vmem:[%s1 + $0x998] sm:$0xff]
    %v334 = vld [vmem:[%s1 + $0x9a0] sm:$0xff]
    %v335 = vld [vmem:[%s1 + $0x9a8] sm:$0xff]
    %v336 = vld [vmem:[%s1 + $0x9b0] sm:$0xff]
    %v337 = vld [vmem:[%s1 + $0x9b8] sm:$0xff]
    %v338 = vld [vmem:[%s1 + $0x9c0] sm:$0xff]
    %v339 = vld [vmem:[%s1 + $0x9c8] sm:$0xff]
    %v340 = vld [vmem:[%s1 + $0x9d0] sm:$0xff]
    %v341 = vld [vmem:[%s1 + $0x9d8] sm:$0xff]
    %v342 = vld [vmem:[%s1 + $0x9e0] sm:$0xff]
    %v343 = vld [vmem:[%s1 + $0x9e8] sm:$0xff]
    %v344 = vld [vmem:[%s1 + $0x9f0] sm:$0xff]
    %v345 = vld [vmem:[%s1 + $0x9f8] sm:$0xff]
    %v346 = vld [vmem:[%s1 + $0xa00] sm:$0xff]
    %v347 = vld [vmem:[%s1 + $0xa08] sm:$0xff]
    %v348 = vld [vmem:[%s1 + $0xa10] sm:$0xff]
    %v349 = vld [vmem:[%s1 + $0xa18] sm:$0xff]
    %v350 = vld [vmem:[%s1 + $0xa20] sm:$0xff]
    %v351 = vld [vmem:[%s1 + $0xa28] sm:$0xff]
    %v352 = vld [vmem:[%s1 + $0xa30] sm:$0xff]
    %v353 = vld [vmem:[%s1 + $0xa38] sm:$0xff]
    %v354 = vld [vmem:[%s1 + $0xa40] sm:$0xff]
    %v355 = vld [vmem:[%s1 + $0xa48] sm:$0xff]
    %v356 = vld [vmem:[%s1 + $0xa50] sm:$0xff]
    %v357 = vld [vmem:[%s1 + $0xa58] sm:$0xff]
    %v358 = vld [vmem:[%s1 + $0xa60] sm:$0xff]
    %v359 = vld [vmem:[%s1 + $0xa68] sm:$0xff]
    %v360 = vld [vmem:[%s1 + $0xa70] sm:$0xff]
    %v361 = vld [vmem:[%s1 + $0xa78] sm:$0xff]
    %v362 = vld [vmem:[%s1 + $0xa80] sm:$0xff]
    %v363 = vld [vmem:[%s1 + $0xa88] sm:$0xff]
    %v364 = vld [vmem:[%s1 + $0xa90] sm:$0xff]
    %v365 = vld [vmem:[%s1 + $0xa98] sm:$0xff]
    %v366 = vld [vmem:[%s1 + $0xaa0] sm:$0xff]
    %v367 = vld [vmem:[%s1 + $0xaa8] sm:$0xff]
    %v368 = vld [vmem:[%s1 + $0xab0] sm:$0xff]
    %v369 = vld [vmem:[%s1 + $0xab8] sm:$0xff]
    %v370 = vld [vmem:[%s1 + $0xac0] sm:$0xff]
    %v371 = vld [vmem:[%s1 + $0xac8] sm:$0xff]
    %v372 = vld [vmem:[%s1 + $0xad0] sm:$0xff]
    %v373 = vld [vmem:[%s1 + $0xad8] sm:$0xff]
    %v374 = vld [vmem:[%s1 + $0xae0] sm:$0xff]
    %v375 = vld [vmem:[%s1 + $0xae8] sm:$0xff]
    %v376 = vld [vmem:[%s1 + $0xaf0] sm:$0xff]
    %v377 = vld [vmem:[%s1 + $0xaf8] sm:$0xff]
    %v378 = vld [vmem:[%s1 + $0xb00] sm:$0xff]
    %v379 = vld [vmem:[%s1 + $0xb08] sm:$0xff]
    %v380 = vld [vmem:[%s1 + $0xb10] sm:$0xff]
    %v381 = vld [vmem:[%s1 + $0xb18] sm:$0xff]
    %v382 = vld [vmem:[%s1 + $0xb20] sm:$0xff]
    %v383 = vld [vmem:[%s1 + $0xb28] sm:$0xff]
    %v384 = vld [vmem:[%s1 + $0xb30] sm:$0xff]
    %v385 = vld [vmem:[%s1 + $0xb38] sm:$0xff]
    %v386 = vld [vmem:[%s1 + $0xb40] sm:$0xff]
    %v387 = vld [vmem:[%s1 + $0xb48] sm:$0xff]
    %v388 = vld [vmem:[%s1 + $0xb50] sm:$0xff]
    %v389 = vld [vmem:[%s1 + $0xb58] sm:$0xff]
    %v390 = vld [vmem:[%s1 + $0xb60] sm:$0xff]
    %v391 = vld [vmem:[%s1 + $0xb68] sm:$0xff]
    %v392 = vld [vmem:[%s1 + $0xb70] sm:$0xff]
    %v393 = vld [vmem:[%s1 + $0xb78] sm:$0xff]
    %v394 = vld [vmem:[%s1 + $0xb80] sm:$0xff]
    %v395 = vld [vmem:[%s1 + $0xb88] sm:$0xff]
    %v396 = vld [vmem:[%s1 + $0xb90] sm:$0xff]
    %v397 = vld [vmem:[%s1 + $0xb98] sm:$0xff]
    %v398 = vld [vmem:[%s1 + $0xba0] sm:$0xff]
    %v399 = vld [vmem:[%s1 + $0xba8] sm:$0xff]
    %v400 = vld [vmem:[%s1 + $0xbb0] sm:$0xff]
    %v401 = vld [vmem:[%s1 + $0xbb8] sm:$0xff]
    %v402 = vld [vmem:[%s1 + $0xbc0] sm:$0xff]
    %v403 = vld [vmem:[%s1 + $0xbc8] sm:$0xff]
    %v404 = vld [vmem:[%s1 + $0xbd0] sm:$0xff]
    %v405 = vld [vmem:[%s1 + $0xbd8] sm:$0xff]
    %v406 = vld [vmem:[%s1 + $0xbe0] sm:$0xff]
    %v407 = vld [vmem:[%s1 + $0xbe8] sm:$0xff]
    %v408 = vld [vmem:[%s1 + $0xbf0] sm:$0xff]
    %v409 = vld [vmem:[%s1 + $0xbf8] sm:$0xff]
    %v410 = vld [vmem:[%s1 + $0xc00] sm:$0xff]
    %v411 = vld [vmem:[%s1 + $0xc08] sm:$0xff]
    %v412 = vld [vmem:[%s1 + $0xc10] sm:$0xff]
    %v413 = vld [vmem:[%s1 + $0xc18] sm:$0xff]
    %v414 = vld [vmem:[%s1 + $0xc20] sm:$0xff]
    %v415 = vld [vmem:[%s1 + $0xc28] sm:$0xff]
    %v416 = vld [vmem:[%s1 + $0xc30] sm:$0xff]
    %v417 = vld [vmem:[%s1 + $0xc38] sm:$0xff]
    %v418 = vld [vmem:[%s1 + $0xc40] sm:$0xff]
    %v419 = vld [vmem:[%s1 + $0xc48] sm:$0xff]
    %v420 = vld [vmem:[%s1 + $0xc50] sm:$0xff]
    %v421 = vld [vmem:[%s1 + $0xc58] sm:$0xff]
    %v422 = vld [vmem:[%s1 + $0xc60] sm:$0xff]
    %v423 = vld [vmem:[%s1 + $0xc68] sm:$0xff]
    %v424 = vld [vmem:[%s1 + $0xc70] sm:$0xff]
    %v425 = vld [vmem:[%s1 + $0xc78] sm:$0xff]
    %v426 = vld [vmem:[%s1 + $0xc80] sm:$0xff]
    %v427 = vld [vmem:[%s1 + $0xc88] sm:$0xff]
    %v428 = vld [vmem:[%s1 + $0xc90] sm:$0xff]
    %v429 = vld [vmem:[%s1 + $0xc98] sm:$0xff]
    %v430 = vld [vmem:[%s1 + $0xca0] sm:$0xff]
    %v431 = vld [vmem:[%s1 + $0xca8] sm:$0xff]
    %v432 = vld [vmem:[%s1 + $0xcb0] sm:$0xff]
    %v433 = vld [vmem:[%s1 + $0xcb8] sm:$0xff]
    %v434 = vld [vmem:[%s1 + $0xcc0] sm:$0xff]
    %v435 = vld [vmem:[%s1 + $0xcc8] sm:$0xff]
    %v436 = vld [vmem:[%s1 + $0xcd0] sm:$0xff]
    %v437 = vld [vmem:[%s1 + $0xcd8] sm:$0xff]
    %v438 = vld [vmem:[%s1 + $0xce0] sm:$0xff]
    %v439 = vld [vmem:[%s1 + $0xce8] sm:$0xff]
    %v440 = vld [vmem:[%s1 + $0xcf0] sm:$0xff]
    %v441 = vld [vmem:[%s1 + $0xcf8] sm:$0xff]
    %v442 = vld [vmem:[%s1 + $0xd00] sm:$0xff]
    %v443 = vld [vmem:[%s1 + $0xd08] sm:$0xff]
    %v444 = vld [vmem:[%s1 + $0xd10] sm:$0xff]
    %v445 = vld [vmem:[%s1 + $0xd18] sm:$0xff]
    %v446 = vld [vmem:[%s1 + $0xd20] sm:$0xff]
    %v447 = vld [vmem:[%s1 + $0xd28] sm:$0xff]
    %v448 = vld [vmem:[%s1 + $0xd30] sm:$0xff]
    %v449 = vld [vmem:[%s1 + $0xd38] sm:$0xff]
    %v450 = vld [vmem:[%s1 + $0xd40] sm:$0xff]
    %v451 = vld [vmem:[%s1 + $0xd48] sm:$0xff]
    %v452 = vld [vmem:[%s1 + $0xd50] sm:$0xff]
    %v453 = vld [vmem:[%s1 + $0xd58] sm:$0xff]
    %v454 = vld [vmem:[%s1 + $0xd60] sm:$0xff]
    %v455 = vld [vmem:[%s1 + $0xd68] sm:$0xff]
    %v456 = vld [vmem:[%s1 + $0xd70] sm:$0xff]
    %v457 = vld [vmem:[%s1 + $0xd78] sm:$0xff]
    %v458 = vld [vmem:[%s1 + $0xd80] sm:$0xff]
    %v459 = vld [vmem:[%s1 + $0xd88] sm:$0xff]
    %v460 = vld [vmem:[%s1 + $0xd90] sm:$0xff]
    %v461 = vld [vmem:[%s1 + $0xd98] sm:$0xff]
    %v462 = vld [vmem:[%s1 + $0xda0] sm:$0xff]
    %v463 = vld [vmem:[%s1 + $0xda8] sm:$0xff]
    %v464 = vld [vmem:[%s1 + $0xdb0] sm:$0xff]
    %v465 = vld [vmem:[%s1 + $0xdb8] sm:$0xff]
    %v466 = vld [vmem:[%s1 + $0xdc0] sm:$0xff]
    %v467 = vld [vmem:[%s1 + $0xdc8] sm:$0xff]
    %v468 = vld [vmem:[%s1 + $0xdd0] sm:$0xff]
    %v469 = vld [vmem:[%s1 + $0xdd8] sm:$0xff]
    %v470 = vld [vmem:[%s1 + $0xde0] sm:$0xff]
    %v471 = vld [vmem:[%s1 + $0xde8] sm:$0xff]
    %v472 = vld [vmem:[%s1 + $0xdf0] sm:$0xff]
    %v473 = vld [vmem:[%s1 + $0xdf8] sm:$0xff]
    %v474 = vld [vmem:[%s1 + $0xe00] sm:$0xff]
    %v475 = vld [vmem:[%s1 + $0xe08] sm:$0xff]
    %v476 = vld [vmem:[%s1 + $0xe10] sm:$0xff]
    %v477 = vld [vmem:[%s1 + $0xe18] sm:$0xff]
    %v478 = vld [vmem:[%s1 + $0xe20] sm:$0xff]
    %v479 = vld [vmem:[%s1 + $0xe28] sm:$0xff]
    %v480 = vld [vmem:[%s1 + $0xe30] sm:$0xff]
    %v481 = vld [vmem:[%s1 + $0xe38] sm:$0xff]
    %v482 = vld [vmem:[%s1 + $0xe40] sm:$0xff]
    %v483 = vld [vmem:[%s1 + $0xe48] sm:$0xff]
    %v484 = vld [vmem:[%s1 + $0xe50] sm:$0xff]
    %v485 = vld [vmem:[%s1 + $0xe58] sm:$0xff]
    %v486 = vld [vmem:[%s1 + $0xe60] sm:$0xff]
    %v487 = vld [vmem:[%s1 + $0xe68] sm:$0xff]
    %v488 = vld [vmem:[%s1 + $0xe70] sm:$0xff]
    %v489 = vld [vmem:[%s1 + $0xe78] sm:$0xff]
    %v490 = vld [vmem:[%s1 + $0xe80] sm:$0xff]
    %v491 = vld [vmem:[%s1 + $0xe88] sm:$0xff]
    %v492 = vld [vmem:[%s1 + $0xe90] sm:$0xff]
    %v493 = vld [vmem:[%s1 + $0xe98] sm:$0xff]
    %v494 = vld [vmem:[%s1 + $0xea0] sm:$0xff]
    %v495 = vld [vmem:[%s1 + $0xea8] sm:$0xff]
    %v496 = vld [vmem:[%s1 + $0xeb0] sm:$0xff]
    %v497 = vld [vmem:[%s1 + $0xeb8] sm:$0xff]
    %v498 = vld [vmem:[%s1 + $0xec0] sm:$0xff]
    %v499 = vld [vmem:[%s1 + $0xec8] sm:$0xff]
    %v500 = vld [vmem:[%s1 + $0xed0] sm:$0xff]
    %v501 = vld [vmem:[%s1 + $0xed8] sm:$0xff]
    %v502 = vld [vmem:[%s1 + $0xee0] sm:$0xff]
    %v503 = vld [vmem:[%s1 + $0xee8] sm:$0xff]
    %v504 = vld [vmem:[%s1 + $0xef0] sm:$0xff]
    %v505 = vld [vmem:[%s1 + $0xef8] sm:$0xff]
    %v506 = vld [vmem:[%s1 + $0xf00] sm:$0xff]
    %v507 = vld [vmem:[%s1 + $0xf08] sm:$0xff]
    %v508 = vld [vmem:[%s1 + $0xf10] sm:$0xff]
    %v509 = vld [vmem:[%s1 + $0xf18] sm:$0xff]
    %v510 = vld [vmem:[%s1 + $0xf20] sm:$0xff]
    %v511 = vld [vmem:[%s1 + $0xf28] sm:$0xff]
    %v512 = vld [vmem:[%s1 + $0xf30] sm:$0xff]
    %v513 = vld [vmem:[%s1 + $0xf38] sm:$0xff]
    %v514 = vld [vmem:[%s1 + $0xf40] sm:$0xff]
    %v515 = vld [vmem:[%s1 + $0xf48] sm:$0xff]
    %v516 = vld [vmem:[%s1 + $0xf50] sm:$0xff]
    %v517 = vld [vmem:[%s1 + $0xf58] sm:$0xff]
    %v518 = vld [vmem:[%s1 + $0xf60] sm:$0xff]
    %v519 = vld [vmem:[%s1 + $0xf68] sm:$0xff]
    %v520 = vld [vmem:[%s1 + $0xf70] sm:$0xff]
    %v521 = vld [vmem:[%s1 + $0xf78] sm:$0xff]
    %v522 = vld [vmem:[%s1 + $0xf80] sm:$0xff]
    %v523 = vld [vmem:[%s1 + $0xf88] sm:$0xff]
    %v524 = vld [vmem:[%s1 + $0xf90] sm:$0xff]
    %v525 = vld [vmem:[%s1 + $0xf98] sm:$0xff]
    %v526 = vld [vmem:[%s1 + $0xfa0] sm:$0xff]
    %v527 = vld [vmem:[%s1 + $0xfa8] sm:$0xff]
    %v528 = vld [vmem:[%s1 + $0xfb0] sm:$0xff]
    %v529 = vld [vmem:[%s1 + $0xfb8] sm:$0xff]
    %v530 = vld [vmem:[%s1 + $0xfc0] sm:$0xff]
    %v531 = vld [vmem:[%s1 + $0xfc8] sm:$0xff]
    %v532 = vld [vmem:[%s1 + $0xfd0] sm:$0xff]
    %v533 = vld [vmem:[%s1 + $0xfd8] sm:$0xff]
    %v534 = vld [vmem:[%s1 + $0xfe0] sm:$0xff]
    %v535 = vld [vmem:[%s1 + $0xfe8] sm:$0xff]
    %v536 = vld [vmem:[%s1 + $0xff0] sm:$0xff]
    %v537 = vld [vmem:[%s1 + $0xff8] sm:$0xff]
    %v538 = vld [vmem:[%s1 + $0x1000] sm:$0xff]
    %v539 = vld [vmem:[%s1 + $0x1008] sm:$0xff]
    %v540 = vld [vmem:[%s1 + $0x1010] sm:$0xff]
    %v541 = vld [vmem:[%s1 + $0x1018] sm:$0xff]
    %v542 = vld [vmem:[%s1 + $0x1020] sm:$0xff]
    %v543 = vld [vmem:[%s1 + $0x1028] sm:$0xff]
    %v544 = vld [vmem:[%s1 + $0x1030] sm:$0xff]
    %v545 = vld [vmem:[%s1 + $0x1038] sm:$0xff]
    %v546 = vld [vmem:[%s1 + $0x1040] sm:$0xff]
    %v547 = vld [vmem:[%s1 + $0x1048] sm:$0xff]
    %v548 = vld [vmem:[%s1 + $0x1050] sm:$0xff]
    %v549 = vld [vmem:[%s1 + $0x1058] sm:$0xff]
    %v550 = vld [vmem:[%s1 + $0x1060] sm:$0xff]
    %v551 = vld [vmem:[%s1 + $0x1068] sm:$0xff]
    %v552 = vld [vmem:[%s1 + $0x1070] sm:$0xff]
    %v553 = vld [vmem:[%s1 + $0x1078] sm:$0xff]
    %v554 = vld [vmem:[%s1 + $0x1080] sm:$0xff]
    %v555 = vld [vmem:[%s1 + $0x1088] sm:$0xff]
    %v556 = vld [vmem:[%s1 + $0x1090] sm:$0xff]
    %v557 = vld [vmem:[%s1 + $0x1098] sm:$0xff]
    %v558 = vld [vmem:[%s1 + $0x10a0] sm:$0xff]
    %v559 = vld [vmem:[%s1 + $0x10a8] sm:$0xff]
    %v560 = vld [vmem:[%s1 + $0x10b0] sm:$0xff]
    %v561 = vld [vmem:[%s1 + $0x10b8] sm:$0xff]
    %v562 = vld [vmem:[%s1 + $0x10c0] sm:$0xff]
    %v563 = vld [vmem:[%s1 + $0x10c8] sm:$0xff]
    %v564 = vld [vmem:[%s1 + $0x10d0] sm:$0xff]
    %v565 = vld [vmem:[%s1 + $0x10d8] sm:$0xff]
    %v566 = vld [vmem:[%s1 + $0x10e0] sm:$0xff]
    %v567 = vld [vmem:[%s1 + $0x10e8] sm:$0xff]
    %v568 = vld [vmem:[%s1 + $0x10f0] sm:$0xff]
    %v569 = vld [vmem:[%s1 + $0x10f8] sm:$0xff]
    %v570 = vld [vmem:[%s1 + $0x1100] sm:$0xff]
    %v571 = vld [vmem:[%s1 + $0x1108] sm:$0xff]
    %v572 = vld [vmem:[%s1 + $0x1110] sm:$0xff]
    %v573 = vld [vmem:[%s1 + $0x1118] sm:$0xff]
    %v574 = vld [vmem:[%s1 + $0x1120] sm:$0xff]
    %v575 = vld [vmem:[%s1 + $0x1128] sm:$0xff]
    %v576 = vld [vmem:[%s1 + $0x1130] sm:$0xff]
    %v577 = vld [vmem:[%s1 + $0x1138] sm:$0xff]
    %v578 = vld [vmem:[%s1 + $0x1140] sm:$0xff]
    %v579 = vld [vmem:[%s1 + $0x1148] sm:$0xff]
    %v580 = vld [vmem:[%s1 + $0x1150] sm:$0xff]
    %v581 = vld [vmem:[%s1 + $0x1158] sm:$0xff]
    %v582 = vld [vmem:[%s1 + $0x1160] sm:$0xff]
    %v583 = vld [vmem:[%s1 + $0x1168] sm:$0xff]
    %v584 = vld [vmem:[%s1 + $0x1170] sm:$0xff]
    %v585 = vld [vmem:[%s1 + $0x1178] sm:$0xff]
    %v586 = vld [vmem:[%s1 + $0x1180] sm:$0xff]
    %v587 = vld [vmem:[%s1 + $0x1188] sm:$0xff]
    %v588 = vld [vmem:[%s1 + $0x1190] sm:$0xff]
    %v589 = vld [vmem:[%s1 + $0x1198] sm:$0xff]
    %v590 = vld [vmem:[%s1 + $0x11a0] sm:$0xff]
    %v591 = vld [vmem:[%s1 + $0x11a8] sm:$0xff]
    %v592 = vld [vmem:[%s1 + $0x11b0] sm:$0xff]
    %v593 = vld [vmem:[%s1 + $0x11b8] sm:$0xff]
    %v594 = vld [vmem:[%s1 + $0x11c0] sm:$0xff]
    %v595 = vld [vmem:[%s1 + $0x11c8] sm:$0xff]
    %v596 = vld [vmem:[%s1 + $0x11d0] sm:$0xff]
    %v597 = vld [vmem:[%s1 + $0x11d8] sm:$0xff]
    %v598 = vld [vmem:[%s1 + $0x11e0] sm:$0xff]
    %v599 = vld [vmem:[%s1 + $0x11e8] sm:$0xff]
    %v600 = vld [vmem:[%s1 + $0x11f0] sm:$0xff]
    %v601 = vld [vmem:[%s1 + $0x11f8] sm:$0xff]
    %v602 = vld [vmem:[%s1 + $0x1200] sm:$0xff]
    %v603 = vld [vmem:[%s1 + $0x1208] sm:$0xff]
    %v604 = vld [vmem:[%s1 + $0x1210] sm:$0xff]
    %v605 = vld [vmem:[%s1 + $0x1218] sm:$0xff]
    %v606 = vld [vmem:[%s1 + $0x1220] sm:$0xff]
    %v607 = vld [vmem:[%s1 + $0x1228] sm:$0xff]
    %v608 = vld [vmem:[%s1 + $0x1230] sm:$0xff]
    %v609 = vld [vmem:[%s1 + $0x1238] sm:$0xff]
    %v610 = vld [vmem:[%s1 + $0x1240] sm:$0xff]
    %v611 = vld [vmem:[%s1 + $0x1248] sm:$0xff]
    %v612 = vld [vmem:[%s1 + $0x1250] sm:$0xff]
    %v613 = vld [vmem:[%s1 + $0x1258] sm:$0xff]
    %v614 = vld [vmem:[%s1 + $0x1260] sm:$0xff]
    %v615 = vld [vmem:[%s1 + $0x1268] sm:$0xff]
    %v616 = vld [vmem:[%s1 + $0x1270] sm:$0xff]
    %v617 = vld [vmem:[%s1 + $0x1278] sm:$0xff]
    %v618 = vld [vmem:[%s1 + $0x1280] sm:$0xff]
    %v619 = vld [vmem:[%s1 + $0x1288] sm:$0xff]
    %v620 = vld [vmem:[%s1 + $0x1290] sm:$0xff]
    %v621 = vld [vmem:[%s1 + $0x1298] sm:$0xff]
    %v622 = vld [vmem:[%s1 + $0x12a0] sm:$0xff]
    %v623 = vld [vmem:[%s1 + $0x12a8] sm:$0xff]
    %v624 = vld [vmem:[%s1 + $0x12b0] sm:$0xff]
    %v625 = vld [vmem:[%s1 + $0x12b8] sm:$0xff]
    %v626 = vld [vmem:[%s1 + $0x12c0] sm:$0xff]
    %v627 = vld [vmem:[%s1 + $0x12c8] sm:$0xff]
    %v628 = vld [vmem:[%s1 + $0x12d0] sm:$0xff]
    %v629 = vld [vmem:[%s1 + $0x12d8] sm:$0xff]
    %v630 = vld [vmem:[%s1 + $0x12e0] sm:$0xff]
    %v631 = vld [vmem:[%s1 + $0x12e8] sm:$0xff]
    %v632 = vld [vmem:[%s1 + $0x12f0] sm:$0xff]
    %v633 = vld [vmem:[%s1 + $0x12f8] sm:$0xff]
    %v634 = vld [vmem:[%s1 + $0x1300] sm:$0xff]
    %v635 = vld [vmem:[%s1 + $0x1308] sm:$0xff]
    %v636 = vld [vmem:[%s1 + $0x1310] sm:$0xff]
    %v637 = vld [vmem:[%s1 + $0x1318] sm:$0xff]
    %v638 = vld [vmem:[%s1 + $0x1320] sm:$0xff]
    %v639 = vld [vmem:[%s1 + $0x1328] sm:$0xff]
    %v640 = vld [vmem:[%s1 + $0x1330] sm:$0xff]
    %v641 = vld [vmem:[%s1 + $0x1338] sm:$0xff]
    %v642 = vld [vmem:[%s1 + $0x1340] sm:$0xff]
    %v643 = vld [vmem:[%s1 + $0x1348] sm:$0xff]
    %v644 = vld [vmem:[%s1 + $0x1350] sm:$0xff]
    %v645 = vld [vmem:[%s1 + $0x1358] sm:$0xff]
    %v646 = vld [vmem:[%s1 + $0x1360] sm:$0xff]
    %v647 = vld [vmem:[%s1 + $0x1368] sm:$0xff]
    %v648 = vld [vmem:[%s1 + $0x1370] sm:$0xff]
    %v649 = vld [vmem:[%s1 + $0x1378] sm:$0xff]
    %v650 = vld [vmem:[%s1 + $0x1380] sm:$0xff]
    %v651 = vld [vmem:[%s1 + $0x1388] sm:$0xff]
    %v652 = vld [vmem:[%s1 + $0x1390] sm:$0xff]
    %v653 = vld [vmem:[%s1 + $0x1398] sm:$0xff]
    %v654 = vld [vmem:[%s1 + $0x13a0] sm:$0xff]
    %v655 = vld [vmem:[%s1 + $0x13a8] sm:$0xff]
    %v656 = vld [vmem:[%s1 + $0x13b0] sm:$0xff]
    %v657 = vld [vmem:[%s1 + $0x13b8] sm:$0xff]
    %v658 = vld [vmem:[%s1 + $0x13c0] sm:$0xff]
    %v659 = vld [vmem:[%s1 + $0x13c8] sm:$0xff]
    %v660 = vld [vmem:[%s1 + $0x13d0] sm:$0xff]
    %v661 = vld [vmem:[%s1 + $0x13d8] sm:$0xff]
    %v662 = vld [vmem:[%s1 + $0x13e0] sm:$0xff]
    %v663 = vld [vmem:[%s1 + $0x13e8] sm:$0xff]
    %v664 = vld [vmem:[%s1 + $0x13f0] sm:$0xff]
    %v665 = vld [vmem:[%s1 + $0x13f8] sm:$0xff]
    %v666 = vld [vmem:[%s1 + $0x1400] sm:$0xff]
    %v667 = vld [vmem:[%s1 + $0x1408] sm:$0xff]
    %v668 = vld [vmem:[%s1 + $0x1410] sm:$0xff]
    %v669 = vld [vmem:[%s1 + $0x1418] sm:$0xff]
    %v670 = vld [vmem:[%s1 + $0x1420] sm:$0xff]
    %v671 = vld [vmem:[%s1 + $0x1428] sm:$0xff]
    %v672 = vld [vmem:[%s1 + $0x1430] sm:$0xff]
    %v673 = vld [vmem:[%s1 + $0x1438] sm:$0xff]
    %v674 = vld [vmem:[%s1 + $0x1440] sm:$0xff]
    %v675 = vld [vmem:[%s1 + $0x1448] sm:$0xff]
    %v676 = vld [vmem:[%s1 + $0x1450] sm:$0xff]
    %v677 = vld [vmem:[%s1 + $0x1458] sm:$0xff]
    %v678 = vld [vmem:[%s1 + $0x1460] sm:$0xff]
    %v679 = vld [vmem:[%s1 + $0x1468] sm:$0xff]
    %v680 = vld [vmem:[%s1 + $0x1470] sm:$0xff]
    %v681 = vld [vmem:[%s1 + $0x1478] sm:$0xff]
    %v682 = vld [vmem:[%s1 + $0x1480] sm:$0xff]
    %v683 = vld [vmem:[%s1 + $0x1488] sm:$0xff]
    %v684 = vld [vmem:[%s1 + $0x1490] sm:$0xff]
    %v685 = vld [vmem:[%s1 + $0x1498] sm:$0xff]
    %v686 = vld [vmem:[%s1 + $0x14a0] sm:$0xff]
    %v687 = vld [vmem:[%s1 + $0x14a8] sm:$0xff]
    %v688 = vld [vmem:[%s1 + $0x14b0] sm:$0xff]
    %v689 = vld [vmem:[%s1 + $0x14b8] sm:$0xff]
    %v690 = vld [vmem:[%s1 + $0x14c0] sm:$0xff]
    %v691 = vld [vmem:[%s1 + $0x14c8] sm:$0xff]
    %v692 = vld [vmem:[%s1 + $0x14d0] sm:$0xff]
    %v693 = vld [vmem:[%s1 + $0x14d8] sm:$0xff]
    %v694 = vld [vmem:[%s1 + $0x14e0] sm:$0xff]
    %v695 = vld [vmem:[%s1 + $0x14e8] sm:$0xff]
    %v696 = vld [vmem:[%s1 + $0x14f0] sm:$0xff]
    %v697 = vld [vmem:[%s1 + $0x14f8] sm:$0xff]
    %v698 = vld [vmem:[%s1 + $0x1500] sm:$0xff]
    %v699 = vld [vmem:[%s1 + $0x1508] sm:$0xff]
    %v700 = vld [vmem:[%s1 + $0x1510] sm:$0xff]
    %v701 = vld [vmem:[%s1 + $0x1518] sm:$0xff]
    %v702 = vld [vmem:[%s1 + $0x1520] sm:$0xff]
    %v703 = vld [vmem:[%s1 + $0x1528] sm:$0xff]
    %v704 = vld [vmem:[%s1 + $0x1530] sm:$0xff]
    %v705 = vld [vmem:[%s1 + $0x1538] sm:$0xff]
    %v706 = vld [vmem:[%s1 + $0x1540] sm:$0xff]
    %v707 = vld [vmem:[%s1 + $0x1548] sm:$0xff]
    %v708 = vld [vmem:[%s1 + $0x1550] sm:$0xff]
    %v709 = vld [vmem:[%s1 + $0x1558] sm:$0xff]
    %v710 = vld [vmem:[%s1 + $0x1560] sm:$0xff]
    %v711 = vld [vmem:[%s1 + $0x1568] sm:$0xff]
    %v712 = vld [vmem:[%s1 + $0x1570] sm:$0xff]
    %v713 = vld [vmem:[%s1 + $0x1578] sm:$0xff]
    %v714 = vld [vmem:[%s1 + $0x1580] sm:$0xff]
    %v715 = vld [vmem:[%s1 + $0x1588] sm:$0xff]
    %v716 = vld [vmem:[%s1 + $0x1590] sm:$0xff]
    %v717 = vld [vmem:[%s1 + $0x1598] sm:$0xff]
    %v718 = vld [vmem:[%s1 + $0x15a0] sm:$0xff]
    %v719 = vld [vmem:[%s1 + $0x15a8] sm:$0xff]
    %v720 = vld [vmem:[%s1 + $0x15b0] sm:$0xff]
    %v721 = vld [vmem:[%s1 + $0x15b8] sm:$0xff]
    %v722 = vld [vmem:[%s1 + $0x15c0] sm:$0xff]
    %v723 = vld [vmem:[%s1 + $0x15c8] sm:$0xff]
    %v724 = vld [vmem:[%s1 + $0x15d0] sm:$0xff]
    %v725 = vld [vmem:[%s1 + $0x15d8] sm:$0xff]
    %v726 = vld [vmem:[%s1 + $0x15e0] sm:$0xff]
    %v727 = vld [vmem:[%s1 + $0x15e8] sm:$0xff]
    %v728 = vld [vmem:[%s1 + $0x15f0] sm:$0xff]
    %v729 = vld [vmem:[%s1 + $0x15f8] sm:$0xff]
    %v730 = vld [vmem:[%s1 + $0x1600] sm:$0xff]
    %v731 = vld [vmem:[%s1 + $0x1608] sm:$0xff]
    %v732 = vld [vmem:[%s1 + $0x1610] sm:$0xff]
    %v733 = vld [vmem:[%s1 + $0x1618] sm:$0xff]
    %v734 = vld [vmem:[%s1 + $0x1620] sm:$0xff]
    %v735 = vld [vmem:[%s1 + $0x1628] sm:$0xff]
    %v736 = vld [vmem:[%s1 + $0x1630] sm:$0xff]
    %v737 = vld [vmem:[%s1 + $0x1638] sm:$0xff]
    %v738 = vld [vmem:[%s1 + $0x1640] sm:$0xff]
    %v739 = vld [vmem:[%s1 + $0x1648] sm:$0xff]
    %v740 = vld [vmem:[%s1 + $0x1650] sm:$0xff]
    %v741 = vld [vmem:[%s1 + $0x1658] sm:$0xff]
    %v742 = vld [vmem:[%s1 + $0x1660] sm:$0xff]
    %v743 = vld [vmem:[%s1 + $0x1668] sm:$0xff]
    %v744 = vld [vmem:[%s1 + $0x1670] sm:$0xff]
    %v745 = vld [vmem:[%s1 + $0x1678] sm:$0xff]
    %v746 = vld [vmem:[%s1 + $0x1680] sm:$0xff]
    %v747 = vld [vmem:[%s1 + $0x1688] sm:$0xff]
    %v748 = vld [vmem:[%s1 + $0x1690] sm:$0xff]
    %v749 = vld [vmem:[%s1 + $0x1698] sm:$0xff]
    %v750 = vld [vmem:[%s1 + $0x16a0] sm:$0xff]
    %v751 = vld [vmem:[%s1 + $0x16a8] sm:$0xff]
    %v752 = vld [vmem:[%s1 + $0x16b0] sm:$0xff]
    %v753 = vld [vmem:[%s1 + $0x16b8] sm:$0xff]
    %v754 = vld [vmem:[%s1 + $0x16c0] sm:$0xff]
    %v755 = vld [vmem:[%s1 + $0x16c8] sm:$0xff]
    %v756 = vld [vmem:[%s1 + $0x16d0] sm:$0xff]
    %v757 = vld [vmem:[%s1 + $0x16d8] sm:$0xff]
    %v758 = vld [vmem:[%s1 + $0x16e0] sm:$0xff]
    %v759 = vld [vmem:[%s1 + $0x16e8] sm:$0xff]
    %v760 = vld [vmem:[%s1 + $0x16f0] sm:$0xff]
    %v761 = vld [vmem:[%s1 + $0x16f8] sm:$0xff]
    %v762 = vld [vmem:[%s1 + $0x1700] sm:$0xff]
    %v763 = vld [vmem:[%s1 + $0x1708] sm:$0xff]
    %v764 = vld [vmem:[%s1 + $0x1710] sm:$0xff]
    %v765 = vld [vmem:[%s1 + $0x1718] sm:$0xff]
    %v766 = vld [vmem:[%s1 + $0x1720] sm:$0xff]
    %v767 = vld [vmem:[%s1 + $0x1728] sm:$0xff]
    %v768 = vld [vmem:[%s1 + $0x1730] sm:$0xff]
    %v769 = vld [vmem:[%s1 + $0x1738] sm:$0xff]
    %v770 = vld [vmem:[%s1 + $0x1740] sm:$0xff]
    %v771 = vld [vmem:[%s1 + $0x1748] sm:$0xff]
    %v772 = vld [vmem:[%s1 + $0x1750] sm:$0xff]
    %v773 = vld [vmem:[%s1 + $0x1758] sm:$0xff]
    %v774 = vld [vmem:[%s1 + $0x1760] sm:$0xff]
    %v775 = vld [vmem:[%s1 + $0x1768] sm:$0xff]
    %v776 = vld [vmem:[%s1 + $0x1770] sm:$0xff]
    %v777 = vld [vmem:[%s1 + $0x1778] sm:$0xff]
    %v778 = vld [vmem:[%s1 + $0x1780] sm:$0xff]
    %v779 = vld [vmem:[%s1 + $0x1788] sm:$0xff]
    %v780 = vld [vmem:[%s1 + $0x1790] sm:$0xff]
    %v781 = vld [vmem:[%s1 + $0x1798] sm:$0xff]
    %v782 = vld [vmem:[%s1 + $0x17a0] sm:$0xff]
    %v783 = vld [vmem:[%s1 + $0x17a8] sm:$0xff]
    %v784 = vld [vmem:[%s1 + $0x17b0] sm:$0xff]
    %v785 = vld [vmem:[%s1 + $0x17b8] sm:$0xff]
    %v786 = vld [vmem:[%s1 + $0x17c0] sm:$0xff]
    %v787 = vld [vmem:[%s1 + $0x17c8] sm:$0xff]
    %v788 = vld [vmem:[%s1 + $0x17d0] sm:$0xff]
    %v789 = vld [vmem:[%s1 + $0x17d8] sm:$0xff]
    %v790 = vld [vmem:[%s1 + $0x17e0] sm:$0xff]
    %v791 = vld [vmem:[%s1 + $0x17e8] sm:$0xff]
    %v792 = vld [vmem:[%s1 + $0x17f0] sm:$0xff]
    %v793 = vld [vmem:[%s1 + $0x17f8] sm:$0xff]
    %v794 = vld [vmem:[%s1 + $0x1800] sm:$0xff]
    %v795 = vld [vmem:[%s1 + $0x1808] sm:$0xff]
    %v796 = vld [vmem:[%s1 + $0x1810] sm:$0xff]
    %v797 = vld [vmem:[%s1 + $0x1818] sm:$0xff]
    %v798 = vld [vmem:[%s1 + $0x1820] sm:$0xff]
    %v799 = vld [vmem:[%s1 + $0x1828] sm:$0xff]
    %v800 = vld [vmem:[%s1 + $0x1830] sm:$0xff]
    %v801 = vld [vmem:[%s1 + $0x1838] sm:$0xff]
    %v802 = vld [vmem:[%s1 + $0x1840] sm:$0xff]
    %v803 = vld [vmem:[%s1 + $0x1848] sm:$0xff]
    %v804 = vld [vmem:[%s1 + $0x1850] sm:$0xff]
    %v805 = vld [vmem:[%s1 + $0x1858] sm:$0xff]
    %v806 = vld [vmem:[%s1 + $0x1860] sm:$0xff]
    %v807 = vld [vmem:[%s1 + $0x1868] sm:$0xff]
    %v808 = vld [vmem:[%s1 + $0x1870] sm:$0xff]
    %v809 = vld [vmem:[%s1 + $0x1878] sm:$0xff]
    %v810 = vld [vmem:[%s2] sm:$0xf]
    %v812 = vlaneseq
    %v813 = vshrl.u32 %v812, 7
    %v814 = vsub.s32 0, %v813
    %v815 = vrot.slane %v810, %v814
    %v816 = vlaneseq
    %v817 = vshrl.u32 %v816, 7
    %v818 = vsub.s32 1, %v817
    %v819 = vrot.slane %v810, %v818
    %v820 = vlaneseq
    %v821 = vshrl.u32 %v820, 7
    %v822 = vsub.s32 2, %v821
    %v823 = vrot.slane %v810, %v822
    %v824 = vlaneseq
    %v825 = vshrl.u32 %v824, 7
    %v826 = vsub.s32 3, %v825
    %v827 = vrot.slane %v810, %v826
    %v836 = vcombine.high %v22, %v22
    %v838 = vunpack.c.l.s4 1966171168
    %v839 = vunpack.c.0.s8 %v838
    %v840 = vlaneseq
    %v841 = vshrl.u32 %v840, 7
    %v842 = vsub.s32 %v839, %v841
    %v843 = vrot.slane %v22, %v842
    %v845 = vunpack.c.l.s4 1966171168
    %v846 = vunpack.c.0.s8 %v845
    %v847 = vlaneseq
    %v848 = vshrl.u32 %v847, 7
    %v849 = vsub.s32 %v846, %v848
    %v850 = vrot.slane %v836, %v849
    %v851 = vcombine.high %v843, %v843
    %v852 = vcombine.high %v850, %v850
    %v854 = vunpack.c.l.s4 1966171168
    %v855 = vunpack.c.0.s8 %v854
    %v856 = vlaneseq
    %v857 = vshrl.u32 %v856, 7
    %v858 = vsub.s32 %v855, %v857
    %v859 = vrot.slane %v843, %v858
    %v861 = vunpack.c.l.s4 1966171168
    %v862 = vunpack.c.0.s8 %v861
    %v863 = vlaneseq
    %v864 = vshrl.u32 %v863, 7
    %v865 = vsub.s32 %v862, %v864
    %v866 = vrot.slane %v850, %v865
    %v868 = vunpack.c.l.s4 1966171168
    %v869 = vunpack.c.0.s8 %v868
    %v870 = vlaneseq
    %v871 = vshrl.u32 %v870, 7
    %v872 = vsub.s32 %v869, %v871
    %v873 = vrot.slane %v851, %v872
    %v875 = vunpack.c.l.s4 1966171168
    %v876 = vunpack.c.0.s8 %v875
    %v877 = vlaneseq
    %v878 = vshrl.u32 %v877, 7
    %v879 = vsub.s32 %v876, %v878
    %v880 = vrot.slane %v852, %v879
    %v881 = vcombine.high %v859, %v859
    %v882 = vcombine.high %v866, %v866
    %v883 = vcombine.high %v873, %v873
    %v884 = vcombine.high %v880, %v880
    %v885 = vcombine.high %v23, %v23
    %v887 = vunpack.c.l.s4 1966171168
    %v888 = vunpack.c.0.s8 %v887
    %v889 = vlaneseq
    %v890 = vshrl.u32 %v889, 7
    %v891 = vsub.s32 %v888, %v890
    %v892 = vrot.slane %v23, %v891
    %v894 = vunpack.c.l.s4 1966171168
    %v895 = vunpack.c.0.s8 %v894
    %v896 = vlaneseq
    %v897 = vshrl.u32 %v896, 7
    %v898 = vsub.s32 %v895, %v897
    %v899 = vrot.slane %v885, %v898
    %v900 = vcombine.high %v892, %v892
    %v901 = vcombine.high %v899, %v899
    %v903 = vunpack.c.l.s4 1966171168
    %v904 = vunpack.c.0.s8 %v903
    %v905 = vlaneseq
    %v906 = vshrl.u32 %v905, 7
    %v907 = vsub.s32 %v904, %v906
    %v908 = vrot.slane %v892, %v907
    %v910 = vunpack.c.l.s4 1966171168
    %v911 = vunpack.c.0.s8 %v910
    %v912 = vlaneseq
    %v913 = vshrl.u32 %v912, 7
    %v914 = vsub.s32 %v911, %v913
    %v915 = vrot.slane %v899, %v914
    %v917 = vunpack.c.l.s4 1966171168
    %v918 = vunpack.c.0.s8 %v917
    %v919 = vlaneseq
    %v920 = vshrl.u32 %v919, 7
    %v921 = vsub.s32 %v918, %v920
    %v922 = vrot.slane %v900, %v921
    %v924 = vunpack.c.l.s4 1966171168
    %v925 = vunpack.c.0.s8 %v924
    %v926 = vlaneseq
    %v927 = vshrl.u32 %v926, 7
    %v928 = vsub.s32 %v925, %v927
    %v929 = vrot.slane %v901, %v928
    %v930 = vcombine.high %v908, %v908
    %v931 = vcombine.high %v915, %v915
    %v932 = vcombine.high %v922, %v922
    %v933 = vcombine.high %v929, %v929
    %v934 = vcombine.high %v24, %v24
    %v936 = vunpack.c.l.s4 1966171168
    %v937 = vunpack.c.0.s8 %v936
    %v938 = vlaneseq
    %v939 = vshrl.u32 %v938, 7
    %v940 = vsub.s32 %v937, %v939
    %v941 = vrot.slane %v24, %v940
    %v943 = vunpack.c.l.s4 1966171168
    %v944 = vunpack.c.0.s8 %v943
    %v945 = vlaneseq
    %v946 = vshrl.u32 %v945, 7
    %v947 = vsub.s32 %v944, %v946
    %v948 = vrot.slane %v934, %v947
    %v949 = vcombine.high %v941, %v941
    %v950 = vcombine.high %v948, %v948
    %v952 = vunpack.c.l.s4 1966171168
    %v953 = vunpack.c.0.s8 %v952
    %v954 = vlaneseq
    %v955 = vshrl.u32 %v954, 7
    %v956 = vsub.s32 %v953, %v955
    %v957 = vrot.slane %v941, %v956
    %v959 = vunpack.c.l.s4 1966171168
    %v960 = vunpack.c.0.s8 %v959
    %v961 = vlaneseq
    %v962 = vshrl.u32 %v961, 7
    %v963 = vsub.s32 %v960, %v962
    %v964 = vrot.slane %v948, %v963
    %v966 = vunpack.c.l.s4 1966171168
    %v967 = vunpack.c.0.s8 %v966
    %v968 = vlaneseq
    %v969 = vshrl.u32 %v968, 7
    %v970 = vsub.s32 %v967, %v969
    %v971 = vrot.slane %v949, %v970
    %v973 = vunpack.c.l.s4 1966171168
    %v974 = vunpack.c.0.s8 %v973
    %v975 = vlaneseq
    %v976 = vshrl.u32 %v975, 7
    %v977 = vsub.s32 %v974, %v976
    %v978 = vrot.slane %v950, %v977
    %v979 = vcombine.high %v957, %v957
    %v980 = vcombine.high %v964, %v964
    %v981 = vcombine.high %v971, %v971
    %v982 = vcombine.high %v978, %v978
    %v984 = vunpack.c.l.s4 1966171168
    %v985 = vunpack.c.0.s8 %v984
    %v986 = vlaneseq
    %v987 = vshrl.u32 %v986, 7
    %v988 = vsub.s32 %v985, %v987
    %v989 = vrot.slane %v25, %v988
    %v991 = vunpack.c.l.s4 1966171168
    %v992 = vunpack.c.0.s8 %v991
    %v993 = vlaneseq
    %v994 = vshrl.u32 %v993, 7
    %v995 = vsub.s32 %v992, %v994
    %v996 = vrot.slane %v989, %v995
    %v1805 = vunpack.c.l.b16 %v26
    %v1806 = vunpack.c.h.b16 %v26
    %v1807 = vunpack.c.l.b16 %v27
    %v1808 = vunpack.c.h.b16 %v27
    %v1809 = vunpack.c.l.b16 %v28
    %v1810 = vunpack.c.h.b16 %v28
    %v1811 = vunpack.c.l.b16 %v29
    %v1812 = vunpack.c.h.b16 %v29
    %v1813 = vunpack.c.l.b16 %v30
    %v1814 = vunpack.c.h.b16 %v30
    %v1815 = vunpack.c.l.b16 %v31
    %v1816 = vunpack.c.h.b16 %v31
    %v1817 = vunpack.c.l.b16 %v32
    %v1818 = vunpack.c.h.b16 %v32
    %v1819 = vunpack.c.l.b16 %v33
    %v1820 = vunpack.c.h.b16 %v33
    %v1821 = vunpack.c.l.b16 %v34
    %v1822 = vunpack.c.h.b16 %v34
    %v1823 = vunpack.c.l.b16 %v35
    %v1824 = vunpack.c.h.b16 %v35
    %v1825 = vunpack.c.l.b16 %v36
    %v1826 = vunpack.c.h.b16 %v36
    %v1827 = vunpack.c.l.b16 %v37
    %v1828 = vunpack.c.h.b16 %v37
    %v1829 = vunpack.c.l.b16 %v38
    %v1830 = vunpack.c.h.b16 %v38
    %v1831 = vunpack.c.l.b16 %v39
    %v1832 = vunpack.c.h.b16 %v39
    %v1833 = vunpack.c.l.b16 %v40
    %v1834 = vunpack.c.h.b16 %v40
    %v1835 = vunpack.c.l.b16 %v41
    %v1836 = vunpack.c.h.b16 %v41
    %v1837 = vunpack.c.l.b16 %v42
    %v1838 = vunpack.c.h.b16 %v42
    %v1839 = vunpack.c.l.b16 %v43
    %v1840 = vunpack.c.h.b16 %v43
    %v1841 = vunpack.c.l.b16 %v44
    %v1842 = vunpack.c.h.b16 %v44
    %v1843 = vunpack.c.l.b16 %v45
    %v1844 = vunpack.c.h.b16 %v45
    %v1845 = vunpack.c.l.b16 %v46
    %v1846 = vunpack.c.h.b16 %v46
    %v1847 = vunpack.c.l.b16 %v47
    %v1848 = vunpack.c.h.b16 %v47
    %v1849 = vunpack.c.l.b16 %v48
    %v1850 = vunpack.c.h.b16 %v48
    %v1851 = vunpack.c.l.b16 %v49
    %v1852 = vunpack.c.h.b16 %v49
    %v1853 = vunpack.c.l.b16 %v50
    %v1854 = vunpack.c.h.b16 %v50
    %v1855 = vunpack.c.l.b16 %v51
    %v1856 = vunpack.c.h.b16 %v51
    %v1857 = vunpack.c.l.b16 %v52
    %v1858 = vunpack.c.h.b16 %v52
    %v1859 = vunpack.c.l.b16 %v53
    %v1860 = vunpack.c.h.b16 %v53
    %v1861 = vunpack.c.l.b16 %v54
    %v1862 = vunpack.c.h.b16 %v54
    %v1863 = vunpack.c.l.b16 %v55
    %v1864 = vunpack.c.h.b16 %v55
    %v1865 = vunpack.c.l.b16 %v56
    %v1866 = vunpack.c.h.b16 %v56
    %v1867 = vunpack.c.l.b16 %v57
    %v1868 = vunpack.c.h.b16 %v57
    %v1869 = vunpack.c.l.b16 %v58
    %v1870 = vunpack.c.h.b16 %v58
    %v1871 = vunpack.c.l.b16 %v59
    %v1872 = vunpack.c.h.b16 %v59
    %v1873 = vunpack.c.l.b16 %v60
    %v1874 = vunpack.c.h.b16 %v60
    %v1875 = vunpack.c.l.b16 %v61
    %v1876 = vunpack.c.h.b16 %v61
    %v1877 = vunpack.c.l.b16 %v62
    %v1878 = vunpack.c.h.b16 %v62
    %v1879 = vunpack.c.l.b16 %v63
    %v1880 = vunpack.c.h.b16 %v63
    %v1881 = vunpack.c.l.b16 %v64
    %v1882 = vunpack.c.h.b16 %v64
    %v1883 = vunpack.c.l.b16 %v65
    %v1884 = vunpack.c.h.b16 %v65
    %v1885 = vunpack.c.l.b16 %v66
    %v1886 = vunpack.c.h.b16 %v66
    %v1887 = vunpack.c.l.b16 %v67
    %v1888 = vunpack.c.h.b16 %v67
    %v1889 = vunpack.c.l.b16 %v68
    %v1890 = vunpack.c.h.b16 %v68
    %v1891 = vunpack.c.l.b16 %v69
    %v1892 = vunpack.c.h.b16 %v69
    %v1893 = vunpack.c.l.b16 %v70
    %v1894 = vunpack.c.h.b16 %v70
    %v1895 = vunpack.c.l.b16 %v71
    %v1896 = vunpack.c.h.b16 %v71
    %v1897 = vunpack.c.l.b16 %v72
    %v1898 = vunpack.c.h.b16 %v72
    %v1899 = vunpack.c.l.b16 %v73
    %v1900 = vunpack.c.h.b16 %v73
    %v1901 = vunpack.c.l.b16 %v74
    %v1902 = vunpack.c.h.b16 %v74
    %v1903 = vunpack.c.l.b16 %v75
    %v1904 = vunpack.c.h.b16 %v75
    %v1905 = vunpack.c.l.b16 %v76
    %v1906 = vunpack.c.h.b16 %v76
    %v1907 = vunpack.c.l.b16 %v77
    %v1908 = vunpack.c.h.b16 %v77
    %v1909 = vunpack.c.l.b16 %v78
    %v1910 = vunpack.c.h.b16 %v78
    %v1911 = vunpack.c.l.b16 %v79
    %v1912 = vunpack.c.h.b16 %v79
    %v1913 = vunpack.c.l.b16 %v80
    %v1914 = vunpack.c.h.b16 %v80
    %v1915 = vunpack.c.l.b16 %v81
    %v1916 = vunpack.c.h.b16 %v81
    %v1917 = vunpack.c.l.b16 %v82
    %v1918 = vunpack.c.h.b16 %v82
    %v1919 = vunpack.c.l.b16 %v83
    %v1920 = vunpack.c.h.b16 %v83
    %v1921 = vunpack.c.l.b16 %v84
    %v1922 = vunpack.c.h.b16 %v84
    %v1923 = vunpack.c.l.b16 %v85
    %v1924 = vunpack.c.h.b16 %v85
    %v1925 = vunpack.c.l.b16 %v86
    %v1926 = vunpack.c.h.b16 %v86
    %v1927 = vunpack.c.l.b16 %v87
    %v1928 = vunpack.c.h.b16 %v87
    %v1929 = vunpack.c.l.b16 %v88
    %v1930 = vunpack.c.h.b16 %v88
    %v1931 = vunpack.c.l.b16 %v89
    %v1932 = vunpack.c.h.b16 %v89
    %v1933 = vunpack.c.l.b16 %v90
    %v1934 = vunpack.c.h.b16 %v90
    %v1935 = vunpack.c.l.b16 %v91
    %v1936 = vunpack.c.h.b16 %v91
    %v1937 = vunpack.c.l.b16 %v92
    %v1938 = vunpack.c.h.b16 %v92
    %v1939 = vunpack.c.l.b16 %v93
    %v1940 = vunpack.c.h.b16 %v93
    %v1941 = vunpack.c.l.b16 %v94
    %v1942 = vunpack.c.h.b16 %v94
    %v1943 = vunpack.c.l.b16 %v95
    %v1944 = vunpack.c.h.b16 %v95
    %v1945 = vunpack.c.l.b16 %v96
    %v1946 = vunpack.c.h.b16 %v96
    %v1947 = vunpack.c.l.b16 %v97
    %v1948 = vunpack.c.h.b16 %v97
    %v1949 = vunpack.c.l.b16 %v98
    %v1950 = vunpack.c.h.b16 %v98
    %v1951 = vunpack.c.l.b16 %v99
    %v1952 = vunpack.c.h.b16 %v99
    %v1953 = vunpack.c.l.b16 %v100
    %v1954 = vunpack.c.h.b16 %v100
    %v1955 = vunpack.c.l.b16 %v101
    %v1956 = vunpack.c.h.b16 %v101
    %v1957 = vunpack.c.l.b16 %v102
    %v1958 = vunpack.c.h.b16 %v102
    %v1959 = vunpack.c.l.b16 %v103
    %v1960 = vunpack.c.h.b16 %v103
    %v1961 = vunpack.c.l.b16 %v104
    %v1962 = vunpack.c.h.b16 %v104
    %v1963 = vunpack.c.l.b16 %v105
    %v1964 = vunpack.c.h.b16 %v105
    %v1965 = vunpack.c.l.b16 %v106
    %v1966 = vunpack.c.h.b16 %v106
    %v1967 = vunpack.c.l.b16 %v107
    %v1968 = vunpack.c.h.b16 %v107
    %v1969 = vunpack.c.l.b16 %v108
    %v1970 = vunpack.c.h.b16 %v108
    %v1971 = vunpack.c.l.b16 %v109
    %v1972 = vunpack.c.h.b16 %v109
    %v1973 = vunpack.c.l.b16 %v110
    %v1974 = vunpack.c.h.b16 %v110
    %v1975 = vunpack.c.l.b16 %v111
    %v1976 = vunpack.c.h.b16 %v111
    %v1977 = vunpack.c.l.b16 %v112
    %v1978 = vunpack.c.h.b16 %v112
    %v1979 = vunpack.c.l.b16 %v113
    %v1980 = vunpack.c.h.b16 %v113
    %v1981 = vunpack.c.l.b16 %v114
    %v1982 = vunpack.c.h.b16 %v114
    %v1983 = vunpack.c.l.b16 %v115
    %v1984 = vunpack.c.h.b16 %v115
    %v1985 = vunpack.c.l.b16 %v116
    %v1986 = vunpack.c.h.b16 %v116
    %v1987 = vunpack.c.l.b16 %v117
    %v1988 = vunpack.c.h.b16 %v117
    %v1989 = vunpack.c.l.b16 %v118
    %v1990 = vunpack.c.h.b16 %v118
    %v1991 = vunpack.c.l.b16 %v119
    %v1992 = vunpack.c.h.b16 %v119
    %v1993 = vunpack.c.l.b16 %v120
    %v1994 = vunpack.c.h.b16 %v120
    %v1995 = vunpack.c.l.b16 %v121
    %v1996 = vunpack.c.h.b16 %v121
    %v1997 = vunpack.c.l.b16 %v122
    %v1998 = vunpack.c.h.b16 %v122
    %v1999 = vunpack.c.l.b16 %v123
    %v2000 = vunpack.c.h.b16 %v123
    %v2001 = vunpack.c.l.b16 %v124
    %v2002 = vunpack.c.h.b16 %v124
    %v2003 = vunpack.c.l.b16 %v125
    %v2004 = vunpack.c.h.b16 %v125
    %v2005 = vunpack.c.l.b16 %v126
    %v2006 = vunpack.c.h.b16 %v126
    %v2007 = vunpack.c.l.b16 %v127
    %v2008 = vunpack.c.h.b16 %v127
    %v2009 = vunpack.c.l.b16 %v128
    %v2010 = vunpack.c.h.b16 %v128
    %v2011 = vunpack.c.l.b16 %v129
    %v2012 = vunpack.c.h.b16 %v129
    %v2013 = vunpack.c.l.b16 %v130
    %v2014 = vunpack.c.h.b16 %v130
    %v2015 = vunpack.c.l.b16 %v131
    %v2016 = vunpack.c.h.b16 %v131
    %v2017 = vunpack.c.l.b16 %v132
    %v2018 = vunpack.c.h.b16 %v132
    %v2019 = vunpack.c.l.b16 %v133
    %v2020 = vunpack.c.h.b16 %v133
    %v2021 = vunpack.c.l.b16 %v134
    %v2022 = vunpack.c.h.b16 %v134
    %v2023 = vunpack.c.l.b16 %v135
    %v2024 = vunpack.c.h.b16 %v135
    %v2025 = vunpack.c.l.b16 %v136
    %v2026 = vunpack.c.h.b16 %v136
    %v2027 = vunpack.c.l.b16 %v137
    %v2028 = vunpack.c.h.b16 %v137
    %v2029 = vunpack.c.l.b16 %v138
    %v2030 = vunpack.c.h.b16 %v138
    %v2031 = vunpack.c.l.b16 %v139
    %v2032 = vunpack.c.h.b16 %v139
    %v2033 = vunpack.c.l.b16 %v140
    %v2034 = vunpack.c.h.b16 %v140
    %v2035 = vunpack.c.l.b16 %v141
    %v2036 = vunpack.c.h.b16 %v141
    %v2037 = vunpack.c.l.b16 %v142
    %v2038 = vunpack.c.h.b16 %v142
    %v2039 = vunpack.c.l.b16 %v143
    %v2040 = vunpack.c.h.b16 %v143
    %v2041 = vunpack.c.l.b16 %v144
    %v2042 = vunpack.c.h.b16 %v144
    %v2043 = vunpack.c.l.b16 %v145
    %v2044 = vunpack.c.h.b16 %v145
    %v2045 = vunpack.c.l.b16 %v146
    %v2046 = vunpack.c.h.b16 %v146
    %v2047 = vunpack.c.l.b16 %v147
    %v2048 = vunpack.c.h.b16 %v147
    %v2049 = vunpack.c.l.b16 %v148
    %v2050 = vunpack.c.h.b16 %v148
    %v2051 = vunpack.c.l.b16 %v149
    %v2052 = vunpack.c.h.b16 %v149
    %v2053 = vunpack.c.l.b16 %v150
    %v2054 = vunpack.c.h.b16 %v150
    %v2055 = vunpack.c.l.b16 %v151
    %v2056 = vunpack.c.h.b16 %v151
    %v2057 = vunpack.c.l.b16 %v152
    %v2058 = vunpack.c.h.b16 %v152
    %v2059 = vunpack.c.l.b16 %v153
    %v2060 = vunpack.c.h.b16 %v153
    %v2061 = vunpack.c.l.b16 %v154
    %v2062 = vunpack.c.h.b16 %v154
    %v2063 = vunpack.c.l.b16 %v155
    %v2064 = vunpack.c.h.b16 %v155
    %v2065 = vunpack.c.l.b16 %v156
    %v2066 = vunpack.c.h.b16 %v156
    %v2067 = vunpack.c.l.b16 %v157
    %v2068 = vunpack.c.h.b16 %v157
    %v2069 = vunpack.c.l.b16 %v158
    %v2070 = vunpack.c.h.b16 %v158
    %v2071 = vunpack.c.l.b16 %v159
    %v2072 = vunpack.c.h.b16 %v159
    %v2073 = vunpack.c.l.b16 %v160
    %v2074 = vunpack.c.h.b16 %v160
    %v2075 = vunpack.c.l.b16 %v161
    %v2076 = vunpack.c.h.b16 %v161
    %v2077 = vunpack.c.l.b16 %v162
    %v2078 = vunpack.c.h.b16 %v162
    %v2079 = vunpack.c.l.b16 %v163
    %v2080 = vunpack.c.h.b16 %v163
    %v2081 = vunpack.c.l.b16 %v164
    %v2082 = vunpack.c.h.b16 %v164
    %v2083 = vunpack.c.l.b16 %v165
    %v2084 = vunpack.c.h.b16 %v165
    %v2085 = vunpack.c.l.b16 %v166
    %v2086 = vunpack.c.h.b16 %v166
    %v2087 = vunpack.c.l.b16 %v167
    %v2088 = vunpack.c.h.b16 %v167
    %v2089 = vunpack.c.l.b16 %v168
    %v2090 = vunpack.c.h.b16 %v168
    %v2091 = vunpack.c.l.b16 %v169
    %v2092 = vunpack.c.h.b16 %v169
    %v2093 = vunpack.c.l.b16 %v170
    %v2094 = vunpack.c.h.b16 %v170
    %v2095 = vunpack.c.l.b16 %v171
    %v2096 = vunpack.c.h.b16 %v171
    %v2097 = vunpack.c.l.b16 %v172
    %v2098 = vunpack.c.h.b16 %v172
    %v2099 = vunpack.c.l.b16 %v173
    %v2100 = vunpack.c.h.b16 %v173
    %v2101 = vunpack.c.l.b16 %v174
    %v2102 = vunpack.c.h.b16 %v174
    %v2103 = vunpack.c.l.b16 %v175
    %v2104 = vunpack.c.h.b16 %v175
    %v2105 = vunpack.c.l.b16 %v176
    %v2106 = vunpack.c.h.b16 %v176
    %v2107 = vunpack.c.l.b16 %v177
    %v2108 = vunpack.c.h.b16 %v177
    %v2109 = vunpack.c.l.b16 %v178
    %v2110 = vunpack.c.h.b16 %v178
    %v2111 = vunpack.c.l.b16 %v179
    %v2112 = vunpack.c.h.b16 %v179
    %v2113 = vunpack.c.l.b16 %v180
    %v2114 = vunpack.c.h.b16 %v180
    %v2115 = vunpack.c.l.b16 %v181
    %v2116 = vunpack.c.h.b16 %v181
    %v2117 = vunpack.c.l.b16 %v182
    %v2118 = vunpack.c.h.b16 %v182
    %v2119 = vunpack.c.l.b16 %v183
    %v2120 = vunpack.c.h.b16 %v183
    %v2121 = vunpack.c.l.b16 %v184
    %v2122 = vunpack.c.h.b16 %v184
    %v2123 = vunpack.c.l.b16 %v185
    %v2124 = vunpack.c.h.b16 %v185
    %v2125 = vunpack.c.l.b16 %v186
    %v2126 = vunpack.c.h.b16 %v186
    %v2127 = vunpack.c.l.b16 %v187
    %v2128 = vunpack.c.h.b16 %v187
    %v2129 = vunpack.c.l.b16 %v188
    %v2130 = vunpack.c.h.b16 %v188
    %v2131 = vunpack.c.l.b16 %v189
    %v2132 = vunpack.c.h.b16 %v189
    %v2133 = vunpack.c.l.b16 %v190
    %v2134 = vunpack.c.h.b16 %v190
    %v2135 = vunpack.c.l.b16 %v191
    %v2136 = vunpack.c.h.b16 %v191
    %v2137 = vunpack.c.l.b16 %v192
    %v2138 = vunpack.c.h.b16 %v192
    %v2139 = vunpack.c.l.b16 %v193
    %v2140 = vunpack.c.h.b16 %v193
    %v2141 = vunpack.c.l.b16 %v194
    %v2142 = vunpack.c.h.b16 %v194
    %v2143 = vunpack.c.l.b16 %v195
    %v2144 = vunpack.c.h.b16 %v195
    %v2145 = vunpack.c.l.b16 %v196
    %v2146 = vunpack.c.h.b16 %v196
    %v2147 = vunpack.c.l.b16 %v197
    %v2148 = vunpack.c.h.b16 %v197
    %v2149 = vunpack.c.l.b16 %v198
    %v2150 = vunpack.c.h.b16 %v198
    %v2151 = vunpack.c.l.b16 %v199
    %v2152 = vunpack.c.h.b16 %v199
    %v2153 = vunpack.c.l.b16 %v200
    %v2154 = vunpack.c.h.b16 %v200
    %v2155 = vunpack.c.l.b16 %v201
    %v2156 = vunpack.c.h.b16 %v201
    %v2157 = vunpack.c.l.b16 %v202
    %v2158 = vunpack.c.h.b16 %v202
    %v2159 = vunpack.c.l.b16 %v203
    %v2160 = vunpack.c.h.b16 %v203
    %v2161 = vunpack.c.l.b16 %v204
    %v2162 = vunpack.c.h.b16 %v204
    %v2163 = vunpack.c.l.b16 %v205
    %v2164 = vunpack.c.h.b16 %v205
    %v2165 = vunpack.c.l.b16 %v206
    %v2166 = vunpack.c.h.b16 %v206
    %v2167 = vunpack.c.l.b16 %v207
    %v2168 = vunpack.c.h.b16 %v207
    %v2169 = vunpack.c.l.b16 %v208
    %v2170 = vunpack.c.h.b16 %v208
    %v2171 = vunpack.c.l.b16 %v209
    %v2172 = vunpack.c.h.b16 %v209
    %v2173 = vunpack.c.l.b16 %v210
    %v2174 = vunpack.c.h.b16 %v210
    %v2175 = vunpack.c.l.b16 %v211
    %v2176 = vunpack.c.h.b16 %v211
    %v2177 = vunpack.c.l.b16 %v212
    %v2178 = vunpack.c.h.b16 %v212
    %v2179 = vunpack.c.l.b16 %v213
    %v2180 = vunpack.c.h.b16 %v213
    %v2181 = vunpack.c.l.b16 %v214
    %v2182 = vunpack.c.h.b16 %v214
    %v2183 = vunpack.c.l.b16 %v215
    %v2184 = vunpack.c.h.b16 %v215
    %v2185 = vunpack.c.l.b16 %v216
    %v2186 = vunpack.c.h.b16 %v216
    %v2187 = vunpack.c.l.b16 %v217
    %v2188 = vunpack.c.h.b16 %v217
    %v2189 = vunpack.c.l.b16 %v218
    %v2190 = vunpack.c.h.b16 %v218
    %v2191 = vunpack.c.l.b16 %v219
    %v2192 = vunpack.c.h.b16 %v219
    %v2193 = vunpack.c.l.b16 %v220
    %v2194 = vunpack.c.h.b16 %v220
    %v2195 = vunpack.c.l.b16 %v221
    %v2196 = vunpack.c.h.b16 %v221
    %v2197 = vunpack.c.l.b16 %v222
    %v2198 = vunpack.c.h.b16 %v222
    %v2199 = vunpack.c.l.b16 %v223
    %v2200 = vunpack.c.h.b16 %v223
    %v2201 = vunpack.c.l.b16 %v224
    %v2202 = vunpack.c.h.b16 %v224
    %v2203 = vunpack.c.l.b16 %v225
    %v2204 = vunpack.c.h.b16 %v225
    %v2205 = vunpack.c.l.b16 %v226
    %v2206 = vunpack.c.h.b16 %v226
    %v2207 = vunpack.c.l.b16 %v227
    %v2208 = vunpack.c.h.b16 %v227
    %v2209 = vunpack.c.l.b16 %v228
    %v2210 = vunpack.c.h.b16 %v228
    %v2211 = vunpack.c.l.b16 %v229
    %v2212 = vunpack.c.h.b16 %v229
    %v2213 = vunpack.c.l.b16 %v230
    %v2214 = vunpack.c.h.b16 %v230
    %v2215 = vunpack.c.l.b16 %v231
    %v2216 = vunpack.c.h.b16 %v231
    %v2217 = vunpack.c.l.b16 %v232
    %v2218 = vunpack.c.h.b16 %v232
    %v2219 = vunpack.c.l.b16 %v233
    %v2220 = vunpack.c.h.b16 %v233
    %v2221 = vunpack.c.l.b16 %v234
    %v2222 = vunpack.c.h.b16 %v234
    %v2223 = vunpack.c.l.b16 %v235
    %v2224 = vunpack.c.h.b16 %v235
    %v2225 = vunpack.c.l.b16 %v236
    %v2226 = vunpack.c.h.b16 %v236
    %v2227 = vunpack.c.l.b16 %v237
    %v2228 = vunpack.c.h.b16 %v237
    %v2229 = vunpack.c.l.b16 %v238
    %v2230 = vunpack.c.h.b16 %v238
    %v2231 = vunpack.c.l.b16 %v239
    %v2232 = vunpack.c.h.b16 %v239
    %v2233 = vunpack.c.l.b16 %v240
    %v2234 = vunpack.c.h.b16 %v240
    %v2235 = vunpack.c.l.b16 %v241
    %v2236 = vunpack.c.h.b16 %v241
    %v2237 = vunpack.c.l.b16 %v242
    %v2238 = vunpack.c.h.b16 %v242
    %v2239 = vunpack.c.l.b16 %v243
    %v2240 = vunpack.c.h.b16 %v243
    %v2241 = vunpack.c.l.b16 %v244
    %v2242 = vunpack.c.h.b16 %v244
    %v2243 = vunpack.c.l.b16 %v245
    %v2244 = vunpack.c.h.b16 %v245
    %v2245 = vunpack.c.l.b16 %v246
    %v2246 = vunpack.c.h.b16 %v246
    %v2247 = vunpack.c.l.b16 %v247
    %v2248 = vunpack.c.h.b16 %v247
    %v2249 = vunpack.c.l.b16 %v248
    %v2250 = vunpack.c.h.b16 %v248
    %v2251 = vunpack.c.l.b16 %v249
    %v2252 = vunpack.c.h.b16 %v249
    %v2253 = vunpack.c.l.b16 %v250
    %v2254 = vunpack.c.h.b16 %v250
    %v2255 = vunpack.c.l.b16 %v251
    %v2256 = vunpack.c.h.b16 %v251
    %v2257 = vunpack.c.l.b16 %v252
    %v2258 = vunpack.c.h.b16 %v252
    %v2259 = vunpack.c.l.b16 %v253
    %v2260 = vunpack.c.h.b16 %v253
    %v2261 = vunpack.c.l.b16 %v254
    %v2262 = vunpack.c.h.b16 %v254
    %v2263 = vunpack.c.l.b16 %v255
    %v2264 = vunpack.c.h.b16 %v255
    %v2265 = vunpack.c.l.b16 %v256
    %v2266 = vunpack.c.h.b16 %v256
    %v2267 = vunpack.c.l.b16 %v257
    %v2268 = vunpack.c.h.b16 %v257
    %v2269 = vunpack.c.l.b16 %v258
    %v2270 = vunpack.c.h.b16 %v258
    %v2271 = vunpack.c.l.b16 %v259
    %v2272 = vunpack.c.h.b16 %v259
    %v2273 = vunpack.c.l.b16 %v260
    %v2274 = vunpack.c.h.b16 %v260
    %v2275 = vunpack.c.l.b16 %v261
    %v2276 = vunpack.c.h.b16 %v261
    %v2277 = vunpack.c.l.b16 %v262
    %v2278 = vunpack.c.h.b16 %v262
    %v2279 = vunpack.c.l.b16 %v263
    %v2280 = vunpack.c.h.b16 %v263
    %v2281 = vunpack.c.l.b16 %v264
    %v2282 = vunpack.c.h.b16 %v264
    %v2283 = vunpack.c.l.b16 %v265
    %v2284 = vunpack.c.h.b16 %v265
    %v2285 = vunpack.c.l.b16 %v266
    %v2286 = vunpack.c.h.b16 %v266
    %v2287 = vunpack.c.l.b16 %v267
    %v2288 = vunpack.c.h.b16 %v267
    %v2289 = vunpack.c.l.b16 %v268
    %v2290 = vunpack.c.h.b16 %v268
    %v2291 = vunpack.c.l.b16 %v269
    %v2292 = vunpack.c.h.b16 %v269
    %v2293 = vunpack.c.l.b16 %v270
    %v2294 = vunpack.c.h.b16 %v270
    %v2295 = vunpack.c.l.b16 %v271
    %v2296 = vunpack.c.h.b16 %v271
    %v2297 = vunpack.c.l.b16 %v272
    %v2298 = vunpack.c.h.b16 %v272
    %v2299 = vunpack.c.l.b16 %v273
    %v2300 = vunpack.c.h.b16 %v273
    %v2301 = vunpack.c.l.b16 %v274
    %v2302 = vunpack.c.h.b16 %v274
    %v2303 = vunpack.c.l.b16 %v275
    %v2304 = vunpack.c.h.b16 %v275
    %v2305 = vunpack.c.l.b16 %v276
    %v2306 = vunpack.c.h.b16 %v276
    %v2307 = vunpack.c.l.b16 %v277
    %v2308 = vunpack.c.h.b16 %v277
    %v2309 = vunpack.c.l.b16 %v278
    %v2310 = vunpack.c.h.b16 %v278
    %v2311 = vunpack.c.l.b16 %v279
    %v2312 = vunpack.c.h.b16 %v279
    %v2313 = vunpack.c.l.b16 %v280
    %v2314 = vunpack.c.h.b16 %v280
    %v2315 = vunpack.c.l.b16 %v281
    %v2316 = vunpack.c.h.b16 %v281
    %v2317 = vunpack.c.l.b16 %v282
    %v2318 = vunpack.c.h.b16 %v282
    %v2319 = vunpack.c.l.b16 %v283
    %v2320 = vunpack.c.h.b16 %v283
    %v2321 = vunpack.c.l.b16 %v284
    %v2322 = vunpack.c.h.b16 %v284
    %v2323 = vunpack.c.l.b16 %v285
    %v2324 = vunpack.c.h.b16 %v285
    %v2325 = vunpack.c.l.b16 %v286
    %v2326 = vunpack.c.h.b16 %v286
    %v2327 = vunpack.c.l.b16 %v287
    %v2328 = vunpack.c.h.b16 %v287
    %v2329 = vunpack.c.l.b16 %v288
    %v2330 = vunpack.c.h.b16 %v288
    %v2331 = vunpack.c.l.b16 %v289
    %v2332 = vunpack.c.h.b16 %v289
    %v2333 = vunpack.c.l.b16 %v290
    %v2334 = vunpack.c.h.b16 %v290
    %v2335 = vunpack.c.l.b16 %v291
    %v2336 = vunpack.c.h.b16 %v291
    %v2337 = vunpack.c.l.b16 %v292
    %v2338 = vunpack.c.h.b16 %v292
    %v2339 = vunpack.c.l.b16 %v293
    %v2340 = vunpack.c.h.b16 %v293
    %v2341 = vunpack.c.l.b16 %v294
    %v2342 = vunpack.c.h.b16 %v294
    %v2343 = vunpack.c.l.b16 %v295
    %v2344 = vunpack.c.h.b16 %v295
    %v2345 = vunpack.c.l.b16 %v296
    %v2346 = vunpack.c.h.b16 %v296
    %v2347 = vunpack.c.l.b16 %v297
    %v2348 = vunpack.c.h.b16 %v297
    %v2349 = vunpack.c.l.b16 %v298
    %v2350 = vunpack.c.h.b16 %v298
    %v2351 = vunpack.c.l.b16 %v299
    %v2352 = vunpack.c.h.b16 %v299
    %v2353 = vunpack.c.l.b16 %v300
    %v2354 = vunpack.c.h.b16 %v300
    %v2355 = vunpack.c.l.b16 %v301
    %v2356 = vunpack.c.h.b16 %v301
    %v2357 = vunpack.c.l.b16 %v302
    %v2358 = vunpack.c.h.b16 %v302
    %v2359 = vunpack.c.l.b16 %v303
    %v2360 = vunpack.c.h.b16 %v303
    %v2361 = vunpack.c.l.b16 %v304
    %v2362 = vunpack.c.h.b16 %v304
    %v2363 = vunpack.c.l.b16 %v305
    %v2364 = vunpack.c.h.b16 %v305
    %v2365 = vunpack.c.l.b16 %v306
    %v2366 = vunpack.c.h.b16 %v306
    %v2367 = vunpack.c.l.b16 %v307
    %v2368 = vunpack.c.h.b16 %v307
    %v2369 = vunpack.c.l.b16 %v308
    %v2370 = vunpack.c.h.b16 %v308
    %v2371 = vunpack.c.l.b16 %v309
    %v2372 = vunpack.c.h.b16 %v309
    %v2373 = vunpack.c.l.b16 %v310
    %v2374 = vunpack.c.h.b16 %v310
    %v2375 = vunpack.c.l.b16 %v311
    %v2376 = vunpack.c.h.b16 %v311
    %v2377 = vunpack.c.l.b16 %v312
    %v2378 = vunpack.c.h.b16 %v312
    %v2379 = vunpack.c.l.b16 %v313
    %v2380 = vunpack.c.h.b16 %v313
    %v2381 = vunpack.c.l.b16 %v314
    %v2382 = vunpack.c.h.b16 %v314
    %v2383 = vunpack.c.l.b16 %v315
    %v2384 = vunpack.c.h.b16 %v315
    %v2385 = vunpack.c.l.b16 %v316
    %v2386 = vunpack.c.h.b16 %v316
    %v2387 = vunpack.c.l.b16 %v317
    %v2388 = vunpack.c.h.b16 %v317
    %v2389 = vunpack.c.l.b16 %v318
    %v2390 = vunpack.c.h.b16 %v318
    %v2391 = vunpack.c.l.b16 %v319
    %v2392 = vunpack.c.h.b16 %v319
    %v2393 = vunpack.c.l.b16 %v320
    %v2394 = vunpack.c.h.b16 %v320
    %v2395 = vunpack.c.l.b16 %v321
    %v2396 = vunpack.c.h.b16 %v321
    %v2397 = vunpack.c.l.b16 %v322
    %v2398 = vunpack.c.h.b16 %v322
    %v2399 = vunpack.c.l.b16 %v323
    %v2400 = vunpack.c.h.b16 %v323
    %v2401 = vunpack.c.l.b16 %v324
    %v2402 = vunpack.c.h.b16 %v324
    %v2403 = vunpack.c.l.b16 %v325
    %v2404 = vunpack.c.h.b16 %v325
    %v2405 = vunpack.c.l.b16 %v326
    %v2406 = vunpack.c.h.b16 %v326
    %v2407 = vunpack.c.l.b16 %v327
    %v2408 = vunpack.c.h.b16 %v327
    %v2409 = vunpack.c.l.b16 %v328
    %v2410 = vunpack.c.h.b16 %v328
    %v2411 = vunpack.c.l.b16 %v329
    %v2412 = vunpack.c.h.b16 %v329
    %v2413 = vunpack.c.l.b16 %v330
    %v2414 = vunpack.c.h.b16 %v330
    %v2415 = vunpack.c.l.b16 %v331
    %v2416 = vunpack.c.h.b16 %v331
    %v2417 = vunpack.c.l.b16 %v332
    %v2418 = vunpack.c.h.b16 %v332
    %v2419 = vunpack.c.l.b16 %v333
    %v2420 = vunpack.c.h.b16 %v333
    %v2421 = vunpack.c.l.b16 %v334
    %v2422 = vunpack.c.h.b16 %v334
    %v2423 = vunpack.c.l.b16 %v335
    %v2424 = vunpack.c.h.b16 %v335
    %v2425 = vunpack.c.l.b16 %v336
    %v2426 = vunpack.c.h.b16 %v336
    %v2427 = vunpack.c.l.b16 %v337
    %v2428 = vunpack.c.h.b16 %v337
    %v2429 = vunpack.c.l.b16 %v338
    %v2430 = vunpack.c.h.b16 %v338
    %v2431 = vunpack.c.l.b16 %v339
    %v2432 = vunpack.c.h.b16 %v339
    %v2433 = vunpack.c.l.b16 %v340
    %v2434 = vunpack.c.h.b16 %v340
    %v2435 = vunpack.c.l.b16 %v341
    %v2436 = vunpack.c.h.b16 %v341
    %v2437 = vunpack.c.l.b16 %v342
    %v2438 = vunpack.c.h.b16 %v342
    %v2439 = vunpack.c.l.b16 %v343
    %v2440 = vunpack.c.h.b16 %v343
    %v2441 = vunpack.c.l.b16 %v344
    %v2442 = vunpack.c.h.b16 %v344
    %v2443 = vunpack.c.l.b16 %v345
    %v2444 = vunpack.c.h.b16 %v345
    %v2445 = vunpack.c.l.b16 %v346
    %v2446 = vunpack.c.h.b16 %v346
    %v2447 = vunpack.c.l.b16 %v347
    %v2448 = vunpack.c.h.b16 %v347
    %v2449 = vunpack.c.l.b16 %v348
    %v2450 = vunpack.c.h.b16 %v348
    %v2451 = vunpack.c.l.b16 %v349
    %v2452 = vunpack.c.h.b16 %v349
    %v2453 = vunpack.c.l.b16 %v350
    %v2454 = vunpack.c.h.b16 %v350
    %v2455 = vunpack.c.l.b16 %v351
    %v2456 = vunpack.c.h.b16 %v351
    %v2457 = vunpack.c.l.b16 %v352
    %v2458 = vunpack.c.h.b16 %v352
    %v2459 = vunpack.c.l.b16 %v353
    %v2460 = vunpack.c.h.b16 %v353
    %v2461 = vunpack.c.l.b16 %v354
    %v2462 = vunpack.c.h.b16 %v354
    %v2463 = vunpack.c.l.b16 %v355
    %v2464 = vunpack.c.h.b16 %v355
    %v2465 = vunpack.c.l.b16 %v356
    %v2466 = vunpack.c.h.b16 %v356
    %v2467 = vunpack.c.l.b16 %v357
    %v2468 = vunpack.c.h.b16 %v357
    %v2469 = vunpack.c.l.b16 %v358
    %v2470 = vunpack.c.h.b16 %v358
    %v2471 = vunpack.c.l.b16 %v359
    %v2472 = vunpack.c.h.b16 %v359
    %v2473 = vunpack.c.l.b16 %v360
    %v2474 = vunpack.c.h.b16 %v360
    %v2475 = vunpack.c.l.b16 %v361
    %v2476 = vunpack.c.h.b16 %v361
    %v2477 = vunpack.c.l.b16 %v362
    %v2478 = vunpack.c.h.b16 %v362
    %v2479 = vunpack.c.l.b16 %v363
    %v2480 = vunpack.c.h.b16 %v363
    %v2481 = vunpack.c.l.b16 %v364
    %v2482 = vunpack.c.h.b16 %v364
    %v2483 = vunpack.c.l.b16 %v365
    %v2484 = vunpack.c.h.b16 %v365
    %v2485 = vunpack.c.l.b16 %v366
    %v2486 = vunpack.c.h.b16 %v366
    %v2487 = vunpack.c.l.b16 %v367
    %v2488 = vunpack.c.h.b16 %v367
    %v2489 = vunpack.c.l.b16 %v368
    %v2490 = vunpack.c.h.b16 %v368
    %v2491 = vunpack.c.l.b16 %v369
    %v2492 = vunpack.c.h.b16 %v369
    %v2493 = vunpack.c.l.b16 %v370
    %v2494 = vunpack.c.h.b16 %v370
    %v2495 = vunpack.c.l.b16 %v371
    %v2496 = vunpack.c.h.b16 %v371
    %v2497 = vunpack.c.l.b16 %v372
    %v2498 = vunpack.c.h.b16 %v372
    %v2499 = vunpack.c.l.b16 %v373
    %v2500 = vunpack.c.h.b16 %v373
    %v2501 = vunpack.c.l.b16 %v374
    %v2502 = vunpack.c.h.b16 %v374
    %v2503 = vunpack.c.l.b16 %v375
    %v2504 = vunpack.c.h.b16 %v375
    %v2505 = vunpack.c.l.b16 %v376
    %v2506 = vunpack.c.h.b16 %v376
    %v2507 = vunpack.c.l.b16 %v377
    %v2508 = vunpack.c.h.b16 %v377
    %v2509 = vunpack.c.l.b16 %v378
    %v2510 = vunpack.c.h.b16 %v378
    %v2511 = vunpack.c.l.b16 %v379
    %v2512 = vunpack.c.h.b16 %v379
    %v2513 = vunpack.c.l.b16 %v380
    %v2514 = vunpack.c.h.b16 %v380
    %v2515 = vunpack.c.l.b16 %v381
    %v2516 = vunpack.c.h.b16 %v381
    %v2517 = vunpack.c.l.b16 %v382
    %v2518 = vunpack.c.h.b16 %v382
    %v2519 = vunpack.c.l.b16 %v383
    %v2520 = vunpack.c.h.b16 %v383
    %v2521 = vunpack.c.l.b16 %v384
    %v2522 = vunpack.c.h.b16 %v384
    %v2523 = vunpack.c.l.b16 %v385
    %v2524 = vunpack.c.h.b16 %v385
    %v2525 = vunpack.c.l.b16 %v386
    %v2526 = vunpack.c.h.b16 %v386
    %v2527 = vunpack.c.l.b16 %v387
    %v2528 = vunpack.c.h.b16 %v387
    %v2529 = vunpack.c.l.b16 %v388
    %v2530 = vunpack.c.h.b16 %v388
    %v2531 = vunpack.c.l.b16 %v389
    %v2532 = vunpack.c.h.b16 %v389
    %v2533 = vunpack.c.l.b16 %v390
    %v2534 = vunpack.c.h.b16 %v390
    %v2535 = vunpack.c.l.b16 %v391
    %v2536 = vunpack.c.h.b16 %v391
    %v2537 = vunpack.c.l.b16 %v392
    %v2538 = vunpack.c.h.b16 %v392
    %v2539 = vunpack.c.l.b16 %v393
    %v2540 = vunpack.c.h.b16 %v393
    %v2541 = vunpack.c.l.b16 %v394
    %v2542 = vunpack.c.h.b16 %v394
    %v2543 = vunpack.c.l.b16 %v395
    %v2544 = vunpack.c.h.b16 %v395
    %v2545 = vunpack.c.l.b16 %v396
    %v2546 = vunpack.c.h.b16 %v396
    %v2547 = vunpack.c.l.b16 %v397
    %v2548 = vunpack.c.h.b16 %v397
    %v2549 = vunpack.c.l.b16 %v398
    %v2550 = vunpack.c.h.b16 %v398
    %v2551 = vunpack.c.l.b16 %v399
    %v2552 = vunpack.c.h.b16 %v399
    %v2553 = vunpack.c.l.b16 %v400
    %v2554 = vunpack.c.h.b16 %v400
    %v2555 = vunpack.c.l.b16 %v401
    %v2556 = vunpack.c.h.b16 %v401
    %v2557 = vunpack.c.l.b16 %v402
    %v2558 = vunpack.c.h.b16 %v402
    %v2559 = vunpack.c.l.b16 %v403
    %v2560 = vunpack.c.h.b16 %v403
    %v2561 = vunpack.c.l.b16 %v404
    %v2562 = vunpack.c.h.b16 %v404
    %v2563 = vunpack.c.l.b16 %v405
    %v2564 = vunpack.c.h.b16 %v405
    %v2565 = vunpack.c.l.b16 %v406
    %v2566 = vunpack.c.h.b16 %v406
    %v2567 = vunpack.c.l.b16 %v407
    %v2568 = vunpack.c.h.b16 %v407
    %v2569 = vunpack.c.l.b16 %v408
    %v2570 = vunpack.c.h.b16 %v408
    %v2571 = vunpack.c.l.b16 %v409
    %v2572 = vunpack.c.h.b16 %v409
    %v2573 = vunpack.c.l.b16 %v410
    %v2574 = vunpack.c.h.b16 %v410
    %v2575 = vunpack.c.l.b16 %v411
    %v2576 = vunpack.c.h.b16 %v411
    %v2577 = vunpack.c.l.b16 %v412
    %v2578 = vunpack.c.h.b16 %v412
    %v2579 = vunpack.c.l.b16 %v413
    %v2580 = vunpack.c.h.b16 %v413
    %v2581 = vunpack.c.l.b16 %v414
    %v2582 = vunpack.c.h.b16 %v414
    %v2583 = vunpack.c.l.b16 %v415
    %v2584 = vunpack.c.h.b16 %v415
    %v2585 = vunpack.c.l.b16 %v416
    %v2586 = vunpack.c.h.b16 %v416
    %v2587 = vunpack.c.l.b16 %v417
    %v2588 = vunpack.c.h.b16 %v417
    %v2589 = vunpack.c.l.b16 %v418
    %v2590 = vunpack.c.h.b16 %v418
    %v2591 = vunpack.c.l.b16 %v419
    %v2592 = vunpack.c.h.b16 %v419
    %v2593 = vunpack.c.l.b16 %v420
    %v2594 = vunpack.c.h.b16 %v420
    %v2595 = vunpack.c.l.b16 %v421
    %v2596 = vunpack.c.h.b16 %v421
    %v2597 = vunpack.c.l.b16 %v422
    %v2598 = vunpack.c.h.b16 %v422
    %v2599 = vunpack.c.l.b16 %v423
    %v2600 = vunpack.c.h.b16 %v423
    %v2601 = vunpack.c.l.b16 %v424
    %v2602 = vunpack.c.h.b16 %v424
    %v2603 = vunpack.c.l.b16 %v425
    %v2604 = vunpack.c.h.b16 %v425
    %v2605 = vunpack.c.l.b16 %v426
    %v2606 = vunpack.c.h.b16 %v426
    %v2607 = vunpack.c.l.b16 %v427
    %v2608 = vunpack.c.h.b16 %v427
    %v2609 = vunpack.c.l.b16 %v428
    %v2610 = vunpack.c.h.b16 %v428
    %v2611 = vunpack.c.l.b16 %v429
    %v2612 = vunpack.c.h.b16 %v429
    %v2613 = vunpack.c.l.b16 %v430
    %v2614 = vunpack.c.h.b16 %v430
    %v2615 = vunpack.c.l.b16 %v431
    %v2616 = vunpack.c.h.b16 %v431
    %v2617 = vunpack.c.l.b16 %v432
    %v2618 = vunpack.c.h.b16 %v432
    %v2619 = vunpack.c.l.b16 %v433
    %v2620 = vunpack.c.h.b16 %v433
    %v2621 = vunpack.c.l.b16 %v434
    %v2622 = vunpack.c.h.b16 %v434
    %v2623 = vunpack.c.l.b16 %v435
    %v2624 = vunpack.c.h.b16 %v435
    %v2625 = vunpack.c.l.b16 %v436
    %v2626 = vunpack.c.h.b16 %v436
    %v2627 = vunpack.c.l.b16 %v437
    %v2628 = vunpack.c.h.b16 %v437
    %v2629 = vunpack.c.l.b16 %v438
    %v2630 = vunpack.c.h.b16 %v438
    %v2631 = vunpack.c.l.b16 %v439
    %v2632 = vunpack.c.h.b16 %v439
    %v2633 = vunpack.c.l.b16 %v440
    %v2634 = vunpack.c.h.b16 %v440
    %v2635 = vunpack.c.l.b16 %v441
    %v2636 = vunpack.c.h.b16 %v441
    %v2637 = vunpack.c.l.b16 %v442
    %v2638 = vunpack.c.h.b16 %v442
    %v2639 = vunpack.c.l.b16 %v443
    %v2640 = vunpack.c.h.b16 %v443
    %v2641 = vunpack.c.l.b16 %v444
    %v2642 = vunpack.c.h.b16 %v444
    %v2643 = vunpack.c.l.b16 %v445
    %v2644 = vunpack.c.h.b16 %v445
    %v2645 = vunpack.c.l.b16 %v446
    %v2646 = vunpack.c.h.b16 %v446
    %v2647 = vunpack.c.l.b16 %v447
    %v2648 = vunpack.c.h.b16 %v447
    %v2649 = vunpack.c.l.b16 %v448
    %v2650 = vunpack.c.h.b16 %v448
    %v2651 = vunpack.c.l.b16 %v449
    %v2652 = vunpack.c.h.b16 %v449
    %v2653 = vunpack.c.l.b16 %v450
    %v2654 = vunpack.c.h.b16 %v450
    %v2655 = vunpack.c.l.b16 %v451
    %v2656 = vunpack.c.h.b16 %v451
    %v2657 = vunpack.c.l.b16 %v452
    %v2658 = vunpack.c.h.b16 %v452
    %v2659 = vunpack.c.l.b16 %v453
    %v2660 = vunpack.c.h.b16 %v453
    %v2661 = vunpack.c.l.b16 %v454
    %v2662 = vunpack.c.h.b16 %v454
    %v2663 = vunpack.c.l.b16 %v455
    %v2664 = vunpack.c.h.b16 %v455
    %v2665 = vunpack.c.l.b16 %v456
    %v2666 = vunpack.c.h.b16 %v456
    %v2667 = vunpack.c.l.b16 %v457
    %v2668 = vunpack.c.h.b16 %v457
    %v2669 = vunpack.c.l.b16 %v458
    %v2670 = vunpack.c.h.b16 %v458
    %v2671 = vunpack.c.l.b16 %v459
    %v2672 = vunpack.c.h.b16 %v459
    %v2673 = vunpack.c.l.b16 %v460
    %v2674 = vunpack.c.h.b16 %v460
    %v2675 = vunpack.c.l.b16 %v461
    %v2676 = vunpack.c.h.b16 %v461
    %v2677 = vunpack.c.l.b16 %v462
    %v2678 = vunpack.c.h.b16 %v462
    %v2679 = vunpack.c.l.b16 %v463
    %v2680 = vunpack.c.h.b16 %v463
    %v2681 = vunpack.c.l.b16 %v464
    %v2682 = vunpack.c.h.b16 %v464
    %v2683 = vunpack.c.l.b16 %v465
    %v2684 = vunpack.c.h.b16 %v465
    %v2685 = vunpack.c.l.b16 %v466
    %v2686 = vunpack.c.h.b16 %v466
    %v2687 = vunpack.c.l.b16 %v467
    %v2688 = vunpack.c.h.b16 %v467
    %v2689 = vunpack.c.l.b16 %v468
    %v2690 = vunpack.c.h.b16 %v468
    %v2691 = vunpack.c.l.b16 %v469
    %v2692 = vunpack.c.h.b16 %v469
    %v2693 = vunpack.c.l.b16 %v470
    %v2694 = vunpack.c.h.b16 %v470
    %v2695 = vunpack.c.l.b16 %v471
    %v2696 = vunpack.c.h.b16 %v471
    %v2697 = vunpack.c.l.b16 %v472
    %v2698 = vunpack.c.h.b16 %v472
    %v2699 = vunpack.c.l.b16 %v473
    %v2700 = vunpack.c.h.b16 %v473
    %v2701 = vunpack.c.l.b16 %v474
    %v2702 = vunpack.c.h.b16 %v474
    %v2703 = vunpack.c.l.b16 %v475
    %v2704 = vunpack.c.h.b16 %v475
    %v2705 = vunpack.c.l.b16 %v476
    %v2706 = vunpack.c.h.b16 %v476
    %v2707 = vunpack.c.l.b16 %v477
    %v2708 = vunpack.c.h.b16 %v477
    %v2709 = vunpack.c.l.b16 %v478
    %v2710 = vunpack.c.h.b16 %v478
    %v2711 = vunpack.c.l.b16 %v479
    %v2712 = vunpack.c.h.b16 %v479
    %v2713 = vunpack.c.l.b16 %v480
    %v2714 = vunpack.c.h.b16 %v480
    %v2715 = vunpack.c.l.b16 %v481
    %v2716 = vunpack.c.h.b16 %v481
    %v2717 = vunpack.c.l.b16 %v482
    %v2718 = vunpack.c.h.b16 %v482
    %v2719 = vunpack.c.l.b16 %v483
    %v2720 = vunpack.c.h.b16 %v483
    %v2721 = vunpack.c.l.b16 %v484
    %v2722 = vunpack.c.h.b16 %v484
    %v2723 = vunpack.c.l.b16 %v485
    %v2724 = vunpack.c.h.b16 %v485
    %v2725 = vunpack.c.l.b16 %v486
    %v2726 = vunpack.c.h.b16 %v486
    %v2727 = vunpack.c.l.b16 %v487
    %v2728 = vunpack.c.h.b16 %v487
    %v2729 = vunpack.c.l.b16 %v488
    %v2730 = vunpack.c.h.b16 %v488
    %v2731 = vunpack.c.l.b16 %v489
    %v2732 = vunpack.c.h.b16 %v489
    %v2733 = vunpack.c.l.b16 %v490
    %v2734 = vunpack.c.h.b16 %v490
    %v2735 = vunpack.c.l.b16 %v491
    %v2736 = vunpack.c.h.b16 %v491
    %v2737 = vunpack.c.l.b16 %v492
    %v2738 = vunpack.c.h.b16 %v492
    %v2739 = vunpack.c.l.b16 %v493
    %v2740 = vunpack.c.h.b16 %v493
    %v2741 = vunpack.c.l.b16 %v494
    %v2742 = vunpack.c.h.b16 %v494
    %v2743 = vunpack.c.l.b16 %v495
    %v2744 = vunpack.c.h.b16 %v495
    %v2745 = vunpack.c.l.b16 %v496
    %v2746 = vunpack.c.h.b16 %v496
    %v2747 = vunpack.c.l.b16 %v497
    %v2748 = vunpack.c.h.b16 %v497
    %v2749 = vunpack.c.l.b16 %v498
    %v2750 = vunpack.c.h.b16 %v498
    %v2751 = vunpack.c.l.b16 %v499
    %v2752 = vunpack.c.h.b16 %v499
    %v2753 = vunpack.c.l.b16 %v500
    %v2754 = vunpack.c.h.b16 %v500
    %v2755 = vunpack.c.l.b16 %v501
    %v2756 = vunpack.c.h.b16 %v501
    %v2757 = vunpack.c.l.b16 %v502
    %v2758 = vunpack.c.h.b16 %v502
    %v2759 = vunpack.c.l.b16 %v503
    %v2760 = vunpack.c.h.b16 %v503
    %v2761 = vunpack.c.l.b16 %v504
    %v2762 = vunpack.c.h.b16 %v504
    %v2763 = vunpack.c.l.b16 %v505
    %v2764 = vunpack.c.h.b16 %v505
    %v2765 = vunpack.c.l.b16 %v506
    %v2766 = vunpack.c.h.b16 %v506
    %v2767 = vunpack.c.l.b16 %v507
    %v2768 = vunpack.c.h.b16 %v507
    %v2769 = vunpack.c.l.b16 %v508
    %v2770 = vunpack.c.h.b16 %v508
    %v2771 = vunpack.c.l.b16 %v509
    %v2772 = vunpack.c.h.b16 %v509
    %v2773 = vunpack.c.l.b16 %v510
    %v2774 = vunpack.c.h.b16 %v510
    %v2775 = vunpack.c.l.b16 %v511
    %v2776 = vunpack.c.h.b16 %v511
    %v2777 = vunpack.c.l.b16 %v512
    %v2778 = vunpack.c.h.b16 %v512
    %v2779 = vunpack.c.l.b16 %v513
    %v2780 = vunpack.c.h.b16 %v513
    %v2781 = vunpack.c.l.b16 %v514
    %v2782 = vunpack.c.h.b16 %v514
    %v2783 = vunpack.c.l.b16 %v515
    %v2784 = vunpack.c.h.b16 %v515
    %v2785 = vunpack.c.l.b16 %v516
    %v2786 = vunpack.c.h.b16 %v516
    %v2787 = vunpack.c.l.b16 %v517
    %v2788 = vunpack.c.h.b16 %v517
    %v2789 = vunpack.c.l.b16 %v518
    %v2790 = vunpack.c.h.b16 %v518
    %v2791 = vunpack.c.l.b16 %v519
    %v2792 = vunpack.c.h.b16 %v519
    %v2793 = vunpack.c.l.b16 %v520
    %v2794 = vunpack.c.h.b16 %v520
    %v2795 = vunpack.c.l.b16 %v521
    %v2796 = vunpack.c.h.b16 %v521
    %v2797 = vunpack.c.l.b16 %v522
    %v2798 = vunpack.c.h.b16 %v522
    %v2799 = vunpack.c.l.b16 %v523
    %v2800 = vunpack.c.h.b16 %v523
    %v2801 = vunpack.c.l.b16 %v524
    %v2802 = vunpack.c.h.b16 %v524
    %v2803 = vunpack.c.l.b16 %v525
    %v2804 = vunpack.c.h.b16 %v525
    %v2805 = vunpack.c.l.b16 %v526
    %v2806 = vunpack.c.h.b16 %v526
    %v2807 = vunpack.c.l.b16 %v527
    %v2808 = vunpack.c.h.b16 %v527
    %v2809 = vunpack.c.l.b16 %v528
    %v2810 = vunpack.c.h.b16 %v528
    %v2811 = vunpack.c.l.b16 %v529
    %v2812 = vunpack.c.h.b16 %v529
    %v2813 = vunpack.c.l.b16 %v530
    %v2814 = vunpack.c.h.b16 %v530
    %v2815 = vunpack.c.l.b16 %v531
    %v2816 = vunpack.c.h.b16 %v531
    %v2817 = vunpack.c.l.b16 %v532
    %v2818 = vunpack.c.h.b16 %v532
    %v2819 = vunpack.c.l.b16 %v533
    %v2820 = vunpack.c.h.b16 %v533
    %v2821 = vunpack.c.l.b16 %v534
    %v2822 = vunpack.c.h.b16 %v534
    %v2823 = vunpack.c.l.b16 %v535
    %v2824 = vunpack.c.h.b16 %v535
    %v2825 = vunpack.c.l.b16 %v536
    %v2826 = vunpack.c.h.b16 %v536
    %v2827 = vunpack.c.l.b16 %v537
    %v2828 = vunpack.c.h.b16 %v537
    %v2829 = vunpack.c.l.b16 %v538
    %v2830 = vunpack.c.h.b16 %v538
    %v2831 = vunpack.c.l.b16 %v539
    %v2832 = vunpack.c.h.b16 %v539
    %v2833 = vunpack.c.l.b16 %v540
    %v2834 = vunpack.c.h.b16 %v540
    %v2835 = vunpack.c.l.b16 %v541
    %v2836 = vunpack.c.h.b16 %v541
    %v2837 = vunpack.c.l.b16 %v542
    %v2838 = vunpack.c.h.b16 %v542
    %v2839 = vunpack.c.l.b16 %v543
    %v2840 = vunpack.c.h.b16 %v543
    %v2841 = vunpack.c.l.b16 %v544
    %v2842 = vunpack.c.h.b16 %v544
    %v2843 = vunpack.c.l.b16 %v545
    %v2844 = vunpack.c.h.b16 %v545
    %v2845 = vunpack.c.l.b16 %v546
    %v2846 = vunpack.c.h.b16 %v546
    %v2847 = vunpack.c.l.b16 %v547
    %v2848 = vunpack.c.h.b16 %v547
    %v2849 = vunpack.c.l.b16 %v548
    %v2850 = vunpack.c.h.b16 %v548
    %v2851 = vunpack.c.l.b16 %v549
    %v2852 = vunpack.c.h.b16 %v549
    %v2853 = vunpack.c.l.b16 %v550
    %v2854 = vunpack.c.h.b16 %v550
    %v2855 = vunpack.c.l.b16 %v551
    %v2856 = vunpack.c.h.b16 %v551
    %v2857 = vunpack.c.l.b16 %v552
    %v2858 = vunpack.c.h.b16 %v552
    %v2859 = vunpack.c.l.b16 %v553
    %v2860 = vunpack.c.h.b16 %v553
    %v2861 = vunpack.c.l.b16 %v554
    %v2862 = vunpack.c.h.b16 %v554
    %v2863 = vunpack.c.l.b16 %v555
    %v2864 = vunpack.c.h.b16 %v555
    %v2865 = vunpack.c.l.b16 %v556
    %v2866 = vunpack.c.h.b16 %v556
    %v2867 = vunpack.c.l.b16 %v557
    %v2868 = vunpack.c.h.b16 %v557
    %v2869 = vunpack.c.l.b16 %v558
    %v2870 = vunpack.c.h.b16 %v558
    %v2871 = vunpack.c.l.b16 %v559
    %v2872 = vunpack.c.h.b16 %v559
    %v2873 = vunpack.c.l.b16 %v560
    %v2874 = vunpack.c.h.b16 %v560
    %v2875 = vunpack.c.l.b16 %v561
    %v2876 = vunpack.c.h.b16 %v561
    %v2877 = vunpack.c.l.b16 %v562
    %v2878 = vunpack.c.h.b16 %v562
    %v2879 = vunpack.c.l.b16 %v563
    %v2880 = vunpack.c.h.b16 %v563
    %v2881 = vunpack.c.l.b16 %v564
    %v2882 = vunpack.c.h.b16 %v564
    %v2883 = vunpack.c.l.b16 %v565
    %v2884 = vunpack.c.h.b16 %v565
    %v2885 = vunpack.c.l.b16 %v566
    %v2886 = vunpack.c.h.b16 %v566
    %v2887 = vunpack.c.l.b16 %v567
    %v2888 = vunpack.c.h.b16 %v567
    %v2889 = vunpack.c.l.b16 %v568
    %v2890 = vunpack.c.h.b16 %v568
    %v2891 = vunpack.c.l.b16 %v569
    %v2892 = vunpack.c.h.b16 %v569
    %v2893 = vunpack.c.l.b16 %v570
    %v2894 = vunpack.c.h.b16 %v570
    %v2895 = vunpack.c.l.b16 %v571
    %v2896 = vunpack.c.h.b16 %v571
    %v2897 = vunpack.c.l.b16 %v572
    %v2898 = vunpack.c.h.b16 %v572
    %v2899 = vunpack.c.l.b16 %v573
    %v2900 = vunpack.c.h.b16 %v573
    %v2901 = vunpack.c.l.b16 %v574
    %v2902 = vunpack.c.h.b16 %v574
    %v2903 = vunpack.c.l.b16 %v575
    %v2904 = vunpack.c.h.b16 %v575
    %v2905 = vunpack.c.l.b16 %v576
    %v2906 = vunpack.c.h.b16 %v576
    %v2907 = vunpack.c.l.b16 %v577
    %v2908 = vunpack.c.h.b16 %v577
    %v2909 = vunpack.c.l.b16 %v578
    %v2910 = vunpack.c.h.b16 %v578
    %v2911 = vunpack.c.l.b16 %v579
    %v2912 = vunpack.c.h.b16 %v579
    %v2913 = vunpack.c.l.b16 %v580
    %v2914 = vunpack.c.h.b16 %v580
    %v2915 = vunpack.c.l.b16 %v581
    %v2916 = vunpack.c.h.b16 %v581
    %v2917 = vunpack.c.l.b16 %v582
    %v2918 = vunpack.c.h.b16 %v582
    %v2919 = vunpack.c.l.b16 %v583
    %v2920 = vunpack.c.h.b16 %v583
    %v2921 = vunpack.c.l.b16 %v584
    %v2922 = vunpack.c.h.b16 %v584
    %v2923 = vunpack.c.l.b16 %v585
    %v2924 = vunpack.c.h.b16 %v585
    %v2925 = vunpack.c.l.b16 %v586
    %v2926 = vunpack.c.h.b16 %v586
    %v2927 = vunpack.c.l.b16 %v587
    %v2928 = vunpack.c.h.b16 %v587
    %v2929 = vunpack.c.l.b16 %v588
    %v2930 = vunpack.c.h.b16 %v588
    %v2931 = vunpack.c.l.b16 %v589
    %v2932 = vunpack.c.h.b16 %v589
    %v2933 = vunpack.c.l.b16 %v590
    %v2934 = vunpack.c.h.b16 %v590
    %v2935 = vunpack.c.l.b16 %v591
    %v2936 = vunpack.c.h.b16 %v591
    %v2937 = vunpack.c.l.b16 %v592
    %v2938 = vunpack.c.h.b16 %v592
    %v2939 = vunpack.c.l.b16 %v593
    %v2940 = vunpack.c.h.b16 %v593
    %v2941 = vunpack.c.l.b16 %v594
    %v2942 = vunpack.c.h.b16 %v594
    %v2943 = vunpack.c.l.b16 %v595
    %v2944 = vunpack.c.h.b16 %v595
    %v2945 = vunpack.c.l.b16 %v596
    %v2946 = vunpack.c.h.b16 %v596
    %v2947 = vunpack.c.l.b16 %v597
    %v2948 = vunpack.c.h.b16 %v597
    %v2949 = vunpack.c.l.b16 %v598
    %v2950 = vunpack.c.h.b16 %v598
    %v2951 = vunpack.c.l.b16 %v599
    %v2952 = vunpack.c.h.b16 %v599
    %v2953 = vunpack.c.l.b16 %v600
    %v2954 = vunpack.c.h.b16 %v600
    %v2955 = vunpack.c.l.b16 %v601
    %v2956 = vunpack.c.h.b16 %v601
    %v2957 = vunpack.c.l.b16 %v602
    %v2958 = vunpack.c.h.b16 %v602
    %v2959 = vunpack.c.l.b16 %v603
    %v2960 = vunpack.c.h.b16 %v603
    %v2961 = vunpack.c.l.b16 %v604
    %v2962 = vunpack.c.h.b16 %v604
    %v2963 = vunpack.c.l.b16 %v605
    %v2964 = vunpack.c.h.b16 %v605
    %v2965 = vunpack.c.l.b16 %v606
    %v2966 = vunpack.c.h.b16 %v606
    %v2967 = vunpack.c.l.b16 %v607
    %v2968 = vunpack.c.h.b16 %v607
    %v2969 = vunpack.c.l.b16 %v608
    %v2970 = vunpack.c.h.b16 %v608
    %v2971 = vunpack.c.l.b16 %v609
    %v2972 = vunpack.c.h.b16 %v609
    %v2973 = vunpack.c.l.b16 %v610
    %v2974 = vunpack.c.h.b16 %v610
    %v2975 = vunpack.c.l.b16 %v611
    %v2976 = vunpack.c.h.b16 %v611
    %v2977 = vunpack.c.l.b16 %v612
    %v2978 = vunpack.c.h.b16 %v612
    %v2979 = vunpack.c.l.b16 %v613
    %v2980 = vunpack.c.h.b16 %v613
    %v2981 = vunpack.c.l.b16 %v614
    %v2982 = vunpack.c.h.b16 %v614
    %v2983 = vunpack.c.l.b16 %v615
    %v2984 = vunpack.c.h.b16 %v615
    %v2985 = vunpack.c.l.b16 %v616
    %v2986 = vunpack.c.h.b16 %v616
    %v2987 = vunpack.c.l.b16 %v617
    %v2988 = vunpack.c.h.b16 %v617
    %v2989 = vunpack.c.l.b16 %v618
    %v2990 = vunpack.c.h.b16 %v618
    %v2991 = vunpack.c.l.b16 %v619
    %v2992 = vunpack.c.h.b16 %v619
    %v2993 = vunpack.c.l.b16 %v620
    %v2994 = vunpack.c.h.b16 %v620
    %v2995 = vunpack.c.l.b16 %v621
    %v2996 = vunpack.c.h.b16 %v621
    %v2997 = vunpack.c.l.b16 %v622
    %v2998 = vunpack.c.h.b16 %v622
    %v2999 = vunpack.c.l.b16 %v623
    %v3000 = vunpack.c.h.b16 %v623
    %v3001 = vunpack.c.l.b16 %v624
    %v3002 = vunpack.c.h.b16 %v624
    %v3003 = vunpack.c.l.b16 %v625
    %v3004 = vunpack.c.h.b16 %v625
    %v3005 = vunpack.c.l.b16 %v626
    %v3006 = vunpack.c.h.b16 %v626
    %v3007 = vunpack.c.l.b16 %v627
    %v3008 = vunpack.c.h.b16 %v627
    %v3009 = vunpack.c.l.b16 %v628
    %v3010 = vunpack.c.h.b16 %v628
    %v3011 = vunpack.c.l.b16 %v629
    %v3012 = vunpack.c.h.b16 %v629
    %v3013 = vunpack.c.l.b16 %v630
    %v3014 = vunpack.c.h.b16 %v630
    %v3015 = vunpack.c.l.b16 %v631
    %v3016 = vunpack.c.h.b16 %v631
    %v3017 = vunpack.c.l.b16 %v632
    %v3018 = vunpack.c.h.b16 %v632
    %v3019 = vunpack.c.l.b16 %v633
    %v3020 = vunpack.c.h.b16 %v633
    %v3021 = vunpack.c.l.b16 %v634
    %v3022 = vunpack.c.h.b16 %v634
    %v3023 = vunpack.c.l.b16 %v635
    %v3024 = vunpack.c.h.b16 %v635
    %v3025 = vunpack.c.l.b16 %v636
    %v3026 = vunpack.c.h.b16 %v636
    %v3027 = vunpack.c.l.b16 %v637
    %v3028 = vunpack.c.h.b16 %v637
    %v3029 = vunpack.c.l.b16 %v638
    %v3030 = vunpack.c.h.b16 %v638
    %v3031 = vunpack.c.l.b16 %v639
    %v3032 = vunpack.c.h.b16 %v639
    %v3033 = vunpack.c.l.b16 %v640
    %v3034 = vunpack.c.h.b16 %v640
    %v3035 = vunpack.c.l.b16 %v641
    %v3036 = vunpack.c.h.b16 %v641
    %v3037 = vunpack.c.l.b16 %v642
    %v3038 = vunpack.c.h.b16 %v642
    %v3039 = vunpack.c.l.b16 %v643
    %v3040 = vunpack.c.h.b16 %v643
    %v3041 = vunpack.c.l.b16 %v644
    %v3042 = vunpack.c.h.b16 %v644
    %v3043 = vunpack.c.l.b16 %v645
    %v3044 = vunpack.c.h.b16 %v645
    %v3045 = vunpack.c.l.b16 %v646
    %v3046 = vunpack.c.h.b16 %v646
    %v3047 = vunpack.c.l.b16 %v647
    %v3048 = vunpack.c.h.b16 %v647
    %v3049 = vunpack.c.l.b16 %v648
    %v3050 = vunpack.c.h.b16 %v648
    %v3051 = vunpack.c.l.b16 %v649
    %v3052 = vunpack.c.h.b16 %v649
    %v3053 = vunpack.c.l.b16 %v650
    %v3054 = vunpack.c.h.b16 %v650
    %v3055 = vunpack.c.l.b16 %v651
    %v3056 = vunpack.c.h.b16 %v651
    %v3057 = vunpack.c.l.b16 %v652
    %v3058 = vunpack.c.h.b16 %v652
    %v3059 = vunpack.c.l.b16 %v653
    %v3060 = vunpack.c.h.b16 %v653
    %v3061 = vunpack.c.l.b16 %v654
    %v3062 = vunpack.c.h.b16 %v654
    %v3063 = vunpack.c.l.b16 %v655
    %v3064 = vunpack.c.h.b16 %v655
    %v3065 = vunpack.c.l.b16 %v656
    %v3066 = vunpack.c.h.b16 %v656
    %v3067 = vunpack.c.l.b16 %v657
    %v3068 = vunpack.c.h.b16 %v657
    %v3069 = vunpack.c.l.b16 %v658
    %v3070 = vunpack.c.h.b16 %v658
    %v3071 = vunpack.c.l.b16 %v659
    %v3072 = vunpack.c.h.b16 %v659
    %v3073 = vunpack.c.l.b16 %v660
    %v3074 = vunpack.c.h.b16 %v660
    %v3075 = vunpack.c.l.b16 %v661
    %v3076 = vunpack.c.h.b16 %v661
    %v3077 = vunpack.c.l.b16 %v662
    %v3078 = vunpack.c.h.b16 %v662
    %v3079 = vunpack.c.l.b16 %v663
    %v3080 = vunpack.c.h.b16 %v663
    %v3081 = vunpack.c.l.b16 %v664
    %v3082 = vunpack.c.h.b16 %v664
    %v3083 = vunpack.c.l.b16 %v665
    %v3084 = vunpack.c.h.b16 %v665
    %v3085 = vunpack.c.l.b16 %v666
    %v3086 = vunpack.c.h.b16 %v666
    %v3087 = vunpack.c.l.b16 %v667
    %v3088 = vunpack.c.h.b16 %v667
    %v3089 = vunpack.c.l.b16 %v668
    %v3090 = vunpack.c.h.b16 %v668
    %v3091 = vunpack.c.l.b16 %v669
    %v3092 = vunpack.c.h.b16 %v669
    %v3093 = vunpack.c.l.b16 %v670
    %v3094 = vunpack.c.h.b16 %v670
    %v3095 = vunpack.c.l.b16 %v671
    %v3096 = vunpack.c.h.b16 %v671
    %v3097 = vunpack.c.l.b16 %v672
    %v3098 = vunpack.c.h.b16 %v672
    %v3099 = vunpack.c.l.b16 %v673
    %v3100 = vunpack.c.h.b16 %v673
    %v3101 = vunpack.c.l.b16 %v674
    %v3102 = vunpack.c.h.b16 %v674
    %v3103 = vunpack.c.l.b16 %v675
    %v3104 = vunpack.c.h.b16 %v675
    %v3105 = vunpack.c.l.b16 %v676
    %v3106 = vunpack.c.h.b16 %v676
    %v3107 = vunpack.c.l.b16 %v677
    %v3108 = vunpack.c.h.b16 %v677
    %v3109 = vunpack.c.l.b16 %v678
    %v3110 = vunpack.c.h.b16 %v678
    %v3111 = vunpack.c.l.b16 %v679
    %v3112 = vunpack.c.h.b16 %v679
    %v3113 = vunpack.c.l.b16 %v680
    %v3114 = vunpack.c.h.b16 %v680
    %v3115 = vunpack.c.l.b16 %v681
    %v3116 = vunpack.c.h.b16 %v681
    %v3117 = vunpack.c.l.b16 %v682
    %v3118 = vunpack.c.h.b16 %v682
    %v3119 = vunpack.c.l.b16 %v683
    %v3120 = vunpack.c.h.b16 %v683
    %v3121 = vunpack.c.l.b16 %v684
    %v3122 = vunpack.c.h.b16 %v684
    %v3123 = vunpack.c.l.b16 %v685
    %v3124 = vunpack.c.h.b16 %v685
    %v3125 = vunpack.c.l.b16 %v686
    %v3126 = vunpack.c.h.b16 %v686
    %v3127 = vunpack.c.l.b16 %v687
    %v3128 = vunpack.c.h.b16 %v687
    %v3129 = vunpack.c.l.b16 %v688
    %v3130 = vunpack.c.h.b16 %v688
    %v3131 = vunpack.c.l.b16 %v689
    %v3132 = vunpack.c.h.b16 %v689
    %v3133 = vunpack.c.l.b16 %v690
    %v3134 = vunpack.c.h.b16 %v690
    %v3135 = vunpack.c.l.b16 %v691
    %v3136 = vunpack.c.h.b16 %v691
    %v3137 = vunpack.c.l.b16 %v692
    %v3138 = vunpack.c.h.b16 %v692
    %v3139 = vunpack.c.l.b16 %v693
    %v3140 = vunpack.c.h.b16 %v693
    %v3141 = vunpack.c.l.b16 %v694
    %v3142 = vunpack.c.h.b16 %v694
    %v3143 = vunpack.c.l.b16 %v695
    %v3144 = vunpack.c.h.b16 %v695
    %v3145 = vunpack.c.l.b16 %v696
    %v3146 = vunpack.c.h.b16 %v696
    %v3147 = vunpack.c.l.b16 %v697
    %v3148 = vunpack.c.h.b16 %v697
    %v3149 = vunpack.c.l.b16 %v698
    %v3150 = vunpack.c.h.b16 %v698
    %v3151 = vunpack.c.l.b16 %v699
    %v3152 = vunpack.c.h.b16 %v699
    %v3153 = vunpack.c.l.b16 %v700
    %v3154 = vunpack.c.h.b16 %v700
    %v3155 = vunpack.c.l.b16 %v701
    %v3156 = vunpack.c.h.b16 %v701
    %v3157 = vunpack.c.l.b16 %v702
    %v3158 = vunpack.c.h.b16 %v702
    %v3159 = vunpack.c.l.b16 %v703
    %v3160 = vunpack.c.h.b16 %v703
    %v3161 = vunpack.c.l.b16 %v704
    %v3162 = vunpack.c.h.b16 %v704
    %v3163 = vunpack.c.l.b16 %v705
    %v3164 = vunpack.c.h.b16 %v705
    %v3165 = vunpack.c.l.b16 %v706
    %v3166 = vunpack.c.h.b16 %v706
    %v3167 = vunpack.c.l.b16 %v707
    %v3168 = vunpack.c.h.b16 %v707
    %v3169 = vunpack.c.l.b16 %v708
    %v3170 = vunpack.c.h.b16 %v708
    %v3171 = vunpack.c.l.b16 %v709
    %v3172 = vunpack.c.h.b16 %v709
    %v3173 = vunpack.c.l.b16 %v710
    %v3174 = vunpack.c.h.b16 %v710
    %v3175 = vunpack.c.l.b16 %v711
    %v3176 = vunpack.c.h.b16 %v711
    %v3177 = vunpack.c.l.b16 %v712
    %v3178 = vunpack.c.h.b16 %v712
    %v3179 = vunpack.c.l.b16 %v713
    %v3180 = vunpack.c.h.b16 %v713
    %v3181 = vunpack.c.l.b16 %v714
    %v3182 = vunpack.c.h.b16 %v714
    %v3183 = vunpack.c.l.b16 %v715
    %v3184 = vunpack.c.h.b16 %v715
    %v3185 = vunpack.c.l.b16 %v716
    %v3186 = vunpack.c.h.b16 %v716
    %v3187 = vunpack.c.l.b16 %v717
    %v3188 = vunpack.c.h.b16 %v717
    %v3189 = vunpack.c.l.b16 %v718
    %v3190 = vunpack.c.h.b16 %v718
    %v3191 = vunpack.c.l.b16 %v719
    %v3192 = vunpack.c.h.b16 %v719
    %v3193 = vunpack.c.l.b16 %v720
    %v3194 = vunpack.c.h.b16 %v720
    %v3195 = vunpack.c.l.b16 %v721
    %v3196 = vunpack.c.h.b16 %v721
    %v3197 = vunpack.c.l.b16 %v722
    %v3198 = vunpack.c.h.b16 %v722
    %v3199 = vunpack.c.l.b16 %v723
    %v3200 = vunpack.c.h.b16 %v723
    %v3201 = vunpack.c.l.b16 %v724
    %v3202 = vunpack.c.h.b16 %v724
    %v3203 = vunpack.c.l.b16 %v725
    %v3204 = vunpack.c.h.b16 %v725
    %v3205 = vunpack.c.l.b16 %v726
    %v3206 = vunpack.c.h.b16 %v726
    %v3207 = vunpack.c.l.b16 %v727
    %v3208 = vunpack.c.h.b16 %v727
    %v3209 = vunpack.c.l.b16 %v728
    %v3210 = vunpack.c.h.b16 %v728
    %v3211 = vunpack.c.l.b16 %v729
    %v3212 = vunpack.c.h.b16 %v729
    %v3213 = vunpack.c.l.b16 %v730
    %v3214 = vunpack.c.h.b16 %v730
    %v3215 = vunpack.c.l.b16 %v731
    %v3216 = vunpack.c.h.b16 %v731
    %v3217 = vunpack.c.l.b16 %v732
    %v3218 = vunpack.c.h.b16 %v732
    %v3219 = vunpack.c.l.b16 %v733
    %v3220 = vunpack.c.h.b16 %v733
    %v3221 = vunpack.c.l.b16 %v734
    %v3222 = vunpack.c.h.b16 %v734
    %v3223 = vunpack.c.l.b16 %v735
    %v3224 = vunpack.c.h.b16 %v735
    %v3225 = vunpack.c.l.b16 %v736
    %v3226 = vunpack.c.h.b16 %v736
    %v3227 = vunpack.c.l.b16 %v737
    %v3228 = vunpack.c.h.b16 %v737
    %v3229 = vunpack.c.l.b16 %v738
    %v3230 = vunpack.c.h.b16 %v738
    %v3231 = vunpack.c.l.b16 %v739
    %v3232 = vunpack.c.h.b16 %v739
    %v3233 = vunpack.c.l.b16 %v740
    %v3234 = vunpack.c.h.b16 %v740
    %v3235 = vunpack.c.l.b16 %v741
    %v3236 = vunpack.c.h.b16 %v741
    %v3237 = vunpack.c.l.b16 %v742
    %v3238 = vunpack.c.h.b16 %v742
    %v3239 = vunpack.c.l.b16 %v743
    %v3240 = vunpack.c.h.b16 %v743
    %v3241 = vunpack.c.l.b16 %v744
    %v3242 = vunpack.c.h.b16 %v744
    %v3243 = vunpack.c.l.b16 %v745
    %v3244 = vunpack.c.h.b16 %v745
    %v3245 = vunpack.c.l.b16 %v746
    %v3246 = vunpack.c.h.b16 %v746
    %v3247 = vunpack.c.l.b16 %v747
    %v3248 = vunpack.c.h.b16 %v747
    %v3249 = vunpack.c.l.b16 %v748
    %v3250 = vunpack.c.h.b16 %v748
    %v3251 = vunpack.c.l.b16 %v749
    %v3252 = vunpack.c.h.b16 %v749
    %v3253 = vunpack.c.l.b16 %v750
    %v3254 = vunpack.c.h.b16 %v750
    %v3255 = vunpack.c.l.b16 %v751
    %v3256 = vunpack.c.h.b16 %v751
    %v3257 = vunpack.c.l.b16 %v752
    %v3258 = vunpack.c.h.b16 %v752
    %v3259 = vunpack.c.l.b16 %v753
    %v3260 = vunpack.c.h.b16 %v753
    %v3261 = vunpack.c.l.b16 %v754
    %v3262 = vunpack.c.h.b16 %v754
    %v3263 = vunpack.c.l.b16 %v755
    %v3264 = vunpack.c.h.b16 %v755
    %v3265 = vunpack.c.l.b16 %v756
    %v3266 = vunpack.c.h.b16 %v756
    %v3267 = vunpack.c.l.b16 %v757
    %v3268 = vunpack.c.h.b16 %v757
    %v3269 = vunpack.c.l.b16 %v758
    %v3270 = vunpack.c.h.b16 %v758
    %v3271 = vunpack.c.l.b16 %v759
    %v3272 = vunpack.c.h.b16 %v759
    %v3273 = vunpack.c.l.b16 %v760
    %v3274 = vunpack.c.h.b16 %v760
    %v3275 = vunpack.c.l.b16 %v761
    %v3276 = vunpack.c.h.b16 %v761
    %v3277 = vunpack.c.l.b16 %v762
    %v3278 = vunpack.c.h.b16 %v762
    %v3279 = vunpack.c.l.b16 %v763
    %v3280 = vunpack.c.h.b16 %v763
    %v3281 = vunpack.c.l.b16 %v764
    %v3282 = vunpack.c.h.b16 %v764
    %v3283 = vunpack.c.l.b16 %v765
    %v3284 = vunpack.c.h.b16 %v765
    %v3285 = vunpack.c.l.b16 %v766
    %v3286 = vunpack.c.h.b16 %v766
    %v3287 = vunpack.c.l.b16 %v767
    %v3288 = vunpack.c.h.b16 %v767
    %v3289 = vunpack.c.l.b16 %v768
    %v3290 = vunpack.c.h.b16 %v768
    %v3291 = vunpack.c.l.b16 %v769
    %v3292 = vunpack.c.h.b16 %v769
    %v3293 = vunpack.c.l.b16 %v770
    %v3294 = vunpack.c.h.b16 %v770
    %v3295 = vunpack.c.l.b16 %v771
    %v3296 = vunpack.c.h.b16 %v771
    %v3297 = vunpack.c.l.b16 %v772
    %v3298 = vunpack.c.h.b16 %v772
    %v3299 = vunpack.c.l.b16 %v773
    %v3300 = vunpack.c.h.b16 %v773
    %v3301 = vunpack.c.l.b16 %v774
    %v3302 = vunpack.c.h.b16 %v774
    %v3303 = vunpack.c.l.b16 %v775
    %v3304 = vunpack.c.h.b16 %v775
    %v3305 = vunpack.c.l.b16 %v776
    %v3306 = vunpack.c.h.b16 %v776
    %v3307 = vunpack.c.l.b16 %v777
    %v3308 = vunpack.c.h.b16 %v777
    %v3309 = vunpack.c.l.b16 %v778
    %v3310 = vunpack.c.h.b16 %v778
    %v3311 = vunpack.c.l.b16 %v779
    %v3312 = vunpack.c.h.b16 %v779
    %v3313 = vunpack.c.l.b16 %v780
    %v3314 = vunpack.c.h.b16 %v780
    %v3315 = vunpack.c.l.b16 %v781
    %v3316 = vunpack.c.h.b16 %v781
    %v3317 = vunpack.c.l.b16 %v782
    %v3318 = vunpack.c.h.b16 %v782
    %v3319 = vunpack.c.l.b16 %v783
    %v3320 = vunpack.c.h.b16 %v783
    %v3321 = vunpack.c.l.b16 %v784
    %v3322 = vunpack.c.h.b16 %v784
    %v3323 = vunpack.c.l.b16 %v785
    %v3324 = vunpack.c.h.b16 %v785
    %v3325 = vunpack.c.l.b16 %v786
    %v3326 = vunpack.c.h.b16 %v786
    %v3327 = vunpack.c.l.b16 %v787
    %v3328 = vunpack.c.h.b16 %v787
    %v3329 = vunpack.c.l.b16 %v788
    %v3330 = vunpack.c.h.b16 %v788
    %v3331 = vunpack.c.l.b16 %v789
    %v3332 = vunpack.c.h.b16 %v789
    %v3333 = vunpack.c.l.b16 %v790
    %v3334 = vunpack.c.h.b16 %v790
    %v3335 = vunpack.c.l.b16 %v791
    %v3336 = vunpack.c.h.b16 %v791
    %v3337 = vunpack.c.l.b16 %v792
    %v3338 = vunpack.c.h.b16 %v792
    %v3339 = vunpack.c.l.b16 %v793
    %v3340 = vunpack.c.h.b16 %v793
    %v3341 = vunpack.c.l.b16 %v794
    %v3342 = vunpack.c.h.b16 %v794
    %v3343 = vunpack.c.l.b16 %v795
    %v3344 = vunpack.c.h.b16 %v795
    %v3345 = vunpack.c.l.b16 %v796
    %v3346 = vunpack.c.h.b16 %v796
    %v3347 = vunpack.c.l.b16 %v797
    %v3348 = vunpack.c.h.b16 %v797
    %v3349 = vunpack.c.l.b16 %v798
    %v3350 = vunpack.c.h.b16 %v798
    %v3351 = vunpack.c.l.b16 %v799
    %v3352 = vunpack.c.h.b16 %v799
    %v3353 = vunpack.c.l.b16 %v800
    %v3354 = vunpack.c.h.b16 %v800
    %v3355 = vunpack.c.l.b16 %v801
    %v3356 = vunpack.c.h.b16 %v801
    %v3357 = vunpack.c.l.b16 %v802
    %v3358 = vunpack.c.h.b16 %v802
    %v3359 = vunpack.c.l.b16 %v803
    %v3360 = vunpack.c.h.b16 %v803
    %v3361 = vunpack.c.l.b16 %v804
    %v3362 = vunpack.c.h.b16 %v804
    %v3363 = vunpack.c.l.b16 %v805
    %v3364 = vunpack.c.h.b16 %v805
    %v3365 = vunpack.c.l.b16 %v806
    %v3366 = vunpack.c.h.b16 %v806
    %v3367 = vunpack.c.l.b16 %v807
    %v3368 = vunpack.c.h.b16 %v807
    %v3369 = vunpack.c.l.b16 %v808
    %v3370 = vunpack.c.h.b16 %v808
    %v3371 = vunpack.c.l.b16 %v809
    %v3372 = vunpack.c.h.b16 %v809
    %v3373 = vpack.c.b16 %v1809, %v1805
    %v3374 = vpack.c.b16 %v1810, %v1806
    %v3375 = vpack.c.b16 %v1811, %v1807
    %v3376 = vpack.c.b16 %v1812, %v1808
    %v3377 = vpack.c.b16 %v1817, %v1813
    %v3378 = vpack.c.b16 %v1818, %v1814
    %v3379 = vpack.c.b16 %v1819, %v1815
    %v3380 = vpack.c.b16 %v1820, %v1816
    %v3381 = vpack.c.b16 %v1825, %v1821
    %v3382 = vpack.c.b16 %v1826, %v1822
    %v3383 = vpack.c.b16 %v1827, %v1823
    %v3384 = vpack.c.b16 %v1828, %v1824
    %v3385 = vpack.c.b16 %v1833, %v1829
    %v3386 = vpack.c.b16 %v1834, %v1830
    %v3387 = vpack.c.b16 %v1835, %v1831
    %v3388 = vpack.c.b16 %v1836, %v1832
    %v3389 = vpack.c.b16 %v1841, %v1837
    %v3390 = vpack.c.b16 %v1842, %v1838
    %v3391 = vpack.c.b16 %v1843, %v1839
    %v3392 = vpack.c.b16 %v1844, %v1840
    %v3393 = vpack.c.b16 %v1849, %v1845
    %v3394 = vpack.c.b16 %v1850, %v1846
    %v3395 = vpack.c.b16 %v1851, %v1847
    %v3396 = vpack.c.b16 %v1852, %v1848
    %v3397 = vpack.c.b16 %v1857, %v1853
    %v3398 = vpack.c.b16 %v1858, %v1854
    %v3399 = vpack.c.b16 %v1859, %v1855
    %v3400 = vpack.c.b16 %v1860, %v1856
    %v3401 = vpack.c.b16 %v1865, %v1861
    %v3402 = vpack.c.b16 %v1866, %v1862
    %v3403 = vpack.c.b16 %v1867, %v1863
    %v3404 = vpack.c.b16 %v1868, %v1864
    %v3405 = vpack.c.b16 %v1873, %v1869
    %v3406 = vpack.c.b16 %v1874, %v1870
    %v3407 = vpack.c.b16 %v1875, %v1871
    %v3408 = vpack.c.b16 %v1876, %v1872
    %v3409 = vpack.c.b16 %v1881, %v1877
    %v3410 = vpack.c.b16 %v1882, %v1878
    %v3411 = vpack.c.b16 %v1883, %v1879
    %v3412 = vpack.c.b16 %v1884, %v1880
    %v3413 = vpack.c.b16 %v1889, %v1885
    %v3414 = vpack.c.b16 %v1890, %v1886
    %v3415 = vpack.c.b16 %v1891, %v1887
    %v3416 = vpack.c.b16 %v1892, %v1888
    %v3417 = vpack.c.b16 %v1897, %v1893
    %v3418 = vpack.c.b16 %v1898, %v1894
    %v3419 = vpack.c.b16 %v1899, %v1895
    %v3420 = vpack.c.b16 %v1900, %v1896
    %v3421 = vpack.c.b16 %v1905, %v1901
    %v3422 = vpack.c.b16 %v1906, %v1902
    %v3423 = vpack.c.b16 %v1907, %v1903
    %v3424 = vpack.c.b16 %v1908, %v1904
    %v3425 = vpack.c.b16 %v1913, %v1909
    %v3426 = vpack.c.b16 %v1914, %v1910
    %v3427 = vpack.c.b16 %v1915, %v1911
    %v3428 = vpack.c.b16 %v1916, %v1912
    %v3429 = vpack.c.b16 %v1921, %v1917
    %v3430 = vpack.c.b16 %v1922, %v1918
    %v3431 = vpack.c.b16 %v1923, %v1919
    %v3432 = vpack.c.b16 %v1924, %v1920
    %v3433 = vpack.c.b16 %v1929, %v1925
    %v3434 = vpack.c.b16 %v1930, %v1926
    %v3435 = vpack.c.b16 %v1931, %v1927
    %v3436 = vpack.c.b16 %v1932, %v1928
    %v3437 = vpack.c.b16 %v1937, %v1933
    %v3438 = vpack.c.b16 %v1938, %v1934
    %v3439 = vpack.c.b16 %v1939, %v1935
    %v3440 = vpack.c.b16 %v1940, %v1936
    %v3441 = vpack.c.b16 %v1945, %v1941
    %v3442 = vpack.c.b16 %v1946, %v1942
    %v3443 = vpack.c.b16 %v1947, %v1943
    %v3444 = vpack.c.b16 %v1948, %v1944
    %v3445 = vpack.c.b16 %v1953, %v1949
    %v3446 = vpack.c.b16 %v1954, %v1950
    %v3447 = vpack.c.b16 %v1955, %v1951
    %v3448 = vpack.c.b16 %v1956, %v1952
    %v3449 = vpack.c.b16 %v1961, %v1957
    %v3450 = vpack.c.b16 %v1962, %v1958
    %v3451 = vpack.c.b16 %v1963, %v1959
    %v3452 = vpack.c.b16 %v1964, %v1960
    %v3453 = vpack.c.b16 %v1969, %v1965
    %v3454 = vpack.c.b16 %v1970, %v1966
    %v3455 = vpack.c.b16 %v1971, %v1967
    %v3456 = vpack.c.b16 %v1972, %v1968
    %v3457 = vpack.c.b16 %v1977, %v1973
    %v3458 = vpack.c.b16 %v1978, %v1974
    %v3459 = vpack.c.b16 %v1979, %v1975
    %v3460 = vpack.c.b16 %v1980, %v1976
    %v3461 = vpack.c.b16 %v1985, %v1981
    %v3462 = vpack.c.b16 %v1986, %v1982
    %v3463 = vpack.c.b16 %v1987, %v1983
    %v3464 = vpack.c.b16 %v1988, %v1984
    %v3465 = vpack.c.b16 %v1993, %v1989
    %v3466 = vpack.c.b16 %v1994, %v1990
    %v3467 = vpack.c.b16 %v1995, %v1991
    %v3468 = vpack.c.b16 %v1996, %v1992
    %v3469 = vpack.c.b16 %v2001, %v1997
    %v3470 = vpack.c.b16 %v2002, %v1998
    %v3471 = vpack.c.b16 %v2003, %v1999
    %v3472 = vpack.c.b16 %v2004, %v2000
    %v3473 = vpack.c.b16 %v2009, %v2005
    %v3474 = vpack.c.b16 %v2010, %v2006
    %v3475 = vpack.c.b16 %v2011, %v2007
    %v3476 = vpack.c.b16 %v2012, %v2008
    %v3477 = vpack.c.b16 %v2017, %v2013
    %v3478 = vpack.c.b16 %v2018, %v2014
    %v3479 = vpack.c.b16 %v2019, %v2015
    %v3480 = vpack.c.b16 %v2020, %v2016
    %v3481 = vpack.c.b16 %v2025, %v2021
    %v3482 = vpack.c.b16 %v2026, %v2022
    %v3483 = vpack.c.b16 %v2027, %v2023
    %v3484 = vpack.c.b16 %v2028, %v2024
    %v3485 = vpack.c.b16 %v2033, %v2029
    %v3486 = vpack.c.b16 %v2034, %v2030
    %v3487 = vpack.c.b16 %v2035, %v2031
    %v3488 = vpack.c.b16 %v2036, %v2032
    %v3489 = vpack.c.b16 %v2041, %v2037
    %v3490 = vpack.c.b16 %v2042, %v2038
    %v3491 = vpack.c.b16 %v2043, %v2039
    %v3492 = vpack.c.b16 %v2044, %v2040
    %v3493 = vpack.c.b16 %v2049, %v2045
    %v3494 = vpack.c.b16 %v2050, %v2046
    %v3495 = vpack.c.b16 %v2051, %v2047
    %v3496 = vpack.c.b16 %v2052, %v2048
    %v3497 = vpack.c.b16 %v2057, %v2053
    %v3498 = vpack.c.b16 %v2058, %v2054
    %v3499 = vpack.c.b16 %v2059, %v2055
    %v3500 = vpack.c.b16 %v2060, %v2056
    %v3501 = vpack.c.b16 %v2065, %v2061
    %v3502 = vpack.c.b16 %v2066, %v2062
    %v3503 = vpack.c.b16 %v2067, %v2063
    %v3504 = vpack.c.b16 %v2068, %v2064
    %v3505 = vpack.c.b16 %v2073, %v2069
    %v3506 = vpack.c.b16 %v2074, %v2070
    %v3507 = vpack.c.b16 %v2075, %v2071
    %v3508 = vpack.c.b16 %v2076, %v2072
    %v3509 = vpack.c.b16 %v2081, %v2077
    %v3510 = vpack.c.b16 %v2082, %v2078
    %v3511 = vpack.c.b16 %v2083, %v2079
    %v3512 = vpack.c.b16 %v2084, %v2080
    %v3513 = vpack.c.b16 %v2089, %v2085
    %v3514 = vpack.c.b16 %v2090, %v2086
    %v3515 = vpack.c.b16 %v2091, %v2087
    %v3516 = vpack.c.b16 %v2092, %v2088
    %v3517 = vpack.c.b16 %v2097, %v2093
    %v3518 = vpack.c.b16 %v2098, %v2094
    %v3519 = vpack.c.b16 %v2099, %v2095
    %v3520 = vpack.c.b16 %v2100, %v2096
    %v3521 = vpack.c.b16 %v2105, %v2101
    %v3522 = vpack.c.b16 %v2106, %v2102
    %v3523 = vpack.c.b16 %v2107, %v2103
    %v3524 = vpack.c.b16 %v2108, %v2104
    %v3525 = vpack.c.b16 %v2113, %v2109
    %v3526 = vpack.c.b16 %v2114, %v2110
    %v3527 = vpack.c.b16 %v2115, %v2111
    %v3528 = vpack.c.b16 %v2116, %v2112
    %v3529 = vpack.c.b16 %v2121, %v2117
    %v3530 = vpack.c.b16 %v2122, %v2118
    %v3531 = vpack.c.b16 %v2123, %v2119
    %v3532 = vpack.c.b16 %v2124, %v2120
    %v3533 = vpack.c.b16 %v2129, %v2125
    %v3534 = vpack.c.b16 %v2130, %v2126
    %v3535 = vpack.c.b16 %v2131, %v2127
    %v3536 = vpack.c.b16 %v2132, %v2128
    %v3537 = vpack.c.b16 %v2137, %v2133
    %v3538 = vpack.c.b16 %v2138, %v2134
    %v3539 = vpack.c.b16 %v2139, %v2135
    %v3540 = vpack.c.b16 %v2140, %v2136
    %v3541 = vpack.c.b16 %v2145, %v2141
    %v3542 = vpack.c.b16 %v2146, %v2142
    %v3543 = vpack.c.b16 %v2147, %v2143
    %v3544 = vpack.c.b16 %v2148, %v2144
    %v3545 = vpack.c.b16 %v2153, %v2149
    %v3546 = vpack.c.b16 %v2154, %v2150
    %v3547 = vpack.c.b16 %v2155, %v2151
    %v3548 = vpack.c.b16 %v2156, %v2152
    %v3549 = vpack.c.b16 %v2161, %v2157
    %v3550 = vpack.c.b16 %v2162, %v2158
    %v3551 = vpack.c.b16 %v2163, %v2159
    %v3552 = vpack.c.b16 %v2164, %v2160
    %v3553 = vpack.c.b16 %v2169, %v2165
    %v3554 = vpack.c.b16 %v2170, %v2166
    %v3555 = vpack.c.b16 %v2171, %v2167
    %v3556 = vpack.c.b16 %v2172, %v2168
    %v3557 = vpack.c.b16 %v2177, %v2173
    %v3558 = vpack.c.b16 %v2178, %v2174
    %v3559 = vpack.c.b16 %v2179, %v2175
    %v3560 = vpack.c.b16 %v2180, %v2176
    %v3561 = vpack.c.b16 %v2185, %v2181
    %v3562 = vpack.c.b16 %v2186, %v2182
    %v3563 = vpack.c.b16 %v2187, %v2183
    %v3564 = vpack.c.b16 %v2188, %v2184
    %v3565 = vpack.c.b16 %v2193, %v2189
    %v3566 = vpack.c.b16 %v2194, %v2190
    %v3567 = vpack.c.b16 %v2195, %v2191
    %v3568 = vpack.c.b16 %v2196, %v2192
    %v3569 = vpack.c.b16 %v2201, %v2197
    %v3570 = vpack.c.b16 %v2202, %v2198
    %v3571 = vpack.c.b16 %v2203, %v2199
    %v3572 = vpack.c.b16 %v2204, %v2200
    %v3573 = vpack.c.b16 %v2209, %v2205
    %v3574 = vpack.c.b16 %v2210, %v2206
    %v3575 = vpack.c.b16 %v2211, %v2207
    %v3576 = vpack.c.b16 %v2212, %v2208
    %v3577 = vpack.c.b16 %v2217, %v2213
    %v3578 = vpack.c.b16 %v2218, %v2214
    %v3579 = vpack.c.b16 %v2219, %v2215
    %v3580 = vpack.c.b16 %v2220, %v2216
    %v3581 = vpack.c.b16 %v2225, %v2221
    %v3582 = vpack.c.b16 %v2226, %v2222
    %v3583 = vpack.c.b16 %v2227, %v2223
    %v3584 = vpack.c.b16 %v2228, %v2224
    %v3585 = vpack.c.b16 %v2233, %v2229
    %v3586 = vpack.c.b16 %v2234, %v2230
    %v3587 = vpack.c.b16 %v2235, %v2231
    %v3588 = vpack.c.b16 %v2236, %v2232
    %v3589 = vpack.c.b16 %v2241, %v2237
    %v3590 = vpack.c.b16 %v2242, %v2238
    %v3591 = vpack.c.b16 %v2243, %v2239
    %v3592 = vpack.c.b16 %v2244, %v2240
    %v3593 = vpack.c.b16 %v2249, %v2245
    %v3594 = vpack.c.b16 %v2250, %v2246
    %v3595 = vpack.c.b16 %v2251, %v2247
    %v3596 = vpack.c.b16 %v2252, %v2248
    %v3597 = vpack.c.b16 %v2257, %v2253
    %v3598 = vpack.c.b16 %v2258, %v2254
    %v3599 = vpack.c.b16 %v2259, %v2255
    %v3600 = vpack.c.b16 %v2260, %v2256
    %v3601 = vpack.c.b16 %v2265, %v2261
    %v3602 = vpack.c.b16 %v2266, %v2262
    %v3603 = vpack.c.b16 %v2267, %v2263
    %v3604 = vpack.c.b16 %v2268, %v2264
    %v3605 = vpack.c.b16 %v2273, %v2269
    %v3606 = vpack.c.b16 %v2274, %v2270
    %v3607 = vpack.c.b16 %v2275, %v2271
    %v3608 = vpack.c.b16 %v2276, %v2272
    %v3609 = vpack.c.b16 %v2281, %v2277
    %v3610 = vpack.c.b16 %v2282, %v2278
    %v3611 = vpack.c.b16 %v2283, %v2279
    %v3612 = vpack.c.b16 %v2284, %v2280
    %v3613 = vpack.c.b16 %v2289, %v2285
    %v3614 = vpack.c.b16 %v2290, %v2286
    %v3615 = vpack.c.b16 %v2291, %v2287
    %v3616 = vpack.c.b16 %v2292, %v2288
    %v3617 = vpack.c.b16 %v2297, %v2293
    %v3618 = vpack.c.b16 %v2298, %v2294
    %v3619 = vpack.c.b16 %v2299, %v2295
    %v3620 = vpack.c.b16 %v2300, %v2296
    %v3621 = vpack.c.b16 %v2305, %v2301
    %v3622 = vpack.c.b16 %v2306, %v2302
    %v3623 = vpack.c.b16 %v2307, %v2303
    %v3624 = vpack.c.b16 %v2308, %v2304
    %v3625 = vpack.c.b16 %v2313, %v2309
    %v3626 = vpack.c.b16 %v2314, %v2310
    %v3627 = vpack.c.b16 %v2315, %v2311
    %v3628 = vpack.c.b16 %v2316, %v2312
    %v3629 = vpack.c.b16 %v2321, %v2317
    %v3630 = vpack.c.b16 %v2322, %v2318
    %v3631 = vpack.c.b16 %v2323, %v2319
    %v3632 = vpack.c.b16 %v2324, %v2320
    %v3633 = vpack.c.b16 %v2329, %v2325
    %v3634 = vpack.c.b16 %v2330, %v2326
    %v3635 = vpack.c.b16 %v2331, %v2327
    %v3636 = vpack.c.b16 %v2332, %v2328
    %v3637 = vpack.c.b16 %v2337, %v2333
    %v3638 = vpack.c.b16 %v2338, %v2334
    %v3639 = vpack.c.b16 %v2339, %v2335
    %v3640 = vpack.c.b16 %v2340, %v2336
    %v3641 = vpack.c.b16 %v2345, %v2341
    %v3642 = vpack.c.b16 %v2346, %v2342
    %v3643 = vpack.c.b16 %v2347, %v2343
    %v3644 = vpack.c.b16 %v2348, %v2344
    %v3645 = vpack.c.b16 %v2353, %v2349
    %v3646 = vpack.c.b16 %v2354, %v2350
    %v3647 = vpack.c.b16 %v2355, %v2351
    %v3648 = vpack.c.b16 %v2356, %v2352
    %v3649 = vpack.c.b16 %v2361, %v2357
    %v3650 = vpack.c.b16 %v2362, %v2358
    %v3651 = vpack.c.b16 %v2363, %v2359
    %v3652 = vpack.c.b16 %v2364, %v2360
    %v3653 = vpack.c.b16 %v2369, %v2365
    %v3654 = vpack.c.b16 %v2370, %v2366
    %v3655 = vpack.c.b16 %v2371, %v2367
    %v3656 = vpack.c.b16 %v2372, %v2368
    %v3657 = vpack.c.b16 %v2377, %v2373
    %v3658 = vpack.c.b16 %v2378, %v2374
    %v3659 = vpack.c.b16 %v2379, %v2375
    %v3660 = vpack.c.b16 %v2380, %v2376
    %v3661 = vpack.c.b16 %v2385, %v2381
    %v3662 = vpack.c.b16 %v2386, %v2382
    %v3663 = vpack.c.b16 %v2387, %v2383
    %v3664 = vpack.c.b16 %v2388, %v2384
    %v3665 = vpack.c.b16 %v2393, %v2389
    %v3666 = vpack.c.b16 %v2394, %v2390
    %v3667 = vpack.c.b16 %v2395, %v2391
    %v3668 = vpack.c.b16 %v2396, %v2392
    %v3669 = vpack.c.b16 %v2401, %v2397
    %v3670 = vpack.c.b16 %v2402, %v2398
    %v3671 = vpack.c.b16 %v2403, %v2399
    %v3672 = vpack.c.b16 %v2404, %v2400
    %v3673 = vpack.c.b16 %v2409, %v2405
    %v3674 = vpack.c.b16 %v2410, %v2406
    %v3675 = vpack.c.b16 %v2411, %v2407
    %v3676 = vpack.c.b16 %v2412, %v2408
    %v3677 = vpack.c.b16 %v2417, %v2413
    %v3678 = vpack.c.b16 %v2418, %v2414
    %v3679 = vpack.c.b16 %v2419, %v2415
    %v3680 = vpack.c.b16 %v2420, %v2416
    %v3681 = vpack.c.b16 %v2425, %v2421
    %v3682 = vpack.c.b16 %v2426, %v2422
    %v3683 = vpack.c.b16 %v2427, %v2423
    %v3684 = vpack.c.b16 %v2428, %v2424
    %v3685 = vpack.c.b16 %v2433, %v2429
    %v3686 = vpack.c.b16 %v2434, %v2430
    %v3687 = vpack.c.b16 %v2435, %v2431
    %v3688 = vpack.c.b16 %v2436, %v2432
    %v3689 = vpack.c.b16 %v2441, %v2437
    %v3690 = vpack.c.b16 %v2442, %v2438
    %v3691 = vpack.c.b16 %v2443, %v2439
    %v3692 = vpack.c.b16 %v2444, %v2440
    %v3693 = vpack.c.b16 %v2449, %v2445
    %v3694 = vpack.c.b16 %v2450, %v2446
    %v3695 = vpack.c.b16 %v2451, %v2447
    %v3696 = vpack.c.b16 %v2452, %v2448
    %v3697 = vpack.c.b16 %v2457, %v2453
    %v3698 = vpack.c.b16 %v2458, %v2454
    %v3699 = vpack.c.b16 %v2459, %v2455
    %v3700 = vpack.c.b16 %v2460, %v2456
    %v3701 = vpack.c.b16 %v2465, %v2461
    %v3702 = vpack.c.b16 %v2466, %v2462
    %v3703 = vpack.c.b16 %v2467, %v2463
    %v3704 = vpack.c.b16 %v2468, %v2464
    %v3705 = vpack.c.b16 %v2473, %v2469
    %v3706 = vpack.c.b16 %v2474, %v2470
    %v3707 = vpack.c.b16 %v2475, %v2471
    %v3708 = vpack.c.b16 %v2476, %v2472
    %v3709 = vpack.c.b16 %v2481, %v2477
    %v3710 = vpack.c.b16 %v2482, %v2478
    %v3711 = vpack.c.b16 %v2483, %v2479
    %v3712 = vpack.c.b16 %v2484, %v2480
    %v3713 = vpack.c.b16 %v2489, %v2485
    %v3714 = vpack.c.b16 %v2490, %v2486
    %v3715 = vpack.c.b16 %v2491, %v2487
    %v3716 = vpack.c.b16 %v2492, %v2488
    %v3717 = vpack.c.b16 %v2497, %v2493
    %v3718 = vpack.c.b16 %v2498, %v2494
    %v3719 = vpack.c.b16 %v2499, %v2495
    %v3720 = vpack.c.b16 %v2500, %v2496
    %v3721 = vpack.c.b16 %v2505, %v2501
    %v3722 = vpack.c.b16 %v2506, %v2502
    %v3723 = vpack.c.b16 %v2507, %v2503
    %v3724 = vpack.c.b16 %v2508, %v2504
    %v3725 = vpack.c.b16 %v2513, %v2509
    %v3726 = vpack.c.b16 %v2514, %v2510
    %v3727 = vpack.c.b16 %v2515, %v2511
    %v3728 = vpack.c.b16 %v2516, %v2512
    %v3729 = vpack.c.b16 %v2521, %v2517
    %v3730 = vpack.c.b16 %v2522, %v2518
    %v3731 = vpack.c.b16 %v2523, %v2519
    %v3732 = vpack.c.b16 %v2524, %v2520
    %v3733 = vpack.c.b16 %v2529, %v2525
    %v3734 = vpack.c.b16 %v2530, %v2526
    %v3735 = vpack.c.b16 %v2531, %v2527
    %v3736 = vpack.c.b16 %v2532, %v2528
    %v3737 = vpack.c.b16 %v2537, %v2533
    %v3738 = vpack.c.b16 %v2538, %v2534
    %v3739 = vpack.c.b16 %v2539, %v2535
    %v3740 = vpack.c.b16 %v2540, %v2536
    %v3741 = vpack.c.b16 %v2545, %v2541
    %v3742 = vpack.c.b16 %v2546, %v2542
    %v3743 = vpack.c.b16 %v2547, %v2543
    %v3744 = vpack.c.b16 %v2548, %v2544
    %v3745 = vpack.c.b16 %v2553, %v2549
    %v3746 = vpack.c.b16 %v2554, %v2550
    %v3747 = vpack.c.b16 %v2555, %v2551
    %v3748 = vpack.c.b16 %v2556, %v2552
    %v3749 = vpack.c.b16 %v2561, %v2557
    %v3750 = vpack.c.b16 %v2562, %v2558
    %v3751 = vpack.c.b16 %v2563, %v2559
    %v3752 = vpack.c.b16 %v2564, %v2560
    %v3753 = vpack.c.b16 %v2569, %v2565
    %v3754 = vpack.c.b16 %v2570, %v2566
    %v3755 = vpack.c.b16 %v2571, %v2567
    %v3756 = vpack.c.b16 %v2572, %v2568
    %v3757 = vpack.c.b16 %v2577, %v2573
    %v3758 = vpack.c.b16 %v2578, %v2574
    %v3759 = vpack.c.b16 %v2579, %v2575
    %v3760 = vpack.c.b16 %v2580, %v2576
    %v3761 = vpack.c.b16 %v2585, %v2581
    %v3762 = vpack.c.b16 %v2586, %v2582
    %v3763 = vpack.c.b16 %v2587, %v2583
    %v3764 = vpack.c.b16 %v2588, %v2584
    %v3765 = vpack.c.b16 %v2593, %v2589
    %v3766 = vpack.c.b16 %v2594, %v2590
    %v3767 = vpack.c.b16 %v2595, %v2591
    %v3768 = vpack.c.b16 %v2596, %v2592
    %v3769 = vpack.c.b16 %v2601, %v2597
    %v3770 = vpack.c.b16 %v2602, %v2598
    %v3771 = vpack.c.b16 %v2603, %v2599
    %v3772 = vpack.c.b16 %v2604, %v2600
    %v3773 = vpack.c.b16 %v2609, %v2605
    %v3774 = vpack.c.b16 %v2610, %v2606
    %v3775 = vpack.c.b16 %v2611, %v2607
    %v3776 = vpack.c.b16 %v2612, %v2608
    %v3777 = vpack.c.b16 %v2617, %v2613
    %v3778 = vpack.c.b16 %v2618, %v2614
    %v3779 = vpack.c.b16 %v2619, %v2615
    %v3780 = vpack.c.b16 %v2620, %v2616
    %v3781 = vpack.c.b16 %v2625, %v2621
    %v3782 = vpack.c.b16 %v2626, %v2622
    %v3783 = vpack.c.b16 %v2627, %v2623
    %v3784 = vpack.c.b16 %v2628, %v2624
    %v3785 = vpack.c.b16 %v2633, %v2629
    %v3786 = vpack.c.b16 %v2634, %v2630
    %v3787 = vpack.c.b16 %v2635, %v2631
    %v3788 = vpack.c.b16 %v2636, %v2632
    %v3789 = vpack.c.b16 %v2641, %v2637
    %v3790 = vpack.c.b16 %v2642, %v2638
    %v3791 = vpack.c.b16 %v2643, %v2639
    %v3792 = vpack.c.b16 %v2644, %v2640
    %v3793 = vpack.c.b16 %v2649, %v2645
    %v3794 = vpack.c.b16 %v2650, %v2646
    %v3795 = vpack.c.b16 %v2651, %v2647
    %v3796 = vpack.c.b16 %v2652, %v2648
    %v3797 = vpack.c.b16 %v2657, %v2653
    %v3798 = vpack.c.b16 %v2658, %v2654
    %v3799 = vpack.c.b16 %v2659, %v2655
    %v3800 = vpack.c.b16 %v2660, %v2656
    %v3801 = vpack.c.b16 %v2665, %v2661
    %v3802 = vpack.c.b16 %v2666, %v2662
    %v3803 = vpack.c.b16 %v2667, %v2663
    %v3804 = vpack.c.b16 %v2668, %v2664
    %v3805 = vpack.c.b16 %v2673, %v2669
    %v3806 = vpack.c.b16 %v2674, %v2670
    %v3807 = vpack.c.b16 %v2675, %v2671
    %v3808 = vpack.c.b16 %v2676, %v2672
    %v3809 = vpack.c.b16 %v2681, %v2677
    %v3810 = vpack.c.b16 %v2682, %v2678
    %v3811 = vpack.c.b16 %v2683, %v2679
    %v3812 = vpack.c.b16 %v2684, %v2680
    %v3813 = vpack.c.b16 %v2689, %v2685
    %v3814 = vpack.c.b16 %v2690, %v2686
    %v3815 = vpack.c.b16 %v2691, %v2687
    %v3816 = vpack.c.b16 %v2692, %v2688
    %v3817 = vpack.c.b16 %v2697, %v2693
    %v3818 = vpack.c.b16 %v2698, %v2694
    %v3819 = vpack.c.b16 %v2699, %v2695
    %v3820 = vpack.c.b16 %v2700, %v2696
    %v3821 = vpack.c.b16 %v2705, %v2701
    %v3822 = vpack.c.b16 %v2706, %v2702
    %v3823 = vpack.c.b16 %v2707, %v2703
    %v3824 = vpack.c.b16 %v2708, %v2704
    %v3825 = vpack.c.b16 %v2713, %v2709
    %v3826 = vpack.c.b16 %v2714, %v2710
    %v3827 = vpack.c.b16 %v2715, %v2711
    %v3828 = vpack.c.b16 %v2716, %v2712
    %v3829 = vpack.c.b16 %v2721, %v2717
    %v3830 = vpack.c.b16 %v2722, %v2718
    %v3831 = vpack.c.b16 %v2723, %v2719
    %v3832 = vpack.c.b16 %v2724, %v2720
    %v3833 = vpack.c.b16 %v2729, %v2725
    %v3834 = vpack.c.b16 %v2730, %v2726
    %v3835 = vpack.c.b16 %v2731, %v2727
    %v3836 = vpack.c.b16 %v2732, %v2728
    %v3837 = vpack.c.b16 %v2737, %v2733
    %v3838 = vpack.c.b16 %v2738, %v2734
    %v3839 = vpack.c.b16 %v2739, %v2735
    %v3840 = vpack.c.b16 %v2740, %v2736
    %v3841 = vpack.c.b16 %v2745, %v2741
    %v3842 = vpack.c.b16 %v2746, %v2742
    %v3843 = vpack.c.b16 %v2747, %v2743
    %v3844 = vpack.c.b16 %v2748, %v2744
    %v3845 = vpack.c.b16 %v2753, %v2749
    %v3846 = vpack.c.b16 %v2754, %v2750
    %v3847 = vpack.c.b16 %v2755, %v2751
    %v3848 = vpack.c.b16 %v2756, %v2752
    %v3849 = vpack.c.b16 %v2761, %v2757
    %v3850 = vpack.c.b16 %v2762, %v2758
    %v3851 = vpack.c.b16 %v2763, %v2759
    %v3852 = vpack.c.b16 %v2764, %v2760
    %v3853 = vpack.c.b16 %v2769, %v2765
    %v3854 = vpack.c.b16 %v2770, %v2766
    %v3855 = vpack.c.b16 %v2771, %v2767
    %v3856 = vpack.c.b16 %v2772, %v2768
    %v3857 = vpack.c.b16 %v2777, %v2773
    %v3858 = vpack.c.b16 %v2778, %v2774
    %v3859 = vpack.c.b16 %v2779, %v2775
    %v3860 = vpack.c.b16 %v2780, %v2776
    %v3861 = vpack.c.b16 %v2785, %v2781
    %v3862 = vpack.c.b16 %v2786, %v2782
    %v3863 = vpack.c.b16 %v2787, %v2783
    %v3864 = vpack.c.b16 %v2788, %v2784
    %v3865 = vpack.c.b16 %v2793, %v2789
    %v3866 = vpack.c.b16 %v2794, %v2790
    %v3867 = vpack.c.b16 %v2795, %v2791
    %v3868 = vpack.c.b16 %v2796, %v2792
    %v3869 = vpack.c.b16 %v2801, %v2797
    %v3870 = vpack.c.b16 %v2802, %v2798
    %v3871 = vpack.c.b16 %v2803, %v2799
    %v3872 = vpack.c.b16 %v2804, %v2800
    %v3873 = vpack.c.b16 %v2809, %v2805
    %v3874 = vpack.c.b16 %v2810, %v2806
    %v3875 = vpack.c.b16 %v2811, %v2807
    %v3876 = vpack.c.b16 %v2812, %v2808
    %v3877 = vpack.c.b16 %v2817, %v2813
    %v3878 = vpack.c.b16 %v2818, %v2814
    %v3879 = vpack.c.b16 %v2819, %v2815
    %v3880 = vpack.c.b16 %v2820, %v2816
    %v3881 = vpack.c.b16 %v2825, %v2821
    %v3882 = vpack.c.b16 %v2826, %v2822
    %v3883 = vpack.c.b16 %v2827, %v2823
    %v3884 = vpack.c.b16 %v2828, %v2824
    %v3885 = vpack.c.b16 %v2833, %v2829
    %v3886 = vpack.c.b16 %v2834, %v2830
    %v3887 = vpack.c.b16 %v2835, %v2831
    %v3888 = vpack.c.b16 %v2836, %v2832
    %v3889 = vpack.c.b16 %v2841, %v2837
    %v3890 = vpack.c.b16 %v2842, %v2838
    %v3891 = vpack.c.b16 %v2843, %v2839
    %v3892 = vpack.c.b16 %v2844, %v2840
    %v3893 = vpack.c.b16 %v2849, %v2845
    %v3894 = vpack.c.b16 %v2850, %v2846
    %v3895 = vpack.c.b16 %v2851, %v2847
    %v3896 = vpack.c.b16 %v2852, %v2848
    %v3897 = vpack.c.b16 %v2857, %v2853
    %v3898 = vpack.c.b16 %v2858, %v2854
    %v3899 = vpack.c.b16 %v2859, %v2855
    %v3900 = vpack.c.b16 %v2860, %v2856
    %v3901 = vpack.c.b16 %v2865, %v2861
    %v3902 = vpack.c.b16 %v2866, %v2862
    %v3903 = vpack.c.b16 %v2867, %v2863
    %v3904 = vpack.c.b16 %v2868, %v2864
    %v3905 = vpack.c.b16 %v2873, %v2869
    %v3906 = vpack.c.b16 %v2874, %v2870
    %v3907 = vpack.c.b16 %v2875, %v2871
    %v3908 = vpack.c.b16 %v2876, %v2872
    %v3909 = vpack.c.b16 %v2881, %v2877
    %v3910 = vpack.c.b16 %v2882, %v2878
    %v3911 = vpack.c.b16 %v2883, %v2879
    %v3912 = vpack.c.b16 %v2884, %v2880
    %v3913 = vpack.c.b16 %v2889, %v2885
    %v3914 = vpack.c.b16 %v2890, %v2886
    %v3915 = vpack.c.b16 %v2891, %v2887
    %v3916 = vpack.c.b16 %v2892, %v2888
    %v3917 = vpack.c.b16 %v2897, %v2893
    %v3918 = vpack.c.b16 %v2898, %v2894
    %v3919 = vpack.c.b16 %v2899, %v2895
    %v3920 = vpack.c.b16 %v2900, %v2896
    %v3921 = vpack.c.b16 %v2905, %v2901
    %v3922 = vpack.c.b16 %v2906, %v2902
    %v3923 = vpack.c.b16 %v2907, %v2903
    %v3924 = vpack.c.b16 %v2908, %v2904
    %v3925 = vpack.c.b16 %v2913, %v2909
    %v3926 = vpack.c.b16 %v2914, %v2910
    %v3927 = vpack.c.b16 %v2915, %v2911
    %v3928 = vpack.c.b16 %v2916, %v2912
    %v3929 = vpack.c.b16 %v2921, %v2917
    %v3930 = vpack.c.b16 %v2922, %v2918
    %v3931 = vpack.c.b16 %v2923, %v2919
    %v3932 = vpack.c.b16 %v2924, %v2920
    %v3933 = vpack.c.b16 %v2929, %v2925
    %v3934 = vpack.c.b16 %v2930, %v2926
    %v3935 = vpack.c.b16 %v2931, %v2927
    %v3936 = vpack.c.b16 %v2932, %v2928
    %v3937 = vpack.c.b16 %v2937, %v2933
    %v3938 = vpack.c.b16 %v2938, %v2934
    %v3939 = vpack.c.b16 %v2939, %v2935
    %v3940 = vpack.c.b16 %v2940, %v2936
    %v3941 = vpack.c.b16 %v2945, %v2941
    %v3942 = vpack.c.b16 %v2946, %v2942
    %v3943 = vpack.c.b16 %v2947, %v2943
    %v3944 = vpack.c.b16 %v2948, %v2944
    %v3945 = vpack.c.b16 %v2953, %v2949
    %v3946 = vpack.c.b16 %v2954, %v2950
    %v3947 = vpack.c.b16 %v2955, %v2951
    %v3948 = vpack.c.b16 %v2956, %v2952
    %v3949 = vpack.c.b16 %v2961, %v2957
    %v3950 = vpack.c.b16 %v2962, %v2958
    %v3951 = vpack.c.b16 %v2963, %v2959
    %v3952 = vpack.c.b16 %v2964, %v2960
    %v3953 = vpack.c.b16 %v2969, %v2965
    %v3954 = vpack.c.b16 %v2970, %v2966
    %v3955 = vpack.c.b16 %v2971, %v2967
    %v3956 = vpack.c.b16 %v2972, %v2968
    %v3957 = vpack.c.b16 %v2977, %v2973
    %v3958 = vpack.c.b16 %v2978, %v2974
    %v3959 = vpack.c.b16 %v2979, %v2975
    %v3960 = vpack.c.b16 %v2980, %v2976
    %v3961 = vpack.c.b16 %v2985, %v2981
    %v3962 = vpack.c.b16 %v2986, %v2982
    %v3963 = vpack.c.b16 %v2987, %v2983
    %v3964 = vpack.c.b16 %v2988, %v2984
    %v3965 = vpack.c.b16 %v2993, %v2989
    %v3966 = vpack.c.b16 %v2994, %v2990
    %v3967 = vpack.c.b16 %v2995, %v2991
    %v3968 = vpack.c.b16 %v2996, %v2992
    %v3969 = vpack.c.b16 %v3001, %v2997
    %v3970 = vpack.c.b16 %v3002, %v2998
    %v3971 = vpack.c.b16 %v3003, %v2999
    %v3972 = vpack.c.b16 %v3004, %v3000
    %v3973 = vpack.c.b16 %v3009, %v3005
    %v3974 = vpack.c.b16 %v3010, %v3006
    %v3975 = vpack.c.b16 %v3011, %v3007
    %v3976 = vpack.c.b16 %v3012, %v3008
    %v3977 = vpack.c.b16 %v3017, %v3013
    %v3978 = vpack.c.b16 %v3018, %v3014
    %v3979 = vpack.c.b16 %v3019, %v3015
    %v3980 = vpack.c.b16 %v3020, %v3016
    %v3981 = vpack.c.b16 %v3025, %v3021
    %v3982 = vpack.c.b16 %v3026, %v3022
    %v3983 = vpack.c.b16 %v3027, %v3023
    %v3984 = vpack.c.b16 %v3028, %v3024
    %v3985 = vpack.c.b16 %v3033, %v3029
    %v3986 = vpack.c.b16 %v3034, %v3030
    %v3987 = vpack.c.b16 %v3035, %v3031
    %v3988 = vpack.c.b16 %v3036, %v3032
    %v3989 = vpack.c.b16 %v3041, %v3037
    %v3990 = vpack.c.b16 %v3042, %v3038
    %v3991 = vpack.c.b16 %v3043, %v3039
    %v3992 = vpack.c.b16 %v3044, %v3040
    %v3993 = vpack.c.b16 %v3049, %v3045
    %v3994 = vpack.c.b16 %v3050, %v3046
    %v3995 = vpack.c.b16 %v3051, %v3047
    %v3996 = vpack.c.b16 %v3052, %v3048
    %v3997 = vpack.c.b16 %v3057, %v3053
    %v3998 = vpack.c.b16 %v3058, %v3054
    %v3999 = vpack.c.b16 %v3059, %v3055
    %v4000 = vpack.c.b16 %v3060, %v3056
    %v4001 = vpack.c.b16 %v3065, %v3061
    %v4002 = vpack.c.b16 %v3066, %v3062
    %v4003 = vpack.c.b16 %v3067, %v3063
    %v4004 = vpack.c.b16 %v3068, %v3064
    %v4005 = vpack.c.b16 %v3073, %v3069
    %v4006 = vpack.c.b16 %v3074, %v3070
    %v4007 = vpack.c.b16 %v3075, %v3071
    %v4008 = vpack.c.b16 %v3076, %v3072
    %v4009 = vpack.c.b16 %v3081, %v3077
    %v4010 = vpack.c.b16 %v3082, %v3078
    %v4011 = vpack.c.b16 %v3083, %v3079
    %v4012 = vpack.c.b16 %v3084, %v3080
    %v4013 = vpack.c.b16 %v3089, %v3085
    %v4014 = vpack.c.b16 %v3090, %v3086
    %v4015 = vpack.c.b16 %v3091, %v3087
    %v4016 = vpack.c.b16 %v3092, %v3088
    %v4017 = vpack.c.b16 %v3097, %v3093
    %v4018 = vpack.c.b16 %v3098, %v3094
    %v4019 = vpack.c.b16 %v3099, %v3095
    %v4020 = vpack.c.b16 %v3100, %v3096
    %v4021 = vpack.c.b16 %v3105, %v3101
    %v4022 = vpack.c.b16 %v3106, %v3102
    %v4023 = vpack.c.b16 %v3107, %v3103
    %v4024 = vpack.c.b16 %v3108, %v3104
    %v4025 = vpack.c.b16 %v3113, %v3109
    %v4026 = vpack.c.b16 %v3114, %v3110
    %v4027 = vpack.c.b16 %v3115, %v3111
    %v4028 = vpack.c.b16 %v3116, %v3112
    %v4029 = vpack.c.b16 %v3121, %v3117
    %v4030 = vpack.c.b16 %v3122, %v3118
    %v4031 = vpack.c.b16 %v3123, %v3119
    %v4032 = vpack.c.b16 %v3124, %v3120
    %v4033 = vpack.c.b16 %v3129, %v3125
    %v4034 = vpack.c.b16 %v3130, %v3126
    %v4035 = vpack.c.b16 %v3131, %v3127
    %v4036 = vpack.c.b16 %v3132, %v3128
    %v4037 = vpack.c.b16 %v3137, %v3133
    %v4038 = vpack.c.b16 %v3138, %v3134
    %v4039 = vpack.c.b16 %v3139, %v3135
    %v4040 = vpack.c.b16 %v3140, %v3136
    %v4041 = vpack.c.b16 %v3145, %v3141
    %v4042 = vpack.c.b16 %v3146, %v3142
    %v4043 = vpack.c.b16 %v3147, %v3143
    %v4044 = vpack.c.b16 %v3148, %v3144
    %v4045 = vpack.c.b16 %v3153, %v3149
    %v4046 = vpack.c.b16 %v3154, %v3150
    %v4047 = vpack.c.b16 %v3155, %v3151
    %v4048 = vpack.c.b16 %v3156, %v3152
    %v4049 = vpack.c.b16 %v3161, %v3157
    %v4050 = vpack.c.b16 %v3162, %v3158
    %v4051 = vpack.c.b16 %v3163, %v3159
    %v4052 = vpack.c.b16 %v3164, %v3160
    %v4053 = vpack.c.b16 %v3169, %v3165
    %v4054 = vpack.c.b16 %v3170, %v3166
    %v4055 = vpack.c.b16 %v3171, %v3167
    %v4056 = vpack.c.b16 %v3172, %v3168
    %v4057 = vpack.c.b16 %v3177, %v3173
    %v4058 = vpack.c.b16 %v3178, %v3174
    %v4059 = vpack.c.b16 %v3179, %v3175
    %v4060 = vpack.c.b16 %v3180, %v3176
    %v4061 = vpack.c.b16 %v3185, %v3181
    %v4062 = vpack.c.b16 %v3186, %v3182
    %v4063 = vpack.c.b16 %v3187, %v3183
    %v4064 = vpack.c.b16 %v3188, %v3184
    %v4065 = vpack.c.b16 %v3193, %v3189
    %v4066 = vpack.c.b16 %v3194, %v3190
    %v4067 = vpack.c.b16 %v3195, %v3191
    %v4068 = vpack.c.b16 %v3196, %v3192
    %v4069 = vpack.c.b16 %v3201, %v3197
    %v4070 = vpack.c.b16 %v3202, %v3198
    %v4071 = vpack.c.b16 %v3203, %v3199
    %v4072 = vpack.c.b16 %v3204, %v3200
    %v4073 = vpack.c.b16 %v3209, %v3205
    %v4074 = vpack.c.b16 %v3210, %v3206
    %v4075 = vpack.c.b16 %v3211, %v3207
    %v4076 = vpack.c.b16 %v3212, %v3208
    %v4077 = vpack.c.b16 %v3217, %v3213
    %v4078 = vpack.c.b16 %v3218, %v3214
    %v4079 = vpack.c.b16 %v3219, %v3215
    %v4080 = vpack.c.b16 %v3220, %v3216
    %v4081 = vpack.c.b16 %v3225, %v3221
    %v4082 = vpack.c.b16 %v3226, %v3222
    %v4083 = vpack.c.b16 %v3227, %v3223
    %v4084 = vpack.c.b16 %v3228, %v3224
    %v4085 = vpack.c.b16 %v3233, %v3229
    %v4086 = vpack.c.b16 %v3234, %v3230
    %v4087 = vpack.c.b16 %v3235, %v3231
    %v4088 = vpack.c.b16 %v3236, %v3232
    %v4089 = vpack.c.b16 %v3241, %v3237
    %v4090 = vpack.c.b16 %v3242, %v3238
    %v4091 = vpack.c.b16 %v3243, %v3239
    %v4092 = vpack.c.b16 %v3244, %v3240
    %v4093 = vpack.c.b16 %v3249, %v3245
    %v4094 = vpack.c.b16 %v3250, %v3246
    %v4095 = vpack.c.b16 %v3251, %v3247
    %v4096 = vpack.c.b16 %v3252, %v3248
    %v4097 = vpack.c.b16 %v3257, %v3253
    %v4098 = vpack.c.b16 %v3258, %v3254
    %v4099 = vpack.c.b16 %v3259, %v3255
    %v4100 = vpack.c.b16 %v3260, %v3256
    %v4101 = vpack.c.b16 %v3265, %v3261
    %v4102 = vpack.c.b16 %v3266, %v3262
    %v4103 = vpack.c.b16 %v3267, %v3263
    %v4104 = vpack.c.b16 %v3268, %v3264
    %v4105 = vpack.c.b16 %v3273, %v3269
    %v4106 = vpack.c.b16 %v3274, %v3270
    %v4107 = vpack.c.b16 %v3275, %v3271
    %v4108 = vpack.c.b16 %v3276, %v3272
    %v4109 = vpack.c.b16 %v3281, %v3277
    %v4110 = vpack.c.b16 %v3282, %v3278
    %v4111 = vpack.c.b16 %v3283, %v3279
    %v4112 = vpack.c.b16 %v3284, %v3280
    %v4113 = vpack.c.b16 %v3289, %v3285
    %v4114 = vpack.c.b16 %v3290, %v3286
    %v4115 = vpack.c.b16 %v3291, %v3287
    %v4116 = vpack.c.b16 %v3292, %v3288
    %v4117 = vpack.c.b16 %v3297, %v3293
    %v4118 = vpack.c.b16 %v3298, %v3294
    %v4119 = vpack.c.b16 %v3299, %v3295
    %v4120 = vpack.c.b16 %v3300, %v3296
    %v4121 = vpack.c.b16 %v3305, %v3301
    %v4122 = vpack.c.b16 %v3306, %v3302
    %v4123 = vpack.c.b16 %v3307, %v3303
    %v4124 = vpack.c.b16 %v3308, %v3304
    %v4125 = vpack.c.b16 %v3313, %v3309
    %v4126 = vpack.c.b16 %v3314, %v3310
    %v4127 = vpack.c.b16 %v3315, %v3311
    %v4128 = vpack.c.b16 %v3316, %v3312
    %v4129 = vpack.c.b16 %v3321, %v3317
    %v4130 = vpack.c.b16 %v3322, %v3318
    %v4131 = vpack.c.b16 %v3323, %v3319
    %v4132 = vpack.c.b16 %v3324, %v3320
    %v4133 = vpack.c.b16 %v3329, %v3325
    %v4134 = vpack.c.b16 %v3330, %v3326
    %v4135 = vpack.c.b16 %v3331, %v3327
    %v4136 = vpack.c.b16 %v3332, %v3328
    %v4137 = vpack.c.b16 %v3337, %v3333
    %v4138 = vpack.c.b16 %v3338, %v3334
    %v4139 = vpack.c.b16 %v3339, %v3335
    %v4140 = vpack.c.b16 %v3340, %v3336
    %v4141 = vpack.c.b16 %v3345, %v3341
    %v4142 = vpack.c.b16 %v3346, %v3342
    %v4143 = vpack.c.b16 %v3347, %v3343
    %v4144 = vpack.c.b16 %v3348, %v3344
    %v4145 = vpack.c.b16 %v3353, %v3349
    %v4146 = vpack.c.b16 %v3354, %v3350
    %v4147 = vpack.c.b16 %v3355, %v3351
    %v4148 = vpack.c.b16 %v3356, %v3352
    %v4149 = vpack.c.b16 %v3361, %v3357
    %v4150 = vpack.c.b16 %v3362, %v3358
    %v4151 = vpack.c.b16 %v3363, %v3359
    %v4152 = vpack.c.b16 %v3364, %v3360
    %v4153 = vpack.c.b16 %v3369, %v3365
    %v4154 = vpack.c.b16 %v3370, %v3366
    %v4155 = vpack.c.b16 %v3371, %v3367
    %v4156 = vpack.c.b16 %v3372, %v3368
    %vm4941 = vcmask 523264
    %v4943 = vsel %vm4941, %v996, 0
    %4945 = vmatprep.subr.bf16.mxu0 %v3374
    %4946 = vmatpush1.bf16.msra.mxu0 %v3373
    %4947 = vmatprep.subr.bf16.mxu0 %v3378
    %4948 = vmatpush1.bf16.msra.mxu0 %v3377
    %4949 = vmatprep.subr.bf16.mxu0 %v3382
    %4950 = vmatpush1.bf16.msra.mxu0 %v3381
    %4951 = vmatprep.subr.bf16.mxu0 %v3386
    %4952 = vmatpush1.bf16.msra.mxu0 %v3385
    %4953 = vmatprep.subr.bf16.mxu0 %v3390
    %4954 = vmatpush1.bf16.msra.mxu0 %v3389
    %4955 = vmatprep.subr.bf16.mxu0 %v3394
    %4956 = vmatpush1.bf16.msra.mxu0 %v3393
    %4957 = vmatprep.subr.bf16.mxu0 %v3398
    %4958 = vmatpush1.bf16.msra.mxu0 %v3397
    %4959 = vmatprep.subr.bf16.mxu0 %v3402
    %4960 = vmatpush1.bf16.msra.mxu0 %v3401
    %4961 = vmatprep.subr.bf16.mxu0 %v3406
    %4962 = vmatpush1.bf16.msra.mxu0 %v3405
    %4963 = vmatprep.subr.bf16.mxu0 %v3410
    %4964 = vmatpush1.bf16.msra.mxu0 %v3409
    %4965 = vmatprep.subr.bf16.mxu0 %v3414
    %4966 = vmatpush1.bf16.msra.mxu0 %v3413
    %4967 = vmatprep.subr.bf16.mxu0 %v3418
    %4968 = vmatpush1.bf16.msra.mxu0 %v3417
    %4969 = vmatprep.subr.bf16.mxu0 %v3422
    %4970 = vmatpush1.bf16.msra.mxu0 %v3421
    %4971 = vmatprep.subr.bf16.mxu0 %v3426
    %4972 = vmatpush1.bf16.msra.mxu0 %v3425
    %4973 = vmatprep.subr.bf16.mxu0 %v3430
    %4974 = vmatpush1.bf16.msra.mxu0 %v3429
    %4975 = vmatprep.subr.bf16.mxu0 %v3434
    %4976 = vmatpush1.bf16.msra.mxu0 %v3433
    %4977 = vmatprep.mubr.bf16.mxu0 %v873
    %4978 = vmatmul.mubr.bf16.gmra.mrb[0].mxu0 %v859
    %v4979 = vpop.f32.mrb[0].mxu0
    %v4980 = vadd.f32 %v815, %v4979
    %v4981 = vpop.f32.mrb[0].mxu0
    %v4982 = vadd.f32 %v819, %v4981
    %v4983 = vpop.f32.mrb[0].mxu0
    %v4984 = vpop.f32.mrb[0].mxu0
    %4985 = vdwg.mxu0
    %4986 = vmatprep.subr.bf16.mxu0 %v3438
    %4987 = vmatpush1.bf16.msra.mxu0 %v3437
    %4988 = vmatprep.subr.bf16.mxu0 %v3442
    %4989 = vmatpush1.bf16.msra.mxu0 %v3441
    %4990 = vmatprep.subr.bf16.mxu0 %v3446
    %4991 = vmatpush1.bf16.msra.mxu0 %v3445
    %4992 = vmatprep.subr.bf16.mxu0 %v3450
    %4993 = vmatpush1.bf16.msra.mxu0 %v3449
    %4994 = vmatprep.subr.bf16.mxu0 %v3454
    %4995 = vmatpush1.bf16.msra.mxu0 %v3453
    %4996 = vmatprep.subr.bf16.mxu0 %v3458
    %4997 = vmatpush1.bf16.msra.mxu0 %v3457
    %4998 = vmatprep.subr.bf16.mxu0 %v3462
    %4999 = vmatpush1.bf16.msra.mxu0 %v3461
    %5000 = vmatprep.subr.bf16.mxu0 %v3466
    %5001 = vmatpush1.bf16.msra.mxu0 %v3465
    %5002 = vmatprep.subr.bf16.mxu0 %v3470
    %5003 = vmatpush1.bf16.msra.mxu0 %v3469
    %5004 = vmatprep.subr.bf16.mxu0 %v3474
    %5005 = vmatpush1.bf16.msra.mxu0 %v3473
    %5006 = vmatprep.subr.bf16.mxu0 %v3478
    %5007 = vmatpush1.bf16.msra.mxu0 %v3477
    %5008 = vmatprep.subr.bf16.mxu0 %v3482
    %5009 = vmatpush1.bf16.msra.mxu0 %v3481
    %5010 = vmatprep.subr.bf16.mxu0 %v3486
    %5011 = vmatpush1.bf16.msra.mxu0 %v3485
    %5012 = vmatprep.subr.bf16.mxu0 %v3490
    %5013 = vmatpush1.bf16.msra.mxu0 %v3489
    %5014 = vmatprep.subr.bf16.mxu0 %v3494
    %5015 = vmatpush1.bf16.msra.mxu0 %v3493
    %5016 = vmatprep.subr.bf16.mxu0 %v3498
    %5017 = vmatpush1.bf16.msra.mxu0 %v3497
    %5018 = vmatprep.mubr.bf16.mxu0 %v883
    %5019 = vmatmul.mubr.bf16.gmra.mrb[0].mxu0 %v881
    %v5020 = vpop.f32.mrb[0].mxu0
    %v5021 = vadd.f32 %v4980, %v5020
    %v5022 = vpop.f32.mrb[0].mxu0
    %v5023 = vadd.f32 %v4982, %v5022
    %v5024 = vpop.f32.mrb[0].mxu0
    %v5025 = vpop.f32.mrb[0].mxu0
    %5026 = vdwg.mxu0
    %5027 = vmatprep.subr.bf16.mxu0 %v3502
    %5028 = vmatpush1.bf16.msra.mxu0 %v3501
    %5029 = vmatprep.subr.bf16.mxu0 %v3506
    %5030 = vmatpush1.bf16.msra.mxu0 %v3505
    %5031 = vmatprep.subr.bf16.mxu0 %v3510
    %5032 = vmatpush1.bf16.msra.mxu0 %v3509
    %5033 = vmatprep.subr.bf16.mxu0 %v3514
    %5034 = vmatpush1.bf16.msra.mxu0 %v3513
    %5035 = vmatprep.subr.bf16.mxu0 %v3518
    %5036 = vmatpush1.bf16.msra.mxu0 %v3517
    %5037 = vmatprep.subr.bf16.mxu0 %v3522
    %5038 = vmatpush1.bf16.msra.mxu0 %v3521
    %5039 = vmatprep.subr.bf16.mxu0 %v3526
    %5040 = vmatpush1.bf16.msra.mxu0 %v3525
    %5041 = vmatprep.subr.bf16.mxu0 %v3530
    %5042 = vmatpush1.bf16.msra.mxu0 %v3529
    %5043 = vmatprep.subr.bf16.mxu0 %v3534
    %5044 = vmatpush1.bf16.msra.mxu0 %v3533
    %5045 = vmatprep.subr.bf16.mxu0 %v3538
    %5046 = vmatpush1.bf16.msra.mxu0 %v3537
    %5047 = vmatprep.subr.bf16.mxu0 %v3542
    %5048 = vmatpush1.bf16.msra.mxu0 %v3541
    %5049 = vmatprep.subr.bf16.mxu0 %v3546
    %5050 = vmatpush1.bf16.msra.mxu0 %v3545
    %5051 = vmatprep.subr.bf16.mxu0 %v3550
    %5052 = vmatpush1.bf16.msra.mxu0 %v3549
    %5053 = vmatprep.subr.bf16.mxu0 %v3554
    %5054 = vmatpush1.bf16.msra.mxu0 %v3553
    %5055 = vmatprep.subr.bf16.mxu0 %v3558
    %5056 = vmatpush1.bf16.msra.mxu0 %v3557
    %5057 = vmatprep.subr.bf16.mxu0 %v3562
    %5058 = vmatpush1.bf16.msra.mxu0 %v3561
    %5059 = vmatprep.mubr.bf16.mxu0 %v880
    %5060 = vmatmul.mubr.bf16.gmra.mrb[0].mxu0 %v866
    %v5061 = vpop.f32.mrb[0].mxu0
    %v5062 = vadd.f32 %v5021, %v5061
    %v5063 = vpop.f32.mrb[0].mxu0
    %v5064 = vadd.f32 %v5023, %v5063
    %v5065 = vpop.f32.mrb[0].mxu0
    %v5066 = vpop.f32.mrb[0].mxu0
    %5067 = vdwg.mxu0
    %5068 = vmatprep.subr.bf16.mxu0 %v3566
    %5069 = vmatpush1.bf16.msra.mxu0 %v3565
    %5070 = vmatprep.subr.bf16.mxu0 %v3570
    %5071 = vmatpush1.bf16.msra.mxu0 %v3569
    %5072 = vmatprep.subr.bf16.mxu0 %v3574
    %5073 = vmatpush1.bf16.msra.mxu0 %v3573
    %5074 = vmatprep.subr.bf16.mxu0 %v3578
    %5075 = vmatpush1.bf16.msra.mxu0 %v3577
    %5076 = vmatprep.subr.bf16.mxu0 %v3582
    %5077 = vmatpush1.bf16.msra.mxu0 %v3581
    %5078 = vmatprep.subr.bf16.mxu0 %v3586
    %5079 = vmatpush1.bf16.msra.mxu0 %v3585
    %5080 = vmatprep.subr.bf16.mxu0 %v3590
    %5081 = vmatpush1.bf16.msra.mxu0 %v3589
    %5082 = vmatprep.subr.bf16.mxu0 %v3594
    %5083 = vmatpush1.bf16.msra.mxu0 %v3593
    %5084 = vmatprep.subr.bf16.mxu0 %v3598
    %5085 = vmatpush1.bf16.msra.mxu0 %v3597
    %5086 = vmatprep.subr.bf16.mxu0 %v3602
    %5087 = vmatpush1.bf16.msra.mxu0 %v3601
    %5088 = vmatprep.subr.bf16.mxu0 %v3606
    %5089 = vmatpush1.bf16.msra.mxu0 %v3605
    %5090 = vmatprep.subr.bf16.mxu0 %v3610
    %5091 = vmatpush1.bf16.msra.mxu0 %v3609
    %5092 = vmatprep.subr.bf16.mxu0 %v3614
    %5093 = vmatpush1.bf16.msra.mxu0 %v3613
    %5094 = vmatprep.subr.bf16.mxu0 %v3618
    %5095 = vmatpush1.bf16.msra.mxu0 %v3617
    %5096 = vmatprep.subr.bf16.mxu0 %v3622
    %5097 = vmatpush1.bf16.msra.mxu0 %v3621
    %5098 = vmatprep.subr.bf16.mxu0 %v3626
    %5099 = vmatpush1.bf16.msra.mxu0 %v3625
    %5100 = vmatprep.mubr.bf16.mxu0 %v884
    %5101 = vmatmul.mubr.bf16.gmra.mrb[0].mxu0 %v882
    %v5102 = vpop.f32.mrb[0].mxu0
    %v5103 = vadd.f32 %v5062, %v5102
    %v5104 = vpop.f32.mrb[0].mxu0
    %v5105 = vadd.f32 %v5064, %v5104
    %v5106 = vpop.f32.mrb[0].mxu0
    %v5107 = vpop.f32.mrb[0].mxu0
    %5108 = vdwg.mxu0
    %5109 = vmatprep.subr.bf16.mxu0 %v3630
    %5110 = vmatpush1.bf16.msra.mxu0 %v3629
    %5111 = vmatprep.subr.bf16.mxu0 %v3634
    %5112 = vmatpush1.bf16.msra.mxu0 %v3633
    %5113 = vmatprep.subr.bf16.mxu0 %v3638
    %5114 = vmatpush1.bf16.msra.mxu0 %v3637
    %5115 = vmatprep.subr.bf16.mxu0 %v3642
    %5116 = vmatpush1.bf16.msra.mxu0 %v3641
    %5117 = vmatprep.subr.bf16.mxu0 %v3646
    %5118 = vmatpush1.bf16.msra.mxu0 %v3645
    %5119 = vmatprep.subr.bf16.mxu0 %v3650
    %5120 = vmatpush1.bf16.msra.mxu0 %v3649
    %5121 = vmatprep.subr.bf16.mxu0 %v3654
    %5122 = vmatpush1.bf16.msra.mxu0 %v3653
    %5123 = vmatprep.subr.bf16.mxu0 %v3658
    %5124 = vmatpush1.bf16.msra.mxu0 %v3657
    %5125 = vmatprep.subr.bf16.mxu0 %v3662
    %5126 = vmatpush1.bf16.msra.mxu0 %v3661
    %5127 = vmatprep.subr.bf16.mxu0 %v3666
    %5128 = vmatpush1.bf16.msra.mxu0 %v3665
    %5129 = vmatprep.subr.bf16.mxu0 %v3670
    %5130 = vmatpush1.bf16.msra.mxu0 %v3669
    %5131 = vmatprep.subr.bf16.mxu0 %v3674
    %5132 = vmatpush1.bf16.msra.mxu0 %v3673
    %5133 = vmatprep.subr.bf16.mxu0 %v3678
    %5134 = vmatpush1.bf16.msra.mxu0 %v3677
    %5135 = vmatprep.subr.bf16.mxu0 %v3682
    %5136 = vmatpush1.bf16.msra.mxu0 %v3681
    %5137 = vmatprep.subr.bf16.mxu0 %v3686
    %5138 = vmatpush1.bf16.msra.mxu0 %v3685
    %5139 = vmatprep.subr.bf16.mxu0 %v3690
    %5140 = vmatpush1.bf16.msra.mxu0 %v3689
    %5141 = vmatprep.mubr.bf16.mxu0 %v922
    %5142 = vmatmul.mubr.bf16.gmra.mrb[0].mxu0 %v908
    %v5143 = vpop.f32.mrb[0].mxu0
    %v5144 = vadd.f32 %v5103, %v5143
    %v5145 = vpop.f32.mrb[0].mxu0
    %v5146 = vadd.f32 %v5105, %v5145
    %v5147 = vpop.f32.mrb[0].mxu0
    %v5148 = vpop.f32.mrb[0].mxu0
    %5149 = vdwg.mxu0
    %5150 = vmatprep.subr.bf16.mxu0 %v3694
    %5151 = vmatpush1.bf16.msra.mxu0 %v3693
    %5152 = vmatprep.subr.bf16.mxu0 %v3698
    %5153 = vmatpush1.bf16.msra.mxu0 %v3697
    %5154 = vmatprep.subr.bf16.mxu0 %v3702
    %5155 = vmatpush1.bf16.msra.mxu0 %v3701
    %5156 = vmatprep.subr.bf16.mxu0 %v3706
    %5157 = vmatpush1.bf16.msra.mxu0 %v3705
    %5158 = vmatprep.subr.bf16.mxu0 %v3710
    %5159 = vmatpush1.bf16.msra.mxu0 %v3709
    %5160 = vmatprep.subr.bf16.mxu0 %v3714
    %5161 = vmatpush1.bf16.msra.mxu0 %v3713
    %5162 = vmatprep.subr.bf16.mxu0 %v3718
    %5163 = vmatpush1.bf16.msra.mxu0 %v3717
    %5164 = vmatprep.subr.bf16.mxu0 %v3722
    %5165 = vmatpush1.bf16.msra.mxu0 %v3721
    %5166 = vmatprep.subr.bf16.mxu0 %v3726
    %5167 = vmatpush1.bf16.msra.mxu0 %v3725
    %5168 = vmatprep.subr.bf16.mxu0 %v3730
    %5169 = vmatpush1.bf16.msra.mxu0 %v3729
    %5170 = vmatprep.subr.bf16.mxu0 %v3734
    %5171 = vmatpush1.bf16.msra.mxu0 %v3733
    %5172 = vmatprep.subr.bf16.mxu0 %v3738
    %5173 = vmatpush1.bf16.msra.mxu0 %v3737
    %5174 = vmatprep.subr.bf16.mxu0 %v3742
    %5175 = vmatpush1.bf16.msra.mxu0 %v3741
    %5176 = vmatprep.subr.bf16.mxu0 %v3746
    %5177 = vmatpush1.bf16.msra.mxu0 %v3745
    %5178 = vmatprep.subr.bf16.mxu0 %v3750
    %5179 = vmatpush1.bf16.msra.mxu0 %v3749
    %5180 = vmatprep.subr.bf16.mxu0 %v3754
    %5181 = vmatpush1.bf16.msra.mxu0 %v3753
    %5182 = vmatprep.mubr.bf16.mxu0 %v932
    %5183 = vmatmul.mubr.bf16.gmra.mrb[0].mxu0 %v930
    %v5184 = vpop.f32.mrb[0].mxu0
    %v5185 = vadd.f32 %v5144, %v5184
    %v5186 = vpop.f32.mrb[0].mxu0
    %v5187 = vadd.f32 %v5146, %v5186
    %v5188 = vpop.f32.mrb[0].mxu0
    %v5189 = vpop.f32.mrb[0].mxu0
    %5190 = vdwg.mxu0
    %5191 = vmatprep.subr.bf16.mxu0 %v3758
    %5192 = vmatpush1.bf16.msra.mxu0 %v3757
    %5193 = vmatprep.subr.bf16.mxu0 %v3762
    %5194 = vmatpush1.bf16.msra.mxu0 %v3761
    %5195 = vmatprep.subr.bf16.mxu0 %v3766
    %5196 = vmatpush1.bf16.msra.mxu0 %v3765
    %5197 = vmatprep.subr.bf16.mxu0 %v3770
    %5198 = vmatpush1.bf16.msra.mxu0 %v3769
    %5199 = vmatprep.subr.bf16.mxu0 %v3774
    %5200 = vmatpush1.bf16.msra.mxu0 %v3773
    %5201 = vmatprep.subr.bf16.mxu0 %v3778
    %5202 = vmatpush1.bf16.msra.mxu0 %v3777
    %5203 = vmatprep.subr.bf16.mxu0 %v3782
    %5204 = vmatpush1.bf16.msra.mxu0 %v3781
    %5205 = vmatprep.subr.bf16.mxu0 %v3786
    %5206 = vmatpush1.bf16.msra.mxu0 %v3785
    %5207 = vmatprep.subr.bf16.mxu0 %v3790
    %5208 = vmatpush1.bf16.msra.mxu0 %v3789
    %5209 = vmatprep.subr.bf16.mxu0 %v3794
    %5210 = vmatpush1.bf16.msra.mxu0 %v3793
    %5211 = vmatprep.subr.bf16.mxu0 %v3798
    %5212 = vmatpush1.bf16.msra.mxu0 %v3797
    %5213 = vmatprep.subr.bf16.mxu0 %v3802
    %5214 = vmatpush1.bf16.msra.mxu0 %v3801
    %5215 = vmatprep.subr.bf16.mxu0 %v3806
    %5216 = vmatpush1.bf16.msra.mxu0 %v3805
    %5217 = vmatprep.subr.bf16.mxu0 %v3810
    %5218 = vmatpush1.bf16.msra.mxu0 %v3809
    %5219 = vmatprep.subr.bf16.mxu0 %v3814
    %5220 = vmatpush1.bf16.msra.mxu0 %v3813
    %5221 = vmatprep.subr.bf16.mxu0 %v3818
    %5222 = vmatpush1.bf16.msra.mxu0 %v3817
    %5223 = vmatprep.mubr.bf16.mxu0 %v929
    %5224 = vmatmul.mubr.bf16.gmra.mrb[0].mxu0 %v915
    %v5225 = vpop.f32.mrb[0].mxu0
    %v5226 = vadd.f32 %v5185, %v5225
    %v5227 = vpop.f32.mrb[0].mxu0
    %v5228 = vadd.f32 %v5187, %v5227
    %v5229 = vpop.f32.mrb[0].mxu0
    %v5230 = vpop.f32.mrb[0].mxu0
    %5231 = vdwg.mxu0
    %5232 = vmatprep.subr.bf16.mxu0 %v3822
    %5233 = vmatpush1.bf16.msra.mxu0 %v3821
    %5234 = vmatprep.subr.bf16.mxu0 %v3826
    %5235 = vmatpush1.bf16.msra.mxu0 %v3825
    %5236 = vmatprep.subr.bf16.mxu0 %v3830
    %5237 = vmatpush1.bf16.msra.mxu0 %v3829
    %5238 = vmatprep.subr.bf16.mxu0 %v3834
    %5239 = vmatpush1.bf16.msra.mxu0 %v3833
    %5240 = vmatprep.subr.bf16.mxu0 %v3838
    %5241 = vmatpush1.bf16.msra.mxu0 %v3837
    %5242 = vmatprep.subr.bf16.mxu0 %v3842
    %5243 = vmatpush1.bf16.msra.mxu0 %v3841
    %5244 = vmatprep.subr.bf16.mxu0 %v3846
    %5245 = vmatpush1.bf16.msra.mxu0 %v3845
    %5246 = vmatprep.subr.bf16.mxu0 %v3850
    %5247 = vmatpush1.bf16.msra.mxu0 %v3849
    %5248 = vmatprep.subr.bf16.mxu0 %v3854
    %5249 = vmatpush1.bf16.msra.mxu0 %v3853
    %5250 = vmatprep.subr.bf16.mxu0 %v3858
    %5251 = vmatpush1.bf16.msra.mxu0 %v3857
    %5252 = vmatprep.subr.bf16.mxu0 %v3862
    %5253 = vmatpush1.bf16.msra.mxu0 %v3861
    %5254 = vmatprep.subr.bf16.mxu0 %v3866
    %5255 = vmatpush1.bf16.msra.mxu0 %v3865
    %5256 = vmatprep.subr.bf16.mxu0 %v3870
    %5257 = vmatpush1.bf16.msra.mxu0 %v3869
    %5258 = vmatprep.subr.bf16.mxu0 %v3874
    %5259 = vmatpush1.bf16.msra.mxu0 %v3873
    %5260 = vmatprep.subr.bf16.mxu0 %v3878
    %5261 = vmatpush1.bf16.msra.mxu0 %v3877
    %5262 = vmatprep.subr.bf16.mxu0 %v3882
    %5263 = vmatpush1.bf16.msra.mxu0 %v3881
    %5264 = vmatprep.mubr.bf16.mxu0 %v933
    %5265 = vmatmul.mubr.bf16.gmra.mrb[0].mxu0 %v931
    %v5266 = vpop.f32.mrb[0].mxu0
    %v5267 = vadd.f32 %v5226, %v5266
    %v5268 = vpop.f32.mrb[0].mxu0
    %v5269 = vadd.f32 %v5228, %v5268
    %v5270 = vpop.f32.mrb[0].mxu0
    %v5271 = vpop.f32.mrb[0].mxu0
    %5272 = vdwg.mxu0
    %5273 = vmatprep.subr.bf16.mxu0 %v3886
    %5274 = vmatpush1.bf16.msra.mxu0 %v3885
    %5275 = vmatprep.subr.bf16.mxu0 %v3890
    %5276 = vmatpush1.bf16.msra.mxu0 %v3889
    %5277 = vmatprep.subr.bf16.mxu0 %v3894
    %5278 = vmatpush1.bf16.msra.mxu0 %v3893
    %5279 = vmatprep.subr.bf16.mxu0 %v3898
    %5280 = vmatpush1.bf16.msra.mxu0 %v3897
    %5281 = vmatprep.subr.bf16.mxu0 %v3902
    %5282 = vmatpush1.bf16.msra.mxu0 %v3901
    %5283 = vmatprep.subr.bf16.mxu0 %v3906
    %5284 = vmatpush1.bf16.msra.mxu0 %v3905
    %5285 = vmatprep.subr.bf16.mxu0 %v3910
    %5286 = vmatpush1.bf16.msra.mxu0 %v3909
    %5287 = vmatprep.subr.bf16.mxu0 %v3914
    %5288 = vmatpush1.bf16.msra.mxu0 %v3913
    %5289 = vmatprep.subr.bf16.mxu0 %v3918
    %5290 = vmatpush1.bf16.msra.mxu0 %v3917
    %5291 = vmatprep.subr.bf16.mxu0 %v3922
    %5292 = vmatpush1.bf16.msra.mxu0 %v3921
    %5293 = vmatprep.subr.bf16.mxu0 %v3926
    %5294 = vmatpush1.bf16.msra.mxu0 %v3925
    %5295 = vmatprep.subr.bf16.mxu0 %v3930
    %5296 = vmatpush1.bf16.msra.mxu0 %v3929
    %5297 = vmatprep.subr.bf16.mxu0 %v3934
    %5298 = vmatpush1.bf16.msra.mxu0 %v3933
    %5299 = vmatprep.subr.bf16.mxu0 %v3938
    %5300 = vmatpush1.bf16.msra.mxu0 %v3937
    %5301 = vmatprep.subr.bf16.mxu0 %v3942
    %5302 = vmatpush1.bf16.msra.mxu0 %v3941
    %5303 = vmatprep.subr.bf16.mxu0 %v3946
    %5304 = vmatpush1.bf16.msra.mxu0 %v3945
    %5305 = vmatprep.mubr.bf16.mxu0 %v971
    %5306 = vmatmul.mubr.bf16.gmra.mrb[0].mxu0 %v957
    %v5307 = vpop.f32.mrb[0].mxu0
    %v5308 = vadd.f32 %v5267, %v5307
    %v5309 = vpop.f32.mrb[0].mxu0
    %v5310 = vadd.f32 %v5269, %v5309
    %v5311 = vpop.f32.mrb[0].mxu0
    %v5312 = vpop.f32.mrb[0].mxu0
    %5313 = vdwg.mxu0
    %5314 = vmatprep.subr.bf16.mxu0 %v3950
    %5315 = vmatpush1.bf16.msra.mxu0 %v3949
    %5316 = vmatprep.subr.bf16.mxu0 %v3954
    %5317 = vmatpush1.bf16.msra.mxu0 %v3953
    %5318 = vmatprep.subr.bf16.mxu0 %v3958
    %5319 = vmatpush1.bf16.msra.mxu0 %v3957
    %5320 = vmatprep.subr.bf16.mxu0 %v3962
    %5321 = vmatpush1.bf16.msra.mxu0 %v3961
    %5322 = vmatprep.subr.bf16.mxu0 %v3966
    %5323 = vmatpush1.bf16.msra.mxu0 %v3965
    %5324 = vmatprep.subr.bf16.mxu0 %v3970
    %5325 = vmatpush1.bf16.msra.mxu0 %v3969
    %5326 = vmatprep.subr.bf16.mxu0 %v3974
    %5327 = vmatpush1.bf16.msra.mxu0 %v3973
    %5328 = vmatprep.subr.bf16.mxu0 %v3978
    %5329 = vmatpush1.bf16.msra.mxu0 %v3977
    %5330 = vmatprep.subr.bf16.mxu0 %v3982
    %5331 = vmatpush1.bf16.msra.mxu0 %v3981
    %5332 = vmatprep.subr.bf16.mxu0 %v3986
    %5333 = vmatpush1.bf16.msra.mxu0 %v3985
    %5334 = vmatprep.subr.bf16.mxu0 %v3990
    %5335 = vmatpush1.bf16.msra.mxu0 %v3989
    %5336 = vmatprep.subr.bf16.mxu0 %v3994
    %5337 = vmatpush1.bf16.msra.mxu0 %v3993
    %5338 = vmatprep.subr.bf16.mxu0 %v3998
    %5339 = vmatpush1.bf16.msra.mxu0 %v3997
    %5340 = vmatprep.subr.bf16.mxu0 %v4002
    %5341 = vmatpush1.bf16.msra.mxu0 %v4001
    %5342 = vmatprep.subr.bf16.mxu0 %v4006
    %5343 = vmatpush1.bf16.msra.mxu0 %v4005
    %5344 = vmatprep.subr.bf16.mxu0 %v4010
    %5345 = vmatpush1.bf16.msra.mxu0 %v4009
    %5346 = vmatprep.mubr.bf16.mxu0 %v981
    %5347 = vmatmul.mubr.bf16.gmra.mrb[0].mxu0 %v979
    %v5348 = vpop.f32.mrb[0].mxu0
    %v5349 = vadd.f32 %v5308, %v5348
    %v5350 = vpop.f32.mrb[0].mxu0
    %v5351 = vadd.f32 %v5310, %v5350
    %v5352 = vpop.f32.mrb[0].mxu0
    %v5353 = vpop.f32.mrb[0].mxu0
    %5354 = vdwg.mxu0
    %5355 = vmatprep.subr.bf16.mxu0 %v4014
    %5356 = vmatpush1.bf16.msra.mxu0 %v4013
    %5357 = vmatprep.subr.bf16.mxu0 %v4018
    %5358 = vmatpush1.bf16.msra.mxu0 %v4017
    %5359 = vmatprep.subr.bf16.mxu0 %v4022
    %5360 = vmatpush1.bf16.msra.mxu0 %v4021
    %5361 = vmatprep.subr.bf16.mxu0 %v4026
    %5362 = vmatpush1.bf16.msra.mxu0 %v4025
    %5363 = vmatprep.subr.bf16.mxu0 %v4030
    %5364 = vmatpush1.bf16.msra.mxu0 %v4029
    %5365 = vmatprep.subr.bf16.mxu0 %v4034
    %5366 = vmatpush1.bf16.msra.mxu0 %v4033
    %5367 = vmatprep.subr.bf16.mxu0 %v4038
    %5368 = vmatpush1.bf16.msra.mxu0 %v4037
    %5369 = vmatprep.subr.bf16.mxu0 %v4042
    %5370 = vmatpush1.bf16.msra.mxu0 %v4041
    %5371 = vmatprep.subr.bf16.mxu0 %v4046
    %5372 = vmatpush1.bf16.msra.mxu0 %v4045
    %5373 = vmatprep.subr.bf16.mxu0 %v4050
    %5374 = vmatpush1.bf16.msra.mxu0 %v4049
    %5375 = vmatprep.subr.bf16.mxu0 %v4054
    %5376 = vmatpush1.bf16.msra.mxu0 %v4053
    %5377 = vmatprep.subr.bf16.mxu0 %v4058
    %5378 = vmatpush1.bf16.msra.mxu0 %v4057
    %5379 = vmatprep.subr.bf16.mxu0 %v4062
    %5380 = vmatpush1.bf16.msra.mxu0 %v4061
    %5381 = vmatprep.subr.bf16.mxu0 %v4066
    %5382 = vmatpush1.bf16.msra.mxu0 %v4065
    %5383 = vmatprep.subr.bf16.mxu0 %v4070
    %5384 = vmatpush1.bf16.msra.mxu0 %v4069
    %5385 = vmatprep.subr.bf16.mxu0 %v4074
    %5386 = vmatpush1.bf16.msra.mxu0 %v4073
    %5387 = vmatprep.mubr.bf16.mxu0 %v978
    %5388 = vmatmul.mubr.bf16.gmra.mrb[0].mxu0 %v964
    %v5389 = vpop.f32.mrb[0].mxu0
    %v5390 = vadd.f32 %v5349, %v5389
    %v5391 = vpop.f32.mrb[0].mxu0
    %v5392 = vadd.f32 %v5351, %v5391
    %v5393 = vpop.f32.mrb[0].mxu0
    %v5394 = vpop.f32.mrb[0].mxu0
    %5395 = vdwg.mxu0
    %5396 = vmatprep.subr.bf16.mxu0 %v4078
    %5397 = vmatpush1.bf16.msra.mxu0 %v4077
    %5398 = vmatprep.subr.bf16.mxu0 %v4082
    %5399 = vmatpush1.bf16.msra.mxu0 %v4081
    %5400 = vmatprep.subr.bf16.mxu0 %v4086
    %5401 = vmatpush1.bf16.msra.mxu0 %v4085
    %5402 = vmatprep.subr.bf16.mxu0 %v4090
    %5403 = vmatpush1.bf16.msra.mxu0 %v4089
    %5404 = vmatprep.subr.bf16.mxu0 %v4094
    %5405 = vmatpush1.bf16.msra.mxu0 %v4093
    %5406 = vmatprep.subr.bf16.mxu0 %v4098
    %5407 = vmatpush1.bf16.msra.mxu0 %v4097
    %5408 = vmatprep.subr.bf16.mxu0 %v4102
    %5409 = vmatpush1.bf16.msra.mxu0 %v4101
    %5410 = vmatprep.subr.bf16.mxu0 %v4106
    %5411 = vmatpush1.bf16.msra.mxu0 %v4105
    %5412 = vmatprep.subr.bf16.mxu0 %v4110
    %5413 = vmatpush1.bf16.msra.mxu0 %v4109
    %5414 = vmatprep.subr.bf16.mxu0 %v4114
    %5415 = vmatpush1.bf16.msra.mxu0 %v4113
    %5416 = vmatprep.subr.bf16.mxu0 %v4118
    %5417 = vmatpush1.bf16.msra.mxu0 %v4117
    %5418 = vmatprep.subr.bf16.mxu0 %v4122
    %5419 = vmatpush1.bf16.msra.mxu0 %v4121
    %5420 = vmatprep.subr.bf16.mxu0 %v4126
    %5421 = vmatpush1.bf16.msra.mxu0 %v4125
    %5422 = vmatprep.subr.bf16.mxu0 %v4130
    %5423 = vmatpush1.bf16.msra.mxu0 %v4129
    %5424 = vmatprep.subr.bf16.mxu0 %v4134
    %5425 = vmatpush1.bf16.msra.mxu0 %v4133
    %5426 = vmatprep.subr.bf16.mxu0 %v4138
    %5427 = vmatpush1.bf16.msra.mxu0 %v4137
    %5428 = vmatprep.mubr.bf16.mxu0 %v982
    %5429 = vmatmul.mubr.bf16.gmra.mrb[0].mxu0 %v980
    %v5430 = vpop.f32.mrb[0].mxu0
    %v5431 = vadd.f32 %v5390, %v5430
    %v5432 = vpop.f32.mrb[0].mxu0
    %v5433 = vadd.f32 %v5392, %v5432
    %v5434 = vpop.f32.mrb[0].mxu0
    %v5435 = vpop.f32.mrb[0].mxu0
    %5436 = vdwg.mxu0
    %5437 = vmatprep.subr.bf16.mxu0 %v4142
    %5438 = vmatpush1.bf16.msra.mxu0 %v4141
    %5439 = vmatprep.subr.bf16.mxu0 %v4146
    %5440 = vmatpush1.bf16.msra.mxu0 %v4145
    %5441 = vmatprep.subr.bf16.mxu0 %v4150
    %5442 = vmatpush1.bf16.msra.mxu0 %v4149
    %5443 = vmatprep.subr.bf16.mxu0 %v4154
    %5444 = vmatpush1.bf16.msra.mxu0 %v4153
    %5445 = vmatprep.subr.bf16.mxu0 0
    %5446 = vmatpush1.bf16.msra.mxu0 0
    %5447 = vmatprep.subr.bf16.mxu0 0
    %5448 = vmatpush1.bf16.msra.mxu0 0
    %5449 = vmatprep.subr.bf16.mxu0 0
    %5450 = vmatpush1.bf16.msra.mxu0 0
    %5451 = vmatprep.subr.bf16.mxu0 0
    %5452 = vmatpush1.bf16.msra.mxu0 0
    %5453 = vmatprep.subr.bf16.mxu0 0
    %5454 = vmatpush1.bf16.msra.mxu0 0
    %5455 = vmatprep.subr.bf16.mxu0 0
    %5456 = vmatpush1.bf16.msra.mxu0 0
    %5457 = vmatprep.subr.bf16.mxu0 0
    %5458 = vmatpush1.bf16.msra.mxu0 0
    %5459 = vmatprep.subr.bf16.mxu0 0
    %5460 = vmatpush1.bf16.msra.mxu0 0
    %5461 = vmatprep.subr.bf16.mxu0 0
    %5462 = vmatpush1.bf16.msra.mxu0 0
    %5463 = vmatprep.subr.bf16.mxu0 0
    %5464 = vmatpush1.bf16.msra.mxu0 0
    %5465 = vmatprep.subr.bf16.mxu0 0
    %5466 = vmatpush1.bf16.msra.mxu0 0
    %5467 = vmatprep.subr.bf16.mxu0 0
    %5468 = vmatpush1.bf16.msra.mxu0 0
    %5469 = vmatprep.mubr.bf16.mxu0 0
    %5470 = vmatmul.mubr.bf16.gmra.mrb[0].mxu0 %v4943
    %v5471 = vpop.f32.mrb[0].mxu0
    %v5472 = vadd.f32 %v5431, %v5471
    %v5473 = vpop.f32.mrb[0].mxu0
    %v5474 = vadd.f32 %v5433, %v5473
    %v5475 = vpop.f32.mrb[0].mxu0
    %v5476 = vpop.f32.mrb[0].mxu0
    %5477 = vdwg.mxu0
    %5478 = vmatprep.subr.bf16.mxu0 %v3376
    %5479 = vmatpush1.bf16.msra.mxu0 %v3375
    %5480 = vmatprep.subr.bf16.mxu0 %v3380
    %5481 = vmatpush1.bf16.msra.mxu0 %v3379
    %5482 = vmatprep.subr.bf16.mxu0 %v3384
    %5483 = vmatpush1.bf16.msra.mxu0 %v3383
    %5484 = vmatprep.subr.bf16.mxu0 %v3388
    %5485 = vmatpush1.bf16.msra.mxu0 %v3387
    %5486 = vmatprep.subr.bf16.mxu0 %v3392
    %5487 = vmatpush1.bf16.msra.mxu0 %v3391
    %5488 = vmatprep.subr.bf16.mxu0 %v3396
    %5489 = vmatpush1.bf16.msra.mxu0 %v3395
    %5490 = vmatprep.subr.bf16.mxu0 %v3400
    %5491 = vmatpush1.bf16.msra.mxu0 %v3399
    %5492 = vmatprep.subr.bf16.mxu0 %v3404
    %5493 = vmatpush1.bf16.msra.mxu0 %v3403
    %5494 = vmatprep.subr.bf16.mxu0 %v3408
    %5495 = vmatpush1.bf16.msra.mxu0 %v3407
    %5496 = vmatprep.subr.bf16.mxu0 %v3412
    %5497 = vmatpush1.bf16.msra.mxu0 %v3411
    %5498 = vmatprep.subr.bf16.mxu0 %v3416
    %5499 = vmatpush1.bf16.msra.mxu0 %v3415
    %5500 = vmatprep.subr.bf16.mxu0 %v3420
    %5501 = vmatpush1.bf16.msra.mxu0 %v3419
    %5502 = vmatprep.subr.bf16.mxu0 %v3424
    %5503 = vmatpush1.bf16.msra.mxu0 %v3423
    %5504 = vmatprep.subr.bf16.mxu0 %v3428
    %5505 = vmatpush1.bf16.msra.mxu0 %v3427
    %5506 = vmatprep.subr.bf16.mxu0 %v3432
    %5507 = vmatpush1.bf16.msra.mxu0 %v3431
    %5508 = vmatprep.subr.bf16.mxu0 %v3436
    %5509 = vmatpush1.bf16.msra.mxu0 %v3435
    %5510 = vmatprep.mubr.bf16.mxu0 %v873
    %5511 = vmatmul.mubr.bf16.gmra.mrb[0].mxu0 %v859
    %v5512 = vpop.f32.mrb[0].mxu0
    %v5513 = vadd.f32 %v823, %v5512
    %v5514 = vpop.f32.mrb[0].mxu0
    %v5515 = vadd.f32 %v827, %v5514
    %v5516 = vpop.f32.mrb[0].mxu0
    %v5517 = vpop.f32.mrb[0].mxu0
    %5518 = vdwg.mxu0
    %5519 = vmatprep.subr.bf16.mxu0 %v3440
    %5520 = vmatpush1.bf16.msra.mxu0 %v3439
    %5521 = vmatprep.subr.bf16.mxu0 %v3444
    %5522 = vmatpush1.bf16.msra.mxu0 %v3443
    %5523 = vmatprep.subr.bf16.mxu0 %v3448
    %5524 = vmatpush1.bf16.msra.mxu0 %v3447
    %5525 = vmatprep.subr.bf16.mxu0 %v3452
    %5526 = vmatpush1.bf16.msra.mxu0 %v3451
    %5527 = vmatprep.subr.bf16.mxu0 %v3456
    %5528 = vmatpush1.bf16.msra.mxu0 %v3455
    %5529 = vmatprep.subr.bf16.mxu0 %v3460
    %5530 = vmatpush1.bf16.msra.mxu0 %v3459
    %5531 = vmatprep.subr.bf16.mxu0 %v3464
    %5532 = vmatpush1.bf16.msra.mxu0 %v3463
    %5533 = vmatprep.subr.bf16.mxu0 %v3468
    %5534 = vmatpush1.bf16.msra.mxu0 %v3467
    %5535 = vmatprep.subr.bf16.mxu0 %v3472
    %5536 = vmatpush1.bf16.msra.mxu0 %v3471
    %5537 = vmatprep.subr.bf16.mxu0 %v3476
    %5538 = vmatpush1.bf16.msra.mxu0 %v3475
    %5539 = vmatprep.subr.bf16.mxu0 %v3480
    %5540 = vmatpush1.bf16.msra.mxu0 %v3479
    %5541 = vmatprep.subr.bf16.mxu0 %v3484
    %5542 = vmatpush1.bf16.msra.mxu0 %v3483
    %5543 = vmatprep.subr.bf16.mxu0 %v3488
    %5544 = vmatpush1.bf16.msra.mxu0 %v3487
    %5545 = vmatprep.subr.bf16.mxu0 %v3492
    %5546 = vmatpush1.bf16.msra.mxu0 %v3491
    %5547 = vmatprep.subr.bf16.mxu0 %v3496
    %5548 = vmatpush1.bf16.msra.mxu0 %v3495
    %5549 = vmatprep.subr.bf16.mxu0 %v3500
    %5550 = vmatpush1.bf16.msra.mxu0 %v3499
    %5551 = vmatprep.mubr.bf16.mxu0 %v883
    %5552 = vmatmul.mubr.bf16.gmra.mrb[0].mxu0 %v881
    %v5553 = vpop.f32.mrb[0].mxu0
    %v5554 = vadd.f32 %v5513, %v5553
    %v5555 = vpop.f32.mrb[0].mxu0
    %v5556 = vadd.f32 %v5515, %v5555
    %v5557 = vpop.f32.mrb[0].mxu0
    %v5558 = vpop.f32.mrb[0].mxu0
    %5559 = vdwg.mxu0
    %5560 = vmatprep.subr.bf16.mxu0 %v3504
    %5561 = vmatpush1.bf16.msra.mxu0 %v3503
    %5562 = vmatprep.subr.bf16.mxu0 %v3508
    %5563 = vmatpush1.bf16.msra.mxu0 %v3507
    %5564 = vmatprep.subr.bf16.mxu0 %v3512
    %5565 = vmatpush1.bf16.msra.mxu0 %v3511
    %5566 = vmatprep.subr.bf16.mxu0 %v3516
    %5567 = vmatpush1.bf16.msra.mxu0 %v3515
    %5568 = vmatprep.subr.bf16.mxu0 %v3520
    %5569 = vmatpush1.bf16.msra.mxu0 %v3519
    %5570 = vmatprep.subr.bf16.mxu0 %v3524
    %5571 = vmatpush1.bf16.msra.mxu0 %v3523
    %5572 = vmatprep.subr.bf16.mxu0 %v3528
    %5573 = vmatpush1.bf16.msra.mxu0 %v3527
    %5574 = vmatprep.subr.bf16.mxu0 %v3532
    %5575 = vmatpush1.bf16.msra.mxu0 %v3531
    %5576 = vmatprep.subr.bf16.mxu0 %v3536
    %5577 = vmatpush1.bf16.msra.mxu0 %v3535
    %5578 = vmatprep.subr.bf16.mxu0 %v3540
    %5579 = vmatpush1.bf16.msra.mxu0 %v3539
    %5580 = vmatprep.subr.bf16.mxu0 %v3544
    %5581 = vmatpush1.bf16.msra.mxu0 %v3543
    %5582 = vmatprep.subr.bf16.mxu0 %v3548
    %5583 = vmatpush1.bf16.msra.mxu0 %v3547
    %5584 = vmatprep.subr.bf16.mxu0 %v3552
    %5585 = vmatpush1.bf16.msra.mxu0 %v3551
    %5586 = vmatprep.subr.bf16.mxu0 %v3556
    %5587 = vmatpush1.bf16.msra.mxu0 %v3555
    %5588 = vmatprep.subr.bf16.mxu0 %v3560
    %5589 = vmatpush1.bf16.msra.mxu0 %v3559
    %5590 = vmatprep.subr.bf16.mxu0 %v3564
    %5591 = vmatpush1.bf16.msra.mxu0 %v3563
    %5592 = vmatprep.mubr.bf16.mxu0 %v880
    %5593 = vmatmul.mubr.bf16.gmra.mrb[0].mxu0 %v866
    %v5594 = vpop.f32.mrb[0].mxu0
    %v5595 = vadd.f32 %v5554, %v5594
    %v5596 = vpop.f32.mrb[0].mxu0
    %v5597 = vadd.f32 %v5556, %v5596
    %v5598 = vpop.f32.mrb[0].mxu0
    %v5599 = vpop.f32.mrb[0].mxu0
    %5600 = vdwg.mxu0
    %5601 = vmatprep.subr.bf16.mxu0 %v3568
    %5602 = vmatpush1.bf16.msra.mxu0 %v3567
    %5603 = vmatprep.subr.bf16.mxu0 %v3572
    %5604 = vmatpush1.bf16.msra.mxu0 %v3571
    %5605 = vmatprep.subr.bf16.mxu0 %v3576
    %5606 = vmatpush1.bf16.msra.mxu0 %v3575
    %5607 = vmatprep.subr.bf16.mxu0 %v3580
    %5608 = vmatpush1.bf16.msra.mxu0 %v3579
    %5609 = vmatprep.subr.bf16.mxu0 %v3584
    %5610 = vmatpush1.bf16.msra.mxu0 %v3583
    %5611 = vmatprep.subr.bf16.mxu0 %v3588
    %5612 = vmatpush1.bf16.msra.mxu0 %v3587
    %5613 = vmatprep.subr.bf16.mxu0 %v3592
    %5614 = vmatpush1.bf16.msra.mxu0 %v3591
    %5615 = vmatprep.subr.bf16.mxu0 %v3596
    %5616 = vmatpush1.bf16.msra.mxu0 %v3595
    %5617 = vmatprep.subr.bf16.mxu0 %v3600
    %5618 = vmatpush1.bf16.msra.mxu0 %v3599
    %5619 = vmatprep.subr.bf16.mxu0 %v3604
    %5620 = vmatpush1.bf16.msra.mxu0 %v3603
    %5621 = vmatprep.subr.bf16.mxu0 %v3608
    %5622 = vmatpush1.bf16.msra.mxu0 %v3607
    %5623 = vmatprep.subr.bf16.mxu0 %v3612
    %5624 = vmatpush1.bf16.msra.mxu0 %v3611
    %5625 = vmatprep.subr.bf16.mxu0 %v3616
    %5626 = vmatpush1.bf16.msra.mxu0 %v3615
    %5627 = vmatprep.subr.bf16.mxu0 %v3620
    %5628 = vmatpush1.bf16.msra.mxu0 %v3619
    %5629 = vmatprep.subr.bf16.mxu0 %v3624
    %5630 = vmatpush1.bf16.msra.mxu0 %v3623
    %5631 = vmatprep.subr.bf16.mxu0 %v3628
    %5632 = vmatpush1.bf16.msra.mxu0 %v3627
    %5633 = vmatprep.mubr.bf16.mxu0 %v884
    %5634 = vmatmul.mubr.bf16.gmra.mrb[0].mxu0 %v882
    %v5635 = vpop.f32.mrb[0].mxu0
    %v5636 = vadd.f32 %v5595, %v5635
    %v5637 = vpop.f32.mrb[0].mxu0
    %v5638 = vadd.f32 %v5597, %v5637
    %v5639 = vpop.f32.mrb[0].mxu0
    %v5640 = vpop.f32.mrb[0].mxu0
    %5641 = vdwg.mxu0
    %5642 = vmatprep.subr.bf16.mxu0 %v3632
    %5643 = vmatpush1.bf16.msra.mxu0 %v3631
    %5644 = vmatprep.subr.bf16.mxu0 %v3636
    %5645 = vmatpush1.bf16.msra.mxu0 %v3635
    %5646 = vmatprep.subr.bf16.mxu0 %v3640
    %5647 = vmatpush1.bf16.msra.mxu0 %v3639
    %5648 = vmatprep.subr.bf16.mxu0 %v3644
    %5649 = vmatpush1.bf16.msra.mxu0 %v3643
    %5650 = vmatprep.subr.bf16.mxu0 %v3648
    %5651 = vmatpush1.bf16.msra.mxu0 %v3647
    %5652 = vmatprep.subr.bf16.mxu0 %v3652
    %5653 = vmatpush1.bf16.msra.mxu0 %v3651
    %5654 = vmatprep.subr.bf16.mxu0 %v3656
    %5655 = vmatpush1.bf16.msra.mxu0 %v3655
    %5656 = vmatprep.subr.bf16.mxu0 %v3660
    %5657 = vmatpush1.bf16.msra.mxu0 %v3659
    %5658 = vmatprep.subr.bf16.mxu0 %v3664
    %5659 = vmatpush1.bf16.msra.mxu0 %v3663
    %5660 = vmatprep.subr.bf16.mxu0 %v3668
    %5661 = vmatpush1.bf16.msra.mxu0 %v3667
    %5662 = vmatprep.subr.bf16.mxu0 %v3672
    %5663 = vmatpush1.bf16.msra.mxu0 %v3671
    %5664 = vmatprep.subr.bf16.mxu0 %v3676
    %5665 = vmatpush1.bf16.msra.mxu0 %v3675
    %5666 = vmatprep.subr.bf16.mxu0 %v3680
    %5667 = vmatpush1.bf16.msra.mxu0 %v3679
    %5668 = vmatprep.subr.bf16.mxu0 %v3684
    %5669 = vmatpush1.bf16.msra.mxu0 %v3683
    %5670 = vmatprep.subr.bf16.mxu0 %v3688
    %5671 = vmatpush1.bf16.msra.mxu0 %v3687
    %5672 = vmatprep.subr.bf16.mxu0 %v3692
    %5673 = vmatpush1.bf16.msra.mxu0 %v3691
    %5674 = vmatprep.mubr.bf16.mxu0 %v922
    %5675 = vmatmul.mubr.bf16.gmra.mrb[0].mxu0 %v908
    %v5676 = vpop.f32.mrb[0].mxu0
    %v5677 = vadd.f32 %v5636, %v5676
    %v5678 = vpop.f32.mrb[0].mxu0
    %v5679 = vadd.f32 %v5638, %v5678
    %v5680 = vpop.f32.mrb[0].mxu0
    %v5681 = vpop.f32.mrb[0].mxu0
    %5682 = vdwg.mxu0
    %5683 = vmatprep.subr.bf16.mxu0 %v3696
    %5684 = vmatpush1.bf16.msra.mxu0 %v3695
    %5685 = vmatprep.subr.bf16.mxu0 %v3700
    %5686 = vmatpush1.bf16.msra.mxu0 %v3699
    %5687 = vmatprep.subr.bf16.mxu0 %v3704
    %5688 = vmatpush1.bf16.msra.mxu0 %v3703
    %5689 = vmatprep.subr.bf16.mxu0 %v3708
    %5690 = vmatpush1.bf16.msra.mxu0 %v3707
    %5691 = vmatprep.subr.bf16.mxu0 %v3712
    %5692 = vmatpush1.bf16.msra.mxu0 %v3711
    %5693 = vmatprep.subr.bf16.mxu0 %v3716
    %5694 = vmatpush1.bf16.msra.mxu0 %v3715
    %5695 = vmatprep.subr.bf16.mxu0 %v3720
    %5696 = vmatpush1.bf16.msra.mxu0 %v3719
    %5697 = vmatprep.subr.bf16.mxu0 %v3724
    %5698 = vmatpush1.bf16.msra.mxu0 %v3723
    %5699 = vmatprep.subr.bf16.mxu0 %v3728
    %5700 = vmatpush1.bf16.msra.mxu0 %v3727
    %5701 = vmatprep.subr.bf16.mxu0 %v3732
    %5702 = vmatpush1.bf16.msra.mxu0 %v3731
    %5703 = vmatprep.subr.bf16.mxu0 %v3736
    %5704 = vmatpush1.bf16.msra.mxu0 %v3735
    %5705 = vmatprep.subr.bf16.mxu0 %v3740
    %5706 = vmatpush1.bf16.msra.mxu0 %v3739
    %5707 = vmatprep.subr.bf16.mxu0 %v3744
    %5708 = vmatpush1.bf16.msra.mxu0 %v3743
    %5709 = vmatprep.subr.bf16.mxu0 %v3748
    %5710 = vmatpush1.bf16.msra.mxu0 %v3747
    %5711 = vmatprep.subr.bf16.mxu0 %v3752
    %5712 = vmatpush1.bf16.msra.mxu0 %v3751
    %5713 = vmatprep.subr.bf16.mxu0 %v3756
    %5714 = vmatpush1.bf16.msra.mxu0 %v3755
    %5715 = vmatprep.mubr.bf16.mxu0 %v932
    %5716 = vmatmul.mubr.bf16.gmra.mrb[0].mxu0 %v930
    %v5717 = vpop.f32.mrb[0].mxu0
    %v5718 = vadd.f32 %v5677, %v5717
    %v5719 = vpop.f32.mrb[0].mxu0
    %v5720 = vadd.f32 %v5679, %v5719
    %v5721 = vpop.f32.mrb[0].mxu0
    %v5722 = vpop.f32.mrb[0].mxu0
    %5723 = vdwg.mxu0
    %5724 = vmatprep.subr.bf16.mxu0 %v3760
    %5725 = vmatpush1.bf16.msra.mxu0 %v3759
    %5726 = vmatprep.subr.bf16.mxu0 %v3764
    %5727 = vmatpush1.bf16.msra.mxu0 %v3763
    %5728 = vmatprep.subr.bf16.mxu0 %v3768
    %5729 = vmatpush1.bf16.msra.mxu0 %v3767
    %5730 = vmatprep.subr.bf16.mxu0 %v3772
    %5731 = vmatpush1.bf16.msra.mxu0 %v3771
    %5732 = vmatprep.subr.bf16.mxu0 %v3776
    %5733 = vmatpush1.bf16.msra.mxu0 %v3775
    %5734 = vmatprep.subr.bf16.mxu0 %v3780
    %5735 = vmatpush1.bf16.msra.mxu0 %v3779
    %5736 = vmatprep.subr.bf16.mxu0 %v3784
    %5737 = vmatpush1.bf16.msra.mxu0 %v3783
    %5738 = vmatprep.subr.bf16.mxu0 %v3788
    %5739 = vmatpush1.bf16.msra.mxu0 %v3787
    %5740 = vmatprep.subr.bf16.mxu0 %v3792
    %5741 = vmatpush1.bf16.msra.mxu0 %v3791
    %5742 = vmatprep.subr.bf16.mxu0 %v3796
    %5743 = vmatpush1.bf16.msra.mxu0 %v3795
    %5744 = vmatprep.subr.bf16.mxu0 %v3800
    %5745 = vmatpush1.bf16.msra.mxu0 %v3799
    %5746 = vmatprep.subr.bf16.mxu0 %v3804
    %5747 = vmatpush1.bf16.msra.mxu0 %v3803
    %5748 = vmatprep.subr.bf16.mxu0 %v3808
    %5749 = vmatpush1.bf16.msra.mxu0 %v3807
    %5750 = vmatprep.subr.bf16.mxu0 %v3812
    %5751 = vmatpush1.bf16.msra.mxu0 %v3811
    %5752 = vmatprep.subr.bf16.mxu0 %v3816
    %5753 = vmatpush1.bf16.msra.mxu0 %v3815
    %5754 = vmatprep.subr.bf16.mxu0 %v3820
    %5755 = vmatpush1.bf16.msra.mxu0 %v3819
    %5756 = vmatprep.mubr.bf16.mxu0 %v929
    %5757 = vmatmul.mubr.bf16.gmra.mrb[0].mxu0 %v915
    %v5758 = vpop.f32.mrb[0].mxu0
    %v5759 = vadd.f32 %v5718, %v5758
    %v5760 = vpop.f32.mrb[0].mxu0
    %v5761 = vadd.f32 %v5720, %v5760
    %v5762 = vpop.f32.mrb[0].mxu0
    %v5763 = vpop.f32.mrb[0].mxu0
    %5764 = vdwg.mxu0
    %5765 = vmatprep.subr.bf16.mxu0 %v3824
    %5766 = vmatpush1.bf16.msra.mxu0 %v3823
    %5767 = vmatprep.subr.bf16.mxu0 %v3828
    %5768 = vmatpush1.bf16.msra.mxu0 %v3827
    %5769 = vmatprep.subr.bf16.mxu0 %v3832
    %5770 = vmatpush1.bf16.msra.mxu0 %v3831
    %5771 = vmatprep.subr.bf16.mxu0 %v3836
    %5772 = vmatpush1.bf16.msra.mxu0 %v3835
    %5773 = vmatprep.subr.bf16.mxu0 %v3840
    %5774 = vmatpush1.bf16.msra.mxu0 %v3839
    %5775 = vmatprep.subr.bf16.mxu0 %v3844
    %5776 = vmatpush1.bf16.msra.mxu0 %v3843
    %5777 = vmatprep.subr.bf16.mxu0 %v3848
    %5778 = vmatpush1.bf16.msra.mxu0 %v3847
    %5779 = vmatprep.subr.bf16.mxu0 %v3852
    %5780 = vmatpush1.bf16.msra.mxu0 %v3851
    %5781 = vmatprep.subr.bf16.mxu0 %v3856
    %5782 = vmatpush1.bf16.msra.mxu0 %v3855
    %5783 = vmatprep.subr.bf16.mxu0 %v3860
    %5784 = vmatpush1.bf16.msra.mxu0 %v3859
    %5785 = vmatprep.subr.bf16.mxu0 %v3864
    %5786 = vmatpush1.bf16.msra.mxu0 %v3863
    %5787 = vmatprep.subr.bf16.mxu0 %v3868
    %5788 = vmatpush1.bf16.msra.mxu0 %v3867
    %5789 = vmatprep.subr.bf16.mxu0 %v3872
    %5790 = vmatpush1.bf16.msra.mxu0 %v3871
    %5791 = vmatprep.subr.bf16.mxu0 %v3876
    %5792 = vmatpush1.bf16.msra.mxu0 %v3875
    %5793 = vmatprep.subr.bf16.mxu0 %v3880
    %5794 = vmatpush1.bf16.msra.mxu0 %v3879
    %5795 = vmatprep.subr.bf16.mxu0 %v3884
    %5796 = vmatpush1.bf16.msra.mxu0 %v3883
    %5797 = vmatprep.mubr.bf16.mxu0 %v933
    %5798 = vmatmul.mubr.bf16.gmra.mrb[0].mxu0 %v931
    %v5799 = vpop.f32.mrb[0].mxu0
    %v5800 = vadd.f32 %v5759, %v5799
    %v5801 = vpop.f32.mrb[0].mxu0
    %v5802 = vadd.f32 %v5761, %v5801
    %v5803 = vpop.f32.mrb[0].mxu0
    %v5804 = vpop.f32.mrb[0].mxu0
    %5805 = vdwg.mxu0
    %5806 = vmatprep.subr.bf16.mxu0 %v3888
    %5807 = vmatpush1.bf16.msra.mxu0 %v3887
    %5808 = vmatprep.subr.bf16.mxu0 %v3892
    %5809 = vmatpush1.bf16.msra.mxu0 %v3891
    %5810 = vmatprep.subr.bf16.mxu0 %v3896
    %5811 = vmatpush1.bf16.msra.mxu0 %v3895
    %5812 = vmatprep.subr.bf16.mxu0 %v3900
    %5813 = vmatpush1.bf16.msra.mxu0 %v3899
    %5814 = vmatprep.subr.bf16.mxu0 %v3904
    %5815 = vmatpush1.bf16.msra.mxu0 %v3903
    %5816 = vmatprep.subr.bf16.mxu0 %v3908
    %5817 = vmatpush1.bf16.msra.mxu0 %v3907
    %5818 = vmatprep.subr.bf16.mxu0 %v3912
    %5819 = vmatpush1.bf16.msra.mxu0 %v3911
    %5820 = vmatprep.subr.bf16.mxu0 %v3916
    %5821 = vmatpush1.bf16.msra.mxu0 %v3915
    %5822 = vmatprep.subr.bf16.mxu0 %v3920
    %5823 = vmatpush1.bf16.msra.mxu0 %v3919
    %5824 = vmatprep.subr.bf16.mxu0 %v3924
    %5825 = vmatpush1.bf16.msra.mxu0 %v3923
    %5826 = vmatprep.subr.bf16.mxu0 %v3928
    %5827 = vmatpush1.bf16.msra.mxu0 %v3927
    %5828 = vmatprep.subr.bf16.mxu0 %v3932
    %5829 = vmatpush1.bf16.msra.mxu0 %v3931
    %5830 = vmatprep.subr.bf16.mxu0 %v3936
    %5831 = vmatpush1.bf16.msra.mxu0 %v3935
    %5832 = vmatprep.subr.bf16.mxu0 %v3940
    %5833 = vmatpush1.bf16.msra.mxu0 %v3939
    %5834 = vmatprep.subr.bf16.mxu0 %v3944
    %5835 = vmatpush1.bf16.msra.mxu0 %v3943
    %5836 = vmatprep.subr.bf16.mxu0 %v3948
    %5837 = vmatpush1.bf16.msra.mxu0 %v3947
    %5838 = vmatprep.mubr.bf16.mxu0 %v971
    %5839 = vmatmul.mubr.bf16.gmra.mrb[0].mxu0 %v957
    %v5840 = vpop.f32.mrb[0].mxu0
    %v5841 = vadd.f32 %v5800, %v5840
    %v5842 = vpop.f32.mrb[0].mxu0
    %v5843 = vadd.f32 %v5802, %v5842
    %v5844 = vpop.f32.mrb[0].mxu0
    %v5845 = vpop.f32.mrb[0].mxu0
    %5846 = vdwg.mxu0
    %5847 = vmatprep.subr.bf16.mxu0 %v3952
    %5848 = vmatpush1.bf16.msra.mxu0 %v3951
    %5849 = vmatprep.subr.bf16.mxu0 %v3956
    %5850 = vmatpush1.bf16.msra.mxu0 %v3955
    %5851 = vmatprep.subr.bf16.mxu0 %v3960
    %5852 = vmatpush1.bf16.msra.mxu0 %v3959
    %5853 = vmatprep.subr.bf16.mxu0 %v3964
    %5854 = vmatpush1.bf16.msra.mxu0 %v3963
    %5855 = vmatprep.subr.bf16.mxu0 %v3968
    %5856 = vmatpush1.bf16.msra.mxu0 %v3967
    %5857 = vmatprep.subr.bf16.mxu0 %v3972
    %5858 = vmatpush1.bf16.msra.mxu0 %v3971
    %5859 = vmatprep.subr.bf16.mxu0 %v3976
    %5860 = vmatpush1.bf16.msra.mxu0 %v3975
    %5861 = vmatprep.subr.bf16.mxu0 %v3980
    %5862 = vmatpush1.bf16.msra.mxu0 %v3979
    %5863 = vmatprep.subr.bf16.mxu0 %v3984
    %5864 = vmatpush1.bf16.msra.mxu0 %v3983
    %5865 = vmatprep.subr.bf16.mxu0 %v3988
    %5866 = vmatpush1.bf16.msra.mxu0 %v3987
    %5867 = vmatprep.subr.bf16.mxu0 %v3992
    %5868 = vmatpush1.bf16.msra.mxu0 %v3991
    %5869 = vmatprep.subr.bf16.mxu0 %v3996
    %5870 = vmatpush1.bf16.msra.mxu0 %v3995
    %5871 = vmatprep.subr.bf16.mxu0 %v4000
    %5872 = vmatpush1.bf16.msra.mxu0 %v3999
    %5873 = vmatprep.subr.bf16.mxu0 %v4004
    %5874 = vmatpush1.bf16.msra.mxu0 %v4003
    %5875 = vmatprep.subr.bf16.mxu0 %v4008
    %5876 = vmatpush1.bf16.msra.mxu0 %v4007
    %5877 = vmatprep.subr.bf16.mxu0 %v4012
    %5878 = vmatpush1.bf16.msra.mxu0 %v4011
    %5879 = vmatprep.mubr.bf16.mxu0 %v981
    %5880 = vmatmul.mubr.bf16.gmra.mrb[0].mxu0 %v979
    %v5881 = vpop.f32.mrb[0].mxu0
    %v5882 = vadd.f32 %v5841, %v5881
    %v5883 = vpop.f32.mrb[0].mxu0
    %v5884 = vadd.f32 %v5843, %v5883
    %v5885 = vpop.f32.mrb[0].mxu0
    %v5886 = vpop.f32.mrb[0].mxu0
    %5887 = vdwg.mxu0
    %5888 = vmatprep.subr.bf16.mxu0 %v4016
    %5889 = vmatpush1.bf16.msra.mxu0 %v4015
    %5890 = vmatprep.subr.bf16.mxu0 %v4020
    %5891 = vmatpush1.bf16.msra.mxu0 %v4019
    %5892 = vmatprep.subr.bf16.mxu0 %v4024
    %5893 = vmatpush1.bf16.msra.mxu0 %v4023
    %5894 = vmatprep.subr.bf16.mxu0 %v4028
    %5895 = vmatpush1.bf16.msra.mxu0 %v4027
    %5896 = vmatprep.subr.bf16.mxu0 %v4032
    %5897 = vmatpush1.bf16.msra.mxu0 %v4031
    %5898 = vmatprep.subr.bf16.mxu0 %v4036
    %5899 = vmatpush1.bf16.msra.mxu0 %v4035
    %5900 = vmatprep.subr.bf16.mxu0 %v4040
    %5901 = vmatpush1.bf16.msra.mxu0 %v4039
    %5902 = vmatprep.subr.bf16.mxu0 %v4044
    %5903 = vmatpush1.bf16.msra.mxu0 %v4043
    %5904 = vmatprep.subr.bf16.mxu0 %v4048
    %5905 = vmatpush1.bf16.msra.mxu0 %v4047
    %5906 = vmatprep.subr.bf16.mxu0 %v4052
    %5907 = vmatpush1.bf16.msra.mxu0 %v4051
    %5908 = vmatprep.subr.bf16.mxu0 %v4056
    %5909 = vmatpush1.bf16.msra.mxu0 %v4055
    %5910 = vmatprep.subr.bf16.mxu0 %v4060
    %5911 = vmatpush1.bf16.msra.mxu0 %v4059
    %5912 = vmatprep.subr.bf16.mxu0 %v4064
    %5913 = vmatpush1.bf16.msra.mxu0 %v4063
    %5914 = vmatprep.subr.bf16.mxu0 %v4068
    %5915 = vmatpush1.bf16.msra.mxu0 %v4067
    %5916 = vmatprep.subr.bf16.mxu0 %v4072
    %5917 = vmatpush1.bf16.msra.mxu0 %v4071
    %5918 = vmatprep.subr.bf16.mxu0 %v4076
    %5919 = vmatpush1.bf16.msra.mxu0 %v4075
    %5920 = vmatprep.mubr.bf16.mxu0 %v978
    %5921 = vmatmul.mubr.bf16.gmra.mrb[0].mxu0 %v964
    %v5922 = vpop.f32.mrb[0].mxu0
    %v5923 = vadd.f32 %v5882, %v5922
    %v5924 = vpop.f32.mrb[0].mxu0
    %v5925 = vadd.f32 %v5884, %v5924
    %v5926 = vpop.f32.mrb[0].mxu0
    %v5927 = vpop.f32.mrb[0].mxu0
    %5928 = vdwg.mxu0
    %5929 = vmatprep.subr.bf16.mxu0 %v4080
    %5930 = vmatpush1.bf16.msra.mxu0 %v4079
    %5931 = vmatprep.subr.bf16.mxu0 %v4084
    %5932 = vmatpush1.bf16.msra.mxu0 %v4083
    %5933 = vmatprep.subr.bf16.mxu0 %v4088
    %5934 = vmatpush1.bf16.msra.mxu0 %v4087
    %5935 = vmatprep.subr.bf16.mxu0 %v4092
    %5936 = vmatpush1.bf16.msra.mxu0 %v4091
    %5937 = vmatprep.subr.bf16.mxu0 %v4096
    %5938 = vmatpush1.bf16.msra.mxu0 %v4095
    %5939 = vmatprep.subr.bf16.mxu0 %v4100
    %5940 = vmatpush1.bf16.msra.mxu0 %v4099
    %5941 = vmatprep.subr.bf16.mxu0 %v4104
    %5942 = vmatpush1.bf16.msra.mxu0 %v4103
    %5943 = vmatprep.subr.bf16.mxu0 %v4108
    %5944 = vmatpush1.bf16.msra.mxu0 %v4107
    %5945 = vmatprep.subr.bf16.mxu0 %v4112
    %5946 = vmatpush1.bf16.msra.mxu0 %v4111
    %5947 = vmatprep.subr.bf16.mxu0 %v4116
    %5948 = vmatpush1.bf16.msra.mxu0 %v4115
    %5949 = vmatprep.subr.bf16.mxu0 %v4120
    %5950 = vmatpush1.bf16.msra.mxu0 %v4119
    %5951 = vmatprep.subr.bf16.mxu0 %v4124
    %5952 = vmatpush1.bf16.msra.mxu0 %v4123
    %5953 = vmatprep.subr.bf16.mxu0 %v4128
    %5954 = vmatpush1.bf16.msra.mxu0 %v4127
    %5955 = vmatprep.subr.bf16.mxu0 %v4132
    %5956 = vmatpush1.bf16.msra.mxu0 %v4131
    %5957 = vmatprep.subr.bf16.mxu0 %v4136
    %5958 = vmatpush1.bf16.msra.mxu0 %v4135
    %5959 = vmatprep.subr.bf16.mxu0 %v4140
    %5960 = vmatpush1.bf16.msra.mxu0 %v4139
    %5961 = vmatprep.mubr.bf16.mxu0 %v982
    %5962 = vmatmul.mubr.bf16.gmra.mrb[0].mxu0 %v980
    %v5963 = vpop.f32.mrb[0].mxu0
    %v5964 = vadd.f32 %v5923, %v5963
    %v5965 = vpop.f32.mrb[0].mxu0
    %v5966 = vadd.f32 %v5925, %v5965
    %v5967 = vpop.f32.mrb[0].mxu0
    %v5968 = vpop.f32.mrb[0].mxu0
    %5969 = vdwg.mxu0
    %5970 = vmatprep.subr.bf16.mxu0 %v4144
    %5971 = vmatpush1.bf16.msra.mxu0 %v4143
    %5972 = vmatprep.subr.bf16.mxu0 %v4148
    %5973 = vmatpush1.bf16.msra.mxu0 %v4147
    %5974 = vmatprep.subr.bf16.mxu0 %v4152
    %5975 = vmatpush1.bf16.msra.mxu0 %v4151
    %5976 = vmatprep.subr.bf16.mxu0 %v4156
    %5977 = vmatpush1.bf16.msra.mxu0 %v4155
    %5978 = vmatprep.subr.bf16.mxu0 0
    %5979 = vmatpush1.bf16.msra.mxu0 0
    %5980 = vmatprep.subr.bf16.mxu0 0
    %5981 = vmatpush1.bf16.msra.mxu0 0
    %5982 = vmatprep.subr.bf16.mxu0 0
    %5983 = vmatpush1.bf16.msra.mxu0 0
    %5984 = vmatprep.subr.bf16.mxu0 0
    %5985 = vmatpush1.bf16.msra.mxu0 0
    %5986 = vmatprep.subr.bf16.mxu0 0
    %5987 = vmatpush1.bf16.msra.mxu0 0
    %5988 = vmatprep.subr.bf16.mxu0 0
    %5989 = vmatpush1.bf16.msra.mxu0 0
    %5990 = vmatprep.subr.bf16.mxu0 0
    %5991 = vmatpush1.bf16.msra.mxu0 0
    %5992 = vmatprep.subr.bf16.mxu0 0
    %5993 = vmatpush1.bf16.msra.mxu0 0
    %5994 = vmatprep.subr.bf16.mxu0 0
    %5995 = vmatpush1.bf16.msra.mxu0 0
    %5996 = vmatprep.subr.bf16.mxu0 0
    %5997 = vmatpush1.bf16.msra.mxu0 0
    %5998 = vmatprep.subr.bf16.mxu0 0
    %5999 = vmatpush1.bf16.msra.mxu0 0
    %6000 = vmatprep.subr.bf16.mxu0 0
    %6001 = vmatpush1.bf16.msra.mxu0 0
    %6002 = vmatprep.mubr.bf16.mxu0 0
    %6003 = vmatmul.mubr.bf16.gmra.mrb[0].mxu0 %v4943
    %v6004 = vpop.f32.mrb[0].mxu0
    %v6005 = vadd.f32 %v5964, %v6004
    %v6006 = vpop.f32.mrb[0].mxu0
    %v6007 = vadd.f32 %v5966, %v6006
    %v6008 = vpop.f32.mrb[0].mxu0
    %v6009 = vpop.f32.mrb[0].mxu0
    %6010 = vdwg.mxu0
    %v6011 = vmax.f32 %v5472, 0.0
    %v6012 = vmax.f32 %v5474, 0.0
    %v6013 = vmax.f32 %v6005, 0.0
    %v6014 = vmax.f32 %v6007, 0.0
    %v6015 = vpack.c.bf16 %v6011, %v6011
    %v6016 = vpack.c.bf16 %v6012, %v6012
    %v6017 = vpack.c.bf16 %v6013, %v6013
    %v6018 = vpack.c.bf16 %v6014, %v6014
    %v6019 = vld [vmem:[%s3] sm:$0xf]
    %v6020 = vld [vmem:[%s3 + $0x4] sm:$0xf]
    %v6021 = vld [vmem:[%s3 + $0x8] sm:$0xf]
    %v6022 = vld [vmem:[%s3 + $0xc] sm:$0xf]
    %v6023 = vld [vmem:[%s3 + $0x10] sm:$0xf]
    %v6024 = vld [vmem:[%s3 + $0x14] sm:$0xf]
    %v6025 = vld [vmem:[%s3 + $0x18] sm:$0xf]
    %v6026 = vld [vmem:[%s3 + $0x1c] sm:$0xf]
    %v6027 = vld [vmem:[%s3 + $0x20] sm:$0xf]
    %v6028 = vld [vmem:[%s3 + $0x24] sm:$0xf]
    %v6029 = vld [vmem:[%s3 + $0x28] sm:$0xf]
    %v6030 = vld [vmem:[%s3 + $0x2c] sm:$0xf]
    %v6031 = vld [vmem:[%s3 + $0x30] sm:$0xf]
    %v6032 = vld [vmem:[%s3 + $0x34] sm:$0xf]
    %v6033 = vld [vmem:[%s3 + $0x38] sm:$0xf]
    %v6034 = vld [vmem:[%s3 + $0x3c] sm:$0xf]
    %v6035 = vld [vmem:[%s3 + $0x40] sm:$0xf]
    %v6036 = vld [vmem:[%s3 + $0x44] sm:$0xf]
    %v6037 = vld [vmem:[%s3 + $0x48] sm:$0xf]
    %v6038 = vld [vmem:[%s3 + $0x4c] sm:$0xf]
    %v6039 = vld [vmem:[%s3 + $0x50] sm:$0xf]
    %v6040 = vld [vmem:[%s3 + $0x54] sm:$0xf]
    %v6041 = vld [vmem:[%s3 + $0x58] sm:$0xf]
    %v6042 = vld [vmem:[%s3 + $0x5c] sm:$0xf]
    %v6043 = vld [vmem:[%s3 + $0x60] sm:$0xf]
    %v6044 = vld [vmem:[%s3 + $0x64] sm:$0xf]
    %v6045 = vld [vmem:[%s3 + $0x68] sm:$0xf]
    %v6046 = vld [vmem:[%s3 + $0x6c] sm:$0xf]
    %v6047 = vld [vmem:[%s3 + $0x70] sm:$0xf]
    %v6048 = vld [vmem:[%s3 + $0x74] sm:$0xf]
    %v6049 = vld [vmem:[%s3 + $0x78] sm:$0xf]
    %v6050 = vld [vmem:[%s3 + $0x7c] sm:$0xf]
    %v6051 = vld [vmem:[%s3 + $0x80] sm:$0xf]
    %v6052 = vld [vmem:[%s3 + $0x84] sm:$0xf]
    %v6053 = vld [vmem:[%s3 + $0x88] sm:$0xf]
    %v6054 = vld [vmem:[%s3 + $0x8c] sm:$0xf]
    %v6055 = vld [vmem:[%s3 + $0x90] sm:$0xf]
    %v6056 = vld [vmem:[%s3 + $0x94] sm:$0xf]
    %v6057 = vld [vmem:[%s3 + $0x98] sm:$0xf]
    %v6058 = vld [vmem:[%s3 + $0x9c] sm:$0xf]
    %v6059 = vld [vmem:[%s3 + $0xa0] sm:$0xf]
    %v6060 = vld [vmem:[%s3 + $0xa4] sm:$0xf]
    %v6061 = vld [vmem:[%s3 + $0xa8] sm:$0xf]
    %v6062 = vld [vmem:[%s3 + $0xac] sm:$0xf]
    %v6063 = vld [vmem:[%s3 + $0xb0] sm:$0xf]
    %v6064 = vld [vmem:[%s3 + $0xb4] sm:$0xf]
    %v6065 = vld [vmem:[%s3 + $0xb8] sm:$0xf]
    %v6066 = vld [vmem:[%s3 + $0xbc] sm:$0xf]
    %v6067 = vld [vmem:[%s3 + $0xc0] sm:$0xf]
    %v6068 = vld [vmem:[%s3 + $0xc4] sm:$0xf]
    %v6069 = vld [vmem:[%s3 + $0xc8] sm:$0xf]
    %v6070 = vld [vmem:[%s3 + $0xcc] sm:$0xf]
    %v6071 = vld [vmem:[%s3 + $0xd0] sm:$0xf]
    %v6072 = vld [vmem:[%s3 + $0xd4] sm:$0xf]
    %v6073 = vld [vmem:[%s3 + $0xd8] sm:$0xf]
    %v6074 = vld [vmem:[%s3 + $0xdc] sm:$0xf]
    %v6075 = vld [vmem:[%s3 + $0xe0] sm:$0xf]
    %v6076 = vld [vmem:[%s3 + $0xe4] sm:$0xf]
    %v6077 = vld [vmem:[%s3 + $0xe8] sm:$0xf]
    %v6078 = vld [vmem:[%s3 + $0xec] sm:$0xf]
    %v6079 = vld [vmem:[%s3 + $0xf0] sm:$0xf]
    %v6080 = vld [vmem:[%s3 + $0xf4] sm:$0xf]
    %v6081 = vld [vmem:[%s3 + $0xf8] sm:$0xf]
    %v6082 = vld [vmem:[%s3 + $0xfc] sm:$0xf]
    %v6083 = vld [vmem:[%s4] sm:$0x1]
    %v6085 = vlaneseq
    %v6086 = vshrl.u32 %v6085, 7
    %v6087 = vsub.s32 0, %v6086
    %v6088 = vrot.slane %v6083, %v6087
    %v6154 = vunpack.c.l.b16 %v6019
    %v6155 = vunpack.c.l.b16 %v6020
    %v6156 = vunpack.c.l.b16 %v6021
    %v6157 = vunpack.c.l.b16 %v6022
    %v6158 = vunpack.c.l.b16 %v6023
    %v6159 = vunpack.c.l.b16 %v6024
    %v6160 = vunpack.c.l.b16 %v6025
    %v6161 = vunpack.c.l.b16 %v6026
    %v6162 = vunpack.c.l.b16 %v6027
    %v6163 = vunpack.c.l.b16 %v6028
    %v6164 = vunpack.c.l.b16 %v6029
    %v6165 = vunpack.c.l.b16 %v6030
    %v6166 = vunpack.c.l.b16 %v6031
    %v6167 = vunpack.c.l.b16 %v6032
    %v6168 = vunpack.c.l.b16 %v6033
    %v6169 = vunpack.c.l.b16 %v6034
    %v6170 = vunpack.c.l.b16 %v6035
    %v6171 = vunpack.c.l.b16 %v6036
    %v6172 = vunpack.c.l.b16 %v6037
    %v6173 = vunpack.c.l.b16 %v6038
    %v6174 = vunpack.c.l.b16 %v6039
    %v6175 = vunpack.c.l.b16 %v6040
    %v6176 = vunpack.c.l.b16 %v6041
    %v6177 = vunpack.c.l.b16 %v6042
    %v6178 = vunpack.c.l.b16 %v6043
    %v6179 = vunpack.c.l.b16 %v6044
    %v6180 = vunpack.c.l.b16 %v6045
    %v6181 = vunpack.c.l.b16 %v6046
    %v6182 = vunpack.c.l.b16 %v6047
    %v6183 = vunpack.c.l.b16 %v6048
    %v6184 = vunpack.c.l.b16 %v6049
    %v6185 = vunpack.c.l.b16 %v6050
    %v6186 = vunpack.c.l.b16 %v6051
    %v6187 = vunpack.c.l.b16 %v6052
    %v6188 = vunpack.c.l.b16 %v6053
    %v6189 = vunpack.c.l.b16 %v6054
    %v6190 = vunpack.c.l.b16 %v6055
    %v6191 = vunpack.c.l.b16 %v6056
    %v6192 = vunpack.c.l.b16 %v6057
    %v6193 = vunpack.c.l.b16 %v6058
    %v6194 = vunpack.c.l.b16 %v6059
    %v6195 = vunpack.c.l.b16 %v6060
    %v6196 = vunpack.c.l.b16 %v6061
    %v6197 = vunpack.c.l.b16 %v6062
    %v6198 = vunpack.c.l.b16 %v6063
    %v6199 = vunpack.c.l.b16 %v6064
    %v6200 = vunpack.c.l.b16 %v6065
    %v6201 = vunpack.c.l.b16 %v6066
    %v6202 = vunpack.c.l.b16 %v6067
    %v6203 = vunpack.c.l.b16 %v6068
    %v6204 = vunpack.c.l.b16 %v6069
    %v6205 = vunpack.c.l.b16 %v6070
    %v6206 = vunpack.c.l.b16 %v6071
    %v6207 = vunpack.c.l.b16 %v6072
    %v6208 = vunpack.c.l.b16 %v6073
    %v6209 = vunpack.c.l.b16 %v6074
    %v6210 = vunpack.c.l.b16 %v6075
    %v6211 = vunpack.c.l.b16 %v6076
    %v6212 = vunpack.c.l.b16 %v6077
    %v6213 = vunpack.c.l.b16 %v6078
    %v6214 = vunpack.c.l.b16 %v6079
    %v6215 = vunpack.c.l.b16 %v6080
    %v6216 = vunpack.c.l.b16 %v6081
    %v6217 = vunpack.c.l.b16 %v6082
    %v6218 = vpack.c.b16 %v6155, %v6154
    %v6219 = vpack.c.b16 %v6157, %v6156
    %v6220 = vpack.c.b16 %v6159, %v6158
    %v6221 = vpack.c.b16 %v6161, %v6160
    %v6222 = vpack.c.b16 %v6163, %v6162
    %v6223 = vpack.c.b16 %v6165, %v6164
    %v6224 = vpack.c.b16 %v6167, %v6166
    %v6225 = vpack.c.b16 %v6169, %v6168
    %v6226 = vpack.c.b16 %v6171, %v6170
    %v6227 = vpack.c.b16 %v6173, %v6172
    %v6228 = vpack.c.b16 %v6175, %v6174
    %v6229 = vpack.c.b16 %v6177, %v6176
    %v6230 = vpack.c.b16 %v6179, %v6178
    %v6231 = vpack.c.b16 %v6181, %v6180
    %v6232 = vpack.c.b16 %v6183, %v6182
    %v6233 = vpack.c.b16 %v6185, %v6184
    %v6234 = vpack.c.b16 %v6187, %v6186
    %v6235 = vpack.c.b16 %v6189, %v6188
    %v6236 = vpack.c.b16 %v6191, %v6190
    %v6237 = vpack.c.b16 %v6193, %v6192
    %v6238 = vpack.c.b16 %v6195, %v6194
    %v6239 = vpack.c.b16 %v6197, %v6196
    %v6240 = vpack.c.b16 %v6199, %v6198
    %v6241 = vpack.c.b16 %v6201, %v6200
    %v6242 = vpack.c.b16 %v6203, %v6202
    %v6243 = vpack.c.b16 %v6205, %v6204
    %v6244 = vpack.c.b16 %v6207, %v6206
    %v6245 = vpack.c.b16 %v6209, %v6208
    %v6246 = vpack.c.b16 %v6211, %v6210
    %v6247 = vpack.c.b16 %v6213, %v6212
    %v6248 = vpack.c.b16 %v6215, %v6214
    %v6249 = vpack.c.b16 %v6217, %v6216
    %6282 = vmatprep.subr.bf16.mxu0 0
    %6283 = vmatpush1.bf16.msra.mxu0 %v6218
    %6284 = vmatprep.subr.bf16.mxu0 0
    %6285 = vmatpush1.bf16.msra.mxu0 %v6219
    %6286 = vmatprep.subr.bf16.mxu0 0
    %6287 = vmatpush1.bf16.msra.mxu0 %v6220
    %6288 = vmatprep.subr.bf16.mxu0 0
    %6289 = vmatpush1.bf16.msra.mxu0 %v6221
    %6290 = vmatprep.subr.bf16.mxu0 0
    %6291 = vmatpush1.bf16.msra.mxu0 %v6222
    %6292 = vmatprep.subr.bf16.mxu0 0
    %6293 = vmatpush1.bf16.msra.mxu0 %v6223
    %6294 = vmatprep.subr.bf16.mxu0 0
    %6295 = vmatpush1.bf16.msra.mxu0 %v6224
    %6296 = vmatprep.subr.bf16.mxu0 0
    %6297 = vmatpush1.bf16.msra.mxu0 %v6225
    %6298 = vmatprep.subr.bf16.mxu0 0
    %6299 = vmatpush1.bf16.msra.mxu0 %v6226
    %6300 = vmatprep.subr.bf16.mxu0 0
    %6301 = vmatpush1.bf16.msra.mxu0 %v6227
    %6302 = vmatprep.subr.bf16.mxu0 0
    %6303 = vmatpush1.bf16.msra.mxu0 %v6228
    %6304 = vmatprep.subr.bf16.mxu0 0
    %6305 = vmatpush1.bf16.msra.mxu0 %v6229
    %6306 = vmatprep.subr.bf16.mxu0 0
    %6307 = vmatpush1.bf16.msra.mxu0 %v6230
    %6308 = vmatprep.subr.bf16.mxu0 0
    %6309 = vmatpush1.bf16.msra.mxu0 %v6231
    %6310 = vmatprep.subr.bf16.mxu0 0
    %6311 = vmatpush1.bf16.msra.mxu0 %v6232
    %6312 = vmatprep.subr.bf16.mxu0 0
    %6313 = vmatpush1.bf16.msra.mxu0 %v6233
    %6314 = vmatprep.mubr.bf16.mxu0 %v6016
    %6315 = vmatmul.mubr.bf16.gmra.mrb[0].mxu0 %v6015
    %v6316 = vpop.f32.mrb[0].mxu0
    %v6317 = vadd.f32 %v6088, %v6316
    %v6318 = vpop.f32.mrb[0].mxu0
    %v6319 = vpop.f32.mrb[0].mxu0
    %v6320 = vpop.f32.mrb[0].mxu0
    %6321 = vdwg.mxu0
    %6322 = vmatprep.subr.bf16.mxu0 0
    %6323 = vmatpush1.bf16.msra.mxu0 %v6234
    %6324 = vmatprep.subr.bf16.mxu0 0
    %6325 = vmatpush1.bf16.msra.mxu0 %v6235
    %6326 = vmatprep.subr.bf16.mxu0 0
    %6327 = vmatpush1.bf16.msra.mxu0 %v6236
    %6328 = vmatprep.subr.bf16.mxu0 0
    %6329 = vmatpush1.bf16.msra.mxu0 %v6237
    %6330 = vmatprep.subr.bf16.mxu0 0
    %6331 = vmatpush1.bf16.msra.mxu0 %v6238
    %6332 = vmatprep.subr.bf16.mxu0 0
    %6333 = vmatpush1.bf16.msra.mxu0 %v6239
    %6334 = vmatprep.subr.bf16.mxu0 0
    %6335 = vmatpush1.bf16.msra.mxu0 %v6240
    %6336 = vmatprep.subr.bf16.mxu0 0
    %6337 = vmatpush1.bf16.msra.mxu0 %v6241
    %6338 = vmatprep.subr.bf16.mxu0 0
    %6339 = vmatpush1.bf16.msra.mxu0 %v6242
    %6340 = vmatprep.subr.bf16.mxu0 0
    %6341 = vmatpush1.bf16.msra.mxu0 %v6243
    %6342 = vmatprep.subr.bf16.mxu0 0
    %6343 = vmatpush1.bf16.msra.mxu0 %v6244
    %6344 = vmatprep.subr.bf16.mxu0 0
    %6345 = vmatpush1.bf16.msra.mxu0 %v6245
    %6346 = vmatprep.subr.bf16.mxu0 0
    %6347 = vmatpush1.bf16.msra.mxu0 %v6246
    %6348 = vmatprep.subr.bf16.mxu0 0
    %6349 = vmatpush1.bf16.msra.mxu0 %v6247
    %6350 = vmatprep.subr.bf16.mxu0 0
    %6351 = vmatpush1.bf16.msra.mxu0 %v6248
    %6352 = vmatprep.subr.bf16.mxu0 0
    %6353 = vmatpush1.bf16.msra.mxu0 %v6249
    %6354 = vmatprep.mubr.bf16.mxu0 %v6018
    %6355 = vmatmul.mubr.bf16.gmra.mrb[0].mxu0 %v6017
    %v6356 = vpop.f32.mrb[0].mxu0
    %v6357 = vadd.f32 %v6317, %v6356
    %v6358 = vpop.f32.mrb[0].mxu0
    %v6359 = vpop.f32.mrb[0].mxu0
    %v6360 = vpop.f32.mrb[0].mxu0
    %6361 = vdwg.mxu0
    %6363 = vset.pattern.permute.xlu0 12
    %6364 = vperm.xlu0 %6363, %v6357
    %v6365 = vpop.permute.xlu0 %6364
    %v6367 = vadd.f32 %v6365, %v6357
    %vm6368 = vcmask 91136
    %v6369 = vsel %vm6368, %v6357, 0.0
    %6370 = vadd.xlane.f32.xlu0 %v6369
    %v6371 = vpop.xlane.xlu0 %6370
    %v6372 = vrcp.pop 12.0
    %v6373 = vmul.f32 %v6371, %v6372
    %v6374 = vsub.f32 %v6367, %v6373
    %6375 = vst.msk [vmem:[#allocation2] sm:$0x3] %vm6368, %v6374
    // Predicated region
    $region22: #{dueling_dqn_forward.7} parent=1 // pred_check
      _
    $region23: #{dueling_dqn_forward.7} parent=1 // pred_check_branch
      %6377 = sbr.rel (0) target = $region25
    $region24: #{dueling_dqn_forward.7} parent=1 // pred_region
      %s6379 = ssub.s32 32, 32
      %6380 = vsyncadd [#allocation3], %s6379
      %s6382 = sshll.u32 [#allocation2], 4
      %s6383 = int_to_ptr.vmem [resolvable:$true] %s6382
      %6385 = dma.vmem_to_hbm [thread:$0]  %s6383, 32, %s5, [#allocation3]
    $region25: #{dueling_dqn_forward.7} parent=1 // pred_fallthru
      _
    // Predicated region
    $region26: #{dueling_dqn_forward.7} parent=1 // pred_check
      _
    $region27: #{dueling_dqn_forward.7} parent=1 // pred_check_branch
      %6387 = sbr.rel (0) target = $region29
    $region28: #{dueling_dqn_forward.7} parent=1 // pred_region
      %6388 = dma.done [#allocation3], 32
    $region29: #{dueling_dqn_forward.7} parent=1 // pred_fallthru
      _
    %6389 = vsyncpa [#allocation3], 1

</llo_original>
